<compile_context>
chip_gen: v6e
topology: v6e:2x2x1
jax: 0.10.0
libtpu: 0.0.40
codegen_flags: <defaults>
</compile_context>

<pallas_src>
import jax
import jax.numpy as jnp
from jax.experimental import pallas as pl
from jax.experimental.pallas import tpu as pltpu

BN_EPS = 1e-5
W_ALIGN = 16  # bf16 sublane tile -> keeps every in-kernel reshape layout-trivial


def _round_up(v, m):
    return ((v + m - 1) // m) * m


def _make_cnn4_kernel(block_dims, mid_c, num_classes, hf, wf):
    """block_dims: list of (h, w, cin, wt) for each of the 4 conv blocks (static)."""

    def _zero_frame(ref, valid_h, valid_w):
        # Zero ONLY the pad frame + width-rounding strip (partial zeroing): the
        # interior [1:1+valid_h, 1:1+valid_w] is fully overwritten by its producer.
        nb, hp, wp, c = ref.shape
        dt = ref.dtype
        ref[:, 0:1, :, :] = jnp.zeros((nb, 1, wp, c), dt)                        # top
        ref[:, 1 + valid_h:hp, :, :] = jnp.zeros((nb, hp - 1 - valid_h, wp, c), dt)   # bottom
        ref[:, :, 0:1, :] = jnp.zeros((nb, hp, 1, c), dt)                        # left
        ref[:, :, 1 + valid_w:wp, :] = jnp.zeros((nb, hp, wp - 1 - valid_w, c), dt)   # right + strip

    def kernel(x_ref,
               w0, g0, b0, w1, g1, b1, w2, g2, b2, w3, g3, b3,
               fcw_ref, fcb_ref,
               o_ref,
               fp0, fp1, fp2, fp3, fp4):
        fps = [fp0, fp1, fp2, fp3, fp4]
        wgb = [(w0, g0, b0), (w1, g1, b1), (w2, g2, b2), (w3, g3, b3)]
        n = x_ref.shape[0]

        # Stage the bf16 NHWC input into block-0's zero-framed scratch.
        h0, w0s, _, _ = block_dims[0]
        _zero_frame(fp0, h0, w0s)
        fp0[:, 1:1 + h0, 1:1 + w0s, :] = x_ref[...]

        for blk in range(4):
            h, w, cin, wt = block_dims[blk]
            hh, wh = h // 2, w // 2
            m_eff = n * h * wt
            fpi, fpo = fps[blk], fps[blk + 1]
            w_ref, g_ref, b_ref = wgb[blk]

            # ---- Conv2d(3x3, pad=1, bias=False) as ONE im2col matmul ----
            # Each window is read once (already bf16), concatenated along the
            # channel axis (all offsets 32-bit-word aligned), then a single
            # (m_eff, 9*cin) x (9*cin, mid_c) MXU dot with f32 accumulation.
            wins = []
            for dy in range(3):
                for dx in range(3):
                    wins.append(fpi[:, dy:dy + h, dx:dx + wt, :])
            lhs = jnp.concatenate(wins, axis=3).reshape(m_eff, 9 * cin)
            y2 = jnp.dot(lhs, w_ref[...], preferred_element_type=jnp.float32)
            y4 = y2.reshape(n, h, wt, mid_c)

            # ---- BatchNorm2d (train-mode batch statistics, f32) ----
            # Garbage width-rounding columns (x >= w) are masked to zero ONCE,
            # then single full-width reductions are used; count covers the
            # n*h*w valid conv outputs only.
            cnt = float(n * h * w)
            if w == wt:
                ym = y2
            else:
                wmask = (jax.lax.broadcasted_iota(jnp.int32, (1, 1, wt, 1), 2)
                         < w).astype(jnp.float32)
                ym = (y4 * wmask).reshape(m_eff, mid_c)
            s1 = jnp.sum(ym, axis=0, keepdims=True)            # (1, C)
            s2 = jnp.sum(ym * ym, axis=0, keepdims=True)       # (1, C)
            mean = s1 / cnt
            var = jnp.maximum(s2 / cnt - mean * mean, 0.0)     # biased var, clamped
            scale = g_ref[...] * jax.lax.rsqrt(var + BN_EPS)
            shift = b_ref[...] - mean * scale

            # BN affine only on the region the pool actually consumes.
            z4 = y4[:, :2 * hh, :2 * wh, :] * scale + shift    # (n, 2hh, 2wh, C) f32

            # ---- MaxPool2d(2,2) + ReLU, vectorized, single bulk store ----
            zr = z4.reshape(n, hh, 2, 2 * wh, mid_c)
            zv = jnp.maximum(zr[:, :, 0, :, :], zr[:, :, 1, :, :])      # row pairs
            pair_max = [jnp.maximum(zv[:, :, 2 * j:2 * j + 1, :],
                                    zv[:, :, 2 * j + 1:2 * j + 2, :])
                        for j in range(wh)]
            zh = jnp.concatenate(pair_max, axis=2)                      # (n, hh, wh, C)
            pooled = jnp.maximum(zh, 0.0)                               # ReLU once

            _zero_frame(fpo, hh, wh)
            fpo[:, 1:1 + hh, 1:1 + wh, :] = pooled.astype(fpo.dtype)    # one store

        # ---- Classifier (nn.Linear); NCHW flatten folded into fcw in the wrapper ----
        acc = jnp.zeros((n, num_classes), jnp.float32)
        for s in range(hf * wf):
            i, j = s // wf, s % wf
            feat = fps[4][:, 1 + i, 1 + j, :]                           # (n, C) bf16
            acc = acc + jnp.dot(feat, fcw_ref[s],
                                preferred_element_type=jnp.float32)
        o_ref[...] = acc + fcb_ref[...]

    return kernel


def init_cnn4_params(key, input_shape, num_classes, intermediate_channels=64):
    """Deterministic parameter init mirroring the module's __init__ shapes."""
    _, in_channels, H, W = input_shape
    keys = jax.random.split(key, 6)
    blocks = []
    cin = in_channels
    for i in range(4):
        fan_in = cin * 9
        bound = float(1.0 / (fan_in ** 0.5))
        w = jax.random.uniform(keys[i], (intermediate_channels, cin, 3, 3),
                               jnp.float32, -bound, bound)
        blocks.append(dict(
            w=w,
            gamma=jnp.ones((intermediate_channels,), jnp.float32),  # BN weight
            beta=jnp.zeros((intermediate_channels,), jnp.float32),  # BN bias
        ))
        cin = intermediate_channels
    n_outputs = intermediate_channels * (H // 16) * (W // 16)  # 4x pool-by-2
    fb = float(1.0 / (n_outputs ** 0.5))
    fc_w = jax.random.uniform(keys[4], (num_classes, n_outputs), jnp.float32, -fb, fb)
    fc_b = jax.random.uniform(keys[5], (num_classes,), jnp.float32, -fb, fb)
    return dict(blocks=blocks, fc_w=fc_w, fc_b=fc_b)


@jax.jit
def cnn4_forward(params, x_nchw):
    # NCHW (PyTorch) -> NHWC bf16 for the kernel (conv path consumes bf16 anyway).
    x = jnp.transpose(x_nchw.astype(jnp.float32), (0, 2, 3, 1)).astype(jnp.bfloat16)
    n, h, w, cin = x.shape
    mid_c = params["blocks"][0]["w"].shape[0]
    num_classes = params["fc_b"].shape[0]

    # Static per-block geometry: (h, w, cin, w_tile). Width rounded up to 16 so
    # every in-kernel reshape of the bf16/f32 tiles is layout-trivial.
    block_dims = []
    bh, bw, bc = h, w, cin
    for _ in params["blocks"]:
        block_dims.append((bh, bw, bc, _round_up(bw, W_ALIGN)))
        bh, bw, bc = bh // 2, bw // 2, mid_c
    hf, wf = bh, bw
    assert hf >= 1 and wf >= 1, "input spatial dims too small for 4 pooling stages"

    # Conv weights as a single (9*cin, cout) bf16 im2col matrix, K ordered
    # (ky, kx, cin); BN affine params as (1, cout) f32.
    conv_inputs = []
    for (_, _, bcin, _), blk in zip(block_dims, params["blocks"]):
        w_mat = jnp.transpose(blk["w"], (2, 3, 1, 0)).reshape(9 * bcin, mid_c)
        conv_inputs += [
            w_mat.astype(jnp.bfloat16),
            blk["gamma"].reshape(1, mid_c).astype(jnp.float32),
            blk["beta"].reshape(1, mid_c).astype(jnp.float32),
        ]

    # Fold the NCHW flatten order (torch nn.Flatten) into the classifier weight:
    # (num_classes, C*hf*wf) -> (hf*wf, C, num_classes), indexed by s = i*wf + j.
    fc_w = params["fc_w"].reshape(num_classes, mid_c, hf, wf)
    fc_w = jnp.transpose(fc_w, (2, 3, 1, 0)).reshape(hf * wf, mid_c, num_classes)
    fc_w = fc_w.astype(jnp.bfloat16)
    fc_b = params["fc_b"].reshape(1, num_classes).astype(jnp.float32)

    # Zero-framed per-block bf16 input feature scratches (resident in VMEM for the
    # whole fused forward pass) plus the final feature grid for the classifier.
    scratch_shapes = [
        pltpu.VMEM((n, dh + 2, dwt + 2, dc), jnp.bfloat16)
        for (dh, _, dc, dwt) in block_dims
    ]
    scratch_shapes.append(pltpu.VMEM((n, hf + 2, wf + 2, mid_c), jnp.bfloat16))

    kernel = _make_cnn4_kernel(block_dims, mid_c, num_classes, hf, wf)
    inputs = [x] + conv_inputs + [fc_w, fc_b]

    return pl.pallas_call(
        kernel,
        out_shape=jax.ShapeDtypeStruct((n, num_classes), jnp.float32),
        in_specs=[pl.BlockSpec(memory_space=pltpu.MemorySpace.VMEM)] * len(inputs),
        out_specs=pl.BlockSpec(memory_space=pltpu.MemorySpace.VMEM),
        scratch_shapes=scratch_shapes,
        compiler_params=pltpu.CompilerParams(vmem_limit_bytes=32 * 1024 * 1024),
    )(*inputs)


if __name__ == "__main__":
    key = jax.random.PRNGKey(0)
    k_x, k_p = jax.random.split(key)

    batch, in_ch, height, width = 2, 4, 16, 16
    num_classes = 5
    input_shape = (batch, in_ch, height, width)

    x = jax.random.normal(k_x, input_shape, dtype=jnp.float32)
    params = init_cnn4_params(k_p, input_shape, num_classes,
                              intermediate_channels=64)

    out = cnn4_forward(params, x)
    jax.block_until_ready(out)

    assert out.shape == (batch, num_classes)
    assert out.dtype == jnp.float32
    print("KERNEL_OK")
</pallas_src>

<mosaic_0001>
module attributes {stable_mosaic.version = 11 : i64} {
  func.func @kernel(%arg0: memref<2x16x16x4xbf16, #tpu.memory_space<vmem>>, %arg1: memref<36x64xbf16, #tpu.memory_space<vmem>>, %arg2: memref<1x64xf32, #tpu.memory_space<vmem>>, %arg3: memref<1x64xf32, #tpu.memory_space<vmem>>, %arg4: memref<576x64xbf16, #tpu.memory_space<vmem>>, %arg5: memref<1x64xf32, #tpu.memory_space<vmem>>, %arg6: memref<1x64xf32, #tpu.memory_space<vmem>>, %arg7: memref<576x64xbf16, #tpu.memory_space<vmem>>, %arg8: memref<1x64xf32, #tpu.memory_space<vmem>>, %arg9: memref<1x64xf32, #tpu.memory_space<vmem>>, %arg10: memref<576x64xbf16, #tpu.memory_space<vmem>>, %arg11: memref<1x64xf32, #tpu.memory_space<vmem>>, %arg12: memref<1x64xf32, #tpu.memory_space<vmem>>, %arg13: memref<1x64x5xbf16, #tpu.memory_space<vmem>>, %arg14: memref<1x5xf32, #tpu.memory_space<vmem>>, %arg15: memref<2x5xf32, #tpu.memory_space<vmem>>, %arg16: memref<2x18x18x4xbf16, #tpu.memory_space<vmem>>, %arg17: memref<2x10x18x64xbf16, #tpu.memory_space<vmem>>, %arg18: memref<2x6x18x64xbf16, #tpu.memory_space<vmem>>, %arg19: memref<2x4x18x64xbf16, #tpu.memory_space<vmem>>, %arg20: memref<2x3x3x64xbf16, #tpu.memory_space<vmem>>) attributes {dimension_semantics = [], scalar_prefetch = 0 : i64, scratch_operands = 5 : i64, tpu.core_type = #tpu.core_type<tc>} {
    %cst = arith.constant 0.000000e+00 : bf16
    %0 = vector.broadcast %cst : bf16 to vector<2x1x18x4xbf16>
    %c0 = arith.constant 0 : index
    %c0_0 = arith.constant 0 : index
    %c0_1 = arith.constant 0 : index
    %c0_2 = arith.constant 0 : index
    %1 = vector.load %arg16[%c0, %c0_0, %c0_1, %c0_2] : memref<2x18x18x4xbf16, #tpu.memory_space<vmem>>, vector<2x1x18x4xbf16>
    tpu.vector_store %arg16[%c0, %c0_0, %c0_1, %c0_2], %0 {strides = array<i32>} : memref<2x18x18x4xbf16, #tpu.memory_space<vmem>>, vector<2x1x18x4xbf16>,
    %cst_3 = arith.constant 0.000000e+00 : bf16
    %2 = vector.broadcast %cst_3 : bf16 to vector<2x1x18x4xbf16>
    %c0_4 = arith.constant 0 : index
    %c17 = arith.constant 17 : index
    %c0_5 = arith.constant 0 : index
    %c0_6 = arith.constant 0 : index
    %3 = vector.load %arg16[%c0_4, %c17, %c0_5, %c0_6] : memref<2x18x18x4xbf16, #tpu.memory_space<vmem>>, vector<2x1x18x4xbf16>
    tpu.vector_store %arg16[%c0_4, %c17, %c0_5, %c0_6], %2 {strides = array<i32>} : memref<2x18x18x4xbf16, #tpu.memory_space<vmem>>, vector<2x1x18x4xbf16>,
    %cst_7 = arith.constant 0.000000e+00 : bf16
    %4 = vector.broadcast %cst_7 : bf16 to vector<2x18x1x4xbf16>
    %c0_8 = arith.constant 0 : index
    %c0_9 = arith.constant 0 : index
    %c0_10 = arith.constant 0 : index
    %c0_11 = arith.constant 0 : index
    %5 = vector.load %arg16[%c0_8, %c0_9, %c0_10, %c0_11] : memref<2x18x18x4xbf16, #tpu.memory_space<vmem>>, vector<2x18x1x4xbf16>
    tpu.vector_store %arg16[%c0_8, %c0_9, %c0_10, %c0_11], %4 {strides = array<i32>} : memref<2x18x18x4xbf16, #tpu.memory_space<vmem>>, vector<2x18x1x4xbf16>,
    %cst_12 = arith.constant 0.000000e+00 : bf16
    %6 = vector.broadcast %cst_12 : bf16 to vector<2x18x1x4xbf16>
    %c0_13 = arith.constant 0 : index
    %c0_14 = arith.constant 0 : index
    %c17_15 = arith.constant 17 : index
    %c0_16 = arith.constant 0 : index
    %7 = vector.load %arg16[%c0_13, %c0_14, %c17_15, %c0_16] : memref<2x18x18x4xbf16, #tpu.memory_space<vmem>>, vector<2x18x1x4xbf16>
    tpu.vector_store %arg16[%c0_13, %c0_14, %c17_15, %c0_16], %6 {strides = array<i32>} : memref<2x18x18x4xbf16, #tpu.memory_space<vmem>>, vector<2x18x1x4xbf16>,
    %c0_17 = arith.constant 0 : index
    %c0_18 = arith.constant 0 : index
    %c0_19 = arith.constant 0 : index
    %c0_20 = arith.constant 0 : index
    %8 = vector.load %arg0[%c0_17, %c0_18, %c0_19, %c0_20] : memref<2x16x16x4xbf16, #tpu.memory_space<vmem>>, vector<2x16x16x4xbf16>
    %c0_21 = arith.constant 0 : index
    %c1 = arith.constant 1 : index
    %c1_22 = arith.constant 1 : index
    %c0_23 = arith.constant 0 : index
    %9 = vector.load %arg16[%c0_21, %c1, %c1_22, %c0_23] : memref<2x18x18x4xbf16, #tpu.memory_space<vmem>>, vector<2x16x16x4xbf16>
    tpu.vector_store %arg16[%c0_21, %c1, %c1_22, %c0_23], %8 {strides = array<i32>} : memref<2x18x18x4xbf16, #tpu.memory_space<vmem>>, vector<2x16x16x4xbf16>,
    %c0_24 = arith.constant 0 : index
    %c0_25 = arith.constant 0 : index
    %c0_26 = arith.constant 0 : index
    %c0_27 = arith.constant 0 : index
    %10 = vector.load %arg16[%c0_24, %c0_25, %c0_26, %c0_27] : memref<2x18x18x4xbf16, #tpu.memory_space<vmem>>, vector<2x16x16x4xbf16>
    %c0_28 = arith.constant 0 : index
    %c0_29 = arith.constant 0 : index
    %c1_30 = arith.constant 1 : index
    %c0_31 = arith.constant 0 : index
    %11 = vector.load %arg16[%c0_28, %c0_29, %c1_30, %c0_31] : memref<2x18x18x4xbf16, #tpu.memory_space<vmem>>, vector<2x16x16x4xbf16>
    %c0_32 = arith.constant 0 : index
    %c0_33 = arith.constant 0 : index
    %c2 = arith.constant 2 : index
    %c0_34 = arith.constant 0 : index
    %12 = vector.load %arg16[%c0_32, %c0_33, %c2, %c0_34] : memref<2x18x18x4xbf16, #tpu.memory_space<vmem>>, vector<2x16x16x4xbf16>
    %c0_35 = arith.constant 0 : index
    %c1_36 = arith.constant 1 : index
    %c0_37 = arith.constant 0 : index
    %c0_38 = arith.constant 0 : index
    %13 = vector.load %arg16[%c0_35, %c1_36, %c0_37, %c0_38] : memref<2x18x18x4xbf16, #tpu.memory_space<vmem>>, vector<2x16x16x4xbf16>
    %c0_39 = arith.constant 0 : index
    %c1_40 = arith.constant 1 : index
    %c1_41 = arith.constant 1 : index
    %c0_42 = arith.constant 0 : index
    %14 = vector.load %arg16[%c0_39, %c1_40, %c1_41, %c0_42] : memref<2x18x18x4xbf16, #tpu.memory_space<vmem>>, vector<2x16x16x4xbf16>
    %c0_43 = arith.constant 0 : index
    %c1_44 = arith.constant 1 : index
    %c2_45 = arith.constant 2 : index
    %c0_46 = arith.constant 0 : index
    %15 = vector.load %arg16[%c0_43, %c1_44, %c2_45, %c0_46] : memref<2x18x18x4xbf16, #tpu.memory_space<vmem>>, vector<2x16x16x4xbf16>
    %c0_47 = arith.constant 0 : index
    %c2_48 = arith.constant 2 : index
    %c0_49 = arith.constant 0 : index
    %c0_50 = arith.constant 0 : index
    %16 = vector.load %arg16[%c0_47, %c2_48, %c0_49, %c0_50] : memref<2x18x18x4xbf16, #tpu.memory_space<vmem>>, vector<2x16x16x4xbf16>
    %c0_51 = arith.constant 0 : index
    %c2_52 = arith.constant 2 : index
    %c1_53 = arith.constant 1 : index
    %c0_54 = arith.constant 0 : index
    %17 = vector.load %arg16[%c0_51, %c2_52, %c1_53, %c0_54] : memref<2x18x18x4xbf16, #tpu.memory_space<vmem>>, vector<2x16x16x4xbf16>
    %c0_55 = arith.constant 0 : index
    %c2_56 = arith.constant 2 : index
    %c2_57 = arith.constant 2 : index
    %c0_58 = arith.constant 0 : index
    %18 = vector.load %arg16[%c0_55, %c2_56, %c2_57, %c0_58] : memref<2x18x18x4xbf16, #tpu.memory_space<vmem>>, vector<2x16x16x4xbf16>
    %19 = tpu.concatenate %10, %11, %12, %13, %14, %15, %16, %17, %18 in 3 : vector<2x16x16x4xbf16>, vector<2x16x16x4xbf16>, vector<2x16x16x4xbf16>, vector<2x16x16x4xbf16>, vector<2x16x16x4xbf16>, vector<2x16x16x4xbf16>, vector<2x16x16x4xbf16>, vector<2x16x16x4xbf16>, vector<2x16x16x4xbf16> -> vector<2x16x16x36xbf16>
    %20 = vector.shape_cast %19 : vector<2x16x16x36xbf16> to vector<512x36xbf16>
    %c0_59 = arith.constant 0 : index
    %c0_60 = arith.constant 0 : index
    %21 = vector.load %arg1[%c0_59, %c0_60] : memref<36x64xbf16, #tpu.memory_space<vmem>>, vector<36x64xbf16>
    %cst_61 = arith.constant dense<0.000000e+00> : vector<512x64xf32>
    %22 = tpu.matmul %20, %21, %cst_61 {dimension_numbers = #tpu.dot_dimension_numbers<[1], [0], [0], [1], [0, 0, 1, 1], [], []>} : vector<512x36xbf16>, vector<36x64xbf16>, vector<512x64xf32> -> vector<512x64xf32>
    %23 = vector.shape_cast %22 : vector<512x64xf32> to vector<2x16x16x64xf32>
    %cst_62 = arith.constant dense<0.000000e+00> : vector<64xf32>
    %24 = vector.multi_reduction <add>, %22, %cst_62 [0] : vector<512x64xf32> to vector<64xf32>
    %25 = vector.shape_cast %24 : vector<64xf32> to vector<1x64xf32>
    %26 = arith.mulf %22, %22 : vector<512x64xf32>
    %cst_63 = arith.constant dense<0.000000e+00> : vector<64xf32>
    %27 = vector.multi_reduction <add>, %26, %cst_63 [0] : vector<512x64xf32> to vector<64xf32>
    %28 = vector.shape_cast %27 : vector<64xf32> to vector<1x64xf32>
    %cst_64 = arith.constant 5.120000e+02 : f32
    %29 = vector.broadcast %cst_64 : f32 to vector<1x64xf32>
    %30 = arith.divf %25, %29 : vector<1x64xf32>
    %cst_65 = arith.constant 5.120000e+02 : f32
    %31 = vector.broadcast %cst_65 : f32 to vector<1x64xf32>
    %32 = arith.divf %28, %31 : vector<1x64xf32>
    %33 = arith.mulf %30, %30 : vector<1x64xf32>
    %34 = arith.subf %32, %33 : vector<1x64xf32>
    %cst_66 = arith.constant 0.000000e+00 : f32
    %35 = vector.broadcast %cst_66 : f32 to vector<1x64xf32>
    %36 = arith.maximumf %34, %35 : vector<1x64xf32>
    %c0_67 = arith.constant 0 : index
    %c0_68 = arith.constant 0 : index
    %37 = vector.load %arg2[%c0_67, %c0_68] : memref<1x64xf32, #tpu.memory_space<vmem>>, vector<1x64xf32>
    %cst_69 = arith.constant 9.99999974E-6 : f32
    %38 = vector.broadcast %cst_69 : f32 to vector<1x64xf32>
    %39 = arith.addf %36, %38 : vector<1x64xf32>
    %40 = math.rsqrt %39 : vector<1x64xf32>
    %41 = arith.mulf %37, %40 : vector<1x64xf32>
    %c0_70 = arith.constant 0 : index
    %c0_71 = arith.constant 0 : index
    %42 = vector.load %arg3[%c0_70, %c0_71] : memref<1x64xf32, #tpu.memory_space<vmem>>, vector<1x64xf32>
    %43 = arith.mulf %30, %41 : vector<1x64xf32>
    %44 = arith.subf %42, %43 : vector<1x64xf32>
    %45 = vector.shape_cast %41 : vector<1x64xf32> to vector<1x1x1x64xf32>
    %46 = vector.broadcast %45 : vector<1x1x1x64xf32> to vector<2x16x16x64xf32>
    %47 = arith.mulf %23, %46 : vector<2x16x16x64xf32>
    %48 = vector.shape_cast %44 : vector<1x64xf32> to vector<1x1x1x64xf32>
    %49 = vector.broadcast %48 : vector<1x1x1x64xf32> to vector<2x16x16x64xf32>
    %50 = arith.addf %47, %49 : vector<2x16x16x64xf32>
    %51 = vector.shape_cast %50 : vector<2x16x16x64xf32> to vector<2x8x2x16x64xf32>
    %52 = vector.extract_strided_slice %51 {offsets = [0, 0, 0, 0, 0], sizes = [2, 8, 1, 16, 64], strides = [1, 1, 1, 1, 1]} : vector<2x8x2x16x64xf32> to vector<2x8x1x16x64xf32>
    %53 = vector.shape_cast %52 : vector<2x8x1x16x64xf32> to vector<2x8x16x64xf32>
    %54 = vector.extract_strided_slice %51 {offsets = [0, 0, 1, 0, 0], sizes = [2, 8, 1, 16, 64], strides = [1, 1, 1, 1, 1]} : vector<2x8x2x16x64xf32> to vector<2x8x1x16x64xf32>
    %55 = vector.shape_cast %54 : vector<2x8x1x16x64xf32> to vector<2x8x16x64xf32>
    %56 = arith.maximumf %53, %55 : vector<2x8x16x64xf32>
    %57 = vector.extract_strided_slice %56 {offsets = [0, 0, 0, 0], sizes = [2, 8, 1, 64], strides = [1, 1, 1, 1]} : vector<2x8x16x64xf32> to vector<2x8x1x64xf32>
    %58 = vector.extract_strided_slice %56 {offsets = [0, 0, 1, 0], sizes = [2, 8, 1, 64], strides = [1, 1, 1, 1]} : vector<2x8x16x64xf32> to vector<2x8x1x64xf32>
    %59 = arith.maximumf %57, %58 : vector<2x8x1x64xf32>
    %60 = vector.extract_strided_slice %56 {offsets = [0, 0, 2, 0], sizes = [2, 8, 1, 64], strides = [1, 1, 1, 1]} : vector<2x8x16x64xf32> to vector<2x8x1x64xf32>
    %61 = vector.extract_strided_slice %56 {offsets = [0, 0, 3, 0], sizes = [2, 8, 1, 64], strides = [1, 1, 1, 1]} : vector<2x8x16x64xf32> to vector<2x8x1x64xf32>
    %62 = arith.maximumf %60, %61 : vector<2x8x1x64xf32>
    %63 = vector.extract_strided_slice %56 {offsets = [0, 0, 4, 0], sizes = [2, 8, 1, 64], strides = [1, 1, 1, 1]} : vector<2x8x16x64xf32> to vector<2x8x1x64xf32>
    %64 = vector.extract_strided_slice %56 {offsets = [0, 0, 5, 0], sizes = [2, 8, 1, 64], strides = [1, 1, 1, 1]} : vector<2x8x16x64xf32> to vector<2x8x1x64xf32>
    %65 = arith.maximumf %63, %64 : vector<2x8x1x64xf32>
    %66 = vector.extract_strided_slice %56 {offsets = [0, 0, 6, 0], sizes = [2, 8, 1, 64], strides = [1, 1, 1, 1]} : vector<2x8x16x64xf32> to vector<2x8x1x64xf32>
    %67 = vector.extract_strided_slice %56 {offsets = [0, 0, 7, 0], sizes = [2, 8, 1, 64], strides = [1, 1, 1, 1]} : vector<2x8x16x64xf32> to vector<2x8x1x64xf32>
    %68 = arith.maximumf %66, %67 : vector<2x8x1x64xf32>
    %69 = vector.extract_strided_slice %56 {offsets = [0, 0, 8, 0], sizes = [2, 8, 1, 64], strides = [1, 1, 1, 1]} : vector<2x8x16x64xf32> to vector<2x8x1x64xf32>
    %70 = vector.extract_strided_slice %56 {offsets = [0, 0, 9, 0], sizes = [2, 8, 1, 64], strides = [1, 1, 1, 1]} : vector<2x8x16x64xf32> to vector<2x8x1x64xf32>
    %71 = arith.maximumf %69, %70 : vector<2x8x1x64xf32>
    %72 = vector.extract_strided_slice %56 {offsets = [0, 0, 10, 0], sizes = [2, 8, 1, 64], strides = [1, 1, 1, 1]} : vector<2x8x16x64xf32> to vector<2x8x1x64xf32>
    %73 = vector.extract_strided_slice %56 {offsets = [0, 0, 11, 0], sizes = [2, 8, 1, 64], strides = [1, 1, 1, 1]} : vector<2x8x16x64xf32> to vector<2x8x1x64xf32>
    %74 = arith.maximumf %72, %73 : vector<2x8x1x64xf32>
    %75 = vector.extract_strided_slice %56 {offsets = [0, 0, 12, 0], sizes = [2, 8, 1, 64], strides = [1, 1, 1, 1]} : vector<2x8x16x64xf32> to vector<2x8x1x64xf32>
    %76 = vector.extract_strided_slice %56 {offsets = [0, 0, 13, 0], sizes = [2, 8, 1, 64], strides = [1, 1, 1, 1]} : vector<2x8x16x64xf32> to vector<2x8x1x64xf32>
    %77 = arith.maximumf %75, %76 : vector<2x8x1x64xf32>
    %78 = vector.extract_strided_slice %56 {offsets = [0, 0, 14, 0], sizes = [2, 8, 1, 64], strides = [1, 1, 1, 1]} : vector<2x8x16x64xf32> to vector<2x8x1x64xf32>
    %79 = vector.extract_strided_slice %56 {offsets = [0, 0, 15, 0], sizes = [2, 8, 1, 64], strides = [1, 1, 1, 1]} : vector<2x8x16x64xf32> to vector<2x8x1x64xf32>
    %80 = arith.maximumf %78, %79 : vector<2x8x1x64xf32>
    %81 = tpu.concatenate %59, %62, %65, %68, %71, %74, %77, %80 in 2 : vector<2x8x1x64xf32>, vector<2x8x1x64xf32>, vector<2x8x1x64xf32>, vector<2x8x1x64xf32>, vector<2x8x1x64xf32>, vector<2x8x1x64xf32>, vector<2x8x1x64xf32>, vector<2x8x1x64xf32> -> vector<2x8x8x64xf32>
    %cst_72 = arith.constant 0.000000e+00 : f32
    %82 = vector.broadcast %cst_72 : f32 to vector<2x8x8x64xf32>
    %83 = arith.maximumf %81, %82 : vector<2x8x8x64xf32>
    %cst_73 = arith.constant 0.000000e+00 : bf16
    %84 = vector.broadcast %cst_73 : bf16 to vector<2x1x18x64xbf16>
    %c0_74 = arith.constant 0 : index
    %c0_75 = arith.constant 0 : index
    %c0_76 = arith.constant 0 : index
    %c0_77 = arith.constant 0 : index
    %85 = vector.load %arg17[%c0_74, %c0_75, %c0_76, %c0_77] : memref<2x10x18x64xbf16, #tpu.memory_space<vmem>>, vector<2x1x18x64xbf16>
    tpu.vector_store %arg17[%c0_74, %c0_75, %c0_76, %c0_77], %84 {strides = array<i32>} : memref<2x10x18x64xbf16, #tpu.memory_space<vmem>>, vector<2x1x18x64xbf16>,
    %cst_78 = arith.constant 0.000000e+00 : bf16
    %86 = vector.broadcast %cst_78 : bf16 to vector<2x1x18x64xbf16>
    %c0_79 = arith.constant 0 : index
    %c9 = arith.constant 9 : index
    %c0_80 = arith.constant 0 : index
    %c0_81 = arith.constant 0 : index
    %87 = vector.load %arg17[%c0_79, %c9, %c0_80, %c0_81] : memref<2x10x18x64xbf16, #tpu.memory_space<vmem>>, vector<2x1x18x64xbf16>
    tpu.vector_store %arg17[%c0_79, %c9, %c0_80, %c0_81], %86 {strides = array<i32>} : memref<2x10x18x64xbf16, #tpu.memory_space<vmem>>, vector<2x1x18x64xbf16>,
    %cst_82 = arith.constant 0.000000e+00 : bf16
    %88 = vector.broadcast %cst_82 : bf16 to vector<2x10x1x64xbf16>
    %c0_83 = arith.constant 0 : index
    %c0_84 = arith.constant 0 : index
    %c0_85 = arith.constant 0 : index
    %c0_86 = arith.constant 0 : index
    %89 = vector.load %arg17[%c0_83, %c0_84, %c0_85, %c0_86] : memref<2x10x18x64xbf16, #tpu.memory_space<vmem>>, vector<2x10x1x64xbf16>
    tpu.vector_store %arg17[%c0_83, %c0_84, %c0_85, %c0_86], %88 {strides = array<i32>} : memref<2x10x18x64xbf16, #tpu.memory_space<vmem>>, vector<2x10x1x64xbf16>,
    %cst_87 = arith.constant 0.000000e+00 : bf16
    %90 = vector.broadcast %cst_87 : bf16 to vector<2x10x9x64xbf16>
    %c0_88 = arith.constant 0 : index
    %c0_89 = arith.constant 0 : index
    %c9_90 = arith.constant 9 : index
    %c0_91 = arith.constant 0 : index
    %91 = vector.load %arg17[%c0_88, %c0_89, %c9_90, %c0_91] : memref<2x10x18x64xbf16, #tpu.memory_space<vmem>>, vector<2x10x9x64xbf16>
    tpu.vector_store %arg17[%c0_88, %c0_89, %c9_90, %c0_91], %90 {strides = array<i32>} : memref<2x10x18x64xbf16, #tpu.memory_space<vmem>>, vector<2x10x9x64xbf16>,
    %92 = arith.truncf %83 : vector<2x8x8x64xf32> to vector<2x8x8x64xbf16>
    %c0_92 = arith.constant 0 : index
    %c1_93 = arith.constant 1 : index
    %c1_94 = arith.constant 1 : index
    %c0_95 = arith.constant 0 : index
    %93 = vector.load %arg17[%c0_92, %c1_93, %c1_94, %c0_95] : memref<2x10x18x64xbf16, #tpu.memory_space<vmem>>, vector<2x8x8x64xbf16>
    tpu.vector_store %arg17[%c0_92, %c1_93, %c1_94, %c0_95], %92 {strides = array<i32>} : memref<2x10x18x64xbf16, #tpu.memory_space<vmem>>, vector<2x8x8x64xbf16>,
    %c0_96 = arith.constant 0 : index
    %c0_97 = arith.constant 0 : index
    %c0_98 = arith.constant 0 : index
    %c0_99 = arith.constant 0 : index
    %94 = vector.load %arg17[%c0_96, %c0_97, %c0_98, %c0_99] : memref<2x10x18x64xbf16, #tpu.memory_space<vmem>>, vector<2x8x16x64xbf16>
    %c0_100 = arith.constant 0 : index
    %c0_101 = arith.constant 0 : index
    %c1_102 = arith.constant 1 : index
    %c0_103 = arith.constant 0 : index
    %95 = vector.load %arg17[%c0_100, %c0_101, %c1_102, %c0_103] : memref<2x10x18x64xbf16, #tpu.memory_space<vmem>>, vector<2x8x16x64xbf16>
    %c0_104 = arith.constant 0 : index
    %c0_105 = arith.constant 0 : index
    %c2_106 = arith.constant 2 : index
    %c0_107 = arith.constant 0 : index
    %96 = vector.load %arg17[%c0_104, %c0_105, %c2_106, %c0_107] : memref<2x10x18x64xbf16, #tpu.memory_space<vmem>>, vector<2x8x16x64xbf16>
    %c0_108 = arith.constant 0 : index
    %c1_109 = arith.constant 1 : index
    %c0_110 = arith.constant 0 : index
    %c0_111 = arith.constant 0 : index
    %97 = vector.load %arg17[%c0_108, %c1_109, %c0_110, %c0_111] : memref<2x10x18x64xbf16, #tpu.memory_space<vmem>>, vector<2x8x16x64xbf16>
    %c0_112 = arith.constant 0 : index
    %c1_113 = arith.constant 1 : index
    %c1_114 = arith.constant 1 : index
    %c0_115 = arith.constant 0 : index
    %98 = vector.load %arg17[%c0_112, %c1_113, %c1_114, %c0_115] : memref<2x10x18x64xbf16, #tpu.memory_space<vmem>>, vector<2x8x16x64xbf16>
    %c0_116 = arith.constant 0 : index
    %c1_117 = arith.constant 1 : index
    %c2_118 = arith.constant 2 : index
    %c0_119 = arith.constant 0 : index
    %99 = vector.load %arg17[%c0_116, %c1_117, %c2_118, %c0_119] : memref<2x10x18x64xbf16, #tpu.memory_space<vmem>>, vector<2x8x16x64xbf16>
    %c0_120 = arith.constant 0 : index
    %c2_121 = arith.constant 2 : index
    %c0_122 = arith.constant 0 : index
    %c0_123 = arith.constant 0 : index
    %100 = vector.load %arg17[%c0_120, %c2_121, %c0_122, %c0_123] : memref<2x10x18x64xbf16, #tpu.memory_space<vmem>>, vector<2x8x16x64xbf16>
    %c0_124 = arith.constant 0 : index
    %c2_125 = arith.constant 2 : index
    %c1_126 = arith.constant 1 : index
    %c0_127 = arith.constant 0 : index
    %101 = vector.load %arg17[%c0_124, %c2_125, %c1_126, %c0_127] : memref<2x10x18x64xbf16, #tpu.memory_space<vmem>>, vector<2x8x16x64xbf16>
    %c0_128 = arith.constant 0 : index
    %c2_129 = arith.constant 2 : index
    %c2_130 = arith.constant 2 : index
    %c0_131 = arith.constant 0 : index
    %102 = vector.load %arg17[%c0_128, %c2_129, %c2_130, %c0_131] : memref<2x10x18x64xbf16, #tpu.memory_space<vmem>>, vector<2x8x16x64xbf16>
    %103 = tpu.concatenate %94, %95, %96, %97, %98, %99, %100, %101, %102 in 3 : vector<2x8x16x64xbf16>, vector<2x8x16x64xbf16>, vector<2x8x16x64xbf16>, vector<2x8x16x64xbf16>, vector<2x8x16x64xbf16>, vector<2x8x16x64xbf16>, vector<2x8x16x64xbf16>, vector<2x8x16x64xbf16>, vector<2x8x16x64xbf16> -> vector<2x8x16x576xbf16>
    %104 = vector.shape_cast %103 : vector<2x8x16x576xbf16> to vector<256x576xbf16>
    %c0_132 = arith.constant 0 : index
    %c0_133 = arith.constant 0 : index
    %105 = vector.load %arg4[%c0_132, %c0_133] : memref<576x64xbf16, #tpu.memory_space<vmem>>, vector<576x64xbf16>
    %cst_134 = arith.constant dense<0.000000e+00> : vector<256x64xf32>
    %106 = tpu.matmul %104, %105, %cst_134 {dimension_numbers = #tpu.dot_dimension_numbers<[1], [0], [0], [1], [0, 0, 1, 1], [], []>} : vector<256x576xbf16>, vector<576x64xbf16>, vector<256x64xf32> -> vector<256x64xf32>
    %107 = vector.shape_cast %106 : vector<256x64xf32> to vector<2x8x16x64xf32>
    %108 = tpu.iota {dimensions = array<i32: 2>} : vector<1x1x16x1xi32>
    %c8_i32 = arith.constant 8 : i32
    %109 = vector.broadcast %c8_i32 : i32 to vector<1x1x16x1xi32>
    %110 = arith.cmpi slt, %108, %109 : vector<1x1x16x1xi32>
    %111 = arith.extui %110 : vector<1x1x16x1xi1> to vector<1x1x16x1xi32>
    %112 = arith.sitofp %111 : vector<1x1x16x1xi32> to vector<1x1x16x1xf32>
    %113 = vector.broadcast %112 : vector<1x1x16x1xf32> to vector<2x8x16x64xf32>
    %114 = arith.mulf %107, %113 : vector<2x8x16x64xf32>
    %115 = vector.shape_cast %114 : vector<2x8x16x64xf32> to vector<256x64xf32>
    %cst_135 = arith.constant dense<0.000000e+00> : vector<64xf32>
    %116 = vector.multi_reduction <add>, %115, %cst_135 [0] : vector<256x64xf32> to vector<64xf32>
    %117 = vector.shape_cast %116 : vector<64xf32> to vector<1x64xf32>
    %118 = arith.mulf %115, %115 : vector<256x64xf32>
    %cst_136 = arith.constant dense<0.000000e+00> : vector<64xf32>
    %119 = vector.multi_reduction <add>, %118, %cst_136 [0] : vector<256x64xf32> to vector<64xf32>
    %120 = vector.shape_cast %119 : vector<64xf32> to vector<1x64xf32>
    %cst_137 = arith.constant 1.280000e+02 : f32
    %121 = vector.broadcast %cst_137 : f32 to vector<1x64xf32>
    %122 = arith.divf %117, %121 : vector<1x64xf32>
    %cst_138 = arith.constant 1.280000e+02 : f32
    %123 = vector.broadcast %cst_138 : f32 to vector<1x64xf32>
    %124 = arith.divf %120, %123 : vector<1x64xf32>
    %125 = arith.mulf %122, %122 : vector<1x64xf32>
    %126 = arith.subf %124, %125 : vector<1x64xf32>
    %cst_139 = arith.constant 0.000000e+00 : f32
    %127 = vector.broadcast %cst_139 : f32 to vector<1x64xf32>
    %128 = arith.maximumf %126, %127 : vector<1x64xf32>
    %c0_140 = arith.constant 0 : index
    %c0_141 = arith.constant 0 : index
    %129 = vector.load %arg5[%c0_140, %c0_141] : memref<1x64xf32, #tpu.memory_space<vmem>>, vector<1x64xf32>
    %cst_142 = arith.constant 9.99999974E-6 : f32
    %130 = vector.broadcast %cst_142 : f32 to vector<1x64xf32>
    %131 = arith.addf %128, %130 : vector<1x64xf32>
    %132 = math.rsqrt %131 : vector<1x64xf32>
    %133 = arith.mulf %129, %132 : vector<1x64xf32>
    %c0_143 = arith.constant 0 : index
    %c0_144 = arith.constant 0 : index
    %134 = vector.load %arg6[%c0_143, %c0_144] : memref<1x64xf32, #tpu.memory_space<vmem>>, vector<1x64xf32>
    %135 = arith.mulf %122, %133 : vector<1x64xf32>
    %136 = arith.subf %134, %135 : vector<1x64xf32>
    %137 = vector.extract_strided_slice %107 {offsets = [0, 0, 0, 0], sizes = [2, 8, 8, 64], strides = [1, 1, 1, 1]} : vector<2x8x16x64xf32> to vector<2x8x8x64xf32>
    %138 = vector.shape_cast %133 : vector<1x64xf32> to vector<1x1x1x64xf32>
    %139 = vector.broadcast %138 : vector<1x1x1x64xf32> to vector<2x8x8x64xf32>
    %140 = arith.mulf %137, %139 : vector<2x8x8x64xf32>
    %141 = vector.shape_cast %136 : vector<1x64xf32> to vector<1x1x1x64xf32>
    %142 = vector.broadcast %141 : vector<1x1x1x64xf32> to vector<2x8x8x64xf32>
    %143 = arith.addf %140, %142 : vector<2x8x8x64xf32>
    %144 = vector.shape_cast %143 : vector<2x8x8x64xf32> to vector<2x4x2x8x64xf32>
    %145 = vector.extract_strided_slice %144 {offsets = [0, 0, 0, 0, 0], sizes = [2, 4, 1, 8, 64], strides = [1, 1, 1, 1, 1]} : vector<2x4x2x8x64xf32> to vector<2x4x1x8x64xf32>
    %146 = vector.shape_cast %145 : vector<2x4x1x8x64xf32> to vector<2x4x8x64xf32>
    %147 = vector.extract_strided_slice %144 {offsets = [0, 0, 1, 0, 0], sizes = [2, 4, 1, 8, 64], strides = [1, 1, 1, 1, 1]} : vector<2x4x2x8x64xf32> to vector<2x4x1x8x64xf32>
    %148 = vector.shape_cast %147 : vector<2x4x1x8x64xf32> to vector<2x4x8x64xf32>
    %149 = arith.maximumf %146, %148 : vector<2x4x8x64xf32>
    %150 = vector.extract_strided_slice %149 {offsets = [0, 0, 0, 0], sizes = [2, 4, 1, 64], strides = [1, 1, 1, 1]} : vector<2x4x8x64xf32> to vector<2x4x1x64xf32>
    %151 = vector.extract_strided_slice %149 {offsets = [0, 0, 1, 0], sizes = [2, 4, 1, 64], strides = [1, 1, 1, 1]} : vector<2x4x8x64xf32> to vector<2x4x1x64xf32>
    %152 = arith.maximumf %150, %151 : vector<2x4x1x64xf32>
    %153 = vector.extract_strided_slice %149 {offsets = [0, 0, 2, 0], sizes = [2, 4, 1, 64], strides = [1, 1, 1, 1]} : vector<2x4x8x64xf32> to vector<2x4x1x64xf32>
    %154 = vector.extract_strided_slice %149 {offsets = [0, 0, 3, 0], sizes = [2, 4, 1, 64], strides = [1, 1, 1, 1]} : vector<2x4x8x64xf32> to vector<2x4x1x64xf32>
    %155 = arith.maximumf %153, %154 : vector<2x4x1x64xf32>
    %156 = vector.extract_strided_slice %149 {offsets = [0, 0, 4, 0], sizes = [2, 4, 1, 64], strides = [1, 1, 1, 1]} : vector<2x4x8x64xf32> to vector<2x4x1x64xf32>
    %157 = vector.extract_strided_slice %149 {offsets = [0, 0, 5, 0], sizes = [2, 4, 1, 64], strides = [1, 1, 1, 1]} : vector<2x4x8x64xf32> to vector<2x4x1x64xf32>
    %158 = arith.maximumf %156, %157 : vector<2x4x1x64xf32>
    %159 = vector.extract_strided_slice %149 {offsets = [0, 0, 6, 0], sizes = [2, 4, 1, 64], strides = [1, 1, 1, 1]} : vector<2x4x8x64xf32> to vector<2x4x1x64xf32>
    %160 = vector.extract_strided_slice %149 {offsets = [0, 0, 7, 0], sizes = [2, 4, 1, 64], strides = [1, 1, 1, 1]} : vector<2x4x8x64xf32> to vector<2x4x1x64xf32>
    %161 = arith.maximumf %159, %160 : vector<2x4x1x64xf32>
    %162 = tpu.concatenate %152, %155, %158, %161 in 2 : vector<2x4x1x64xf32>, vector<2x4x1x64xf32>, vector<2x4x1x64xf32>, vector<2x4x1x64xf32> -> vector<2x4x4x64xf32>
    %cst_145 = arith.constant 0.000000e+00 : f32
    %163 = vector.broadcast %cst_145 : f32 to vector<2x4x4x64xf32>
    %164 = arith.maximumf %162, %163 : vector<2x4x4x64xf32>
    %cst_146 = arith.constant 0.000000e+00 : bf16
    %165 = vector.broadcast %cst_146 : bf16 to vector<2x1x18x64xbf16>
    %c0_147 = arith.constant 0 : index
    %c0_148 = arith.constant 0 : index
    %c0_149 = arith.constant 0 : index
    %c0_150 = arith.constant 0 : index
    %166 = vector.load %arg18[%c0_147, %c0_148, %c0_149, %c0_150] : memref<2x6x18x64xbf16, #tpu.memory_space<vmem>>, vector<2x1x18x64xbf16>
    tpu.vector_store %arg18[%c0_147, %c0_148, %c0_149, %c0_150], %165 {strides = array<i32>} : memref<2x6x18x64xbf16, #tpu.memory_space<vmem>>, vector<2x1x18x64xbf16>,
    %cst_151 = arith.constant 0.000000e+00 : bf16
    %167 = vector.broadcast %cst_151 : bf16 to vector<2x1x18x64xbf16>
    %c0_152 = arith.constant 0 : index
    %c5 = arith.constant 5 : index
    %c0_153 = arith.constant 0 : index
    %c0_154 = arith.constant 0 : index
    %168 = vector.load %arg18[%c0_152, %c5, %c0_153, %c0_154] : memref<2x6x18x64xbf16, #tpu.memory_space<vmem>>, vector<2x1x18x64xbf16>
    tpu.vector_store %arg18[%c0_152, %c5, %c0_153, %c0_154], %167 {strides = array<i32>} : memref<2x6x18x64xbf16, #tpu.memory_space<vmem>>, vector<2x1x18x64xbf16>,
    %cst_155 = arith.constant 0.000000e+00 : bf16
    %169 = vector.broadcast %cst_155 : bf16 to vector<2x6x1x64xbf16>
    %c0_156 = arith.constant 0 : index
    %c0_157 = arith.constant 0 : index
    %c0_158 = arith.constant 0 : index
    %c0_159 = arith.constant 0 : index
    %170 = vector.load %arg18[%c0_156, %c0_157, %c0_158, %c0_159] : memref<2x6x18x64xbf16, #tpu.memory_space<vmem>>, vector<2x6x1x64xbf16>
    tpu.vector_store %arg18[%c0_156, %c0_157, %c0_158, %c0_159], %169 {strides = array<i32>} : memref<2x6x18x64xbf16, #tpu.memory_space<vmem>>, vector<2x6x1x64xbf16>,
    %cst_160 = arith.constant 0.000000e+00 : bf16
    %171 = vector.broadcast %cst_160 : bf16 to vector<2x6x13x64xbf16>
    %c0_161 = arith.constant 0 : index
    %c0_162 = arith.constant 0 : index
    %c5_163 = arith.constant 5 : index
    %c0_164 = arith.constant 0 : index
    %172 = vector.load %arg18[%c0_161, %c0_162, %c5_163, %c0_164] : memref<2x6x18x64xbf16, #tpu.memory_space<vmem>>, vector<2x6x13x64xbf16>
    tpu.vector_store %arg18[%c0_161, %c0_162, %c5_163, %c0_164], %171 {strides = array<i32>} : memref<2x6x18x64xbf16, #tpu.memory_space<vmem>>, vector<2x6x13x64xbf16>,
    %173 = arith.truncf %164 : vector<2x4x4x64xf32> to vector<2x4x4x64xbf16>
    %c0_165 = arith.constant 0 : index
    %c1_166 = arith.constant 1 : index
    %c1_167 = arith.constant 1 : index
    %c0_168 = arith.constant 0 : index
    %174 = vector.load %arg18[%c0_165, %c1_166, %c1_167, %c0_168] : memref<2x6x18x64xbf16, #tpu.memory_space<vmem>>, vector<2x4x4x64xbf16>
    tpu.vector_store %arg18[%c0_165, %c1_166, %c1_167, %c0_168], %173 {strides = array<i32>} : memref<2x6x18x64xbf16, #tpu.memory_space<vmem>>, vector<2x4x4x64xbf16>,
    %c0_169 = arith.constant 0 : index
    %c0_170 = arith.constant 0 : index
    %c0_171 = arith.constant 0 : index
    %c0_172 = arith.constant 0 : index
    %175 = vector.load %arg18[%c0_169, %c0_170, %c0_171, %c0_172] : memref<2x6x18x64xbf16, #tpu.memory_space<vmem>>, vector<2x4x16x64xbf16>
    %c0_173 = arith.constant 0 : index
    %c0_174 = arith.constant 0 : index
    %c1_175 = arith.constant 1 : index
    %c0_176 = arith.constant 0 : index
    %176 = vector.load %arg18[%c0_173, %c0_174, %c1_175, %c0_176] : memref<2x6x18x64xbf16, #tpu.memory_space<vmem>>, vector<2x4x16x64xbf16>
    %c0_177 = arith.constant 0 : index
    %c0_178 = arith.constant 0 : index
    %c2_179 = arith.constant 2 : index
    %c0_180 = arith.constant 0 : index
    %177 = vector.load %arg18[%c0_177, %c0_178, %c2_179, %c0_180] : memref<2x6x18x64xbf16, #tpu.memory_space<vmem>>, vector<2x4x16x64xbf16>
    %c0_181 = arith.constant 0 : index
    %c1_182 = arith.constant 1 : index
    %c0_183 = arith.constant 0 : index
    %c0_184 = arith.constant 0 : index
    %178 = vector.load %arg18[%c0_181, %c1_182, %c0_183, %c0_184] : memref<2x6x18x64xbf16, #tpu.memory_space<vmem>>, vector<2x4x16x64xbf16>
    %c0_185 = arith.constant 0 : index
    %c1_186 = arith.constant 1 : index
    %c1_187 = arith.constant 1 : index
    %c0_188 = arith.constant 0 : index
    %179 = vector.load %arg18[%c0_185, %c1_186, %c1_187, %c0_188] : memref<2x6x18x64xbf16, #tpu.memory_space<vmem>>, vector<2x4x16x64xbf16>
    %c0_189 = arith.constant 0 : index
    %c1_190 = arith.constant 1 : index
    %c2_191 = arith.constant 2 : index
    %c0_192 = arith.constant 0 : index
    %180 = vector.load %arg18[%c0_189, %c1_190, %c2_191, %c0_192] : memref<2x6x18x64xbf16, #tpu.memory_space<vmem>>, vector<2x4x16x64xbf16>
    %c0_193 = arith.constant 0 : index
    %c2_194 = arith.constant 2 : index
    %c0_195 = arith.constant 0 : index
    %c0_196 = arith.constant 0 : index
    %181 = vector.load %arg18[%c0_193, %c2_194, %c0_195, %c0_196] : memref<2x6x18x64xbf16, #tpu.memory_space<vmem>>, vector<2x4x16x64xbf16>
    %c0_197 = arith.constant 0 : index
    %c2_198 = arith.constant 2 : index
    %c1_199 = arith.constant 1 : index
    %c0_200 = arith.constant 0 : index
    %182 = vector.load %arg18[%c0_197, %c2_198, %c1_199, %c0_200] : memref<2x6x18x64xbf16, #tpu.memory_space<vmem>>, vector<2x4x16x64xbf16>
    %c0_201 = arith.constant 0 : index
    %c2_202 = arith.constant 2 : index
    %c2_203 = arith.constant 2 : index
    %c0_204 = arith.constant 0 : index
    %183 = vector.load %arg18[%c0_201, %c2_202, %c2_203, %c0_204] : memref<2x6x18x64xbf16, #tpu.memory_space<vmem>>, vector<2x4x16x64xbf16>
    %184 = tpu.concatenate %175, %176, %177, %178, %179, %180, %181, %182, %183 in 3 : vector<2x4x16x64xbf16>, vector<2x4x16x64xbf16>, vector<2x4x16x64xbf16>, vector<2x4x16x64xbf16>, vector<2x4x16x64xbf16>, vector<2x4x16x64xbf16>, vector<2x4x16x64xbf16>, vector<2x4x16x64xbf16>, vector<2x4x16x64xbf16> -> vector<2x4x16x576xbf16>
    %185 = vector.shape_cast %184 : vector<2x4x16x576xbf16> to vector<128x576xbf16>
    %c0_205 = arith.constant 0 : index
    %c0_206 = arith.constant 0 : index
    %186 = vector.load %arg7[%c0_205, %c0_206] : memref<576x64xbf16, #tpu.memory_space<vmem>>, vector<576x64xbf16>
    %cst_207 = arith.constant dense<0.000000e+00> : vector<128x64xf32>
    %187 = tpu.matmul %185, %186, %cst_207 {dimension_numbers = #tpu.dot_dimension_numbers<[1], [0], [0], [1], [0, 0, 1, 1], [], []>} : vector<128x576xbf16>, vector<576x64xbf16>, vector<128x64xf32> -> vector<128x64xf32>
    %188 = vector.shape_cast %187 : vector<128x64xf32> to vector<2x4x16x64xf32>
    %189 = tpu.iota {dimensions = array<i32: 2>} : vector<1x1x16x1xi32>
    %c4_i32 = arith.constant 4 : i32
    %190 = vector.broadcast %c4_i32 : i32 to vector<1x1x16x1xi32>
    %191 = arith.cmpi slt, %189, %190 : vector<1x1x16x1xi32>
    %192 = arith.extui %191 : vector<1x1x16x1xi1> to vector<1x1x16x1xi32>
    %193 = arith.sitofp %192 : vector<1x1x16x1xi32> to vector<1x1x16x1xf32>
    %194 = vector.broadcast %193 : vector<1x1x16x1xf32> to vector<2x4x16x64xf32>
    %195 = arith.mulf %188, %194 : vector<2x4x16x64xf32>
    %196 = vector.shape_cast %195 : vector<2x4x16x64xf32> to vector<128x64xf32>
    %cst_208 = arith.constant dense<0.000000e+00> : vector<64xf32>
    %197 = vector.multi_reduction <add>, %196, %cst_208 [0] : vector<128x64xf32> to vector<64xf32>
    %198 = vector.shape_cast %197 : vector<64xf32> to vector<1x64xf32>
    %199 = arith.mulf %196, %196 : vector<128x64xf32>
    %cst_209 = arith.constant dense<0.000000e+00> : vector<64xf32>
    %200 = vector.multi_reduction <add>, %199, %cst_209 [0] : vector<128x64xf32> to vector<64xf32>
    %201 = vector.shape_cast %200 : vector<64xf32> to vector<1x64xf32>
    %cst_210 = arith.constant 3.200000e+01 : f32
    %202 = vector.broadcast %cst_210 : f32 to vector<1x64xf32>
    %203 = arith.divf %198, %202 : vector<1x64xf32>
    %cst_211 = arith.constant 3.200000e+01 : f32
    %204 = vector.broadcast %cst_211 : f32 to vector<1x64xf32>
    %205 = arith.divf %201, %204 : vector<1x64xf32>
    %206 = arith.mulf %203, %203 : vector<1x64xf32>
    %207 = arith.subf %205, %206 : vector<1x64xf32>
    %cst_212 = arith.constant 0.000000e+00 : f32
    %208 = vector.broadcast %cst_212 : f32 to vector<1x64xf32>
    %209 = arith.maximumf %207, %208 : vector<1x64xf32>
    %c0_213 = arith.constant 0 : index
    %c0_214 = arith.constant 0 : index
    %210 = vector.load %arg8[%c0_213, %c0_214] : memref<1x64xf32, #tpu.memory_space<vmem>>, vector<1x64xf32>
    %cst_215 = arith.constant 9.99999974E-6 : f32
    %211 = vector.broadcast %cst_215 : f32 to vector<1x64xf32>
    %212 = arith.addf %209, %211 : vector<1x64xf32>
    %213 = math.rsqrt %212 : vector<1x64xf32>
    %214 = arith.mulf %210, %213 : vector<1x64xf32>
    %c0_216 = arith.constant 0 : index
    %c0_217 = arith.constant 0 : index
    %215 = vector.load %arg9[%c0_216, %c0_217] : memref<1x64xf32, #tpu.memory_space<vmem>>, vector<1x64xf32>
    %216 = arith.mulf %203, %214 : vector<1x64xf32>
    %217 = arith.subf %215, %216 : vector<1x64xf32>
    %218 = vector.extract_strided_slice %188 {offsets = [0, 0, 0, 0], sizes = [2, 4, 4, 64], strides = [1, 1, 1, 1]} : vector<2x4x16x64xf32> to vector<2x4x4x64xf32>
    %219 = vector.shape_cast %214 : vector<1x64xf32> to vector<1x1x1x64xf32>
    %220 = vector.broadcast %219 : vector<1x1x1x64xf32> to vector<2x4x4x64xf32>
    %221 = arith.mulf %218, %220 : vector<2x4x4x64xf32>
    %222 = vector.shape_cast %217 : vector<1x64xf32> to vector<1x1x1x64xf32>
    %223 = vector.broadcast %222 : vector<1x1x1x64xf32> to vector<2x4x4x64xf32>
    %224 = arith.addf %221, %223 : vector<2x4x4x64xf32>
    %225 = vector.shape_cast %224 : vector<2x4x4x64xf32> to vector<2x2x2x4x64xf32>
    %226 = vector.extract_strided_slice %225 {offsets = [0, 0, 0, 0, 0], sizes = [2, 2, 1, 4, 64], strides = [1, 1, 1, 1, 1]} : vector<2x2x2x4x64xf32> to vector<2x2x1x4x64xf32>
    %227 = vector.shape_cast %226 : vector<2x2x1x4x64xf32> to vector<2x2x4x64xf32>
    %228 = vector.extract_strided_slice %225 {offsets = [0, 0, 1, 0, 0], sizes = [2, 2, 1, 4, 64], strides = [1, 1, 1, 1, 1]} : vector<2x2x2x4x64xf32> to vector<2x2x1x4x64xf32>
    %229 = vector.shape_cast %228 : vector<2x2x1x4x64xf32> to vector<2x2x4x64xf32>
    %230 = arith.maximumf %227, %229 : vector<2x2x4x64xf32>
    %231 = vector.extract_strided_slice %230 {offsets = [0, 0, 0, 0], sizes = [2, 2, 1, 64], strides = [1, 1, 1, 1]} : vector<2x2x4x64xf32> to vector<2x2x1x64xf32>
    %232 = vector.extract_strided_slice %230 {offsets = [0, 0, 1, 0], sizes = [2, 2, 1, 64], strides = [1, 1, 1, 1]} : vector<2x2x4x64xf32> to vector<2x2x1x64xf32>
    %233 = arith.maximumf %231, %232 : vector<2x2x1x64xf32>
    %234 = vector.extract_strided_slice %230 {offsets = [0, 0, 2, 0], sizes = [2, 2, 1, 64], strides = [1, 1, 1, 1]} : vector<2x2x4x64xf32> to vector<2x2x1x64xf32>
    %235 = vector.extract_strided_slice %230 {offsets = [0, 0, 3, 0], sizes = [2, 2, 1, 64], strides = [1, 1, 1, 1]} : vector<2x2x4x64xf32> to vector<2x2x1x64xf32>
    %236 = arith.maximumf %234, %235 : vector<2x2x1x64xf32>
    %237 = tpu.concatenate %233, %236 in 2 : vector<2x2x1x64xf32>, vector<2x2x1x64xf32> -> vector<2x2x2x64xf32>
    %cst_218 = arith.constant 0.000000e+00 : f32
    %238 = vector.broadcast %cst_218 : f32 to vector<2x2x2x64xf32>
    %239 = arith.maximumf %237, %238 : vector<2x2x2x64xf32>
    %cst_219 = arith.constant 0.000000e+00 : bf16
    %240 = vector.broadcast %cst_219 : bf16 to vector<2x1x18x64xbf16>
    %c0_220 = arith.constant 0 : index
    %c0_221 = arith.constant 0 : index
    %c0_222 = arith.constant 0 : index
    %c0_223 = arith.constant 0 : index
    %241 = vector.load %arg19[%c0_220, %c0_221, %c0_222, %c0_223] : memref<2x4x18x64xbf16, #tpu.memory_space<vmem>>, vector<2x1x18x64xbf16>
    tpu.vector_store %arg19[%c0_220, %c0_221, %c0_222, %c0_223], %240 {strides = array<i32>} : memref<2x4x18x64xbf16, #tpu.memory_space<vmem>>, vector<2x1x18x64xbf16>,
    %cst_224 = arith.constant 0.000000e+00 : bf16
    %242 = vector.broadcast %cst_224 : bf16 to vector<2x1x18x64xbf16>
    %c0_225 = arith.constant 0 : index
    %c3 = arith.constant 3 : index
    %c0_226 = arith.constant 0 : index
    %c0_227 = arith.constant 0 : index
    %243 = vector.load %arg19[%c0_225, %c3, %c0_226, %c0_227] : memref<2x4x18x64xbf16, #tpu.memory_space<vmem>>, vector<2x1x18x64xbf16>
    tpu.vector_store %arg19[%c0_225, %c3, %c0_226, %c0_227], %242 {strides = array<i32>} : memref<2x4x18x64xbf16, #tpu.memory_space<vmem>>, vector<2x1x18x64xbf16>,
    %cst_228 = arith.constant 0.000000e+00 : bf16
    %244 = vector.broadcast %cst_228 : bf16 to vector<2x4x1x64xbf16>
    %c0_229 = arith.constant 0 : index
    %c0_230 = arith.constant 0 : index
    %c0_231 = arith.constant 0 : index
    %c0_232 = arith.constant 0 : index
    %245 = vector.load %arg19[%c0_229, %c0_230, %c0_231, %c0_232] : memref<2x4x18x64xbf16, #tpu.memory_space<vmem>>, vector<2x4x1x64xbf16>
    tpu.vector_store %arg19[%c0_229, %c0_230, %c0_231, %c0_232], %244 {strides = array<i32>} : memref<2x4x18x64xbf16, #tpu.memory_space<vmem>>, vector<2x4x1x64xbf16>,
    %cst_233 = arith.constant 0.000000e+00 : bf16
    %246 = vector.broadcast %cst_233 : bf16 to vector<2x4x15x64xbf16>
    %c0_234 = arith.constant 0 : index
    %c0_235 = arith.constant 0 : index
    %c3_236 = arith.constant 3 : index
    %c0_237 = arith.constant 0 : index
    %247 = vector.load %arg19[%c0_234, %c0_235, %c3_236, %c0_237] : memref<2x4x18x64xbf16, #tpu.memory_space<vmem>>, vector<2x4x15x64xbf16>
    tpu.vector_store %arg19[%c0_234, %c0_235, %c3_236, %c0_237], %246 {strides = array<i32>} : memref<2x4x18x64xbf16, #tpu.memory_space<vmem>>, vector<2x4x15x64xbf16>,
    %248 = arith.truncf %239 : vector<2x2x2x64xf32> to vector<2x2x2x64xbf16>
    %c0_238 = arith.constant 0 : index
    %c1_239 = arith.constant 1 : index
    %c1_240 = arith.constant 1 : index
    %c0_241 = arith.constant 0 : index
    %249 = vector.load %arg19[%c0_238, %c1_239, %c1_240, %c0_241] : memref<2x4x18x64xbf16, #tpu.memory_space<vmem>>, vector<2x2x2x64xbf16>
    tpu.vector_store %arg19[%c0_238, %c1_239, %c1_240, %c0_241], %248 {strides = array<i32>} : memref<2x4x18x64xbf16, #tpu.memory_space<vmem>>, vector<2x2x2x64xbf16>,
    %c0_242 = arith.constant 0 : index
    %c0_243 = arith.constant 0 : index
    %c0_244 = arith.constant 0 : index
    %c0_245 = arith.constant 0 : index
    %250 = vector.load %arg19[%c0_242, %c0_243, %c0_244, %c0_245] : memref<2x4x18x64xbf16, #tpu.memory_space<vmem>>, vector<2x2x16x64xbf16>
    %c0_246 = arith.constant 0 : index
    %c0_247 = arith.constant 0 : index
    %c1_248 = arith.constant 1 : index
    %c0_249 = arith.constant 0 : index
    %251 = vector.load %arg19[%c0_246, %c0_247, %c1_248, %c0_249] : memref<2x4x18x64xbf16, #tpu.memory_space<vmem>>, vector<2x2x16x64xbf16>
    %c0_250 = arith.constant 0 : index
    %c0_251 = arith.constant 0 : index
    %c2_252 = arith.constant 2 : index
    %c0_253 = arith.constant 0 : index
    %252 = vector.load %arg19[%c0_250, %c0_251, %c2_252, %c0_253] : memref<2x4x18x64xbf16, #tpu.memory_space<vmem>>, vector<2x2x16x64xbf16>
    %c0_254 = arith.constant 0 : index
    %c1_255 = arith.constant 1 : index
    %c0_256 = arith.constant 0 : index
    %c0_257 = arith.constant 0 : index
    %253 = vector.load %arg19[%c0_254, %c1_255, %c0_256, %c0_257] : memref<2x4x18x64xbf16, #tpu.memory_space<vmem>>, vector<2x2x16x64xbf16>
    %c0_258 = arith.constant 0 : index
    %c1_259 = arith.constant 1 : index
    %c1_260 = arith.constant 1 : index
    %c0_261 = arith.constant 0 : index
    %254 = vector.load %arg19[%c0_258, %c1_259, %c1_260, %c0_261] : memref<2x4x18x64xbf16, #tpu.memory_space<vmem>>, vector<2x2x16x64xbf16>
    %c0_262 = arith.constant 0 : index
    %c1_263 = arith.constant 1 : index
    %c2_264 = arith.constant 2 : index
    %c0_265 = arith.constant 0 : index
    %255 = vector.load %arg19[%c0_262, %c1_263, %c2_264, %c0_265] : memref<2x4x18x64xbf16, #tpu.memory_space<vmem>>, vector<2x2x16x64xbf16>
    %c0_266 = arith.constant 0 : index
    %c2_267 = arith.constant 2 : index
    %c0_268 = arith.constant 0 : index
    %c0_269 = arith.constant 0 : index
    %256 = vector.load %arg19[%c0_266, %c2_267, %c0_268, %c0_269] : memref<2x4x18x64xbf16, #tpu.memory_space<vmem>>, vector<2x2x16x64xbf16>
    %c0_270 = arith.constant 0 : index
    %c2_271 = arith.constant 2 : index
    %c1_272 = arith.constant 1 : index
    %c0_273 = arith.constant 0 : index
    %257 = vector.load %arg19[%c0_270, %c2_271, %c1_272, %c0_273] : memref<2x4x18x64xbf16, #tpu.memory_space<vmem>>, vector<2x2x16x64xbf16>
    %c0_274 = arith.constant 0 : index
    %c2_275 = arith.constant 2 : index
    %c2_276 = arith.constant 2 : index
    %c0_277 = arith.constant 0 : index
    %258 = vector.load %arg19[%c0_274, %c2_275, %c2_276, %c0_277] : memref<2x4x18x64xbf16, #tpu.memory_space<vmem>>, vector<2x2x16x64xbf16>
    %259 = tpu.concatenate %250, %251, %252, %253, %254, %255, %256, %257, %258 in 3 : vector<2x2x16x64xbf16>, vector<2x2x16x64xbf16>, vector<2x2x16x64xbf16>, vector<2x2x16x64xbf16>, vector<2x2x16x64xbf16>, vector<2x2x16x64xbf16>, vector<2x2x16x64xbf16>, vector<2x2x16x64xbf16>, vector<2x2x16x64xbf16> -> vector<2x2x16x576xbf16>
    %260 = vector.shape_cast %259 : vector<2x2x16x576xbf16> to vector<64x576xbf16>
    %c0_278 = arith.constant 0 : index
    %c0_279 = arith.constant 0 : index
    %261 = vector.load %arg10[%c0_278, %c0_279] : memref<576x64xbf16, #tpu.memory_space<vmem>>, vector<576x64xbf16>
    %cst_280 = arith.constant dense<0.000000e+00> : vector<64x64xf32>
    %262 = tpu.matmul %260, %261, %cst_280 {dimension_numbers = #tpu.dot_dimension_numbers<[1], [0], [0], [1], [0, 0, 1, 1], [], []>} : vector<64x576xbf16>, vector<576x64xbf16>, vector<64x64xf32> -> vector<64x64xf32>
    %263 = vector.shape_cast %262 : vector<64x64xf32> to vector<2x2x16x64xf32>
    %264 = tpu.iota {dimensions = array<i32: 2>} : vector<1x1x16x1xi32>
    %c2_i32 = arith.constant 2 : i32
    %265 = vector.broadcast %c2_i32 : i32 to vector<1x1x16x1xi32>
    %266 = arith.cmpi slt, %264, %265 : vector<1x1x16x1xi32>
    %267 = arith.extui %266 : vector<1x1x16x1xi1> to vector<1x1x16x1xi32>
    %268 = arith.sitofp %267 : vector<1x1x16x1xi32> to vector<1x1x16x1xf32>
    %269 = vector.broadcast %268 : vector<1x1x16x1xf32> to vector<2x2x16x64xf32>
    %270 = arith.mulf %263, %269 : vector<2x2x16x64xf32>
    %271 = vector.shape_cast %270 : vector<2x2x16x64xf32> to vector<64x64xf32>
    %cst_281 = arith.constant dense<0.000000e+00> : vector<64xf32>
    %272 = vector.multi_reduction <add>, %271, %cst_281 [0] : vector<64x64xf32> to vector<64xf32>
    %273 = vector.shape_cast %272 : vector<64xf32> to vector<1x64xf32>
    %274 = arith.mulf %271, %271 : vector<64x64xf32>
    %cst_282 = arith.constant dense<0.000000e+00> : vector<64xf32>
    %275 = vector.multi_reduction <add>, %274, %cst_282 [0] : vector<64x64xf32> to vector<64xf32>
    %276 = vector.shape_cast %275 : vector<64xf32> to vector<1x64xf32>
    %cst_283 = arith.constant 8.000000e+00 : f32
    %277 = vector.broadcast %cst_283 : f32 to vector<1x64xf32>
    %278 = arith.divf %273, %277 : vector<1x64xf32>
    %cst_284 = arith.constant 8.000000e+00 : f32
    %279 = vector.broadcast %cst_284 : f32 to vector<1x64xf32>
    %280 = arith.divf %276, %279 : vector<1x64xf32>
    %281 = arith.mulf %278, %278 : vector<1x64xf32>
    %282 = arith.subf %280, %281 : vector<1x64xf32>
    %cst_285 = arith.constant 0.000000e+00 : f32
    %283 = vector.broadcast %cst_285 : f32 to vector<1x64xf32>
    %284 = arith.maximumf %282, %283 : vector<1x64xf32>
    %c0_286 = arith.constant 0 : index
    %c0_287 = arith.constant 0 : index
    %285 = vector.load %arg11[%c0_286, %c0_287] : memref<1x64xf32, #tpu.memory_space<vmem>>, vector<1x64xf32>
    %cst_288 = arith.constant 9.99999974E-6 : f32
    %286 = vector.broadcast %cst_288 : f32 to vector<1x64xf32>
    %287 = arith.addf %284, %286 : vector<1x64xf32>
    %288 = math.rsqrt %287 : vector<1x64xf32>
    %289 = arith.mulf %285, %288 : vector<1x64xf32>
    %c0_289 = arith.constant 0 : index
    %c0_290 = arith.constant 0 : index
    %290 = vector.load %arg12[%c0_289, %c0_290] : memref<1x64xf32, #tpu.memory_space<vmem>>, vector<1x64xf32>
    %291 = arith.mulf %278, %289 : vector<1x64xf32>
    %292 = arith.subf %290, %291 : vector<1x64xf32>
    %293 = vector.extract_strided_slice %263 {offsets = [0, 0, 0, 0], sizes = [2, 2, 2, 64], strides = [1, 1, 1, 1]} : vector<2x2x16x64xf32> to vector<2x2x2x64xf32>
    %294 = vector.shape_cast %289 : vector<1x64xf32> to vector<1x1x1x64xf32>
    %295 = vector.broadcast %294 : vector<1x1x1x64xf32> to vector<2x2x2x64xf32>
    %296 = arith.mulf %293, %295 : vector<2x2x2x64xf32>
    %297 = vector.shape_cast %292 : vector<1x64xf32> to vector<1x1x1x64xf32>
    %298 = vector.broadcast %297 : vector<1x1x1x64xf32> to vector<2x2x2x64xf32>
    %299 = arith.addf %296, %298 : vector<2x2x2x64xf32>
    %300 = vector.shape_cast %299 : vector<2x2x2x64xf32> to vector<2x1x2x2x64xf32>
    %301 = vector.extract_strided_slice %300 {offsets = [0, 0, 0, 0, 0], sizes = [2, 1, 1, 2, 64], strides = [1, 1, 1, 1, 1]} : vector<2x1x2x2x64xf32> to vector<2x1x1x2x64xf32>
    %302 = vector.shape_cast %301 : vector<2x1x1x2x64xf32> to vector<2x1x2x64xf32>
    %303 = vector.extract_strided_slice %300 {offsets = [0, 0, 1, 0, 0], sizes = [2, 1, 1, 2, 64], strides = [1, 1, 1, 1, 1]} : vector<2x1x2x2x64xf32> to vector<2x1x1x2x64xf32>
    %304 = vector.shape_cast %303 : vector<2x1x1x2x64xf32> to vector<2x1x2x64xf32>
    %305 = arith.maximumf %302, %304 : vector<2x1x2x64xf32>
    %306 = vector.extract_strided_slice %305 {offsets = [0, 0, 0, 0], sizes = [2, 1, 1, 64], strides = [1, 1, 1, 1]} : vector<2x1x2x64xf32> to vector<2x1x1x64xf32>
    %307 = vector.extract_strided_slice %305 {offsets = [0, 0, 1, 0], sizes = [2, 1, 1, 64], strides = [1, 1, 1, 1]} : vector<2x1x2x64xf32> to vector<2x1x1x64xf32>
    %308 = arith.maximumf %306, %307 : vector<2x1x1x64xf32>
    %cst_291 = arith.constant 0.000000e+00 : f32
    %309 = vector.broadcast %cst_291 : f32 to vector<2x1x1x64xf32>
    %310 = arith.maximumf %308, %309 : vector<2x1x1x64xf32>
    %cst_292 = arith.constant 0.000000e+00 : bf16
    %311 = vector.broadcast %cst_292 : bf16 to vector<2x1x3x64xbf16>
    %c0_293 = arith.constant 0 : index
    %c0_294 = arith.constant 0 : index
    %c0_295 = arith.constant 0 : index
    %c0_296 = arith.constant 0 : index
    %312 = vector.load %arg20[%c0_293, %c0_294, %c0_295, %c0_296] : memref<2x3x3x64xbf16, #tpu.memory_space<vmem>>, vector<2x1x3x64xbf16>
    tpu.vector_store %arg20[%c0_293, %c0_294, %c0_295, %c0_296], %311 {strides = array<i32>} : memref<2x3x3x64xbf16, #tpu.memory_space<vmem>>, vector<2x1x3x64xbf16>,
    %cst_297 = arith.constant 0.000000e+00 : bf16
    %313 = vector.broadcast %cst_297 : bf16 to vector<2x1x3x64xbf16>
    %c0_298 = arith.constant 0 : index
    %c2_299 = arith.constant 2 : index
    %c0_300 = arith.constant 0 : index
    %c0_301 = arith.constant 0 : index
    %314 = vector.load %arg20[%c0_298, %c2_299, %c0_300, %c0_301] : memref<2x3x3x64xbf16, #tpu.memory_space<vmem>>, vector<2x1x3x64xbf16>
    tpu.vector_store %arg20[%c0_298, %c2_299, %c0_300, %c0_301], %313 {strides = array<i32>} : memref<2x3x3x64xbf16, #tpu.memory_space<vmem>>, vector<2x1x3x64xbf16>,
    %cst_302 = arith.constant 0.000000e+00 : bf16
    %315 = vector.broadcast %cst_302 : bf16 to vector<2x3x1x64xbf16>
    %c0_303 = arith.constant 0 : index
    %c0_304 = arith.constant 0 : index
    %c0_305 = arith.constant 0 : index
    %c0_306 = arith.constant 0 : index
    %316 = vector.load %arg20[%c0_303, %c0_304, %c0_305, %c0_306] : memref<2x3x3x64xbf16, #tpu.memory_space<vmem>>, vector<2x3x1x64xbf16>
    tpu.vector_store %arg20[%c0_303, %c0_304, %c0_305, %c0_306], %315 {strides = array<i32>} : memref<2x3x3x64xbf16, #tpu.memory_space<vmem>>, vector<2x3x1x64xbf16>,
    %cst_307 = arith.constant 0.000000e+00 : bf16
    %317 = vector.broadcast %cst_307 : bf16 to vector<2x3x1x64xbf16>
    %c0_308 = arith.constant 0 : index
    %c0_309 = arith.constant 0 : index
    %c2_310 = arith.constant 2 : index
    %c0_311 = arith.constant 0 : index
    %318 = vector.load %arg20[%c0_308, %c0_309, %c2_310, %c0_311] : memref<2x3x3x64xbf16, #tpu.memory_space<vmem>>, vector<2x3x1x64xbf16>
    tpu.vector_store %arg20[%c0_308, %c0_309, %c2_310, %c0_311], %317 {strides = array<i32>} : memref<2x3x3x64xbf16, #tpu.memory_space<vmem>>, vector<2x3x1x64xbf16>,
    %319 = arith.truncf %310 : vector<2x1x1x64xf32> to vector<2x1x1x64xbf16>
    %c0_312 = arith.constant 0 : index
    %c1_313 = arith.constant 1 : index
    %c1_314 = arith.constant 1 : index
    %c0_315 = arith.constant 0 : index
    %320 = vector.load %arg20[%c0_312, %c1_313, %c1_314, %c0_315] : memref<2x3x3x64xbf16, #tpu.memory_space<vmem>>, vector<2x1x1x64xbf16>
    tpu.vector_store %arg20[%c0_312, %c1_313, %c1_314, %c0_315], %319 {strides = array<i32>} : memref<2x3x3x64xbf16, #tpu.memory_space<vmem>>, vector<2x1x1x64xbf16>,
    %cst_316 = arith.constant 0.000000e+00 : f32
    %321 = vector.broadcast %cst_316 : f32 to vector<2x5xf32>
    %c0_317 = arith.constant 0 : index
    %c1_318 = arith.constant 1 : index
    %c1_319 = arith.constant 1 : index
    %c0_320 = arith.constant 0 : index
    %322 = vector.load %arg20[%c0_317, %c1_318, %c1_319, %c0_320] : memref<2x3x3x64xbf16, #tpu.memory_space<vmem>>, vector<2x1x1x64xbf16>
    %323 = vector.shape_cast %322 : vector<2x1x1x64xbf16> to vector<2x64xbf16>
    %c0_321 = arith.constant 0 : index
    %c0_322 = arith.constant 0 : index
    %c0_323 = arith.constant 0 : index
    %324 = vector.load %arg13[%c0_321, %c0_322, %c0_323] : memref<1x64x5xbf16, #tpu.memory_space<vmem>>, vector<1x64x5xbf16>
    %325 = vector.shape_cast %324 : vector<1x64x5xbf16> to vector<64x5xbf16>
    %cst_324 = arith.constant dense<0.000000e+00> : vector<2x5xf32>
    %326 = tpu.matmul %323, %325, %cst_324 {dimension_numbers = #tpu.dot_dimension_numbers<[1], [0], [0], [1], [0, 0, 1, 1], [], []>} : vector<2x64xbf16>, vector<64x5xbf16>, vector<2x5xf32> -> vector<2x5xf32>
    %327 = arith.addf %321, %326 : vector<2x5xf32>
    %c0_325 = arith.constant 0 : index
    %c0_326 = arith.constant 0 : index
    %328 = vector.load %arg14[%c0_325, %c0_326] : memref<1x5xf32, #tpu.memory_space<vmem>>, vector<1x5xf32>
    %329 = vector.broadcast %328 : vector<1x5xf32> to vector<2x5xf32>
    %330 = arith.addf %327, %329 : vector<2x5xf32>
    %c0_327 = arith.constant 0 : index
    %c0_328 = arith.constant 0 : index
    %331 = vector.load %arg15[%c0_327, %c0_328] : memref<2x5xf32, #tpu.memory_space<vmem>>, vector<2x5xf32>
    tpu.vector_store %arg15[%c0_327, %c0_328], %330 {strides = array<i32>} : memref<2x5xf32, #tpu.memory_space<vmem>>, vector<2x5xf32>,
    return
  }
}

</mosaic_0001>

<llo_original>
// kernel: cnn4_forward.1
$region0: #{cnn4_forward.1}
  #allocation0 [shape = 'u32[]', space=smem, size = 0x4, offset = 0x4, fixed_abs, tag = 'smem constant byte address 0x4 - core index']
  #allocation1 [shape = 'u32[144,128]{1,0:T(1,128)}', space=vmem, size = 0x12000, scoped, tag = 'internal scratch']
  #allocation2 [shape = 'bf16[2,18,18,4]{3,2,1,0:T(8,128)(2,1)}', space=vmem, size = 0x36000, scoped, tag = 'scratch operand']
  #allocation3 [shape = 'bf16[2,10,18,64]{3,2,1,0:T(8,128)(2,1)}', space=vmem, size = 0x1e000, scoped, tag = 'scratch operand']
  #allocation4 [shape = 'bf16[2,6,18,64]{3,2,1,0:T(8,128)(2,1)}', space=vmem, size = 0x12000, scoped, tag = 'scratch operand']
  #allocation5 [shape = 'bf16[2,4,18,64]{3,2,1,0:T(8,128)(2,1)}', space=vmem, size = 0xc000, scoped, tag = 'scratch operand']
  #allocation6 [shape = 'bf16[2,3,3,64]{3,2,1,0:T(4,128)(2,1)}', space=vmem, size = 0x1800, scoped, tag = 'scratch operand']
  %s0 = inlined_call_operand.vmem [shape: bf16[2,16,16,4], index: 0, kind: input, shape index: {}]
  %s1 = inlined_call_operand.vmem [shape: bf16[36,64], index: 1, kind: input, shape index: {}]
  %s2 = inlined_call_operand.vmem [shape: f32[1,64], index: 2, kind: input, shape index: {}]
  %s3 = inlined_call_operand.vmem [shape: f32[1,64], index: 3, kind: input, shape index: {}]
  %s4 = inlined_call_operand.vmem [shape: bf16[576,64], index: 4, kind: input, shape index: {}]
  %s5 = inlined_call_operand.vmem [shape: f32[1,64], index: 5, kind: input, shape index: {}]
  %s6 = inlined_call_operand.vmem [shape: f32[1,64], index: 6, kind: input, shape index: {}]
  %s7 = inlined_call_operand.vmem [shape: bf16[576,64], index: 7, kind: input, shape index: {}]
  %s8 = inlined_call_operand.vmem [shape: f32[1,64], index: 8, kind: input, shape index: {}]
  %s9 = inlined_call_operand.vmem [shape: f32[1,64], index: 9, kind: input, shape index: {}]
  %s10 = inlined_call_operand.vmem [shape: bf16[576,64], index: 10, kind: input, shape index: {}]
  %s11 = inlined_call_operand.vmem [shape: f32[1,64], index: 11, kind: input, shape index: {}]
  %s12 = inlined_call_operand.vmem [shape: f32[1,64], index: 12, kind: input, shape index: {}]
  %s13 = inlined_call_operand.vmem [shape: bf16[1,64,5], index: 13, kind: input, shape index: {}]
  %s14 = inlined_call_operand.vmem [shape: f32[1,5], index: 14, kind: input, shape index: {}]
  %s15 = inlined_call_operand.hbm [shape: f32[2,5], index: 15, kind: output, shape index: {}]
  %s16 = sld [smem:[#allocation0]]
  $region70: #{cnn4_forward.1} parent=0
    _
  %s18 = ssub.s32 1, %s16
  %s19 = scalar_select 0, %s18, %s16
  $region1: #{cnn4_forward.1} parent=0
    #allocation7 [shape = 'u8[1024]{0}', space=vmem, size = 0x400, scoped, tag = 'output window, operand 0, single buffered']
    #allocation8 [shape = 's32[1]{0}', space=sflag, size = 0x4, scoped, tag = 'scoped memory for cnn4_forward.1']
    %20 = vsyncpa [#allocation8], 0
    // Predicated region
    $region2: #{cnn4_forward.1} parent=1 // pred_check
      _
    $region3: #{cnn4_forward.1} parent=1 // pred_check_branch
      %22 = sbr.rel (0) target = $region5
    $region4: #{cnn4_forward.1} parent=1 // pred_region
      _
    $region5: #{cnn4_forward.1} parent=1 // pred_fallthru
      _
    // Predicated region
    $region6: #{cnn4_forward.1} parent=1 // pred_check
      _
    $region7: #{cnn4_forward.1} parent=1 // pred_check_branch
      %24 = sbr.rel (0) target = $region9
    $region8: #{cnn4_forward.1} parent=1 // pred_region
      _
    $region9: #{cnn4_forward.1} parent=1 // pred_fallthru
      _
    // Predicated region
    $region10: #{cnn4_forward.1} parent=1 // pred_check
      _
    $region11: #{cnn4_forward.1} parent=1 // pred_check_branch
      %26 = sbr.rel (0) target = $region13
    $region12: #{cnn4_forward.1} parent=1 // pred_region
      _
    $region13: #{cnn4_forward.1} parent=1 // pred_fallthru
      _
    // Predicated region
    $region14: #{cnn4_forward.1} parent=1 // pred_check
      _
    $region15: #{cnn4_forward.1} parent=1 // pred_check_branch
      %28 = sbr.rel (0) target = $region17
    $region16: #{cnn4_forward.1} parent=1 // pred_region
      _
    $region17: #{cnn4_forward.1} parent=1 // pred_fallthru
      _
    // Predicated region
    $region18: #{cnn4_forward.1} parent=1 // pred_check
      _
    $region19: #{cnn4_forward.1} parent=1 // pred_check_branch
      %30 = sbr.rel (0) target = $region21
    $region20: #{cnn4_forward.1} parent=1 // pred_region
      _
    $region21: #{cnn4_forward.1} parent=1 // pred_fallthru
      _
    // Predicated region
    $region22: #{cnn4_forward.1} parent=1 // pred_check
      _
    $region23: #{cnn4_forward.1} parent=1 // pred_check_branch
      %32 = sbr.rel (0) target = $region25
    $region24: #{cnn4_forward.1} parent=1 // pred_region
      _
    $region25: #{cnn4_forward.1} parent=1 // pred_fallthru
      _
    // Predicated region
    $region26: #{cnn4_forward.1} parent=1 // pred_check
      _
    $region27: #{cnn4_forward.1} parent=1 // pred_check_branch
      %34 = sbr.rel (0) target = $region29
    $region28: #{cnn4_forward.1} parent=1 // pred_region
      _
    $region29: #{cnn4_forward.1} parent=1 // pred_fallthru
      _
    // Predicated region
    $region30: #{cnn4_forward.1} parent=1 // pred_check
      _
    $region31: #{cnn4_forward.1} parent=1 // pred_check_branch
      %36 = sbr.rel (0) target = $region33
    $region32: #{cnn4_forward.1} parent=1 // pred_region
      _
    $region33: #{cnn4_forward.1} parent=1 // pred_fallthru
      _
    // Predicated region
    $region34: #{cnn4_forward.1} parent=1 // pred_check
      _
    $region35: #{cnn4_forward.1} parent=1 // pred_check_branch
      %38 = sbr.rel (0) target = $region37
    $region36: #{cnn4_forward.1} parent=1 // pred_region
      _
    $region37: #{cnn4_forward.1} parent=1 // pred_fallthru
      _
    // Predicated region
    $region38: #{cnn4_forward.1} parent=1 // pred_check
      _
    $region39: #{cnn4_forward.1} parent=1 // pred_check_branch
      %40 = sbr.rel (0) target = $region41
    $region40: #{cnn4_forward.1} parent=1 // pred_region
      _
    $region41: #{cnn4_forward.1} parent=1 // pred_fallthru
      _
    // Predicated region
    $region42: #{cnn4_forward.1} parent=1 // pred_check
      _
    $region43: #{cnn4_forward.1} parent=1 // pred_check_branch
      %42 = sbr.rel (0) target = $region45
    $region44: #{cnn4_forward.1} parent=1 // pred_region
      _
    $region45: #{cnn4_forward.1} parent=1 // pred_fallthru
      _
    // Predicated region
    $region46: #{cnn4_forward.1} parent=1 // pred_check
      _
    $region47: #{cnn4_forward.1} parent=1 // pred_check_branch
      %44 = sbr.rel (0) target = $region49
    $region48: #{cnn4_forward.1} parent=1 // pred_region
      _
    $region49: #{cnn4_forward.1} parent=1 // pred_fallthru
      _
    // Predicated region
    $region50: #{cnn4_forward.1} parent=1 // pred_check
      _
    $region51: #{cnn4_forward.1} parent=1 // pred_check_branch
      %46 = sbr.rel (0) target = $region53
    $region52: #{cnn4_forward.1} parent=1 // pred_region
      _
    $region53: #{cnn4_forward.1} parent=1 // pred_fallthru
      _
    // Predicated region
    $region54: #{cnn4_forward.1} parent=1 // pred_check
      _
    $region55: #{cnn4_forward.1} parent=1 // pred_check_branch
      %48 = sbr.rel (0) target = $region57
    $region56: #{cnn4_forward.1} parent=1 // pred_region
      _
    $region57: #{cnn4_forward.1} parent=1 // pred_fallthru
      _
    // Predicated region
    $region58: #{cnn4_forward.1} parent=1 // pred_check
      _
    $region59: #{cnn4_forward.1} parent=1 // pred_check_branch
      %50 = sbr.rel (0) target = $region61
    $region60: #{cnn4_forward.1} parent=1 // pred_region
      _
    $region61: #{cnn4_forward.1} parent=1 // pred_fallthru
      _
    %vm52 = vcmask 27648
    %53 = vst.msk [vmem:[#allocation2] sm:$0xf] %vm52, 0
    %54 = vst.msk [vmem:[#allocation2 + $0x4] sm:$0xf] %vm52, 0
    %vm55 = vcmask 24576
    %56 = vst.msk [vmem:[#allocation2 + $0x8] sm:$0x1] %vm55, 0
    %57 = vst.msk [vmem:[#allocation2 + $0xd8] sm:$0xf] %vm52, 0
    %58 = vst.msk [vmem:[#allocation2 + $0xdc] sm:$0xf] %vm52, 0
    %59 = vst.msk [vmem:[#allocation2 + $0xe0] sm:$0x1] %vm55, 0
    %s60 = scalar_lea.vmem [#allocation2], 204
    %61 = vst.msk [vmem:[%s60] sm:$0xf] %vm52, 0
    %62 = vst.msk [vmem:[%s60 + $0x4] sm:$0xf] %vm52, 0
    %63 = vst.msk [vmem:[%s60 + $0x8] sm:$0x1] %vm55, 0
    %64 = vst.msk [vmem:[%s60 + $0xd8] sm:$0xf] %vm52, 0
    %65 = vst.msk [vmem:[%s60 + $0xdc] sm:$0xf] %vm52, 0
    %66 = vst.msk [vmem:[%s60 + $0xe0] sm:$0x1] %vm55, 0
    %vm67 = vcmask 24576
    %vm68 = vsmask.f32 256
    %vm69 = vmand %vm67, %vm68
    %v70 = vld [vmem:[#allocation2] sm:$0x1]
    %v71 = vsel %vm69, 0, %v70
    %72 = vst [vmem:[#allocation2] sm:$0x1] %v71
    %v73 = vld [vmem:[#allocation2 + $0xc] sm:$0x1]
    %v74 = vsel %vm69, 0, %v73
    %75 = vst [vmem:[#allocation2 + $0xc] sm:$0x1] %v74
    %v76 = vld [vmem:[#allocation2 + $0x18] sm:$0x1]
    %v77 = vsel %vm69, 0, %v76
    %78 = vst [vmem:[#allocation2 + $0x18] sm:$0x1] %v77
    %v79 = vld [vmem:[#allocation2 + $0x24] sm:$0x1]
    %v80 = vsel %vm69, 0, %v79
    %81 = vst [vmem:[#allocation2 + $0x24] sm:$0x1] %v80
    %v82 = vld [vmem:[#allocation2 + $0x30] sm:$0x1]
    %v83 = vsel %vm69, 0, %v82
    %84 = vst [vmem:[#allocation2 + $0x30] sm:$0x1] %v83
    %v85 = vld [vmem:[#allocation2 + $0x3c] sm:$0x1]
    %v86 = vsel %vm69, 0, %v85
    %87 = vst [vmem:[#allocation2 + $0x3c] sm:$0x1] %v86
    %v88 = vld [vmem:[#allocation2 + $0x48] sm:$0x1]
    %v89 = vsel %vm69, 0, %v88
    %90 = vst [vmem:[#allocation2 + $0x48] sm:$0x1] %v89
    %v91 = vld [vmem:[#allocation2 + $0x54] sm:$0x1]
    %v92 = vsel %vm69, 0, %v91
    %93 = vst [vmem:[#allocation2 + $0x54] sm:$0x1] %v92
    %v94 = vld [vmem:[#allocation2 + $0x60] sm:$0x1]
    %v95 = vsel %vm69, 0, %v94
    %96 = vst [vmem:[#allocation2 + $0x60] sm:$0x1] %v95
    %v97 = vld [vmem:[#allocation2 + $0x6c] sm:$0x1]
    %v98 = vsel %vm69, 0, %v97
    %99 = vst [vmem:[#allocation2 + $0x6c] sm:$0x1] %v98
    %v100 = vld [vmem:[#allocation2 + $0x78] sm:$0x1]
    %v101 = vsel %vm69, 0, %v100
    %102 = vst [vmem:[#allocation2 + $0x78] sm:$0x1] %v101
    %v103 = vld [vmem:[#allocation2 + $0x84] sm:$0x1]
    %v104 = vsel %vm69, 0, %v103
    %105 = vst [vmem:[#allocation2 + $0x84] sm:$0x1] %v104
    %v106 = vld [vmem:[#allocation2 + $0x90] sm:$0x1]
    %v107 = vsel %vm69, 0, %v106
    %108 = vst [vmem:[#allocation2 + $0x90] sm:$0x1] %v107
    %v109 = vld [vmem:[#allocation2 + $0x9c] sm:$0x1]
    %v110 = vsel %vm69, 0, %v109
    %111 = vst [vmem:[#allocation2 + $0x9c] sm:$0x1] %v110
    %v112 = vld [vmem:[#allocation2 + $0xa8] sm:$0x1]
    %v113 = vsel %vm69, 0, %v112
    %114 = vst [vmem:[#allocation2 + $0xa8] sm:$0x1] %v113
    %v115 = vld [vmem:[#allocation2 + $0xb4] sm:$0x1]
    %v116 = vsel %vm69, 0, %v115
    %117 = vst [vmem:[#allocation2 + $0xb4] sm:$0x1] %v116
    %v118 = vld [vmem:[#allocation2 + $0xc0] sm:$0x1]
    %v119 = vsel %vm69, 0, %v118
    %120 = vst [vmem:[#allocation2 + $0xc0] sm:$0x1] %v119
    %v121 = vld [vmem:[#allocation2 + $0xcc] sm:$0x1]
    %v122 = vsel %vm69, 0, %v121
    %123 = vst [vmem:[#allocation2 + $0xcc] sm:$0x1] %v122
    %v124 = vld [vmem:[#allocation2 + $0xd8] sm:$0x1]
    %v125 = vsel %vm69, 0, %v124
    %126 = vst [vmem:[#allocation2 + $0xd8] sm:$0x1] %v125
    %v127 = vld [vmem:[#allocation2 + $0xe4] sm:$0x1]
    %v128 = vsel %vm69, 0, %v127
    %129 = vst [vmem:[#allocation2 + $0xe4] sm:$0x1] %v128
    %v130 = vld [vmem:[#allocation2 + $0xf0] sm:$0x1]
    %v131 = vsel %vm69, 0, %v130
    %132 = vst [vmem:[#allocation2 + $0xf0] sm:$0x1] %v131
    %v133 = vld [vmem:[#allocation2 + $0xfc] sm:$0x1]
    %v134 = vsel %vm69, 0, %v133
    %135 = vst [vmem:[#allocation2 + $0xfc] sm:$0x1] %v134
    %v136 = vld [vmem:[#allocation2 + $0x108] sm:$0x1]
    %v137 = vsel %vm69, 0, %v136
    %138 = vst [vmem:[#allocation2 + $0x108] sm:$0x1] %v137
    %v139 = vld [vmem:[#allocation2 + $0x114] sm:$0x1]
    %v140 = vsel %vm69, 0, %v139
    %141 = vst [vmem:[#allocation2 + $0x114] sm:$0x1] %v140
    %v142 = vld [vmem:[#allocation2 + $0x120] sm:$0x1]
    %v143 = vsel %vm69, 0, %v142
    %144 = vst [vmem:[#allocation2 + $0x120] sm:$0x1] %v143
    %v145 = vld [vmem:[#allocation2 + $0x12c] sm:$0x1]
    %v146 = vsel %vm69, 0, %v145
    %147 = vst [vmem:[#allocation2 + $0x12c] sm:$0x1] %v146
    %v148 = vld [vmem:[#allocation2 + $0x138] sm:$0x1]
    %v149 = vsel %vm69, 0, %v148
    %150 = vst [vmem:[#allocation2 + $0x138] sm:$0x1] %v149
    %v151 = vld [vmem:[#allocation2 + $0x144] sm:$0x1]
    %v152 = vsel %vm69, 0, %v151
    %153 = vst [vmem:[#allocation2 + $0x144] sm:$0x1] %v152
    %v154 = vld [vmem:[#allocation2 + $0x150] sm:$0x1]
    %v155 = vsel %vm69, 0, %v154
    %156 = vst [vmem:[#allocation2 + $0x150] sm:$0x1] %v155
    %v157 = vld [vmem:[#allocation2 + $0x15c] sm:$0x1]
    %v158 = vsel %vm69, 0, %v157
    %159 = vst [vmem:[#allocation2 + $0x15c] sm:$0x1] %v158
    %v160 = vld [vmem:[#allocation2 + $0x168] sm:$0x1]
    %v161 = vsel %vm69, 0, %v160
    %162 = vst [vmem:[#allocation2 + $0x168] sm:$0x1] %v161
    %v163 = vld [vmem:[#allocation2 + $0x174] sm:$0x1]
    %v164 = vsel %vm69, 0, %v163
    %165 = vst [vmem:[#allocation2 + $0x174] sm:$0x1] %v164
    %v166 = vld [vmem:[#allocation2 + $0x180] sm:$0x1]
    %v167 = vsel %vm69, 0, %v166
    %168 = vst [vmem:[#allocation2 + $0x180] sm:$0x1] %v167
    %v169 = vld [vmem:[#allocation2 + $0x18c] sm:$0x1]
    %v170 = vsel %vm69, 0, %v169
    %171 = vst [vmem:[#allocation2 + $0x18c] sm:$0x1] %v170
    %v172 = vld [vmem:[#allocation2 + $0x198] sm:$0x1]
    %v173 = vsel %vm69, 0, %v172
    %174 = vst [vmem:[#allocation2 + $0x198] sm:$0x1] %v173
    %v175 = vld [vmem:[#allocation2 + $0x1a4] sm:$0x1]
    %v176 = vsel %vm69, 0, %v175
    %177 = vst [vmem:[#allocation2 + $0x1a4] sm:$0x1] %v176
    %vm178 = vsmask.f32 7938
    %vm179 = vmand %vm67, %vm178
    %v180 = vld [vmem:[#allocation2 + $0x8] sm:$0x1]
    %v181 = vsel %vm179, 0, %v180
    %182 = vst [vmem:[#allocation2 + $0x8] sm:$0x1] %v181
    %v183 = vld [vmem:[#allocation2 + $0x14] sm:$0x1]
    %v184 = vsel %vm179, 0, %v183
    %185 = vst [vmem:[#allocation2 + $0x14] sm:$0x1] %v184
    %v186 = vld [vmem:[#allocation2 + $0x20] sm:$0x1]
    %v187 = vsel %vm179, 0, %v186
    %188 = vst [vmem:[#allocation2 + $0x20] sm:$0x1] %v187
    %v189 = vld [vmem:[#allocation2 + $0x2c] sm:$0x1]
    %v190 = vsel %vm179, 0, %v189
    %191 = vst [vmem:[#allocation2 + $0x2c] sm:$0x1] %v190
    %v192 = vld [vmem:[#allocation2 + $0x38] sm:$0x1]
    %v193 = vsel %vm179, 0, %v192
    %194 = vst [vmem:[#allocation2 + $0x38] sm:$0x1] %v193
    %v195 = vld [vmem:[#allocation2 + $0x44] sm:$0x1]
    %v196 = vsel %vm179, 0, %v195
    %197 = vst [vmem:[#allocation2 + $0x44] sm:$0x1] %v196
    %v198 = vld [vmem:[#allocation2 + $0x50] sm:$0x1]
    %v199 = vsel %vm179, 0, %v198
    %200 = vst [vmem:[#allocation2 + $0x50] sm:$0x1] %v199
    %v201 = vld [vmem:[#allocation2 + $0x5c] sm:$0x1]
    %v202 = vsel %vm179, 0, %v201
    %203 = vst [vmem:[#allocation2 + $0x5c] sm:$0x1] %v202
    %v204 = vld [vmem:[#allocation2 + $0x68] sm:$0x1]
    %v205 = vsel %vm179, 0, %v204
    %206 = vst [vmem:[#allocation2 + $0x68] sm:$0x1] %v205
    %v207 = vld [vmem:[#allocation2 + $0x74] sm:$0x1]
    %v208 = vsel %vm179, 0, %v207
    %209 = vst [vmem:[#allocation2 + $0x74] sm:$0x1] %v208
    %v210 = vld [vmem:[#allocation2 + $0x80] sm:$0x1]
    %v211 = vsel %vm179, 0, %v210
    %212 = vst [vmem:[#allocation2 + $0x80] sm:$0x1] %v211
    %v213 = vld [vmem:[#allocation2 + $0x8c] sm:$0x1]
    %v214 = vsel %vm179, 0, %v213
    %215 = vst [vmem:[#allocation2 + $0x8c] sm:$0x1] %v214
    %v216 = vld [vmem:[#allocation2 + $0x98] sm:$0x1]
    %v217 = vsel %vm179, 0, %v216
    %218 = vst [vmem:[#allocation2 + $0x98] sm:$0x1] %v217
    %v219 = vld [vmem:[#allocation2 + $0xa4] sm:$0x1]
    %v220 = vsel %vm179, 0, %v219
    %221 = vst [vmem:[#allocation2 + $0xa4] sm:$0x1] %v220
    %v222 = vld [vmem:[#allocation2 + $0xb0] sm:$0x1]
    %v223 = vsel %vm179, 0, %v222
    %224 = vst [vmem:[#allocation2 + $0xb0] sm:$0x1] %v223
    %v225 = vld [vmem:[#allocation2 + $0xbc] sm:$0x1]
    %v226 = vsel %vm179, 0, %v225
    %227 = vst [vmem:[#allocation2 + $0xbc] sm:$0x1] %v226
    %v228 = vld [vmem:[#allocation2 + $0xc8] sm:$0x1]
    %v229 = vsel %vm179, 0, %v228
    %230 = vst [vmem:[#allocation2 + $0xc8] sm:$0x1] %v229
    %v231 = vld [vmem:[#allocation2 + $0xd4] sm:$0x1]
    %v232 = vsel %vm179, 0, %v231
    %233 = vst [vmem:[#allocation2 + $0xd4] sm:$0x1] %v232
    %v234 = vld [vmem:[#allocation2 + $0xe0] sm:$0x1]
    %v235 = vsel %vm179, 0, %v234
    %236 = vst [vmem:[#allocation2 + $0xe0] sm:$0x1] %v235
    %v237 = vld [vmem:[#allocation2 + $0xec] sm:$0x1]
    %v238 = vsel %vm179, 0, %v237
    %239 = vst [vmem:[#allocation2 + $0xec] sm:$0x1] %v238
    %v240 = vld [vmem:[#allocation2 + $0xf8] sm:$0x1]
    %v241 = vsel %vm179, 0, %v240
    %242 = vst [vmem:[#allocation2 + $0xf8] sm:$0x1] %v241
    %v243 = vld [vmem:[#allocation2 + $0x104] sm:$0x1]
    %v244 = vsel %vm179, 0, %v243
    %245 = vst [vmem:[#allocation2 + $0x104] sm:$0x1] %v244
    %v246 = vld [vmem:[#allocation2 + $0x110] sm:$0x1]
    %v247 = vsel %vm179, 0, %v246
    %248 = vst [vmem:[#allocation2 + $0x110] sm:$0x1] %v247
    %v249 = vld [vmem:[#allocation2 + $0x11c] sm:$0x1]
    %v250 = vsel %vm179, 0, %v249
    %251 = vst [vmem:[#allocation2 + $0x11c] sm:$0x1] %v250
    %v252 = vld [vmem:[#allocation2 + $0x128] sm:$0x1]
    %v253 = vsel %vm179, 0, %v252
    %254 = vst [vmem:[#allocation2 + $0x128] sm:$0x1] %v253
    %v255 = vld [vmem:[#allocation2 + $0x134] sm:$0x1]
    %v256 = vsel %vm179, 0, %v255
    %257 = vst [vmem:[#allocation2 + $0x134] sm:$0x1] %v256
    %v258 = vld [vmem:[#allocation2 + $0x140] sm:$0x1]
    %v259 = vsel %vm179, 0, %v258
    %260 = vst [vmem:[#allocation2 + $0x140] sm:$0x1] %v259
    %v261 = vld [vmem:[#allocation2 + $0x14c] sm:$0x1]
    %v262 = vsel %vm179, 0, %v261
    %263 = vst [vmem:[#allocation2 + $0x14c] sm:$0x1] %v262
    %v264 = vld [vmem:[#allocation2 + $0x158] sm:$0x1]
    %v265 = vsel %vm179, 0, %v264
    %266 = vst [vmem:[#allocation2 + $0x158] sm:$0x1] %v265
    %v267 = vld [vmem:[#allocation2 + $0x164] sm:$0x1]
    %v268 = vsel %vm179, 0, %v267
    %269 = vst [vmem:[#allocation2 + $0x164] sm:$0x1] %v268
    %v270 = vld [vmem:[#allocation2 + $0x170] sm:$0x1]
    %v271 = vsel %vm179, 0, %v270
    %272 = vst [vmem:[#allocation2 + $0x170] sm:$0x1] %v271
    %v273 = vld [vmem:[#allocation2 + $0x17c] sm:$0x1]
    %v274 = vsel %vm179, 0, %v273
    %275 = vst [vmem:[#allocation2 + $0x17c] sm:$0x1] %v274
    %v276 = vld [vmem:[#allocation2 + $0x188] sm:$0x1]
    %v277 = vsel %vm179, 0, %v276
    %278 = vst [vmem:[#allocation2 + $0x188] sm:$0x1] %v277
    %v279 = vld [vmem:[#allocation2 + $0x194] sm:$0x1]
    %v280 = vsel %vm179, 0, %v279
    %281 = vst [vmem:[#allocation2 + $0x194] sm:$0x1] %v280
    %v282 = vld [vmem:[#allocation2 + $0x1a0] sm:$0x1]
    %v283 = vsel %vm179, 0, %v282
    %284 = vst [vmem:[#allocation2 + $0x1a0] sm:$0x1] %v283
    %v285 = vld [vmem:[#allocation2 + $0x1ac] sm:$0x1]
    %v286 = vsel %vm179, 0, %v285
    %287 = vst [vmem:[#allocation2 + $0x1ac] sm:$0x1] %v286
    %v288 = vld [vmem:[%s0] sm:$0xf]
    %v289 = vld [vmem:[%s0 + $0x4] sm:$0xf]
    %v290 = vld [vmem:[%s0 + $0x8] sm:$0xf]
    %v291 = vld [vmem:[%s0 + $0xc] sm:$0xf]
    %v292 = vld [vmem:[%s0 + $0x10] sm:$0xf]
    %v293 = vld [vmem:[%s0 + $0x14] sm:$0xf]
    %v294 = vld [vmem:[%s0 + $0x18] sm:$0xf]
    %v295 = vld [vmem:[%s0 + $0x1c] sm:$0xf]
    %v296 = vld [vmem:[%s0 + $0x20] sm:$0xf]
    %v297 = vld [vmem:[%s0 + $0x24] sm:$0xf]
    %v298 = vld [vmem:[%s0 + $0x28] sm:$0xf]
    %v299 = vld [vmem:[%s0 + $0x2c] sm:$0xf]
    %v300 = vld [vmem:[%s0 + $0x30] sm:$0xf]
    %v301 = vld [vmem:[%s0 + $0x34] sm:$0xf]
    %v302 = vld [vmem:[%s0 + $0x38] sm:$0xf]
    %v303 = vld [vmem:[%s0 + $0x3c] sm:$0xf]
    %v304 = vld [vmem:[%s0 + $0x40] sm:$0xf]
    %v305 = vld [vmem:[%s0 + $0x44] sm:$0xf]
    %v306 = vld [vmem:[%s0 + $0x48] sm:$0xf]
    %v307 = vld [vmem:[%s0 + $0x4c] sm:$0xf]
    %v308 = vld [vmem:[%s0 + $0x50] sm:$0xf]
    %v309 = vld [vmem:[%s0 + $0x54] sm:$0xf]
    %v310 = vld [vmem:[%s0 + $0x58] sm:$0xf]
    %v311 = vld [vmem:[%s0 + $0x5c] sm:$0xf]
    %v312 = vld [vmem:[%s0 + $0x60] sm:$0xf]
    %v313 = vld [vmem:[%s0 + $0x64] sm:$0xf]
    %v314 = vld [vmem:[%s0 + $0x68] sm:$0xf]
    %v315 = vld [vmem:[%s0 + $0x6c] sm:$0xf]
    %v316 = vld [vmem:[%s0 + $0x70] sm:$0xf]
    %v317 = vld [vmem:[%s0 + $0x74] sm:$0xf]
    %v318 = vld [vmem:[%s0 + $0x78] sm:$0xf]
    %v319 = vld [vmem:[%s0 + $0x7c] sm:$0xf]
    %v320 = vld [vmem:[%s0 + $0x80] sm:$0xf]
    %v321 = vld [vmem:[%s0 + $0x84] sm:$0xf]
    %v322 = vld [vmem:[%s0 + $0x88] sm:$0xf]
    %v323 = vld [vmem:[%s0 + $0x8c] sm:$0xf]
    %v324 = vld [vmem:[%s0 + $0x90] sm:$0xf]
    %v325 = vld [vmem:[%s0 + $0x94] sm:$0xf]
    %v326 = vld [vmem:[%s0 + $0x98] sm:$0xf]
    %v327 = vld [vmem:[%s0 + $0x9c] sm:$0xf]
    %v328 = vld [vmem:[%s0 + $0xa0] sm:$0xf]
    %v329 = vld [vmem:[%s0 + $0xa4] sm:$0xf]
    %v330 = vld [vmem:[%s0 + $0xa8] sm:$0xf]
    %v331 = vld [vmem:[%s0 + $0xac] sm:$0xf]
    %v332 = vld [vmem:[%s0 + $0xb0] sm:$0xf]
    %v333 = vld [vmem:[%s0 + $0xb4] sm:$0xf]
    %v334 = vld [vmem:[%s0 + $0xb8] sm:$0xf]
    %v335 = vld [vmem:[%s0 + $0xbc] sm:$0xf]
    %v336 = vld [vmem:[%s0 + $0xc0] sm:$0xf]
    %v337 = vld [vmem:[%s0 + $0xc4] sm:$0xf]
    %v338 = vld [vmem:[%s0 + $0xc8] sm:$0xf]
    %v339 = vld [vmem:[%s0 + $0xcc] sm:$0xf]
    %v340 = vld [vmem:[%s0 + $0xd0] sm:$0xf]
    %v341 = vld [vmem:[%s0 + $0xd4] sm:$0xf]
    %v342 = vld [vmem:[%s0 + $0xd8] sm:$0xf]
    %v343 = vld [vmem:[%s0 + $0xdc] sm:$0xf]
    %v344 = vld [vmem:[%s0 + $0xe0] sm:$0xf]
    %v345 = vld [vmem:[%s0 + $0xe4] sm:$0xf]
    %v346 = vld [vmem:[%s0 + $0xe8] sm:$0xf]
    %v347 = vld [vmem:[%s0 + $0xec] sm:$0xf]
    %v348 = vld [vmem:[%s0 + $0xf0] sm:$0xf]
    %v349 = vld [vmem:[%s0 + $0xf4] sm:$0xf]
    %v350 = vld [vmem:[%s0 + $0xf8] sm:$0xf]
    %v351 = vld [vmem:[%s0 + $0xfc] sm:$0xf]
    %vm352 = vsmask.f32 4368
    %vm353 = vmor %vm68, %vm352
    %v355 = vshrl.u32 %v288, 16
    %v357 = vrot.slane %v355, 7
    %v358 = vshll.u32 %v288, 16
    %v360 = vor.u32 %v357, %v358
    %v361 = vrot.slane %v357, 4
    %v363 = vshrl.u32 %v289, 16
    %v365 = vrot.slane %v363, 7
    %v366 = vshll.u32 %v289, 16
    %v368 = vor.u32 %v365, %v366
    %v369 = vsel %vm353, %v361, %v368
    %v370 = vrot.slane %v365, 4
    %v372 = vshrl.u32 %v290, 16
    %v374 = vrot.slane %v372, 7
    %v375 = vshll.u32 %v290, 16
    %v377 = vor.u32 %v374, %v375
    %v378 = vrot.slane %v374, 4
    %v380 = vshrl.u32 %v291, 16
    %v382 = vrot.slane %v380, 7
    %v383 = vshll.u32 %v291, 16
    %v385 = vor.u32 %v382, %v383
    %v386 = vsel %vm353, %v378, %v385
    %v387 = vrot.slane %v382, 4
    %v389 = vshrl.u32 %v292, 16
    %v391 = vrot.slane %v389, 7
    %v392 = vshll.u32 %v292, 16
    %v394 = vor.u32 %v391, %v392
    %v395 = vrot.slane %v391, 4
    %v397 = vshrl.u32 %v293, 16
    %v399 = vrot.slane %v397, 7
    %v400 = vshll.u32 %v293, 16
    %v402 = vor.u32 %v399, %v400
    %v403 = vsel %vm353, %v395, %v402
    %v404 = vrot.slane %v399, 4
    %v406 = vshrl.u32 %v294, 16
    %v408 = vrot.slane %v406, 7
    %v409 = vshll.u32 %v294, 16
    %v411 = vor.u32 %v408, %v409
    %v412 = vrot.slane %v408, 4
    %v414 = vshrl.u32 %v295, 16
    %v416 = vrot.slane %v414, 7
    %v417 = vshll.u32 %v295, 16
    %v419 = vor.u32 %v416, %v417
    %v420 = vsel %vm353, %v412, %v419
    %v421 = vrot.slane %v416, 4
    %v423 = vshrl.u32 %v296, 16
    %v425 = vrot.slane %v423, 7
    %v426 = vshll.u32 %v296, 16
    %v428 = vor.u32 %v425, %v426
    %v429 = vrot.slane %v425, 4
    %v431 = vshrl.u32 %v297, 16
    %v433 = vrot.slane %v431, 7
    %v434 = vshll.u32 %v297, 16
    %v436 = vor.u32 %v433, %v434
    %v437 = vsel %vm353, %v429, %v436
    %v438 = vrot.slane %v433, 4
    %v440 = vshrl.u32 %v298, 16
    %v442 = vrot.slane %v440, 7
    %v443 = vshll.u32 %v298, 16
    %v445 = vor.u32 %v442, %v443
    %v446 = vrot.slane %v442, 4
    %v448 = vshrl.u32 %v299, 16
    %v450 = vrot.slane %v448, 7
    %v451 = vshll.u32 %v299, 16
    %v453 = vor.u32 %v450, %v451
    %v454 = vsel %vm353, %v446, %v453
    %v455 = vrot.slane %v450, 4
    %v457 = vshrl.u32 %v300, 16
    %v459 = vrot.slane %v457, 7
    %v460 = vshll.u32 %v300, 16
    %v462 = vor.u32 %v459, %v460
    %v463 = vrot.slane %v459, 4
    %v465 = vshrl.u32 %v301, 16
    %v467 = vrot.slane %v465, 7
    %v468 = vshll.u32 %v301, 16
    %v470 = vor.u32 %v467, %v468
    %v471 = vsel %vm353, %v463, %v470
    %v472 = vrot.slane %v467, 4
    %v474 = vshrl.u32 %v302, 16
    %v476 = vrot.slane %v474, 7
    %v477 = vshll.u32 %v302, 16
    %v479 = vor.u32 %v476, %v477
    %v480 = vrot.slane %v476, 4
    %v482 = vshrl.u32 %v303, 16
    %v484 = vrot.slane %v482, 7
    %v485 = vshll.u32 %v303, 16
    %v487 = vor.u32 %v484, %v485
    %v488 = vsel %vm353, %v480, %v487
    %v489 = vrot.slane %v484, 4
    %v491 = vshrl.u32 %v304, 16
    %v493 = vrot.slane %v491, 7
    %v494 = vshll.u32 %v304, 16
    %v496 = vor.u32 %v493, %v494
    %v497 = vrot.slane %v493, 4
    %v499 = vshrl.u32 %v305, 16
    %v501 = vrot.slane %v499, 7
    %v502 = vshll.u32 %v305, 16
    %v504 = vor.u32 %v501, %v502
    %v505 = vsel %vm353, %v497, %v504
    %v506 = vrot.slane %v501, 4
    %v508 = vshrl.u32 %v306, 16
    %v510 = vrot.slane %v508, 7
    %v511 = vshll.u32 %v306, 16
    %v513 = vor.u32 %v510, %v511
    %v514 = vrot.slane %v510, 4
    %v516 = vshrl.u32 %v307, 16
    %v518 = vrot.slane %v516, 7
    %v519 = vshll.u32 %v307, 16
    %v521 = vor.u32 %v518, %v519
    %v522 = vsel %vm353, %v514, %v521
    %v523 = vrot.slane %v518, 4
    %v525 = vshrl.u32 %v308, 16
    %v527 = vrot.slane %v525, 7
    %v528 = vshll.u32 %v308, 16
    %v530 = vor.u32 %v527, %v528
    %v531 = vrot.slane %v527, 4
    %v533 = vshrl.u32 %v309, 16
    %v535 = vrot.slane %v533, 7
    %v536 = vshll.u32 %v309, 16
    %v538 = vor.u32 %v535, %v536
    %v539 = vsel %vm353, %v531, %v538
    %v540 = vrot.slane %v535, 4
    %v542 = vshrl.u32 %v310, 16
    %v544 = vrot.slane %v542, 7
    %v545 = vshll.u32 %v310, 16
    %v547 = vor.u32 %v544, %v545
    %v548 = vrot.slane %v544, 4
    %v550 = vshrl.u32 %v311, 16
    %v552 = vrot.slane %v550, 7
    %v553 = vshll.u32 %v311, 16
    %v555 = vor.u32 %v552, %v553
    %v556 = vsel %vm353, %v548, %v555
    %v557 = vrot.slane %v552, 4
    %v559 = vshrl.u32 %v312, 16
    %v561 = vrot.slane %v559, 7
    %v562 = vshll.u32 %v312, 16
    %v564 = vor.u32 %v561, %v562
    %v565 = vrot.slane %v561, 4
    %v567 = vshrl.u32 %v313, 16
    %v569 = vrot.slane %v567, 7
    %v570 = vshll.u32 %v313, 16
    %v572 = vor.u32 %v569, %v570
    %v573 = vsel %vm353, %v565, %v572
    %v574 = vrot.slane %v569, 4
    %v576 = vshrl.u32 %v314, 16
    %v578 = vrot.slane %v576, 7
    %v579 = vshll.u32 %v314, 16
    %v581 = vor.u32 %v578, %v579
    %v582 = vrot.slane %v578, 4
    %v584 = vshrl.u32 %v315, 16
    %v586 = vrot.slane %v584, 7
    %v587 = vshll.u32 %v315, 16
    %v589 = vor.u32 %v586, %v587
    %v590 = vsel %vm353, %v582, %v589
    %v591 = vrot.slane %v586, 4
    %v593 = vshrl.u32 %v316, 16
    %v595 = vrot.slane %v593, 7
    %v596 = vshll.u32 %v316, 16
    %v598 = vor.u32 %v595, %v596
    %v599 = vrot.slane %v595, 4
    %v601 = vshrl.u32 %v317, 16
    %v603 = vrot.slane %v601, 7
    %v604 = vshll.u32 %v317, 16
    %v606 = vor.u32 %v603, %v604
    %v607 = vsel %vm353, %v599, %v606
    %v608 = vrot.slane %v603, 4
    %v610 = vshrl.u32 %v318, 16
    %v612 = vrot.slane %v610, 7
    %v613 = vshll.u32 %v318, 16
    %v615 = vor.u32 %v612, %v613
    %v616 = vrot.slane %v612, 4
    %v618 = vshrl.u32 %v319, 16
    %v620 = vrot.slane %v618, 7
    %v621 = vshll.u32 %v319, 16
    %v623 = vor.u32 %v620, %v621
    %v624 = vsel %vm353, %v616, %v623
    %v625 = vrot.slane %v620, 4
    %v627 = vshrl.u32 %v320, 16
    %v629 = vrot.slane %v627, 7
    %v630 = vshll.u32 %v320, 16
    %v632 = vor.u32 %v629, %v630
    %v633 = vrot.slane %v629, 4
    %v635 = vshrl.u32 %v321, 16
    %v637 = vrot.slane %v635, 7
    %v638 = vshll.u32 %v321, 16
    %v640 = vor.u32 %v637, %v638
    %v641 = vsel %vm353, %v633, %v640
    %v642 = vrot.slane %v637, 4
    %v644 = vshrl.u32 %v322, 16
    %v646 = vrot.slane %v644, 7
    %v647 = vshll.u32 %v322, 16
    %v649 = vor.u32 %v646, %v647
    %v650 = vrot.slane %v646, 4
    %v652 = vshrl.u32 %v323, 16
    %v654 = vrot.slane %v652, 7
    %v655 = vshll.u32 %v323, 16
    %v657 = vor.u32 %v654, %v655
    %v658 = vsel %vm353, %v650, %v657
    %v659 = vrot.slane %v654, 4
    %v661 = vshrl.u32 %v324, 16
    %v663 = vrot.slane %v661, 7
    %v664 = vshll.u32 %v324, 16
    %v666 = vor.u32 %v663, %v664
    %v667 = vrot.slane %v663, 4
    %v669 = vshrl.u32 %v325, 16
    %v671 = vrot.slane %v669, 7
    %v672 = vshll.u32 %v325, 16
    %v674 = vor.u32 %v671, %v672
    %v675 = vsel %vm353, %v667, %v674
    %v676 = vrot.slane %v671, 4
    %v678 = vshrl.u32 %v326, 16
    %v680 = vrot.slane %v678, 7
    %v681 = vshll.u32 %v326, 16
    %v683 = vor.u32 %v680, %v681
    %v684 = vrot.slane %v680, 4
    %v686 = vshrl.u32 %v327, 16
    %v688 = vrot.slane %v686, 7
    %v689 = vshll.u32 %v327, 16
    %v691 = vor.u32 %v688, %v689
    %v692 = vsel %vm353, %v684, %v691
    %v693 = vrot.slane %v688, 4
    %v695 = vshrl.u32 %v328, 16
    %v697 = vrot.slane %v695, 7
    %v698 = vshll.u32 %v328, 16
    %v700 = vor.u32 %v697, %v698
    %v701 = vrot.slane %v697, 4
    %v703 = vshrl.u32 %v329, 16
    %v705 = vrot.slane %v703, 7
    %v706 = vshll.u32 %v329, 16
    %v708 = vor.u32 %v705, %v706
    %v709 = vsel %vm353, %v701, %v708
    %v710 = vrot.slane %v705, 4
    %v712 = vshrl.u32 %v330, 16
    %v714 = vrot.slane %v712, 7
    %v715 = vshll.u32 %v330, 16
    %v717 = vor.u32 %v714, %v715
    %v718 = vrot.slane %v714, 4
    %v720 = vshrl.u32 %v331, 16
    %v722 = vrot.slane %v720, 7
    %v723 = vshll.u32 %v331, 16
    %v725 = vor.u32 %v722, %v723
    %v726 = vsel %vm353, %v718, %v725
    %v727 = vrot.slane %v722, 4
    %v729 = vshrl.u32 %v332, 16
    %v731 = vrot.slane %v729, 7
    %v732 = vshll.u32 %v332, 16
    %v734 = vor.u32 %v731, %v732
    %v735 = vrot.slane %v731, 4
    %v737 = vshrl.u32 %v333, 16
    %v739 = vrot.slane %v737, 7
    %v740 = vshll.u32 %v333, 16
    %v742 = vor.u32 %v739, %v740
    %v743 = vsel %vm353, %v735, %v742
    %v744 = vrot.slane %v739, 4
    %v746 = vshrl.u32 %v334, 16
    %v748 = vrot.slane %v746, 7
    %v749 = vshll.u32 %v334, 16
    %v751 = vor.u32 %v748, %v749
    %v752 = vrot.slane %v748, 4
    %v754 = vshrl.u32 %v335, 16
    %v756 = vrot.slane %v754, 7
    %v757 = vshll.u32 %v335, 16
    %v759 = vor.u32 %v756, %v757
    %v760 = vsel %vm353, %v752, %v759
    %v761 = vrot.slane %v756, 4
    %v763 = vshrl.u32 %v336, 16
    %v765 = vrot.slane %v763, 7
    %v766 = vshll.u32 %v336, 16
    %v768 = vor.u32 %v765, %v766
    %v769 = vrot.slane %v765, 4
    %v771 = vshrl.u32 %v337, 16
    %v773 = vrot.slane %v771, 7
    %v774 = vshll.u32 %v337, 16
    %v776 = vor.u32 %v773, %v774
    %v777 = vsel %vm353, %v769, %v776
    %v778 = vrot.slane %v773, 4
    %v780 = vshrl.u32 %v338, 16
    %v782 = vrot.slane %v780, 7
    %v783 = vshll.u32 %v338, 16
    %v785 = vor.u32 %v782, %v783
    %v786 = vrot.slane %v782, 4
    %v788 = vshrl.u32 %v339, 16
    %v790 = vrot.slane %v788, 7
    %v791 = vshll.u32 %v339, 16
    %v793 = vor.u32 %v790, %v791
    %v794 = vsel %vm353, %v786, %v793
    %v795 = vrot.slane %v790, 4
    %v797 = vshrl.u32 %v340, 16
    %v799 = vrot.slane %v797, 7
    %v800 = vshll.u32 %v340, 16
    %v802 = vor.u32 %v799, %v800
    %v803 = vrot.slane %v799, 4
    %v805 = vshrl.u32 %v341, 16
    %v807 = vrot.slane %v805, 7
    %v808 = vshll.u32 %v341, 16
    %v810 = vor.u32 %v807, %v808
    %v811 = vsel %vm353, %v803, %v810
    %v812 = vrot.slane %v807, 4
    %v814 = vshrl.u32 %v342, 16
    %v816 = vrot.slane %v814, 7
    %v817 = vshll.u32 %v342, 16
    %v819 = vor.u32 %v816, %v817
    %v820 = vrot.slane %v816, 4
    %v822 = vshrl.u32 %v343, 16
    %v824 = vrot.slane %v822, 7
    %v825 = vshll.u32 %v343, 16
    %v827 = vor.u32 %v824, %v825
    %v828 = vsel %vm353, %v820, %v827
    %v829 = vrot.slane %v824, 4
    %v831 = vshrl.u32 %v344, 16
    %v833 = vrot.slane %v831, 7
    %v834 = vshll.u32 %v344, 16
    %v836 = vor.u32 %v833, %v834
    %v837 = vrot.slane %v833, 4
    %v839 = vshrl.u32 %v345, 16
    %v841 = vrot.slane %v839, 7
    %v842 = vshll.u32 %v345, 16
    %v844 = vor.u32 %v841, %v842
    %v845 = vsel %vm353, %v837, %v844
    %v846 = vrot.slane %v841, 4
    %v848 = vshrl.u32 %v346, 16
    %v850 = vrot.slane %v848, 7
    %v851 = vshll.u32 %v346, 16
    %v853 = vor.u32 %v850, %v851
    %v854 = vrot.slane %v850, 4
    %v856 = vshrl.u32 %v347, 16
    %v858 = vrot.slane %v856, 7
    %v859 = vshll.u32 %v347, 16
    %v861 = vor.u32 %v858, %v859
    %v862 = vsel %vm353, %v854, %v861
    %v863 = vrot.slane %v858, 4
    %v865 = vshrl.u32 %v348, 16
    %v867 = vrot.slane %v865, 7
    %v868 = vshll.u32 %v348, 16
    %v870 = vor.u32 %v867, %v868
    %v871 = vrot.slane %v867, 4
    %v873 = vshrl.u32 %v349, 16
    %v875 = vrot.slane %v873, 7
    %v876 = vshll.u32 %v349, 16
    %v878 = vor.u32 %v875, %v876
    %v879 = vsel %vm353, %v871, %v878
    %v880 = vrot.slane %v875, 4
    %v882 = vshrl.u32 %v350, 16
    %v884 = vrot.slane %v882, 7
    %v885 = vshll.u32 %v350, 16
    %v887 = vor.u32 %v884, %v885
    %v888 = vrot.slane %v884, 4
    %v890 = vshrl.u32 %v351, 16
    %v892 = vrot.slane %v890, 7
    %v893 = vshll.u32 %v351, 16
    %v895 = vor.u32 %v892, %v893
    %v896 = vsel %vm353, %v888, %v895
    %v897 = vrot.slane %v892, 4
    %s994 = scalar_lea.vmem [#allocation2], 12
    %vm995 = vcmask 27648
    %vm996 = vmand %vm995, %vm178
    %v997 = vld [vmem:[%s994] sm:$0xf]
    %v998 = vsel %vm996, %v360, %v997
    %999 = vst [vmem:[%s994] sm:$0xf] %v998
    %1000 = vst.msk [vmem:[%s994 + $0x4] sm:$0xf] %vm52, %v369
    %v1001 = vld [vmem:[%s994 + $0x8] sm:$0x1]
    %v1002 = vsel %vm69, %v370, %v1001
    %1003 = vst [vmem:[%s994 + $0x8] sm:$0x1] %v1002
    %v1004 = vld [vmem:[%s994 + $0xc] sm:$0xf]
    %v1005 = vsel %vm996, %v377, %v1004
    %1006 = vst [vmem:[%s994 + $0xc] sm:$0xf] %v1005
    %1007 = vst.msk [vmem:[%s994 + $0x10] sm:$0xf] %vm52, %v386
    %v1008 = vld [vmem:[%s994 + $0x14] sm:$0x1]
    %v1009 = vsel %vm69, %v387, %v1008
    %1010 = vst [vmem:[%s994 + $0x14] sm:$0x1] %v1009
    %v1011 = vld [vmem:[%s994 + $0x18] sm:$0xf]
    %v1012 = vsel %vm996, %v394, %v1011
    %1013 = vst [vmem:[%s994 + $0x18] sm:$0xf] %v1012
    %1014 = vst.msk [vmem:[%s994 + $0x1c] sm:$0xf] %vm52, %v403
    %v1015 = vld [vmem:[%s994 + $0x20] sm:$0x1]
    %v1016 = vsel %vm69, %v404, %v1015
    %1017 = vst [vmem:[%s994 + $0x20] sm:$0x1] %v1016
    %v1018 = vld [vmem:[%s994 + $0x24] sm:$0xf]
    %v1019 = vsel %vm996, %v411, %v1018
    %1020 = vst [vmem:[%s994 + $0x24] sm:$0xf] %v1019
    %1021 = vst.msk [vmem:[%s994 + $0x28] sm:$0xf] %vm52, %v420
    %v1022 = vld [vmem:[%s994 + $0x2c] sm:$0x1]
    %v1023 = vsel %vm69, %v421, %v1022
    %1024 = vst [vmem:[%s994 + $0x2c] sm:$0x1] %v1023
    %v1025 = vld [vmem:[%s994 + $0x30] sm:$0xf]
    %v1026 = vsel %vm996, %v428, %v1025
    %1027 = vst [vmem:[%s994 + $0x30] sm:$0xf] %v1026
    %1028 = vst.msk [vmem:[%s994 + $0x34] sm:$0xf] %vm52, %v437
    %v1029 = vld [vmem:[%s994 + $0x38] sm:$0x1]
    %v1030 = vsel %vm69, %v438, %v1029
    %1031 = vst [vmem:[%s994 + $0x38] sm:$0x1] %v1030
    %v1032 = vld [vmem:[%s994 + $0x3c] sm:$0xf]
    %v1033 = vsel %vm996, %v445, %v1032
    %1034 = vst [vmem:[%s994 + $0x3c] sm:$0xf] %v1033
    %1035 = vst.msk [vmem:[%s994 + $0x40] sm:$0xf] %vm52, %v454
    %v1036 = vld [vmem:[%s994 + $0x44] sm:$0x1]
    %v1037 = vsel %vm69, %v455, %v1036
    %1038 = vst [vmem:[%s994 + $0x44] sm:$0x1] %v1037
    %v1039 = vld [vmem:[%s994 + $0x48] sm:$0xf]
    %v1040 = vsel %vm996, %v462, %v1039
    %1041 = vst [vmem:[%s994 + $0x48] sm:$0xf] %v1040
    %1042 = vst.msk [vmem:[%s994 + $0x4c] sm:$0xf] %vm52, %v471
    %v1043 = vld [vmem:[%s994 + $0x50] sm:$0x1]
    %v1044 = vsel %vm69, %v472, %v1043
    %1045 = vst [vmem:[%s994 + $0x50] sm:$0x1] %v1044
    %v1046 = vld [vmem:[%s994 + $0x54] sm:$0xf]
    %v1047 = vsel %vm996, %v479, %v1046
    %1048 = vst [vmem:[%s994 + $0x54] sm:$0xf] %v1047
    %1049 = vst.msk [vmem:[%s994 + $0x58] sm:$0xf] %vm52, %v488
    %v1050 = vld [vmem:[%s994 + $0x5c] sm:$0x1]
    %v1051 = vsel %vm69, %v489, %v1050
    %1052 = vst [vmem:[%s994 + $0x5c] sm:$0x1] %v1051
    %v1053 = vld [vmem:[%s994 + $0x60] sm:$0xf]
    %v1054 = vsel %vm996, %v496, %v1053
    %1055 = vst [vmem:[%s994 + $0x60] sm:$0xf] %v1054
    %1056 = vst.msk [vmem:[%s994 + $0x64] sm:$0xf] %vm52, %v505
    %v1057 = vld [vmem:[%s994 + $0x68] sm:$0x1]
    %v1058 = vsel %vm69, %v506, %v1057
    %1059 = vst [vmem:[%s994 + $0x68] sm:$0x1] %v1058
    %v1060 = vld [vmem:[%s994 + $0x6c] sm:$0xf]
    %v1061 = vsel %vm996, %v513, %v1060
    %1062 = vst [vmem:[%s994 + $0x6c] sm:$0xf] %v1061
    %1063 = vst.msk [vmem:[%s994 + $0x70] sm:$0xf] %vm52, %v522
    %v1064 = vld [vmem:[%s994 + $0x74] sm:$0x1]
    %v1065 = vsel %vm69, %v523, %v1064
    %1066 = vst [vmem:[%s994 + $0x74] sm:$0x1] %v1065
    %v1067 = vld [vmem:[%s994 + $0x78] sm:$0xf]
    %v1068 = vsel %vm996, %v530, %v1067
    %1069 = vst [vmem:[%s994 + $0x78] sm:$0xf] %v1068
    %1070 = vst.msk [vmem:[%s994 + $0x7c] sm:$0xf] %vm52, %v539
    %v1071 = vld [vmem:[%s994 + $0x80] sm:$0x1]
    %v1072 = vsel %vm69, %v540, %v1071
    %1073 = vst [vmem:[%s994 + $0x80] sm:$0x1] %v1072
    %v1074 = vld [vmem:[%s994 + $0x84] sm:$0xf]
    %v1075 = vsel %vm996, %v547, %v1074
    %1076 = vst [vmem:[%s994 + $0x84] sm:$0xf] %v1075
    %1077 = vst.msk [vmem:[%s994 + $0x88] sm:$0xf] %vm52, %v556
    %v1078 = vld [vmem:[%s994 + $0x8c] sm:$0x1]
    %v1079 = vsel %vm69, %v557, %v1078
    %1080 = vst [vmem:[%s994 + $0x8c] sm:$0x1] %v1079
    %v1081 = vld [vmem:[%s994 + $0x90] sm:$0xf]
    %v1082 = vsel %vm996, %v564, %v1081
    %1083 = vst [vmem:[%s994 + $0x90] sm:$0xf] %v1082
    %1084 = vst.msk [vmem:[%s994 + $0x94] sm:$0xf] %vm52, %v573
    %v1085 = vld [vmem:[%s994 + $0x98] sm:$0x1]
    %v1086 = vsel %vm69, %v574, %v1085
    %1087 = vst [vmem:[%s994 + $0x98] sm:$0x1] %v1086
    %v1088 = vld [vmem:[%s994 + $0x9c] sm:$0xf]
    %v1089 = vsel %vm996, %v581, %v1088
    %1090 = vst [vmem:[%s994 + $0x9c] sm:$0xf] %v1089
    %1091 = vst.msk [vmem:[%s994 + $0xa0] sm:$0xf] %vm52, %v590
    %v1092 = vld [vmem:[%s994 + $0xa4] sm:$0x1]
    %v1093 = vsel %vm69, %v591, %v1092
    %1094 = vst [vmem:[%s994 + $0xa4] sm:$0x1] %v1093
    %v1095 = vld [vmem:[%s994 + $0xa8] sm:$0xf]
    %v1096 = vsel %vm996, %v598, %v1095
    %1097 = vst [vmem:[%s994 + $0xa8] sm:$0xf] %v1096
    %1098 = vst.msk [vmem:[%s994 + $0xac] sm:$0xf] %vm52, %v607
    %v1099 = vld [vmem:[%s994 + $0xb0] sm:$0x1]
    %v1100 = vsel %vm69, %v608, %v1099
    %1101 = vst [vmem:[%s994 + $0xb0] sm:$0x1] %v1100
    %v1102 = vld [vmem:[%s994 + $0xb4] sm:$0xf]
    %v1103 = vsel %vm996, %v615, %v1102
    %1104 = vst [vmem:[%s994 + $0xb4] sm:$0xf] %v1103
    %1105 = vst.msk [vmem:[%s994 + $0xb8] sm:$0xf] %vm52, %v624
    %v1106 = vld [vmem:[%s994 + $0xbc] sm:$0x1]
    %v1107 = vsel %vm69, %v625, %v1106
    %1108 = vst [vmem:[%s994 + $0xbc] sm:$0x1] %v1107
    %v1109 = vld [vmem:[%s994 + $0xd8] sm:$0xf]
    %v1110 = vsel %vm996, %v632, %v1109
    %1111 = vst [vmem:[%s994 + $0xd8] sm:$0xf] %v1110
    %1112 = vst.msk [vmem:[%s994 + $0xdc] sm:$0xf] %vm52, %v641
    %v1113 = vld [vmem:[%s994 + $0xe0] sm:$0x1]
    %v1114 = vsel %vm69, %v642, %v1113
    %1115 = vst [vmem:[%s994 + $0xe0] sm:$0x1] %v1114
    %v1116 = vld [vmem:[%s994 + $0xe4] sm:$0xf]
    %v1117 = vsel %vm996, %v649, %v1116
    %1118 = vst [vmem:[%s994 + $0xe4] sm:$0xf] %v1117
    %1119 = vst.msk [vmem:[%s994 + $0xe8] sm:$0xf] %vm52, %v658
    %v1120 = vld [vmem:[%s994 + $0xec] sm:$0x1]
    %v1121 = vsel %vm69, %v659, %v1120
    %1122 = vst [vmem:[%s994 + $0xec] sm:$0x1] %v1121
    %v1123 = vld [vmem:[%s994 + $0xf0] sm:$0xf]
    %v1124 = vsel %vm996, %v666, %v1123
    %1125 = vst [vmem:[%s994 + $0xf0] sm:$0xf] %v1124
    %1126 = vst.msk [vmem:[%s994 + $0xf4] sm:$0xf] %vm52, %v675
    %v1127 = vld [vmem:[%s994 + $0xf8] sm:$0x1]
    %v1128 = vsel %vm69, %v676, %v1127
    %1129 = vst [vmem:[%s994 + $0xf8] sm:$0x1] %v1128
    %v1130 = vld [vmem:[%s994 + $0xfc] sm:$0xf]
    %v1131 = vsel %vm996, %v683, %v1130
    %1132 = vst [vmem:[%s994 + $0xfc] sm:$0xf] %v1131
    %1133 = vst.msk [vmem:[%s994 + $0x100] sm:$0xf] %vm52, %v692
    %v1134 = vld [vmem:[%s994 + $0x104] sm:$0x1]
    %v1135 = vsel %vm69, %v693, %v1134
    %1136 = vst [vmem:[%s994 + $0x104] sm:$0x1] %v1135
    %v1137 = vld [vmem:[%s994 + $0x108] sm:$0xf]
    %v1138 = vsel %vm996, %v700, %v1137
    %1139 = vst [vmem:[%s994 + $0x108] sm:$0xf] %v1138
    %1140 = vst.msk [vmem:[%s994 + $0x10c] sm:$0xf] %vm52, %v709
    %v1141 = vld [vmem:[%s994 + $0x110] sm:$0x1]
    %v1142 = vsel %vm69, %v710, %v1141
    %1143 = vst [vmem:[%s994 + $0x110] sm:$0x1] %v1142
    %v1144 = vld [vmem:[%s994 + $0x114] sm:$0xf]
    %v1145 = vsel %vm996, %v717, %v1144
    %1146 = vst [vmem:[%s994 + $0x114] sm:$0xf] %v1145
    %1147 = vst.msk [vmem:[%s994 + $0x118] sm:$0xf] %vm52, %v726
    %v1148 = vld [vmem:[%s994 + $0x11c] sm:$0x1]
    %v1149 = vsel %vm69, %v727, %v1148
    %1150 = vst [vmem:[%s994 + $0x11c] sm:$0x1] %v1149
    %v1151 = vld [vmem:[%s994 + $0x120] sm:$0xf]
    %v1152 = vsel %vm996, %v734, %v1151
    %1153 = vst [vmem:[%s994 + $0x120] sm:$0xf] %v1152
    %1154 = vst.msk [vmem:[%s994 + $0x124] sm:$0xf] %vm52, %v743
    %v1155 = vld [vmem:[%s994 + $0x128] sm:$0x1]
    %v1156 = vsel %vm69, %v744, %v1155
    %1157 = vst [vmem:[%s994 + $0x128] sm:$0x1] %v1156
    %v1158 = vld [vmem:[%s994 + $0x12c] sm:$0xf]
    %v1159 = vsel %vm996, %v751, %v1158
    %1160 = vst [vmem:[%s994 + $0x12c] sm:$0xf] %v1159
    %1161 = vst.msk [vmem:[%s994 + $0x130] sm:$0xf] %vm52, %v760
    %v1162 = vld [vmem:[%s994 + $0x134] sm:$0x1]
    %v1163 = vsel %vm69, %v761, %v1162
    %1164 = vst [vmem:[%s994 + $0x134] sm:$0x1] %v1163
    %v1165 = vld [vmem:[%s994 + $0x138] sm:$0xf]
    %v1166 = vsel %vm996, %v768, %v1165
    %1167 = vst [vmem:[%s994 + $0x138] sm:$0xf] %v1166
    %1168 = vst.msk [vmem:[%s994 + $0x13c] sm:$0xf] %vm52, %v777
    %v1169 = vld [vmem:[%s994 + $0x140] sm:$0x1]
    %v1170 = vsel %vm69, %v778, %v1169
    %1171 = vst [vmem:[%s994 + $0x140] sm:$0x1] %v1170
    %v1172 = vld [vmem:[%s994 + $0x144] sm:$0xf]
    %v1173 = vsel %vm996, %v785, %v1172
    %1174 = vst [vmem:[%s994 + $0x144] sm:$0xf] %v1173
    %1175 = vst.msk [vmem:[%s994 + $0x148] sm:$0xf] %vm52, %v794
    %v1176 = vld [vmem:[%s994 + $0x14c] sm:$0x1]
    %v1177 = vsel %vm69, %v795, %v1176
    %1178 = vst [vmem:[%s994 + $0x14c] sm:$0x1] %v1177
    %v1179 = vld [vmem:[%s994 + $0x150] sm:$0xf]
    %v1180 = vsel %vm996, %v802, %v1179
    %1181 = vst [vmem:[%s994 + $0x150] sm:$0xf] %v1180
    %1182 = vst.msk [vmem:[%s994 + $0x154] sm:$0xf] %vm52, %v811
    %v1183 = vld [vmem:[%s994 + $0x158] sm:$0x1]
    %v1184 = vsel %vm69, %v812, %v1183
    %1185 = vst [vmem:[%s994 + $0x158] sm:$0x1] %v1184
    %v1186 = vld [vmem:[%s994 + $0x15c] sm:$0xf]
    %v1187 = vsel %vm996, %v819, %v1186
    %1188 = vst [vmem:[%s994 + $0x15c] sm:$0xf] %v1187
    %1189 = vst.msk [vmem:[%s994 + $0x160] sm:$0xf] %vm52, %v828
    %v1190 = vld [vmem:[%s994 + $0x164] sm:$0x1]
    %v1191 = vsel %vm69, %v829, %v1190
    %1192 = vst [vmem:[%s994 + $0x164] sm:$0x1] %v1191
    %v1193 = vld [vmem:[%s994 + $0x168] sm:$0xf]
    %v1194 = vsel %vm996, %v836, %v1193
    %1195 = vst [vmem:[%s994 + $0x168] sm:$0xf] %v1194
    %1196 = vst.msk [vmem:[%s994 + $0x16c] sm:$0xf] %vm52, %v845
    %v1197 = vld [vmem:[%s994 + $0x170] sm:$0x1]
    %v1198 = vsel %vm69, %v846, %v1197
    %1199 = vst [vmem:[%s994 + $0x170] sm:$0x1] %v1198
    %v1200 = vld [vmem:[%s994 + $0x174] sm:$0xf]
    %v1201 = vsel %vm996, %v853, %v1200
    %1202 = vst [vmem:[%s994 + $0x174] sm:$0xf] %v1201
    %1203 = vst.msk [vmem:[%s994 + $0x178] sm:$0xf] %vm52, %v862
    %v1204 = vld [vmem:[%s994 + $0x17c] sm:$0x1]
    %v1205 = vsel %vm69, %v863, %v1204
    %1206 = vst [vmem:[%s994 + $0x17c] sm:$0x1] %v1205
    %v1207 = vld [vmem:[%s994 + $0x180] sm:$0xf]
    %v1208 = vsel %vm996, %v870, %v1207
    %1209 = vst [vmem:[%s994 + $0x180] sm:$0xf] %v1208
    %1210 = vst.msk [vmem:[%s994 + $0x184] sm:$0xf] %vm52, %v879
    %v1211 = vld [vmem:[%s994 + $0x188] sm:$0x1]
    %v1212 = vsel %vm69, %v880, %v1211
    %1213 = vst [vmem:[%s994 + $0x188] sm:$0x1] %v1212
    %v1214 = vld [vmem:[%s994 + $0x18c] sm:$0xf]
    %v1215 = vsel %vm996, %v887, %v1214
    %1216 = vst [vmem:[%s994 + $0x18c] sm:$0xf] %v1215
    %1217 = vst.msk [vmem:[%s994 + $0x190] sm:$0xf] %vm52, %v896
    %v1218 = vld [vmem:[%s994 + $0x194] sm:$0x1]
    %v1219 = vsel %vm69, %v897, %v1218
    %1220 = vst [vmem:[%s994 + $0x194] sm:$0x1] %v1219
    %v1221 = vld [vmem:[#allocation2] sm:$0xf]
    %v1222 = vld [vmem:[#allocation2 + $0x4] sm:$0xf]
    %v1223 = vld [vmem:[#allocation2 + $0xc] sm:$0xf]
    %v1224 = vld [vmem:[#allocation2 + $0x10] sm:$0xf]
    %v1225 = vld [vmem:[#allocation2 + $0x18] sm:$0xf]
    %v1226 = vld [vmem:[#allocation2 + $0x1c] sm:$0xf]
    %v1227 = vld [vmem:[#allocation2 + $0x24] sm:$0xf]
    %v1228 = vld [vmem:[#allocation2 + $0x28] sm:$0xf]
    %v1229 = vld [vmem:[#allocation2 + $0x30] sm:$0xf]
    %v1230 = vld [vmem:[#allocation2 + $0x34] sm:$0xf]
    %v1231 = vld [vmem:[#allocation2 + $0x3c] sm:$0xf]
    %v1232 = vld [vmem:[#allocation2 + $0x40] sm:$0xf]
    %v1233 = vld [vmem:[#allocation2 + $0x48] sm:$0xf]
    %v1234 = vld [vmem:[#allocation2 + $0x4c] sm:$0xf]
    %v1235 = vld [vmem:[#allocation2 + $0x54] sm:$0xf]
    %v1236 = vld [vmem:[#allocation2 + $0x58] sm:$0xf]
    %v1237 = vld [vmem:[#allocation2 + $0x60] sm:$0xf]
    %v1238 = vld [vmem:[#allocation2 + $0x64] sm:$0xf]
    %v1239 = vld [vmem:[#allocation2 + $0x6c] sm:$0xf]
    %v1240 = vld [vmem:[#allocation2 + $0x70] sm:$0xf]
    %v1241 = vld [vmem:[#allocation2 + $0x78] sm:$0xf]
    %v1242 = vld [vmem:[#allocation2 + $0x7c] sm:$0xf]
    %v1243 = vld [vmem:[#allocation2 + $0x84] sm:$0xf]
    %v1244 = vld [vmem:[#allocation2 + $0x88] sm:$0xf]
    %v1245 = vld [vmem:[#allocation2 + $0x90] sm:$0xf]
    %v1246 = vld [vmem:[#allocation2 + $0x94] sm:$0xf]
    %v1247 = vld [vmem:[#allocation2 + $0x9c] sm:$0xf]
    %v1248 = vld [vmem:[#allocation2 + $0xa0] sm:$0xf]
    %v1249 = vld [vmem:[#allocation2 + $0xa8] sm:$0xf]
    %v1250 = vld [vmem:[#allocation2 + $0xac] sm:$0xf]
    %v1251 = vld [vmem:[#allocation2 + $0xb4] sm:$0xf]
    %v1252 = vld [vmem:[#allocation2 + $0xb8] sm:$0xf]
    %v1253 = vld [vmem:[#allocation2 + $0xd8] sm:$0xf]
    %v1254 = vld [vmem:[#allocation2 + $0xdc] sm:$0xf]
    %v1255 = vld [vmem:[#allocation2 + $0xe4] sm:$0xf]
    %v1256 = vld [vmem:[#allocation2 + $0xe8] sm:$0xf]
    %v1257 = vld [vmem:[#allocation2 + $0xf0] sm:$0xf]
    %v1258 = vld [vmem:[#allocation2 + $0xf4] sm:$0xf]
    %v1259 = vld [vmem:[#allocation2 + $0xfc] sm:$0xf]
    %v1260 = vld [vmem:[#allocation2 + $0x100] sm:$0xf]
    %v1261 = vld [vmem:[#allocation2 + $0x108] sm:$0xf]
    %v1262 = vld [vmem:[#allocation2 + $0x10c] sm:$0xf]
    %v1263 = vld [vmem:[#allocation2 + $0x114] sm:$0xf]
    %v1264 = vld [vmem:[#allocation2 + $0x118] sm:$0xf]
    %v1265 = vld [vmem:[#allocation2 + $0x120] sm:$0xf]
    %v1266 = vld [vmem:[#allocation2 + $0x124] sm:$0xf]
    %v1267 = vld [vmem:[#allocation2 + $0x12c] sm:$0xf]
    %v1268 = vld [vmem:[#allocation2 + $0x130] sm:$0xf]
    %v1269 = vld [vmem:[#allocation2 + $0x138] sm:$0xf]
    %v1270 = vld [vmem:[#allocation2 + $0x13c] sm:$0xf]
    %v1271 = vld [vmem:[#allocation2 + $0x144] sm:$0xf]
    %v1272 = vld [vmem:[#allocation2 + $0x148] sm:$0xf]
    %v1273 = vld [vmem:[#allocation2 + $0x150] sm:$0xf]
    %v1274 = vld [vmem:[#allocation2 + $0x154] sm:$0xf]
    %v1275 = vld [vmem:[#allocation2 + $0x15c] sm:$0xf]
    %v1276 = vld [vmem:[#allocation2 + $0x160] sm:$0xf]
    %v1277 = vld [vmem:[#allocation2 + $0x168] sm:$0xf]
    %v1278 = vld [vmem:[#allocation2 + $0x16c] sm:$0xf]
    %v1279 = vld [vmem:[#allocation2 + $0x174] sm:$0xf]
    %v1280 = vld [vmem:[#allocation2 + $0x178] sm:$0xf]
    %v1281 = vld [vmem:[#allocation2 + $0x180] sm:$0xf]
    %v1282 = vld [vmem:[#allocation2 + $0x184] sm:$0xf]
    %v1283 = vld [vmem:[#allocation2 + $0x18c] sm:$0xf]
    %v1284 = vld [vmem:[#allocation2 + $0x190] sm:$0xf]
    %v1285 = vld [vmem:[#allocation2 + $0x8] sm:$0x1]
    %v1286 = vld [vmem:[#allocation2 + $0x14] sm:$0x1]
    %v1287 = vld [vmem:[#allocation2 + $0x20] sm:$0x1]
    %v1288 = vld [vmem:[#allocation2 + $0x2c] sm:$0x1]
    %v1289 = vld [vmem:[#allocation2 + $0x38] sm:$0x1]
    %v1290 = vld [vmem:[#allocation2 + $0x44] sm:$0x1]
    %v1291 = vld [vmem:[#allocation2 + $0x50] sm:$0x1]
    %v1292 = vld [vmem:[#allocation2 + $0x5c] sm:$0x1]
    %v1293 = vld [vmem:[#allocation2 + $0x68] sm:$0x1]
    %v1294 = vld [vmem:[#allocation2 + $0x74] sm:$0x1]
    %v1295 = vld [vmem:[#allocation2 + $0x80] sm:$0x1]
    %v1296 = vld [vmem:[#allocation2 + $0x8c] sm:$0x1]
    %v1297 = vld [vmem:[#allocation2 + $0x98] sm:$0x1]
    %v1298 = vld [vmem:[#allocation2 + $0xa4] sm:$0x1]
    %v1299 = vld [vmem:[#allocation2 + $0xb0] sm:$0x1]
    %v1300 = vld [vmem:[#allocation2 + $0xbc] sm:$0x1]
    %v1301 = vld [vmem:[#allocation2 + $0xe0] sm:$0x1]
    %v1302 = vld [vmem:[#allocation2 + $0xec] sm:$0x1]
    %v1303 = vld [vmem:[#allocation2 + $0xf8] sm:$0x1]
    %v1304 = vld [vmem:[#allocation2 + $0x104] sm:$0x1]
    %v1305 = vld [vmem:[#allocation2 + $0x110] sm:$0x1]
    %v1306 = vld [vmem:[#allocation2 + $0x11c] sm:$0x1]
    %v1307 = vld [vmem:[#allocation2 + $0x128] sm:$0x1]
    %v1308 = vld [vmem:[#allocation2 + $0x134] sm:$0x1]
    %v1309 = vld [vmem:[#allocation2 + $0x140] sm:$0x1]
    %v1310 = vld [vmem:[#allocation2 + $0x14c] sm:$0x1]
    %v1311 = vld [vmem:[#allocation2 + $0x158] sm:$0x1]
    %v1312 = vld [vmem:[#allocation2 + $0x164] sm:$0x1]
    %v1313 = vld [vmem:[#allocation2 + $0x170] sm:$0x1]
    %v1314 = vld [vmem:[#allocation2 + $0x17c] sm:$0x1]
    %v1315 = vld [vmem:[#allocation2 + $0x188] sm:$0x1]
    %v1316 = vld [vmem:[#allocation2 + $0x194] sm:$0x1]
    %v1317 = vld [vmem:[#allocation2] sm:$0xe]
    %v1318 = vld [vmem:[#allocation2 + $0xc] sm:$0xe]
    %v1319 = vld [vmem:[#allocation2 + $0x18] sm:$0xe]
    %v1320 = vld [vmem:[#allocation2 + $0x24] sm:$0xe]
    %v1321 = vld [vmem:[#allocation2 + $0x30] sm:$0xe]
    %v1322 = vld [vmem:[#allocation2 + $0x3c] sm:$0xe]
    %v1323 = vld [vmem:[#allocation2 + $0x48] sm:$0xe]
    %v1324 = vld [vmem:[#allocation2 + $0x54] sm:$0xe]
    %v1325 = vld [vmem:[#allocation2 + $0x60] sm:$0xe]
    %v1326 = vld [vmem:[#allocation2 + $0x6c] sm:$0xe]
    %v1327 = vld [vmem:[#allocation2 + $0x78] sm:$0xe]
    %v1328 = vld [vmem:[#allocation2 + $0x84] sm:$0xe]
    %v1329 = vld [vmem:[#allocation2 + $0x90] sm:$0xe]
    %v1330 = vld [vmem:[#allocation2 + $0x9c] sm:$0xe]
    %v1331 = vld [vmem:[#allocation2 + $0xa8] sm:$0xe]
    %v1332 = vld [vmem:[#allocation2 + $0xb4] sm:$0xe]
    %v1333 = vld [vmem:[#allocation2 + $0xd8] sm:$0xe]
    %v1334 = vld [vmem:[#allocation2 + $0xe4] sm:$0xe]
    %v1335 = vld [vmem:[#allocation2 + $0xf0] sm:$0xe]
    %v1336 = vld [vmem:[#allocation2 + $0xfc] sm:$0xe]
    %v1337 = vld [vmem:[#allocation2 + $0x108] sm:$0xe]
    %v1338 = vld [vmem:[#allocation2 + $0x114] sm:$0xe]
    %v1339 = vld [vmem:[#allocation2 + $0x120] sm:$0xe]
    %v1340 = vld [vmem:[#allocation2 + $0x12c] sm:$0xe]
    %v1341 = vld [vmem:[#allocation2 + $0x138] sm:$0xe]
    %v1342 = vld [vmem:[#allocation2 + $0x144] sm:$0xe]
    %v1343 = vld [vmem:[#allocation2 + $0x150] sm:$0xe]
    %v1344 = vld [vmem:[#allocation2 + $0x15c] sm:$0xe]
    %v1345 = vld [vmem:[#allocation2 + $0x168] sm:$0xe]
    %v1346 = vld [vmem:[#allocation2 + $0x174] sm:$0xe]
    %v1347 = vld [vmem:[#allocation2 + $0x180] sm:$0xe]
    %v1348 = vld [vmem:[#allocation2 + $0x18c] sm:$0xe]
    %v1349 = vld [vmem:[%s994] sm:$0xf]
    %v1350 = vld [vmem:[%s994 + $0x4] sm:$0xf]
    %v1351 = vld [vmem:[%s994 + $0xc] sm:$0xf]
    %v1352 = vld [vmem:[%s994 + $0x10] sm:$0xf]
    %v1353 = vld [vmem:[%s994 + $0x18] sm:$0xf]
    %v1354 = vld [vmem:[%s994 + $0x1c] sm:$0xf]
    %v1355 = vld [vmem:[%s994 + $0x24] sm:$0xf]
    %v1356 = vld [vmem:[%s994 + $0x28] sm:$0xf]
    %v1357 = vld [vmem:[%s994 + $0x30] sm:$0xf]
    %v1358 = vld [vmem:[%s994 + $0x34] sm:$0xf]
    %v1359 = vld [vmem:[%s994 + $0x3c] sm:$0xf]
    %v1360 = vld [vmem:[%s994 + $0x40] sm:$0xf]
    %v1361 = vld [vmem:[%s994 + $0x48] sm:$0xf]
    %v1362 = vld [vmem:[%s994 + $0x4c] sm:$0xf]
    %v1363 = vld [vmem:[%s994 + $0x54] sm:$0xf]
    %v1364 = vld [vmem:[%s994 + $0x58] sm:$0xf]
    %v1365 = vld [vmem:[%s994 + $0x60] sm:$0xf]
    %v1366 = vld [vmem:[%s994 + $0x64] sm:$0xf]
    %v1367 = vld [vmem:[%s994 + $0x6c] sm:$0xf]
    %v1368 = vld [vmem:[%s994 + $0x70] sm:$0xf]
    %v1369 = vld [vmem:[%s994 + $0x78] sm:$0xf]
    %v1370 = vld [vmem:[%s994 + $0x7c] sm:$0xf]
    %v1371 = vld [vmem:[%s994 + $0x84] sm:$0xf]
    %v1372 = vld [vmem:[%s994 + $0x88] sm:$0xf]
    %v1373 = vld [vmem:[%s994 + $0x90] sm:$0xf]
    %v1374 = vld [vmem:[%s994 + $0x94] sm:$0xf]
    %v1375 = vld [vmem:[%s994 + $0x9c] sm:$0xf]
    %v1376 = vld [vmem:[%s994 + $0xa0] sm:$0xf]
    %v1377 = vld [vmem:[%s994 + $0xa8] sm:$0xf]
    %v1378 = vld [vmem:[%s994 + $0xac] sm:$0xf]
    %v1379 = vld [vmem:[%s994 + $0xb4] sm:$0xf]
    %v1380 = vld [vmem:[%s994 + $0xb8] sm:$0xf]
    %v1381 = vld [vmem:[%s994 + $0xd8] sm:$0xf]
    %v1382 = vld [vmem:[%s994 + $0xdc] sm:$0xf]
    %v1383 = vld [vmem:[%s994 + $0xe4] sm:$0xf]
    %v1384 = vld [vmem:[%s994 + $0xe8] sm:$0xf]
    %v1385 = vld [vmem:[%s994 + $0xf0] sm:$0xf]
    %v1386 = vld [vmem:[%s994 + $0xf4] sm:$0xf]
    %v1387 = vld [vmem:[%s994 + $0xfc] sm:$0xf]
    %v1388 = vld [vmem:[%s994 + $0x100] sm:$0xf]
    %v1389 = vld [vmem:[%s994 + $0x108] sm:$0xf]
    %v1390 = vld [vmem:[%s994 + $0x10c] sm:$0xf]
    %v1391 = vld [vmem:[%s994 + $0x114] sm:$0xf]
    %v1392 = vld [vmem:[%s994 + $0x118] sm:$0xf]
    %v1393 = vld [vmem:[%s994 + $0x120] sm:$0xf]
    %v1394 = vld [vmem:[%s994 + $0x124] sm:$0xf]
    %v1395 = vld [vmem:[%s994 + $0x12c] sm:$0xf]
    %v1396 = vld [vmem:[%s994 + $0x130] sm:$0xf]
    %v1397 = vld [vmem:[%s994 + $0x138] sm:$0xf]
    %v1398 = vld [vmem:[%s994 + $0x13c] sm:$0xf]
    %v1399 = vld [vmem:[%s994 + $0x144] sm:$0xf]
    %v1400 = vld [vmem:[%s994 + $0x148] sm:$0xf]
    %v1401 = vld [vmem:[%s994 + $0x150] sm:$0xf]
    %v1402 = vld [vmem:[%s994 + $0x154] sm:$0xf]
    %v1403 = vld [vmem:[%s994 + $0x15c] sm:$0xf]
    %v1404 = vld [vmem:[%s994 + $0x160] sm:$0xf]
    %v1405 = vld [vmem:[%s994 + $0x168] sm:$0xf]
    %v1406 = vld [vmem:[%s994 + $0x16c] sm:$0xf]
    %v1407 = vld [vmem:[%s994 + $0x174] sm:$0xf]
    %v1408 = vld [vmem:[%s994 + $0x178] sm:$0xf]
    %v1409 = vld [vmem:[%s994 + $0x180] sm:$0xf]
    %v1410 = vld [vmem:[%s994 + $0x184] sm:$0xf]
    %v1411 = vld [vmem:[%s994 + $0x18c] sm:$0xf]
    %v1412 = vld [vmem:[%s994 + $0x190] sm:$0xf]
    %v1413 = vld [vmem:[%s994 + $0x8] sm:$0x1]
    %v1414 = vld [vmem:[%s994 + $0x14] sm:$0x1]
    %v1415 = vld [vmem:[%s994 + $0x20] sm:$0x1]
    %v1416 = vld [vmem:[%s994 + $0x2c] sm:$0x1]
    %v1417 = vld [vmem:[%s994 + $0x38] sm:$0x1]
    %v1418 = vld [vmem:[%s994 + $0x44] sm:$0x1]
    %v1419 = vld [vmem:[%s994 + $0x50] sm:$0x1]
    %v1420 = vld [vmem:[%s994 + $0x5c] sm:$0x1]
    %v1421 = vld [vmem:[%s994 + $0x68] sm:$0x1]
    %v1422 = vld [vmem:[%s994 + $0x74] sm:$0x1]
    %v1423 = vld [vmem:[%s994 + $0x80] sm:$0x1]
    %v1424 = vld [vmem:[%s994 + $0x8c] sm:$0x1]
    %v1425 = vld [vmem:[%s994 + $0x98] sm:$0x1]
    %v1426 = vld [vmem:[%s994 + $0xa4] sm:$0x1]
    %v1427 = vld [vmem:[%s994 + $0xb0] sm:$0x1]
    %v1428 = vld [vmem:[%s994 + $0xbc] sm:$0x1]
    %v1429 = vld [vmem:[%s994 + $0xe0] sm:$0x1]
    %v1430 = vld [vmem:[%s994 + $0xec] sm:$0x1]
    %v1431 = vld [vmem:[%s994 + $0xf8] sm:$0x1]
    %v1432 = vld [vmem:[%s994 + $0x104] sm:$0x1]
    %v1433 = vld [vmem:[%s994 + $0x110] sm:$0x1]
    %v1434 = vld [vmem:[%s994 + $0x11c] sm:$0x1]
    %v1435 = vld [vmem:[%s994 + $0x128] sm:$0x1]
    %v1436 = vld [vmem:[%s994 + $0x134] sm:$0x1]
    %v1437 = vld [vmem:[%s994 + $0x140] sm:$0x1]
    %v1438 = vld [vmem:[%s994 + $0x14c] sm:$0x1]
    %v1439 = vld [vmem:[%s994 + $0x158] sm:$0x1]
    %v1440 = vld [vmem:[%s994 + $0x164] sm:$0x1]
    %v1441 = vld [vmem:[%s994 + $0x170] sm:$0x1]
    %v1442 = vld [vmem:[%s994 + $0x17c] sm:$0x1]
    %v1443 = vld [vmem:[%s994 + $0x188] sm:$0x1]
    %v1444 = vld [vmem:[%s994 + $0x194] sm:$0x1]
    %v1445 = vld [vmem:[%s994] sm:$0xe]
    %v1446 = vld [vmem:[%s994 + $0xc] sm:$0xe]
    %v1447 = vld [vmem:[%s994 + $0x18] sm:$0xe]
    %v1448 = vld [vmem:[%s994 + $0x24] sm:$0xe]
    %v1449 = vld [vmem:[%s994 + $0x30] sm:$0xe]
    %v1450 = vld [vmem:[%s994 + $0x3c] sm:$0xe]
    %v1451 = vld [vmem:[%s994 + $0x48] sm:$0xe]
    %v1452 = vld [vmem:[%s994 + $0x54] sm:$0xe]
    %v1453 = vld [vmem:[%s994 + $0x60] sm:$0xe]
    %v1454 = vld [vmem:[%s994 + $0x6c] sm:$0xe]
    %v1455 = vld [vmem:[%s994 + $0x78] sm:$0xe]
    %v1456 = vld [vmem:[%s994 + $0x84] sm:$0xe]
    %v1457 = vld [vmem:[%s994 + $0x90] sm:$0xe]
    %v1458 = vld [vmem:[%s994 + $0x9c] sm:$0xe]
    %v1459 = vld [vmem:[%s994 + $0xa8] sm:$0xe]
    %v1460 = vld [vmem:[%s994 + $0xb4] sm:$0xe]
    %v1461 = vld [vmem:[%s994 + $0xd8] sm:$0xe]
    %v1462 = vld [vmem:[%s994 + $0xe4] sm:$0xe]
    %v1463 = vld [vmem:[%s994 + $0xf0] sm:$0xe]
    %v1464 = vld [vmem:[%s994 + $0xfc] sm:$0xe]
    %v1465 = vld [vmem:[%s994 + $0x108] sm:$0xe]
    %v1466 = vld [vmem:[%s994 + $0x114] sm:$0xe]
    %v1467 = vld [vmem:[%s994 + $0x120] sm:$0xe]
    %v1468 = vld [vmem:[%s994 + $0x12c] sm:$0xe]
    %v1469 = vld [vmem:[%s994 + $0x138] sm:$0xe]
    %v1470 = vld [vmem:[%s994 + $0x144] sm:$0xe]
    %v1471 = vld [vmem:[%s994 + $0x150] sm:$0xe]
    %v1472 = vld [vmem:[%s994 + $0x15c] sm:$0xe]
    %v1473 = vld [vmem:[%s994 + $0x168] sm:$0xe]
    %v1474 = vld [vmem:[%s994 + $0x174] sm:$0xe]
    %v1475 = vld [vmem:[%s994 + $0x180] sm:$0xe]
    %v1476 = vld [vmem:[%s994 + $0x18c] sm:$0xe]
    %s1477 = scalar_lea.vmem [#allocation2], 24
    %v1478 = vld [vmem:[%s1477] sm:$0xf]
    %v1479 = vld [vmem:[%s1477 + $0x4] sm:$0xf]
    %v1480 = vld [vmem:[%s1477 + $0xc] sm:$0xf]
    %v1481 = vld [vmem:[%s1477 + $0x10] sm:$0xf]
    %v1482 = vld [vmem:[%s1477 + $0x18] sm:$0xf]
    %v1483 = vld [vmem:[%s1477 + $0x1c] sm:$0xf]
    %v1484 = vld [vmem:[%s1477 + $0x24] sm:$0xf]
    %v1485 = vld [vmem:[%s1477 + $0x28] sm:$0xf]
    %v1486 = vld [vmem:[%s1477 + $0x30] sm:$0xf]
    %v1487 = vld [vmem:[%s1477 + $0x34] sm:$0xf]
    %v1488 = vld [vmem:[%s1477 + $0x3c] sm:$0xf]
    %v1489 = vld [vmem:[%s1477 + $0x40] sm:$0xf]
    %v1490 = vld [vmem:[%s1477 + $0x48] sm:$0xf]
    %v1491 = vld [vmem:[%s1477 + $0x4c] sm:$0xf]
    %v1492 = vld [vmem:[%s1477 + $0x54] sm:$0xf]
    %v1493 = vld [vmem:[%s1477 + $0x58] sm:$0xf]
    %v1494 = vld [vmem:[%s1477 + $0x60] sm:$0xf]
    %v1495 = vld [vmem:[%s1477 + $0x64] sm:$0xf]
    %v1496 = vld [vmem:[%s1477 + $0x6c] sm:$0xf]
    %v1497 = vld [vmem:[%s1477 + $0x70] sm:$0xf]
    %v1498 = vld [vmem:[%s1477 + $0x78] sm:$0xf]
    %v1499 = vld [vmem:[%s1477 + $0x7c] sm:$0xf]
    %v1500 = vld [vmem:[%s1477 + $0x84] sm:$0xf]
    %v1501 = vld [vmem:[%s1477 + $0x88] sm:$0xf]
    %v1502 = vld [vmem:[%s1477 + $0x90] sm:$0xf]
    %v1503 = vld [vmem:[%s1477 + $0x94] sm:$0xf]
    %v1504 = vld [vmem:[%s1477 + $0x9c] sm:$0xf]
    %v1505 = vld [vmem:[%s1477 + $0xa0] sm:$0xf]
    %v1506 = vld [vmem:[%s1477 + $0xa8] sm:$0xf]
    %v1507 = vld [vmem:[%s1477 + $0xac] sm:$0xf]
    %v1508 = vld [vmem:[%s1477 + $0xb4] sm:$0xf]
    %v1509 = vld [vmem:[%s1477 + $0xb8] sm:$0xf]
    %v1510 = vld [vmem:[%s1477 + $0xd8] sm:$0xf]
    %v1511 = vld [vmem:[%s1477 + $0xdc] sm:$0xf]
    %v1512 = vld [vmem:[%s1477 + $0xe4] sm:$0xf]
    %v1513 = vld [vmem:[%s1477 + $0xe8] sm:$0xf]
    %v1514 = vld [vmem:[%s1477 + $0xf0] sm:$0xf]
    %v1515 = vld [vmem:[%s1477 + $0xf4] sm:$0xf]
    %v1516 = vld [vmem:[%s1477 + $0xfc] sm:$0xf]
    %v1517 = vld [vmem:[%s1477 + $0x100] sm:$0xf]
    %v1518 = vld [vmem:[%s1477 + $0x108] sm:$0xf]
    %v1519 = vld [vmem:[%s1477 + $0x10c] sm:$0xf]
    %v1520 = vld [vmem:[%s1477 + $0x114] sm:$0xf]
    %v1521 = vld [vmem:[%s1477 + $0x118] sm:$0xf]
    %v1522 = vld [vmem:[%s1477 + $0x120] sm:$0xf]
    %v1523 = vld [vmem:[%s1477 + $0x124] sm:$0xf]
    %v1524 = vld [vmem:[%s1477 + $0x12c] sm:$0xf]
    %v1525 = vld [vmem:[%s1477 + $0x130] sm:$0xf]
    %v1526 = vld [vmem:[%s1477 + $0x138] sm:$0xf]
    %v1527 = vld [vmem:[%s1477 + $0x13c] sm:$0xf]
    %v1528 = vld [vmem:[%s1477 + $0x144] sm:$0xf]
    %v1529 = vld [vmem:[%s1477 + $0x148] sm:$0xf]
    %v1530 = vld [vmem:[%s1477 + $0x150] sm:$0xf]
    %v1531 = vld [vmem:[%s1477 + $0x154] sm:$0xf]
    %v1532 = vld [vmem:[%s1477 + $0x15c] sm:$0xf]
    %v1533 = vld [vmem:[%s1477 + $0x160] sm:$0xf]
    %v1534 = vld [vmem:[%s1477 + $0x168] sm:$0xf]
    %v1535 = vld [vmem:[%s1477 + $0x16c] sm:$0xf]
    %v1536 = vld [vmem:[%s1477 + $0x174] sm:$0xf]
    %v1537 = vld [vmem:[%s1477 + $0x178] sm:$0xf]
    %v1538 = vld [vmem:[%s1477 + $0x180] sm:$0xf]
    %v1539 = vld [vmem:[%s1477 + $0x184] sm:$0xf]
    %v1540 = vld [vmem:[%s1477 + $0x18c] sm:$0xf]
    %v1541 = vld [vmem:[%s1477 + $0x190] sm:$0xf]
    %v1542 = vld [vmem:[%s1477 + $0x8] sm:$0x1]
    %v1543 = vld [vmem:[%s1477 + $0x14] sm:$0x1]
    %v1544 = vld [vmem:[%s1477 + $0x20] sm:$0x1]
    %v1545 = vld [vmem:[%s1477 + $0x2c] sm:$0x1]
    %v1546 = vld [vmem:[%s1477 + $0x38] sm:$0x1]
    %v1547 = vld [vmem:[%s1477 + $0x44] sm:$0x1]
    %v1548 = vld [vmem:[%s1477 + $0x50] sm:$0x1]
    %v1549 = vld [vmem:[%s1477 + $0x5c] sm:$0x1]
    %v1550 = vld [vmem:[%s1477 + $0x68] sm:$0x1]
    %v1551 = vld [vmem:[%s1477 + $0x74] sm:$0x1]
    %v1552 = vld [vmem:[%s1477 + $0x80] sm:$0x1]
    %v1553 = vld [vmem:[%s1477 + $0x8c] sm:$0x1]
    %v1554 = vld [vmem:[%s1477 + $0x98] sm:$0x1]
    %v1555 = vld [vmem:[%s1477 + $0xa4] sm:$0x1]
    %v1556 = vld [vmem:[%s1477 + $0xb0] sm:$0x1]
    %v1557 = vld [vmem:[%s1477 + $0xbc] sm:$0x1]
    %v1558 = vld [vmem:[%s1477 + $0xe0] sm:$0x1]
    %v1559 = vld [vmem:[%s1477 + $0xec] sm:$0x1]
    %v1560 = vld [vmem:[%s1477 + $0xf8] sm:$0x1]
    %v1561 = vld [vmem:[%s1477 + $0x104] sm:$0x1]
    %v1562 = vld [vmem:[%s1477 + $0x110] sm:$0x1]
    %v1563 = vld [vmem:[%s1477 + $0x11c] sm:$0x1]
    %v1564 = vld [vmem:[%s1477 + $0x128] sm:$0x1]
    %v1565 = vld [vmem:[%s1477 + $0x134] sm:$0x1]
    %v1566 = vld [vmem:[%s1477 + $0x140] sm:$0x1]
    %v1567 = vld [vmem:[%s1477 + $0x14c] sm:$0x1]
    %v1568 = vld [vmem:[%s1477 + $0x158] sm:$0x1]
    %v1569 = vld [vmem:[%s1477 + $0x164] sm:$0x1]
    %v1570 = vld [vmem:[%s1477 + $0x170] sm:$0x1]
    %v1571 = vld [vmem:[%s1477 + $0x17c] sm:$0x1]
    %v1572 = vld [vmem:[%s1477 + $0x188] sm:$0x1]
    %v1573 = vld [vmem:[%s1477 + $0x194] sm:$0x1]
    %v1574 = vld [vmem:[%s1477] sm:$0xe]
    %v1575 = vld [vmem:[%s1477 + $0xc] sm:$0xe]
    %v1576 = vld [vmem:[%s1477 + $0x18] sm:$0xe]
    %v1577 = vld [vmem:[%s1477 + $0x24] sm:$0xe]
    %v1578 = vld [vmem:[%s1477 + $0x30] sm:$0xe]
    %v1579 = vld [vmem:[%s1477 + $0x3c] sm:$0xe]
    %v1580 = vld [vmem:[%s1477 + $0x48] sm:$0xe]
    %v1581 = vld [vmem:[%s1477 + $0x54] sm:$0xe]
    %v1582 = vld [vmem:[%s1477 + $0x60] sm:$0xe]
    %v1583 = vld [vmem:[%s1477 + $0x6c] sm:$0xe]
    %v1584 = vld [vmem:[%s1477 + $0x78] sm:$0xe]
    %v1585 = vld [vmem:[%s1477 + $0x84] sm:$0xe]
    %v1586 = vld [vmem:[%s1477 + $0x90] sm:$0xe]
    %v1587 = vld [vmem:[%s1477 + $0x9c] sm:$0xe]
    %v1588 = vld [vmem:[%s1477 + $0xa8] sm:$0xe]
    %v1589 = vld [vmem:[%s1477 + $0xb4] sm:$0xe]
    %v1590 = vld [vmem:[%s1477 + $0xd8] sm:$0xe]
    %v1591 = vld [vmem:[%s1477 + $0xe4] sm:$0xe]
    %v1592 = vld [vmem:[%s1477 + $0xf0] sm:$0xe]
    %v1593 = vld [vmem:[%s1477 + $0xfc] sm:$0xe]
    %v1594 = vld [vmem:[%s1477 + $0x108] sm:$0xe]
    %v1595 = vld [vmem:[%s1477 + $0x114] sm:$0xe]
    %v1596 = vld [vmem:[%s1477 + $0x120] sm:$0xe]
    %v1597 = vld [vmem:[%s1477 + $0x12c] sm:$0xe]
    %v1598 = vld [vmem:[%s1477 + $0x138] sm:$0xe]
    %v1599 = vld [vmem:[%s1477 + $0x144] sm:$0xe]
    %v1600 = vld [vmem:[%s1477 + $0x150] sm:$0xe]
    %v1601 = vld [vmem:[%s1477 + $0x15c] sm:$0xe]
    %v1602 = vld [vmem:[%s1477 + $0x168] sm:$0xe]
    %v1603 = vld [vmem:[%s1477 + $0x174] sm:$0xe]
    %v1604 = vld [vmem:[%s1477 + $0x180] sm:$0xe]
    %v1605 = vld [vmem:[%s1477 + $0x18c] sm:$0xe]
    %v1670 = vunpack.c.l.b16 %v1221
    %v1671 = vunpack.c.l.b16 %v1222
    %v1672 = vunpack.c.l.b16 %v1223
    %v1673 = vunpack.c.l.b16 %v1224
    %v1674 = vunpack.c.l.b16 %v1225
    %v1675 = vunpack.c.l.b16 %v1226
    %v1676 = vunpack.c.l.b16 %v1227
    %v1677 = vunpack.c.l.b16 %v1228
    %v1678 = vunpack.c.l.b16 %v1229
    %v1679 = vunpack.c.l.b16 %v1230
    %v1680 = vunpack.c.l.b16 %v1231
    %v1681 = vunpack.c.l.b16 %v1232
    %v1682 = vunpack.c.l.b16 %v1233
    %v1683 = vunpack.c.l.b16 %v1234
    %v1684 = vunpack.c.l.b16 %v1235
    %v1685 = vunpack.c.l.b16 %v1236
    %v1686 = vunpack.c.l.b16 %v1237
    %v1687 = vunpack.c.l.b16 %v1238
    %v1688 = vunpack.c.l.b16 %v1239
    %v1689 = vunpack.c.l.b16 %v1240
    %v1690 = vunpack.c.l.b16 %v1241
    %v1691 = vunpack.c.l.b16 %v1242
    %v1692 = vunpack.c.l.b16 %v1243
    %v1693 = vunpack.c.l.b16 %v1244
    %v1694 = vunpack.c.l.b16 %v1245
    %v1695 = vunpack.c.l.b16 %v1246
    %v1696 = vunpack.c.l.b16 %v1247
    %v1697 = vunpack.c.l.b16 %v1248
    %v1698 = vunpack.c.l.b16 %v1249
    %v1699 = vunpack.c.l.b16 %v1250
    %v1700 = vunpack.c.l.b16 %v1251
    %v1701 = vunpack.c.l.b16 %v1252
    %v1702 = vunpack.c.l.b16 %v1253
    %v1703 = vunpack.c.l.b16 %v1254
    %v1704 = vunpack.c.l.b16 %v1255
    %v1705 = vunpack.c.l.b16 %v1256
    %v1706 = vunpack.c.l.b16 %v1257
    %v1707 = vunpack.c.l.b16 %v1258
    %v1708 = vunpack.c.l.b16 %v1259
    %v1709 = vunpack.c.l.b16 %v1260
    %v1710 = vunpack.c.l.b16 %v1261
    %v1711 = vunpack.c.l.b16 %v1262
    %v1712 = vunpack.c.l.b16 %v1263
    %v1713 = vunpack.c.l.b16 %v1264
    %v1714 = vunpack.c.l.b16 %v1265
    %v1715 = vunpack.c.l.b16 %v1266
    %v1716 = vunpack.c.l.b16 %v1267
    %v1717 = vunpack.c.l.b16 %v1268
    %v1718 = vunpack.c.l.b16 %v1269
    %v1719 = vunpack.c.l.b16 %v1270
    %v1720 = vunpack.c.l.b16 %v1271
    %v1721 = vunpack.c.l.b16 %v1272
    %v1722 = vunpack.c.l.b16 %v1273
    %v1723 = vunpack.c.l.b16 %v1274
    %v1724 = vunpack.c.l.b16 %v1275
    %v1725 = vunpack.c.l.b16 %v1276
    %v1726 = vunpack.c.l.b16 %v1277
    %v1727 = vunpack.c.l.b16 %v1278
    %v1728 = vunpack.c.l.b16 %v1279
    %v1729 = vunpack.c.l.b16 %v1280
    %v1730 = vunpack.c.l.b16 %v1281
    %v1731 = vunpack.c.l.b16 %v1282
    %v1732 = vunpack.c.l.b16 %v1283
    %v1733 = vunpack.c.l.b16 %v1284
    %v1734 = vpack.c.b16 %v1671, %v1670
    %v1735 = vpack.c.b16 %v1673, %v1672
    %v1736 = vpack.c.b16 %v1675, %v1674
    %v1737 = vpack.c.b16 %v1677, %v1676
    %v1738 = vpack.c.b16 %v1679, %v1678
    %v1739 = vpack.c.b16 %v1681, %v1680
    %v1740 = vpack.c.b16 %v1683, %v1682
    %v1741 = vpack.c.b16 %v1685, %v1684
    %v1742 = vpack.c.b16 %v1687, %v1686
    %v1743 = vpack.c.b16 %v1689, %v1688
    %v1744 = vpack.c.b16 %v1691, %v1690
    %v1745 = vpack.c.b16 %v1693, %v1692
    %v1746 = vpack.c.b16 %v1695, %v1694
    %v1747 = vpack.c.b16 %v1697, %v1696
    %v1748 = vpack.c.b16 %v1699, %v1698
    %v1749 = vpack.c.b16 %v1701, %v1700
    %v1750 = vpack.c.b16 %v1703, %v1702
    %v1751 = vpack.c.b16 %v1705, %v1704
    %v1752 = vpack.c.b16 %v1707, %v1706
    %v1753 = vpack.c.b16 %v1709, %v1708
    %v1754 = vpack.c.b16 %v1711, %v1710
    %v1755 = vpack.c.b16 %v1713, %v1712
    %v1756 = vpack.c.b16 %v1715, %v1714
    %v1757 = vpack.c.b16 %v1717, %v1716
    %v1758 = vpack.c.b16 %v1719, %v1718
    %v1759 = vpack.c.b16 %v1721, %v1720
    %v1760 = vpack.c.b16 %v1723, %v1722
    %v1761 = vpack.c.b16 %v1725, %v1724
    %v1762 = vpack.c.b16 %v1727, %v1726
    %v1763 = vpack.c.b16 %v1729, %v1728
    %v1764 = vpack.c.b16 %v1731, %v1730
    %v1765 = vpack.c.b16 %v1733, %v1732
    %v1798 = vunpack.c.l.b16 %v1285
    %v1799 = vunpack.c.l.b16 %v1286
    %v1800 = vunpack.c.l.b16 %v1287
    %v1801 = vunpack.c.l.b16 %v1288
    %v1802 = vunpack.c.l.b16 %v1289
    %v1803 = vunpack.c.l.b16 %v1290
    %v1804 = vunpack.c.l.b16 %v1291
    %v1805 = vunpack.c.l.b16 %v1292
    %v1806 = vunpack.c.l.b16 %v1293
    %v1807 = vunpack.c.l.b16 %v1294
    %v1808 = vunpack.c.l.b16 %v1295
    %v1809 = vunpack.c.l.b16 %v1296
    %v1810 = vunpack.c.l.b16 %v1297
    %v1811 = vunpack.c.l.b16 %v1298
    %v1812 = vunpack.c.l.b16 %v1299
    %v1813 = vunpack.c.l.b16 %v1300
    %v1814 = vunpack.c.l.b16 %v1301
    %v1815 = vunpack.c.l.b16 %v1302
    %v1816 = vunpack.c.l.b16 %v1303
    %v1817 = vunpack.c.l.b16 %v1304
    %v1818 = vunpack.c.l.b16 %v1305
    %v1819 = vunpack.c.l.b16 %v1306
    %v1820 = vunpack.c.l.b16 %v1307
    %v1821 = vunpack.c.l.b16 %v1308
    %v1822 = vunpack.c.l.b16 %v1309
    %v1823 = vunpack.c.l.b16 %v1310
    %v1824 = vunpack.c.l.b16 %v1311
    %v1825 = vunpack.c.l.b16 %v1312
    %v1826 = vunpack.c.l.b16 %v1313
    %v1827 = vunpack.c.l.b16 %v1314
    %v1828 = vunpack.c.l.b16 %v1315
    %v1829 = vunpack.c.l.b16 %v1316
    %v1830 = vpack.c.b16 %v1798, %v1798
    %v1831 = vpack.c.b16 %v1799, %v1799
    %v1832 = vpack.c.b16 %v1800, %v1800
    %v1833 = vpack.c.b16 %v1801, %v1801
    %v1834 = vpack.c.b16 %v1802, %v1802
    %v1835 = vpack.c.b16 %v1803, %v1803
    %v1836 = vpack.c.b16 %v1804, %v1804
    %v1837 = vpack.c.b16 %v1805, %v1805
    %v1838 = vpack.c.b16 %v1806, %v1806
    %v1839 = vpack.c.b16 %v1807, %v1807
    %v1840 = vpack.c.b16 %v1808, %v1808
    %v1841 = vpack.c.b16 %v1809, %v1809
    %v1842 = vpack.c.b16 %v1810, %v1810
    %v1843 = vpack.c.b16 %v1811, %v1811
    %v1844 = vpack.c.b16 %v1812, %v1812
    %v1845 = vpack.c.b16 %v1813, %v1813
    %v1846 = vpack.c.b16 %v1814, %v1814
    %v1847 = vpack.c.b16 %v1815, %v1815
    %v1848 = vpack.c.b16 %v1816, %v1816
    %v1849 = vpack.c.b16 %v1817, %v1817
    %v1850 = vpack.c.b16 %v1818, %v1818
    %v1851 = vpack.c.b16 %v1819, %v1819
    %v1852 = vpack.c.b16 %v1820, %v1820
    %v1853 = vpack.c.b16 %v1821, %v1821
    %v1854 = vpack.c.b16 %v1822, %v1822
    %v1855 = vpack.c.b16 %v1823, %v1823
    %v1856 = vpack.c.b16 %v1824, %v1824
    %v1857 = vpack.c.b16 %v1825, %v1825
    %v1858 = vpack.c.b16 %v1826, %v1826
    %v1859 = vpack.c.b16 %v1827, %v1827
    %v1860 = vpack.c.b16 %v1828, %v1828
    %v1861 = vpack.c.b16 %v1829, %v1829
    %vm1862 = vsmask.f32 7424
    %v1864 = vshrl.u32 %v1734, 16
    %v1866 = vshll.u32 %v1734, 16
    %v1868 = vrot.slane %v1866, 1
    %v1869 = vor.u32 %v1864, %v1868
    %v1871 = vshll.u32 %v1830, 16
    %v1873 = vrot.slane %v1871, 1
    %v1874 = vsel %vm1862, %v1869, %v1873
    %v1876 = vshrl.u32 %v1735, 16
    %v1878 = vshll.u32 %v1735, 16
    %v1880 = vrot.slane %v1878, 1
    %v1881 = vor.u32 %v1876, %v1880
    %v1883 = vshll.u32 %v1831, 16
    %v1885 = vrot.slane %v1883, 1
    %v1886 = vsel %vm1862, %v1881, %v1885
    %v1888 = vshrl.u32 %v1736, 16
    %v1890 = vshll.u32 %v1736, 16
    %v1892 = vrot.slane %v1890, 1
    %v1893 = vor.u32 %v1888, %v1892
    %v1895 = vshll.u32 %v1832, 16
    %v1897 = vrot.slane %v1895, 1
    %v1898 = vsel %vm1862, %v1893, %v1897
    %v1900 = vshrl.u32 %v1737, 16
    %v1902 = vshll.u32 %v1737, 16
    %v1904 = vrot.slane %v1902, 1
    %v1905 = vor.u32 %v1900, %v1904
    %v1907 = vshll.u32 %v1833, 16
    %v1909 = vrot.slane %v1907, 1
    %v1910 = vsel %vm1862, %v1905, %v1909
    %v1912 = vshrl.u32 %v1738, 16
    %v1914 = vshll.u32 %v1738, 16
    %v1916 = vrot.slane %v1914, 1
    %v1917 = vor.u32 %v1912, %v1916
    %v1919 = vshll.u32 %v1834, 16
    %v1921 = vrot.slane %v1919, 1
    %v1922 = vsel %vm1862, %v1917, %v1921
    %v1924 = vshrl.u32 %v1739, 16
    %v1926 = vshll.u32 %v1739, 16
    %v1928 = vrot.slane %v1926, 1
    %v1929 = vor.u32 %v1924, %v1928
    %v1931 = vshll.u32 %v1835, 16
    %v1933 = vrot.slane %v1931, 1
    %v1934 = vsel %vm1862, %v1929, %v1933
    %v1936 = vshrl.u32 %v1740, 16
    %v1938 = vshll.u32 %v1740, 16
    %v1940 = vrot.slane %v1938, 1
    %v1941 = vor.u32 %v1936, %v1940
    %v1943 = vshll.u32 %v1836, 16
    %v1945 = vrot.slane %v1943, 1
    %v1946 = vsel %vm1862, %v1941, %v1945
    %v1948 = vshrl.u32 %v1741, 16
    %v1950 = vshll.u32 %v1741, 16
    %v1952 = vrot.slane %v1950, 1
    %v1953 = vor.u32 %v1948, %v1952
    %v1955 = vshll.u32 %v1837, 16
    %v1957 = vrot.slane %v1955, 1
    %v1958 = vsel %vm1862, %v1953, %v1957
    %v1960 = vshrl.u32 %v1742, 16
    %v1962 = vshll.u32 %v1742, 16
    %v1964 = vrot.slane %v1962, 1
    %v1965 = vor.u32 %v1960, %v1964
    %v1967 = vshll.u32 %v1838, 16
    %v1969 = vrot.slane %v1967, 1
    %v1970 = vsel %vm1862, %v1965, %v1969
    %v1972 = vshrl.u32 %v1743, 16
    %v1974 = vshll.u32 %v1743, 16
    %v1976 = vrot.slane %v1974, 1
    %v1977 = vor.u32 %v1972, %v1976
    %v1979 = vshll.u32 %v1839, 16
    %v1981 = vrot.slane %v1979, 1
    %v1982 = vsel %vm1862, %v1977, %v1981
    %v1984 = vshrl.u32 %v1744, 16
    %v1986 = vshll.u32 %v1744, 16
    %v1988 = vrot.slane %v1986, 1
    %v1989 = vor.u32 %v1984, %v1988
    %v1991 = vshll.u32 %v1840, 16
    %v1993 = vrot.slane %v1991, 1
    %v1994 = vsel %vm1862, %v1989, %v1993
    %v1996 = vshrl.u32 %v1745, 16
    %v1998 = vshll.u32 %v1745, 16
    %v2000 = vrot.slane %v1998, 1
    %v2001 = vor.u32 %v1996, %v2000
    %v2003 = vshll.u32 %v1841, 16
    %v2005 = vrot.slane %v2003, 1
    %v2006 = vsel %vm1862, %v2001, %v2005
    %v2008 = vshrl.u32 %v1746, 16
    %v2010 = vshll.u32 %v1746, 16
    %v2012 = vrot.slane %v2010, 1
    %v2013 = vor.u32 %v2008, %v2012
    %v2015 = vshll.u32 %v1842, 16
    %v2017 = vrot.slane %v2015, 1
    %v2018 = vsel %vm1862, %v2013, %v2017
    %v2020 = vshrl.u32 %v1747, 16
    %v2022 = vshll.u32 %v1747, 16
    %v2024 = vrot.slane %v2022, 1
    %v2025 = vor.u32 %v2020, %v2024
    %v2027 = vshll.u32 %v1843, 16
    %v2029 = vrot.slane %v2027, 1
    %v2030 = vsel %vm1862, %v2025, %v2029
    %v2032 = vshrl.u32 %v1748, 16
    %v2034 = vshll.u32 %v1748, 16
    %v2036 = vrot.slane %v2034, 1
    %v2037 = vor.u32 %v2032, %v2036
    %v2039 = vshll.u32 %v1844, 16
    %v2041 = vrot.slane %v2039, 1
    %v2042 = vsel %vm1862, %v2037, %v2041
    %v2044 = vshrl.u32 %v1749, 16
    %v2046 = vshll.u32 %v1749, 16
    %v2048 = vrot.slane %v2046, 1
    %v2049 = vor.u32 %v2044, %v2048
    %v2051 = vshll.u32 %v1845, 16
    %v2053 = vrot.slane %v2051, 1
    %v2054 = vsel %vm1862, %v2049, %v2053
    %v2056 = vshrl.u32 %v1750, 16
    %v2058 = vshll.u32 %v1750, 16
    %v2060 = vrot.slane %v2058, 1
    %v2061 = vor.u32 %v2056, %v2060
    %v2063 = vshll.u32 %v1846, 16
    %v2065 = vrot.slane %v2063, 1
    %v2066 = vsel %vm1862, %v2061, %v2065
    %v2068 = vshrl.u32 %v1751, 16
    %v2070 = vshll.u32 %v1751, 16
    %v2072 = vrot.slane %v2070, 1
    %v2073 = vor.u32 %v2068, %v2072
    %v2075 = vshll.u32 %v1847, 16
    %v2077 = vrot.slane %v2075, 1
    %v2078 = vsel %vm1862, %v2073, %v2077
    %v2080 = vshrl.u32 %v1752, 16
    %v2082 = vshll.u32 %v1752, 16
    %v2084 = vrot.slane %v2082, 1
    %v2085 = vor.u32 %v2080, %v2084
    %v2087 = vshll.u32 %v1848, 16
    %v2089 = vrot.slane %v2087, 1
    %v2090 = vsel %vm1862, %v2085, %v2089
    %v2092 = vshrl.u32 %v1753, 16
    %v2094 = vshll.u32 %v1753, 16
    %v2096 = vrot.slane %v2094, 1
    %v2097 = vor.u32 %v2092, %v2096
    %v2099 = vshll.u32 %v1849, 16
    %v2101 = vrot.slane %v2099, 1
    %v2102 = vsel %vm1862, %v2097, %v2101
    %v2104 = vshrl.u32 %v1754, 16
    %v2106 = vshll.u32 %v1754, 16
    %v2108 = vrot.slane %v2106, 1
    %v2109 = vor.u32 %v2104, %v2108
    %v2111 = vshll.u32 %v1850, 16
    %v2113 = vrot.slane %v2111, 1
    %v2114 = vsel %vm1862, %v2109, %v2113
    %v2116 = vshrl.u32 %v1755, 16
    %v2118 = vshll.u32 %v1755, 16
    %v2120 = vrot.slane %v2118, 1
    %v2121 = vor.u32 %v2116, %v2120
    %v2123 = vshll.u32 %v1851, 16
    %v2125 = vrot.slane %v2123, 1
    %v2126 = vsel %vm1862, %v2121, %v2125
    %v2128 = vshrl.u32 %v1756, 16
    %v2130 = vshll.u32 %v1756, 16
    %v2132 = vrot.slane %v2130, 1
    %v2133 = vor.u32 %v2128, %v2132
    %v2135 = vshll.u32 %v1852, 16
    %v2137 = vrot.slane %v2135, 1
    %v2138 = vsel %vm1862, %v2133, %v2137
    %v2140 = vshrl.u32 %v1757, 16
    %v2142 = vshll.u32 %v1757, 16
    %v2144 = vrot.slane %v2142, 1
    %v2145 = vor.u32 %v2140, %v2144
    %v2147 = vshll.u32 %v1853, 16
    %v2149 = vrot.slane %v2147, 1
    %v2150 = vsel %vm1862, %v2145, %v2149
    %v2152 = vshrl.u32 %v1758, 16
    %v2154 = vshll.u32 %v1758, 16
    %v2156 = vrot.slane %v2154, 1
    %v2157 = vor.u32 %v2152, %v2156
    %v2159 = vshll.u32 %v1854, 16
    %v2161 = vrot.slane %v2159, 1
    %v2162 = vsel %vm1862, %v2157, %v2161
    %v2164 = vshrl.u32 %v1759, 16
    %v2166 = vshll.u32 %v1759, 16
    %v2168 = vrot.slane %v2166, 1
    %v2169 = vor.u32 %v2164, %v2168
    %v2171 = vshll.u32 %v1855, 16
    %v2173 = vrot.slane %v2171, 1
    %v2174 = vsel %vm1862, %v2169, %v2173
    %v2176 = vshrl.u32 %v1760, 16
    %v2178 = vshll.u32 %v1760, 16
    %v2180 = vrot.slane %v2178, 1
    %v2181 = vor.u32 %v2176, %v2180
    %v2183 = vshll.u32 %v1856, 16
    %v2185 = vrot.slane %v2183, 1
    %v2186 = vsel %vm1862, %v2181, %v2185
    %v2188 = vshrl.u32 %v1761, 16
    %v2190 = vshll.u32 %v1761, 16
    %v2192 = vrot.slane %v2190, 1
    %v2193 = vor.u32 %v2188, %v2192
    %v2195 = vshll.u32 %v1857, 16
    %v2197 = vrot.slane %v2195, 1
    %v2198 = vsel %vm1862, %v2193, %v2197
    %v2200 = vshrl.u32 %v1762, 16
    %v2202 = vshll.u32 %v1762, 16
    %v2204 = vrot.slane %v2202, 1
    %v2205 = vor.u32 %v2200, %v2204
    %v2207 = vshll.u32 %v1858, 16
    %v2209 = vrot.slane %v2207, 1
    %v2210 = vsel %vm1862, %v2205, %v2209
    %v2212 = vshrl.u32 %v1763, 16
    %v2214 = vshll.u32 %v1763, 16
    %v2216 = vrot.slane %v2214, 1
    %v2217 = vor.u32 %v2212, %v2216
    %v2219 = vshll.u32 %v1859, 16
    %v2221 = vrot.slane %v2219, 1
    %v2222 = vsel %vm1862, %v2217, %v2221
    %v2224 = vshrl.u32 %v1764, 16
    %v2226 = vshll.u32 %v1764, 16
    %v2228 = vrot.slane %v2226, 1
    %v2229 = vor.u32 %v2224, %v2228
    %v2231 = vshll.u32 %v1860, 16
    %v2233 = vrot.slane %v2231, 1
    %v2234 = vsel %vm1862, %v2229, %v2233
    %v2236 = vshrl.u32 %v1765, 16
    %v2238 = vshll.u32 %v1765, 16
    %v2240 = vrot.slane %v2238, 1
    %v2241 = vor.u32 %v2236, %v2240
    %v2243 = vshll.u32 %v1861, 16
    %v2245 = vrot.slane %v2243, 1
    %v2246 = vsel %vm1862, %v2241, %v2245
    %2247 = vrot.lane.b32.xlu0 %v1874, 4
    %v2248 = vpop.permute.xlu0 %2247
    %2249 = vrot.lane.b32.xlu0 %v1886, 4
    %v2250 = vpop.permute.xlu0 %2249
    %2251 = vrot.lane.b32.xlu0 %v1898, 4
    %v2252 = vpop.permute.xlu0 %2251
    %2253 = vrot.lane.b32.xlu0 %v1910, 4
    %v2254 = vpop.permute.xlu0 %2253
    %2255 = vrot.lane.b32.xlu0 %v1922, 4
    %v2256 = vpop.permute.xlu0 %2255
    %2257 = vrot.lane.b32.xlu0 %v1934, 4
    %v2258 = vpop.permute.xlu0 %2257
    %2259 = vrot.lane.b32.xlu0 %v1946, 4
    %v2260 = vpop.permute.xlu0 %2259
    %2261 = vrot.lane.b32.xlu0 %v1958, 4
    %v2262 = vpop.permute.xlu0 %2261
    %2263 = vrot.lane.b32.xlu0 %v1970, 4
    %v2264 = vpop.permute.xlu0 %2263
    %2265 = vrot.lane.b32.xlu0 %v1982, 4
    %v2266 = vpop.permute.xlu0 %2265
    %2267 = vrot.lane.b32.xlu0 %v1994, 4
    %v2268 = vpop.permute.xlu0 %2267
    %2269 = vrot.lane.b32.xlu0 %v2006, 4
    %v2270 = vpop.permute.xlu0 %2269
    %2271 = vrot.lane.b32.xlu0 %v2018, 4
    %v2272 = vpop.permute.xlu0 %2271
    %2273 = vrot.lane.b32.xlu0 %v2030, 4
    %v2274 = vpop.permute.xlu0 %2273
    %2275 = vrot.lane.b32.xlu0 %v2042, 4
    %v2276 = vpop.permute.xlu0 %2275
    %2277 = vrot.lane.b32.xlu0 %v2054, 4
    %v2278 = vpop.permute.xlu0 %2277
    %2279 = vrot.lane.b32.xlu0 %v2066, 4
    %v2280 = vpop.permute.xlu0 %2279
    %2281 = vrot.lane.b32.xlu0 %v2078, 4
    %v2282 = vpop.permute.xlu0 %2281
    %2283 = vrot.lane.b32.xlu0 %v2090, 4
    %v2284 = vpop.permute.xlu0 %2283
    %2285 = vrot.lane.b32.xlu0 %v2102, 4
    %v2286 = vpop.permute.xlu0 %2285
    %2287 = vrot.lane.b32.xlu0 %v2114, 4
    %v2288 = vpop.permute.xlu0 %2287
    %2289 = vrot.lane.b32.xlu0 %v2126, 4
    %v2290 = vpop.permute.xlu0 %2289
    %2291 = vrot.lane.b32.xlu0 %v2138, 4
    %v2292 = vpop.permute.xlu0 %2291
    %2293 = vrot.lane.b32.xlu0 %v2150, 4
    %v2294 = vpop.permute.xlu0 %2293
    %2295 = vrot.lane.b32.xlu0 %v2162, 4
    %v2296 = vpop.permute.xlu0 %2295
    %2297 = vrot.lane.b32.xlu0 %v2174, 4
    %v2298 = vpop.permute.xlu0 %2297
    %2299 = vrot.lane.b32.xlu0 %v2186, 4
    %v2300 = vpop.permute.xlu0 %2299
    %2301 = vrot.lane.b32.xlu0 %v2198, 4
    %v2302 = vpop.permute.xlu0 %2301
    %2303 = vrot.lane.b32.xlu0 %v2210, 4
    %v2304 = vpop.permute.xlu0 %2303
    %2305 = vrot.lane.b32.xlu0 %v2222, 4
    %v2306 = vpop.permute.xlu0 %2305
    %2307 = vrot.lane.b32.xlu0 %v2234, 4
    %v2308 = vpop.permute.xlu0 %2307
    %2309 = vrot.lane.b32.xlu0 %v2246, 4
    %v2310 = vpop.permute.xlu0 %2309
    %v2343 = vunpack.c.l.b16 %v1317
    %v2344 = vunpack.c.l.b16 %v1318
    %v2345 = vunpack.c.l.b16 %v1319
    %v2346 = vunpack.c.l.b16 %v1320
    %v2347 = vunpack.c.l.b16 %v1321
    %v2348 = vunpack.c.l.b16 %v1322
    %v2349 = vunpack.c.l.b16 %v1323
    %v2350 = vunpack.c.l.b16 %v1324
    %v2351 = vunpack.c.l.b16 %v1325
    %v2352 = vunpack.c.l.b16 %v1326
    %v2353 = vunpack.c.l.b16 %v1327
    %v2354 = vunpack.c.l.b16 %v1328
    %v2355 = vunpack.c.l.b16 %v1329
    %v2356 = vunpack.c.l.b16 %v1330
    %v2357 = vunpack.c.l.b16 %v1331
    %v2358 = vunpack.c.l.b16 %v1332
    %v2359 = vunpack.c.l.b16 %v1333
    %v2360 = vunpack.c.l.b16 %v1334
    %v2361 = vunpack.c.l.b16 %v1335
    %v2362 = vunpack.c.l.b16 %v1336
    %v2363 = vunpack.c.l.b16 %v1337
    %v2364 = vunpack.c.l.b16 %v1338
    %v2365 = vunpack.c.l.b16 %v1339
    %v2366 = vunpack.c.l.b16 %v1340
    %v2367 = vunpack.c.l.b16 %v1341
    %v2368 = vunpack.c.l.b16 %v1342
    %v2369 = vunpack.c.l.b16 %v1343
    %v2370 = vunpack.c.l.b16 %v1344
    %v2371 = vunpack.c.l.b16 %v1345
    %v2372 = vunpack.c.l.b16 %v1346
    %v2373 = vunpack.c.l.b16 %v1347
    %v2374 = vunpack.c.l.b16 %v1348
    %v2375 = vpack.c.b16 %v1671, %v2343
    %v2376 = vpack.c.b16 %v1673, %v2344
    %v2377 = vpack.c.b16 %v1675, %v2345
    %v2378 = vpack.c.b16 %v1677, %v2346
    %v2379 = vpack.c.b16 %v1679, %v2347
    %v2380 = vpack.c.b16 %v1681, %v2348
    %v2381 = vpack.c.b16 %v1683, %v2349
    %v2382 = vpack.c.b16 %v1685, %v2350
    %v2383 = vpack.c.b16 %v1687, %v2351
    %v2384 = vpack.c.b16 %v1689, %v2352
    %v2385 = vpack.c.b16 %v1691, %v2353
    %v2386 = vpack.c.b16 %v1693, %v2354
    %v2387 = vpack.c.b16 %v1695, %v2355
    %v2388 = vpack.c.b16 %v1697, %v2356
    %v2389 = vpack.c.b16 %v1699, %v2357
    %v2390 = vpack.c.b16 %v1701, %v2358
    %v2391 = vpack.c.b16 %v1703, %v2359
    %v2392 = vpack.c.b16 %v1705, %v2360
    %v2393 = vpack.c.b16 %v1707, %v2361
    %v2394 = vpack.c.b16 %v1709, %v2362
    %v2395 = vpack.c.b16 %v1711, %v2363
    %v2396 = vpack.c.b16 %v1713, %v2364
    %v2397 = vpack.c.b16 %v1715, %v2365
    %v2398 = vpack.c.b16 %v1717, %v2366
    %v2399 = vpack.c.b16 %v1719, %v2367
    %v2400 = vpack.c.b16 %v1721, %v2368
    %v2401 = vpack.c.b16 %v1723, %v2369
    %v2402 = vpack.c.b16 %v1725, %v2370
    %v2403 = vpack.c.b16 %v1727, %v2371
    %v2404 = vpack.c.b16 %v1729, %v2372
    %v2405 = vpack.c.b16 %v1731, %v2373
    %v2406 = vpack.c.b16 %v1733, %v2374
    %vm2407 = vcmask 1046528
    %v2408 = vrot.slane %v2375, 1
    %v2409 = vrot.slane %v1830, 1
    %v2410 = vsel %vm2407, %v2408, %v2409
    %v2411 = vrot.slane %v2376, 1
    %v2412 = vrot.slane %v1831, 1
    %v2413 = vsel %vm2407, %v2411, %v2412
    %v2414 = vrot.slane %v2377, 1
    %v2415 = vrot.slane %v1832, 1
    %v2416 = vsel %vm2407, %v2414, %v2415
    %v2417 = vrot.slane %v2378, 1
    %v2418 = vrot.slane %v1833, 1
    %v2419 = vsel %vm2407, %v2417, %v2418
    %v2420 = vrot.slane %v2379, 1
    %v2421 = vrot.slane %v1834, 1
    %v2422 = vsel %vm2407, %v2420, %v2421
    %v2423 = vrot.slane %v2380, 1
    %v2424 = vrot.slane %v1835, 1
    %v2425 = vsel %vm2407, %v2423, %v2424
    %v2426 = vrot.slane %v2381, 1
    %v2427 = vrot.slane %v1836, 1
    %v2428 = vsel %vm2407, %v2426, %v2427
    %v2429 = vrot.slane %v2382, 1
    %v2430 = vrot.slane %v1837, 1
    %v2431 = vsel %vm2407, %v2429, %v2430
    %v2432 = vrot.slane %v2383, 1
    %v2433 = vrot.slane %v1838, 1
    %v2434 = vsel %vm2407, %v2432, %v2433
    %v2435 = vrot.slane %v2384, 1
    %v2436 = vrot.slane %v1839, 1
    %v2437 = vsel %vm2407, %v2435, %v2436
    %v2438 = vrot.slane %v2385, 1
    %v2439 = vrot.slane %v1840, 1
    %v2440 = vsel %vm2407, %v2438, %v2439
    %v2441 = vrot.slane %v2386, 1
    %v2442 = vrot.slane %v1841, 1
    %v2443 = vsel %vm2407, %v2441, %v2442
    %v2444 = vrot.slane %v2387, 1
    %v2445 = vrot.slane %v1842, 1
    %v2446 = vsel %vm2407, %v2444, %v2445
    %v2447 = vrot.slane %v2388, 1
    %v2448 = vrot.slane %v1843, 1
    %v2449 = vsel %vm2407, %v2447, %v2448
    %v2450 = vrot.slane %v2389, 1
    %v2451 = vrot.slane %v1844, 1
    %v2452 = vsel %vm2407, %v2450, %v2451
    %v2453 = vrot.slane %v2390, 1
    %v2454 = vrot.slane %v1845, 1
    %v2455 = vsel %vm2407, %v2453, %v2454
    %v2456 = vrot.slane %v2391, 1
    %v2457 = vrot.slane %v1846, 1
    %v2458 = vsel %vm2407, %v2456, %v2457
    %v2459 = vrot.slane %v2392, 1
    %v2460 = vrot.slane %v1847, 1
    %v2461 = vsel %vm2407, %v2459, %v2460
    %v2462 = vrot.slane %v2393, 1
    %v2463 = vrot.slane %v1848, 1
    %v2464 = vsel %vm2407, %v2462, %v2463
    %v2465 = vrot.slane %v2394, 1
    %v2466 = vrot.slane %v1849, 1
    %v2467 = vsel %vm2407, %v2465, %v2466
    %v2468 = vrot.slane %v2395, 1
    %v2469 = vrot.slane %v1850, 1
    %v2470 = vsel %vm2407, %v2468, %v2469
    %v2471 = vrot.slane %v2396, 1
    %v2472 = vrot.slane %v1851, 1
    %v2473 = vsel %vm2407, %v2471, %v2472
    %v2474 = vrot.slane %v2397, 1
    %v2475 = vrot.slane %v1852, 1
    %v2476 = vsel %vm2407, %v2474, %v2475
    %v2477 = vrot.slane %v2398, 1
    %v2478 = vrot.slane %v1853, 1
    %v2479 = vsel %vm2407, %v2477, %v2478
    %v2480 = vrot.slane %v2399, 1
    %v2481 = vrot.slane %v1854, 1
    %v2482 = vsel %vm2407, %v2480, %v2481
    %v2483 = vrot.slane %v2400, 1
    %v2484 = vrot.slane %v1855, 1
    %v2485 = vsel %vm2407, %v2483, %v2484
    %v2486 = vrot.slane %v2401, 1
    %v2487 = vrot.slane %v1856, 1
    %v2488 = vsel %vm2407, %v2486, %v2487
    %v2489 = vrot.slane %v2402, 1
    %v2490 = vrot.slane %v1857, 1
    %v2491 = vsel %vm2407, %v2489, %v2490
    %v2492 = vrot.slane %v2403, 1
    %v2493 = vrot.slane %v1858, 1
    %v2494 = vsel %vm2407, %v2492, %v2493
    %v2495 = vrot.slane %v2404, 1
    %v2496 = vrot.slane %v1859, 1
    %v2497 = vsel %vm2407, %v2495, %v2496
    %v2498 = vrot.slane %v2405, 1
    %v2499 = vrot.slane %v1860, 1
    %v2500 = vsel %vm2407, %v2498, %v2499
    %v2501 = vrot.slane %v2406, 1
    %v2502 = vrot.slane %v1861, 1
    %v2503 = vsel %vm2407, %v2501, %v2502
    %2504 = vrot.lane.b32.xlu0 %v2410, 8
    %v2505 = vpop.permute.xlu0 %2504
    %2506 = vrot.lane.b32.xlu0 %v2413, 8
    %v2507 = vpop.permute.xlu0 %2506
    %2508 = vrot.lane.b32.xlu0 %v2416, 8
    %v2509 = vpop.permute.xlu0 %2508
    %2510 = vrot.lane.b32.xlu0 %v2419, 8
    %v2511 = vpop.permute.xlu0 %2510
    %2512 = vrot.lane.b32.xlu0 %v2422, 8
    %v2513 = vpop.permute.xlu0 %2512
    %2514 = vrot.lane.b32.xlu0 %v2425, 8
    %v2515 = vpop.permute.xlu0 %2514
    %2516 = vrot.lane.b32.xlu0 %v2428, 8
    %v2517 = vpop.permute.xlu0 %2516
    %2518 = vrot.lane.b32.xlu0 %v2431, 8
    %v2519 = vpop.permute.xlu0 %2518
    %2520 = vrot.lane.b32.xlu0 %v2434, 8
    %v2521 = vpop.permute.xlu0 %2520
    %2522 = vrot.lane.b32.xlu0 %v2437, 8
    %v2523 = vpop.permute.xlu0 %2522
    %2524 = vrot.lane.b32.xlu0 %v2440, 8
    %v2525 = vpop.permute.xlu0 %2524
    %2526 = vrot.lane.b32.xlu0 %v2443, 8
    %v2527 = vpop.permute.xlu0 %2526
    %2528 = vrot.lane.b32.xlu0 %v2446, 8
    %v2529 = vpop.permute.xlu0 %2528
    %2530 = vrot.lane.b32.xlu0 %v2449, 8
    %v2531 = vpop.permute.xlu0 %2530
    %2532 = vrot.lane.b32.xlu0 %v2452, 8
    %v2533 = vpop.permute.xlu0 %2532
    %2534 = vrot.lane.b32.xlu0 %v2455, 8
    %v2535 = vpop.permute.xlu0 %2534
    %2536 = vrot.lane.b32.xlu0 %v2458, 8
    %v2537 = vpop.permute.xlu0 %2536
    %2538 = vrot.lane.b32.xlu0 %v2461, 8
    %v2539 = vpop.permute.xlu0 %2538
    %2540 = vrot.lane.b32.xlu0 %v2464, 8
    %v2541 = vpop.permute.xlu0 %2540
    %2542 = vrot.lane.b32.xlu0 %v2467, 8
    %v2543 = vpop.permute.xlu0 %2542
    %2544 = vrot.lane.b32.xlu0 %v2470, 8
    %v2545 = vpop.permute.xlu0 %2544
    %2546 = vrot.lane.b32.xlu0 %v2473, 8
    %v2547 = vpop.permute.xlu0 %2546
    %2548 = vrot.lane.b32.xlu0 %v2476, 8
    %v2549 = vpop.permute.xlu0 %2548
    %2550 = vrot.lane.b32.xlu0 %v2479, 8
    %v2551 = vpop.permute.xlu0 %2550
    %2552 = vrot.lane.b32.xlu0 %v2482, 8
    %v2553 = vpop.permute.xlu0 %2552
    %2554 = vrot.lane.b32.xlu0 %v2485, 8
    %v2555 = vpop.permute.xlu0 %2554
    %2556 = vrot.lane.b32.xlu0 %v2488, 8
    %v2557 = vpop.permute.xlu0 %2556
    %2558 = vrot.lane.b32.xlu0 %v2491, 8
    %v2559 = vpop.permute.xlu0 %2558
    %2560 = vrot.lane.b32.xlu0 %v2494, 8
    %v2561 = vpop.permute.xlu0 %2560
    %2562 = vrot.lane.b32.xlu0 %v2497, 8
    %v2563 = vpop.permute.xlu0 %2562
    %2564 = vrot.lane.b32.xlu0 %v2500, 8
    %v2565 = vpop.permute.xlu0 %2564
    %2566 = vrot.lane.b32.xlu0 %v2503, 8
    %v2567 = vpop.permute.xlu0 %2566
    %v2632 = vunpack.c.l.b16 %v1349
    %v2633 = vunpack.c.l.b16 %v1350
    %v2634 = vunpack.c.l.b16 %v1351
    %v2635 = vunpack.c.l.b16 %v1352
    %v2636 = vunpack.c.l.b16 %v1353
    %v2637 = vunpack.c.l.b16 %v1354
    %v2638 = vunpack.c.l.b16 %v1355
    %v2639 = vunpack.c.l.b16 %v1356
    %v2640 = vunpack.c.l.b16 %v1357
    %v2641 = vunpack.c.l.b16 %v1358
    %v2642 = vunpack.c.l.b16 %v1359
    %v2643 = vunpack.c.l.b16 %v1360
    %v2644 = vunpack.c.l.b16 %v1361
    %v2645 = vunpack.c.l.b16 %v1362
    %v2646 = vunpack.c.l.b16 %v1363
    %v2647 = vunpack.c.l.b16 %v1364
    %v2648 = vunpack.c.l.b16 %v1365
    %v2649 = vunpack.c.l.b16 %v1366
    %v2650 = vunpack.c.l.b16 %v1367
    %v2651 = vunpack.c.l.b16 %v1368
    %v2652 = vunpack.c.l.b16 %v1369
    %v2653 = vunpack.c.l.b16 %v1370
    %v2654 = vunpack.c.l.b16 %v1371
    %v2655 = vunpack.c.l.b16 %v1372
    %v2656 = vunpack.c.l.b16 %v1373
    %v2657 = vunpack.c.l.b16 %v1374
    %v2658 = vunpack.c.l.b16 %v1375
    %v2659 = vunpack.c.l.b16 %v1376
    %v2660 = vunpack.c.l.b16 %v1377
    %v2661 = vunpack.c.l.b16 %v1378
    %v2662 = vunpack.c.l.b16 %v1379
    %v2663 = vunpack.c.l.b16 %v1380
    %v2664 = vunpack.c.l.b16 %v1381
    %v2665 = vunpack.c.l.b16 %v1382
    %v2666 = vunpack.c.l.b16 %v1383
    %v2667 = vunpack.c.l.b16 %v1384
    %v2668 = vunpack.c.l.b16 %v1385
    %v2669 = vunpack.c.l.b16 %v1386
    %v2670 = vunpack.c.l.b16 %v1387
    %v2671 = vunpack.c.l.b16 %v1388
    %v2672 = vunpack.c.l.b16 %v1389
    %v2673 = vunpack.c.l.b16 %v1390
    %v2674 = vunpack.c.l.b16 %v1391
    %v2675 = vunpack.c.l.b16 %v1392
    %v2676 = vunpack.c.l.b16 %v1393
    %v2677 = vunpack.c.l.b16 %v1394
    %v2678 = vunpack.c.l.b16 %v1395
    %v2679 = vunpack.c.l.b16 %v1396
    %v2680 = vunpack.c.l.b16 %v1397
    %v2681 = vunpack.c.l.b16 %v1398
    %v2682 = vunpack.c.l.b16 %v1399
    %v2683 = vunpack.c.l.b16 %v1400
    %v2684 = vunpack.c.l.b16 %v1401
    %v2685 = vunpack.c.l.b16 %v1402
    %v2686 = vunpack.c.l.b16 %v1403
    %v2687 = vunpack.c.l.b16 %v1404
    %v2688 = vunpack.c.l.b16 %v1405
    %v2689 = vunpack.c.l.b16 %v1406
    %v2690 = vunpack.c.l.b16 %v1407
    %v2691 = vunpack.c.l.b16 %v1408
    %v2692 = vunpack.c.l.b16 %v1409
    %v2693 = vunpack.c.l.b16 %v1410
    %v2694 = vunpack.c.l.b16 %v1411
    %v2695 = vunpack.c.l.b16 %v1412
    %v2696 = vpack.c.b16 %v2633, %v2632
    %v2697 = vpack.c.b16 %v2635, %v2634
    %v2698 = vpack.c.b16 %v2637, %v2636
    %v2699 = vpack.c.b16 %v2639, %v2638
    %v2700 = vpack.c.b16 %v2641, %v2640
    %v2701 = vpack.c.b16 %v2643, %v2642
    %v2702 = vpack.c.b16 %v2645, %v2644
    %v2703 = vpack.c.b16 %v2647, %v2646
    %v2704 = vpack.c.b16 %v2649, %v2648
    %v2705 = vpack.c.b16 %v2651, %v2650
    %v2706 = vpack.c.b16 %v2653, %v2652
    %v2707 = vpack.c.b16 %v2655, %v2654
    %v2708 = vpack.c.b16 %v2657, %v2656
    %v2709 = vpack.c.b16 %v2659, %v2658
    %v2710 = vpack.c.b16 %v2661, %v2660
    %v2711 = vpack.c.b16 %v2663, %v2662
    %v2712 = vpack.c.b16 %v2665, %v2664
    %v2713 = vpack.c.b16 %v2667, %v2666
    %v2714 = vpack.c.b16 %v2669, %v2668
    %v2715 = vpack.c.b16 %v2671, %v2670
    %v2716 = vpack.c.b16 %v2673, %v2672
    %v2717 = vpack.c.b16 %v2675, %v2674
    %v2718 = vpack.c.b16 %v2677, %v2676
    %v2719 = vpack.c.b16 %v2679, %v2678
    %v2720 = vpack.c.b16 %v2681, %v2680
    %v2721 = vpack.c.b16 %v2683, %v2682
    %v2722 = vpack.c.b16 %v2685, %v2684
    %v2723 = vpack.c.b16 %v2687, %v2686
    %v2724 = vpack.c.b16 %v2689, %v2688
    %v2725 = vpack.c.b16 %v2691, %v2690
    %v2726 = vpack.c.b16 %v2693, %v2692
    %v2727 = vpack.c.b16 %v2695, %v2694
    %2728 = vrot.lane.b32.xlu0 %v2696, 12
    %v2729 = vpop.permute.xlu0 %2728
    %2730 = vrot.lane.b32.xlu0 %v2697, 12
    %v2731 = vpop.permute.xlu0 %2730
    %2732 = vrot.lane.b32.xlu0 %v2698, 12
    %v2733 = vpop.permute.xlu0 %2732
    %2734 = vrot.lane.b32.xlu0 %v2699, 12
    %v2735 = vpop.permute.xlu0 %2734
    %2736 = vrot.lane.b32.xlu0 %v2700, 12
    %v2737 = vpop.permute.xlu0 %2736
    %2738 = vrot.lane.b32.xlu0 %v2701, 12
    %v2739 = vpop.permute.xlu0 %2738
    %2740 = vrot.lane.b32.xlu0 %v2702, 12
    %v2741 = vpop.permute.xlu0 %2740
    %2742 = vrot.lane.b32.xlu0 %v2703, 12
    %v2743 = vpop.permute.xlu0 %2742
    %2744 = vrot.lane.b32.xlu0 %v2704, 12
    %v2745 = vpop.permute.xlu0 %2744
    %2746 = vrot.lane.b32.xlu0 %v2705, 12
    %v2747 = vpop.permute.xlu0 %2746
    %2748 = vrot.lane.b32.xlu0 %v2706, 12
    %v2749 = vpop.permute.xlu0 %2748
    %2750 = vrot.lane.b32.xlu0 %v2707, 12
    %v2751 = vpop.permute.xlu0 %2750
    %2752 = vrot.lane.b32.xlu0 %v2708, 12
    %v2753 = vpop.permute.xlu0 %2752
    %2754 = vrot.lane.b32.xlu0 %v2709, 12
    %v2755 = vpop.permute.xlu0 %2754
    %2756 = vrot.lane.b32.xlu0 %v2710, 12
    %v2757 = vpop.permute.xlu0 %2756
    %2758 = vrot.lane.b32.xlu0 %v2711, 12
    %v2759 = vpop.permute.xlu0 %2758
    %2760 = vrot.lane.b32.xlu0 %v2712, 12
    %v2761 = vpop.permute.xlu0 %2760
    %2762 = vrot.lane.b32.xlu0 %v2713, 12
    %v2763 = vpop.permute.xlu0 %2762
    %2764 = vrot.lane.b32.xlu0 %v2714, 12
    %v2765 = vpop.permute.xlu0 %2764
    %2766 = vrot.lane.b32.xlu0 %v2715, 12
    %v2767 = vpop.permute.xlu0 %2766
    %2768 = vrot.lane.b32.xlu0 %v2716, 12
    %v2769 = vpop.permute.xlu0 %2768
    %2770 = vrot.lane.b32.xlu0 %v2717, 12
    %v2771 = vpop.permute.xlu0 %2770
    %2772 = vrot.lane.b32.xlu0 %v2718, 12
    %v2773 = vpop.permute.xlu0 %2772
    %2774 = vrot.lane.b32.xlu0 %v2719, 12
    %v2775 = vpop.permute.xlu0 %2774
    %2776 = vrot.lane.b32.xlu0 %v2720, 12
    %v2777 = vpop.permute.xlu0 %2776
    %2778 = vrot.lane.b32.xlu0 %v2721, 12
    %v2779 = vpop.permute.xlu0 %2778
    %2780 = vrot.lane.b32.xlu0 %v2722, 12
    %v2781 = vpop.permute.xlu0 %2780
    %2782 = vrot.lane.b32.xlu0 %v2723, 12
    %v2783 = vpop.permute.xlu0 %2782
    %2784 = vrot.lane.b32.xlu0 %v2724, 12
    %v2785 = vpop.permute.xlu0 %2784
    %2786 = vrot.lane.b32.xlu0 %v2725, 12
    %v2787 = vpop.permute.xlu0 %2786
    %2788 = vrot.lane.b32.xlu0 %v2726, 12
    %v2789 = vpop.permute.xlu0 %2788
    %2790 = vrot.lane.b32.xlu0 %v2727, 12
    %v2791 = vpop.permute.xlu0 %2790
    %v2824 = vunpack.c.l.b16 %v1413
    %v2825 = vunpack.c.l.b16 %v1414
    %v2826 = vunpack.c.l.b16 %v1415
    %v2827 = vunpack.c.l.b16 %v1416
    %v2828 = vunpack.c.l.b16 %v1417
    %v2829 = vunpack.c.l.b16 %v1418
    %v2830 = vunpack.c.l.b16 %v1419
    %v2831 = vunpack.c.l.b16 %v1420
    %v2832 = vunpack.c.l.b16 %v1421
    %v2833 = vunpack.c.l.b16 %v1422
    %v2834 = vunpack.c.l.b16 %v1423
    %v2835 = vunpack.c.l.b16 %v1424
    %v2836 = vunpack.c.l.b16 %v1425
    %v2837 = vunpack.c.l.b16 %v1426
    %v2838 = vunpack.c.l.b16 %v1427
    %v2839 = vunpack.c.l.b16 %v1428
    %v2840 = vunpack.c.l.b16 %v1429
    %v2841 = vunpack.c.l.b16 %v1430
    %v2842 = vunpack.c.l.b16 %v1431
    %v2843 = vunpack.c.l.b16 %v1432
    %v2844 = vunpack.c.l.b16 %v1433
    %v2845 = vunpack.c.l.b16 %v1434
    %v2846 = vunpack.c.l.b16 %v1435
    %v2847 = vunpack.c.l.b16 %v1436
    %v2848 = vunpack.c.l.b16 %v1437
    %v2849 = vunpack.c.l.b16 %v1438
    %v2850 = vunpack.c.l.b16 %v1439
    %v2851 = vunpack.c.l.b16 %v1440
    %v2852 = vunpack.c.l.b16 %v1441
    %v2853 = vunpack.c.l.b16 %v1442
    %v2854 = vunpack.c.l.b16 %v1443
    %v2855 = vunpack.c.l.b16 %v1444
    %v2856 = vpack.c.b16 %v2824, %v2824
    %v2857 = vpack.c.b16 %v2825, %v2825
    %v2858 = vpack.c.b16 %v2826, %v2826
    %v2859 = vpack.c.b16 %v2827, %v2827
    %v2860 = vpack.c.b16 %v2828, %v2828
    %v2861 = vpack.c.b16 %v2829, %v2829
    %v2862 = vpack.c.b16 %v2830, %v2830
    %v2863 = vpack.c.b16 %v2831, %v2831
    %v2864 = vpack.c.b16 %v2832, %v2832
    %v2865 = vpack.c.b16 %v2833, %v2833
    %v2866 = vpack.c.b16 %v2834, %v2834
    %v2867 = vpack.c.b16 %v2835, %v2835
    %v2868 = vpack.c.b16 %v2836, %v2836
    %v2869 = vpack.c.b16 %v2837, %v2837
    %v2870 = vpack.c.b16 %v2838, %v2838
    %v2871 = vpack.c.b16 %v2839, %v2839
    %v2872 = vpack.c.b16 %v2840, %v2840
    %v2873 = vpack.c.b16 %v2841, %v2841
    %v2874 = vpack.c.b16 %v2842, %v2842
    %v2875 = vpack.c.b16 %v2843, %v2843
    %v2876 = vpack.c.b16 %v2844, %v2844
    %v2877 = vpack.c.b16 %v2845, %v2845
    %v2878 = vpack.c.b16 %v2846, %v2846
    %v2879 = vpack.c.b16 %v2847, %v2847
    %v2880 = vpack.c.b16 %v2848, %v2848
    %v2881 = vpack.c.b16 %v2849, %v2849
    %v2882 = vpack.c.b16 %v2850, %v2850
    %v2883 = vpack.c.b16 %v2851, %v2851
    %v2884 = vpack.c.b16 %v2852, %v2852
    %v2885 = vpack.c.b16 %v2853, %v2853
    %v2886 = vpack.c.b16 %v2854, %v2854
    %v2887 = vpack.c.b16 %v2855, %v2855
    %v2889 = vshrl.u32 %v2696, 16
    %v2891 = vshll.u32 %v2696, 16
    %v2893 = vrot.slane %v2891, 1
    %v2894 = vor.u32 %v2889, %v2893
    %v2896 = vshll.u32 %v2856, 16
    %v2898 = vrot.slane %v2896, 1
    %v2899 = vsel %vm1862, %v2894, %v2898
    %v2901 = vshrl.u32 %v2697, 16
    %v2903 = vshll.u32 %v2697, 16
    %v2905 = vrot.slane %v2903, 1
    %v2906 = vor.u32 %v2901, %v2905
    %v2908 = vshll.u32 %v2857, 16
    %v2910 = vrot.slane %v2908, 1
    %v2911 = vsel %vm1862, %v2906, %v2910
    %v2913 = vshrl.u32 %v2698, 16
    %v2915 = vshll.u32 %v2698, 16
    %v2917 = vrot.slane %v2915, 1
    %v2918 = vor.u32 %v2913, %v2917
    %v2920 = vshll.u32 %v2858, 16
    %v2922 = vrot.slane %v2920, 1
    %v2923 = vsel %vm1862, %v2918, %v2922
    %v2925 = vshrl.u32 %v2699, 16
    %v2927 = vshll.u32 %v2699, 16
    %v2929 = vrot.slane %v2927, 1
    %v2930 = vor.u32 %v2925, %v2929
    %v2932 = vshll.u32 %v2859, 16
    %v2934 = vrot.slane %v2932, 1
    %v2935 = vsel %vm1862, %v2930, %v2934
    %v2937 = vshrl.u32 %v2700, 16
    %v2939 = vshll.u32 %v2700, 16
    %v2941 = vrot.slane %v2939, 1
    %v2942 = vor.u32 %v2937, %v2941
    %v2944 = vshll.u32 %v2860, 16
    %v2946 = vrot.slane %v2944, 1
    %v2947 = vsel %vm1862, %v2942, %v2946
    %v2949 = vshrl.u32 %v2701, 16
    %v2951 = vshll.u32 %v2701, 16
    %v2953 = vrot.slane %v2951, 1
    %v2954 = vor.u32 %v2949, %v2953
    %v2956 = vshll.u32 %v2861, 16
    %v2958 = vrot.slane %v2956, 1
    %v2959 = vsel %vm1862, %v2954, %v2958
    %v2961 = vshrl.u32 %v2702, 16
    %v2963 = vshll.u32 %v2702, 16
    %v2965 = vrot.slane %v2963, 1
    %v2966 = vor.u32 %v2961, %v2965
    %v2968 = vshll.u32 %v2862, 16
    %v2970 = vrot.slane %v2968, 1
    %v2971 = vsel %vm1862, %v2966, %v2970
    %v2973 = vshrl.u32 %v2703, 16
    %v2975 = vshll.u32 %v2703, 16
    %v2977 = vrot.slane %v2975, 1
    %v2978 = vor.u32 %v2973, %v2977
    %v2980 = vshll.u32 %v2863, 16
    %v2982 = vrot.slane %v2980, 1
    %v2983 = vsel %vm1862, %v2978, %v2982
    %v2985 = vshrl.u32 %v2704, 16
    %v2987 = vshll.u32 %v2704, 16
    %v2989 = vrot.slane %v2987, 1
    %v2990 = vor.u32 %v2985, %v2989
    %v2992 = vshll.u32 %v2864, 16
    %v2994 = vrot.slane %v2992, 1
    %v2995 = vsel %vm1862, %v2990, %v2994
    %v2997 = vshrl.u32 %v2705, 16
    %v2999 = vshll.u32 %v2705, 16
    %v3001 = vrot.slane %v2999, 1
    %v3002 = vor.u32 %v2997, %v3001
    %v3004 = vshll.u32 %v2865, 16
    %v3006 = vrot.slane %v3004, 1
    %v3007 = vsel %vm1862, %v3002, %v3006
    %v3009 = vshrl.u32 %v2706, 16
    %v3011 = vshll.u32 %v2706, 16
    %v3013 = vrot.slane %v3011, 1
    %v3014 = vor.u32 %v3009, %v3013
    %v3016 = vshll.u32 %v2866, 16
    %v3018 = vrot.slane %v3016, 1
    %v3019 = vsel %vm1862, %v3014, %v3018
    %v3021 = vshrl.u32 %v2707, 16
    %v3023 = vshll.u32 %v2707, 16
    %v3025 = vrot.slane %v3023, 1
    %v3026 = vor.u32 %v3021, %v3025
    %v3028 = vshll.u32 %v2867, 16
    %v3030 = vrot.slane %v3028, 1
    %v3031 = vsel %vm1862, %v3026, %v3030
    %v3033 = vshrl.u32 %v2708, 16
    %v3035 = vshll.u32 %v2708, 16
    %v3037 = vrot.slane %v3035, 1
    %v3038 = vor.u32 %v3033, %v3037
    %v3040 = vshll.u32 %v2868, 16
    %v3042 = vrot.slane %v3040, 1
    %v3043 = vsel %vm1862, %v3038, %v3042
    %v3045 = vshrl.u32 %v2709, 16
    %v3047 = vshll.u32 %v2709, 16
    %v3049 = vrot.slane %v3047, 1
    %v3050 = vor.u32 %v3045, %v3049
    %v3052 = vshll.u32 %v2869, 16
    %v3054 = vrot.slane %v3052, 1
    %v3055 = vsel %vm1862, %v3050, %v3054
    %v3057 = vshrl.u32 %v2710, 16
    %v3059 = vshll.u32 %v2710, 16
    %v3061 = vrot.slane %v3059, 1
    %v3062 = vor.u32 %v3057, %v3061
    %v3064 = vshll.u32 %v2870, 16
    %v3066 = vrot.slane %v3064, 1
    %v3067 = vsel %vm1862, %v3062, %v3066
    %v3069 = vshrl.u32 %v2711, 16
    %v3071 = vshll.u32 %v2711, 16
    %v3073 = vrot.slane %v3071, 1
    %v3074 = vor.u32 %v3069, %v3073
    %v3076 = vshll.u32 %v2871, 16
    %v3078 = vrot.slane %v3076, 1
    %v3079 = vsel %vm1862, %v3074, %v3078
    %v3081 = vshrl.u32 %v2712, 16
    %v3083 = vshll.u32 %v2712, 16
    %v3085 = vrot.slane %v3083, 1
    %v3086 = vor.u32 %v3081, %v3085
    %v3088 = vshll.u32 %v2872, 16
    %v3090 = vrot.slane %v3088, 1
    %v3091 = vsel %vm1862, %v3086, %v3090
    %v3093 = vshrl.u32 %v2713, 16
    %v3095 = vshll.u32 %v2713, 16
    %v3097 = vrot.slane %v3095, 1
    %v3098 = vor.u32 %v3093, %v3097
    %v3100 = vshll.u32 %v2873, 16
    %v3102 = vrot.slane %v3100, 1
    %v3103 = vsel %vm1862, %v3098, %v3102
    %v3105 = vshrl.u32 %v2714, 16
    %v3107 = vshll.u32 %v2714, 16
    %v3109 = vrot.slane %v3107, 1
    %v3110 = vor.u32 %v3105, %v3109
    %v3112 = vshll.u32 %v2874, 16
    %v3114 = vrot.slane %v3112, 1
    %v3115 = vsel %vm1862, %v3110, %v3114
    %v3117 = vshrl.u32 %v2715, 16
    %v3119 = vshll.u32 %v2715, 16
    %v3121 = vrot.slane %v3119, 1
    %v3122 = vor.u32 %v3117, %v3121
    %v3124 = vshll.u32 %v2875, 16
    %v3126 = vrot.slane %v3124, 1
    %v3127 = vsel %vm1862, %v3122, %v3126
    %v3129 = vshrl.u32 %v2716, 16
    %v3131 = vshll.u32 %v2716, 16
    %v3133 = vrot.slane %v3131, 1
    %v3134 = vor.u32 %v3129, %v3133
    %v3136 = vshll.u32 %v2876, 16
    %v3138 = vrot.slane %v3136, 1
    %v3139 = vsel %vm1862, %v3134, %v3138
    %v3141 = vshrl.u32 %v2717, 16
    %v3143 = vshll.u32 %v2717, 16
    %v3145 = vrot.slane %v3143, 1
    %v3146 = vor.u32 %v3141, %v3145
    %v3148 = vshll.u32 %v2877, 16
    %v3150 = vrot.slane %v3148, 1
    %v3151 = vsel %vm1862, %v3146, %v3150
    %v3153 = vshrl.u32 %v2718, 16
    %v3155 = vshll.u32 %v2718, 16
    %v3157 = vrot.slane %v3155, 1
    %v3158 = vor.u32 %v3153, %v3157
    %v3160 = vshll.u32 %v2878, 16
    %v3162 = vrot.slane %v3160, 1
    %v3163 = vsel %vm1862, %v3158, %v3162
    %v3165 = vshrl.u32 %v2719, 16
    %v3167 = vshll.u32 %v2719, 16
    %v3169 = vrot.slane %v3167, 1
    %v3170 = vor.u32 %v3165, %v3169
    %v3172 = vshll.u32 %v2879, 16
    %v3174 = vrot.slane %v3172, 1
    %v3175 = vsel %vm1862, %v3170, %v3174
    %v3177 = vshrl.u32 %v2720, 16
    %v3179 = vshll.u32 %v2720, 16
    %v3181 = vrot.slane %v3179, 1
    %v3182 = vor.u32 %v3177, %v3181
    %v3184 = vshll.u32 %v2880, 16
    %v3186 = vrot.slane %v3184, 1
    %v3187 = vsel %vm1862, %v3182, %v3186
    %v3189 = vshrl.u32 %v2721, 16
    %v3191 = vshll.u32 %v2721, 16
    %v3193 = vrot.slane %v3191, 1
    %v3194 = vor.u32 %v3189, %v3193
    %v3196 = vshll.u32 %v2881, 16
    %v3198 = vrot.slane %v3196, 1
    %v3199 = vsel %vm1862, %v3194, %v3198
    %v3201 = vshrl.u32 %v2722, 16
    %v3203 = vshll.u32 %v2722, 16
    %v3205 = vrot.slane %v3203, 1
    %v3206 = vor.u32 %v3201, %v3205
    %v3208 = vshll.u32 %v2882, 16
    %v3210 = vrot.slane %v3208, 1
    %v3211 = vsel %vm1862, %v3206, %v3210
    %v3213 = vshrl.u32 %v2723, 16
    %v3215 = vshll.u32 %v2723, 16
    %v3217 = vrot.slane %v3215, 1
    %v3218 = vor.u32 %v3213, %v3217
    %v3220 = vshll.u32 %v2883, 16
    %v3222 = vrot.slane %v3220, 1
    %v3223 = vsel %vm1862, %v3218, %v3222
    %v3225 = vshrl.u32 %v2724, 16
    %v3227 = vshll.u32 %v2724, 16
    %v3229 = vrot.slane %v3227, 1
    %v3230 = vor.u32 %v3225, %v3229
    %v3232 = vshll.u32 %v2884, 16
    %v3234 = vrot.slane %v3232, 1
    %v3235 = vsel %vm1862, %v3230, %v3234
    %v3237 = vshrl.u32 %v2725, 16
    %v3239 = vshll.u32 %v2725, 16
    %v3241 = vrot.slane %v3239, 1
    %v3242 = vor.u32 %v3237, %v3241
    %v3244 = vshll.u32 %v2885, 16
    %v3246 = vrot.slane %v3244, 1
    %v3247 = vsel %vm1862, %v3242, %v3246
    %v3249 = vshrl.u32 %v2726, 16
    %v3251 = vshll.u32 %v2726, 16
    %v3253 = vrot.slane %v3251, 1
    %v3254 = vor.u32 %v3249, %v3253
    %v3256 = vshll.u32 %v2886, 16
    %v3258 = vrot.slane %v3256, 1
    %v3259 = vsel %vm1862, %v3254, %v3258
    %v3261 = vshrl.u32 %v2727, 16
    %v3263 = vshll.u32 %v2727, 16
    %v3265 = vrot.slane %v3263, 1
    %v3266 = vor.u32 %v3261, %v3265
    %v3268 = vshll.u32 %v2887, 16
    %v3270 = vrot.slane %v3268, 1
    %v3271 = vsel %vm1862, %v3266, %v3270
    %3272 = vrot.lane.b32.xlu0 %v2899, 16
    %v3273 = vpop.permute.xlu0 %3272
    %3274 = vrot.lane.b32.xlu0 %v2911, 16
    %v3275 = vpop.permute.xlu0 %3274
    %3276 = vrot.lane.b32.xlu0 %v2923, 16
    %v3277 = vpop.permute.xlu0 %3276
    %3278 = vrot.lane.b32.xlu0 %v2935, 16
    %v3279 = vpop.permute.xlu0 %3278
    %3280 = vrot.lane.b32.xlu0 %v2947, 16
    %v3281 = vpop.permute.xlu0 %3280
    %3282 = vrot.lane.b32.xlu0 %v2959, 16
    %v3283 = vpop.permute.xlu0 %3282
    %3284 = vrot.lane.b32.xlu0 %v2971, 16
    %v3285 = vpop.permute.xlu0 %3284
    %3286 = vrot.lane.b32.xlu0 %v2983, 16
    %v3287 = vpop.permute.xlu0 %3286
    %3288 = vrot.lane.b32.xlu0 %v2995, 16
    %v3289 = vpop.permute.xlu0 %3288
    %3290 = vrot.lane.b32.xlu0 %v3007, 16
    %v3291 = vpop.permute.xlu0 %3290
    %3292 = vrot.lane.b32.xlu0 %v3019, 16
    %v3293 = vpop.permute.xlu0 %3292
    %3294 = vrot.lane.b32.xlu0 %v3031, 16
    %v3295 = vpop.permute.xlu0 %3294
    %3296 = vrot.lane.b32.xlu0 %v3043, 16
    %v3297 = vpop.permute.xlu0 %3296
    %3298 = vrot.lane.b32.xlu0 %v3055, 16
    %v3299 = vpop.permute.xlu0 %3298
    %3300 = vrot.lane.b32.xlu0 %v3067, 16
    %v3301 = vpop.permute.xlu0 %3300
    %3302 = vrot.lane.b32.xlu0 %v3079, 16
    %v3303 = vpop.permute.xlu0 %3302
    %3304 = vrot.lane.b32.xlu0 %v3091, 16
    %v3305 = vpop.permute.xlu0 %3304
    %3306 = vrot.lane.b32.xlu0 %v3103, 16
    %v3307 = vpop.permute.xlu0 %3306
    %3308 = vrot.lane.b32.xlu0 %v3115, 16
    %v3309 = vpop.permute.xlu0 %3308
    %3310 = vrot.lane.b32.xlu0 %v3127, 16
    %v3311 = vpop.permute.xlu0 %3310
    %3312 = vrot.lane.b32.xlu0 %v3139, 16
    %v3313 = vpop.permute.xlu0 %3312
    %3314 = vrot.lane.b32.xlu0 %v3151, 16
    %v3315 = vpop.permute.xlu0 %3314
    %3316 = vrot.lane.b32.xlu0 %v3163, 16
    %v3317 = vpop.permute.xlu0 %3316
    %3318 = vrot.lane.b32.xlu0 %v3175, 16
    %v3319 = vpop.permute.xlu0 %3318
    %3320 = vrot.lane.b32.xlu0 %v3187, 16
    %v3321 = vpop.permute.xlu0 %3320
    %3322 = vrot.lane.b32.xlu0 %v3199, 16
    %v3323 = vpop.permute.xlu0 %3322
    %3324 = vrot.lane.b32.xlu0 %v3211, 16
    %v3325 = vpop.permute.xlu0 %3324
    %3326 = vrot.lane.b32.xlu0 %v3223, 16
    %v3327 = vpop.permute.xlu0 %3326
    %3328 = vrot.lane.b32.xlu0 %v3235, 16
    %v3329 = vpop.permute.xlu0 %3328
    %3330 = vrot.lane.b32.xlu0 %v3247, 16
    %v3331 = vpop.permute.xlu0 %3330
    %3332 = vrot.lane.b32.xlu0 %v3259, 16
    %v3333 = vpop.permute.xlu0 %3332
    %3334 = vrot.lane.b32.xlu0 %v3271, 16
    %v3335 = vpop.permute.xlu0 %3334
    %v3368 = vunpack.c.l.b16 %v1445
    %v3369 = vunpack.c.l.b16 %v1446
    %v3370 = vunpack.c.l.b16 %v1447
    %v3371 = vunpack.c.l.b16 %v1448
    %v3372 = vunpack.c.l.b16 %v1449
    %v3373 = vunpack.c.l.b16 %v1450
    %v3374 = vunpack.c.l.b16 %v1451
    %v3375 = vunpack.c.l.b16 %v1452
    %v3376 = vunpack.c.l.b16 %v1453
    %v3377 = vunpack.c.l.b16 %v1454
    %v3378 = vunpack.c.l.b16 %v1455
    %v3379 = vunpack.c.l.b16 %v1456
    %v3380 = vunpack.c.l.b16 %v1457
    %v3381 = vunpack.c.l.b16 %v1458
    %v3382 = vunpack.c.l.b16 %v1459
    %v3383 = vunpack.c.l.b16 %v1460
    %v3384 = vunpack.c.l.b16 %v1461
    %v3385 = vunpack.c.l.b16 %v1462
    %v3386 = vunpack.c.l.b16 %v1463
    %v3387 = vunpack.c.l.b16 %v1464
    %v3388 = vunpack.c.l.b16 %v1465
    %v3389 = vunpack.c.l.b16 %v1466
    %v3390 = vunpack.c.l.b16 %v1467
    %v3391 = vunpack.c.l.b16 %v1468
    %v3392 = vunpack.c.l.b16 %v1469
    %v3393 = vunpack.c.l.b16 %v1470
    %v3394 = vunpack.c.l.b16 %v1471
    %v3395 = vunpack.c.l.b16 %v1472
    %v3396 = vunpack.c.l.b16 %v1473
    %v3397 = vunpack.c.l.b16 %v1474
    %v3398 = vunpack.c.l.b16 %v1475
    %v3399 = vunpack.c.l.b16 %v1476
    %v3400 = vpack.c.b16 %v2633, %v3368
    %v3401 = vpack.c.b16 %v2635, %v3369
    %v3402 = vpack.c.b16 %v2637, %v3370
    %v3403 = vpack.c.b16 %v2639, %v3371
    %v3404 = vpack.c.b16 %v2641, %v3372
    %v3405 = vpack.c.b16 %v2643, %v3373
    %v3406 = vpack.c.b16 %v2645, %v3374
    %v3407 = vpack.c.b16 %v2647, %v3375
    %v3408 = vpack.c.b16 %v2649, %v3376
    %v3409 = vpack.c.b16 %v2651, %v3377
    %v3410 = vpack.c.b16 %v2653, %v3378
    %v3411 = vpack.c.b16 %v2655, %v3379
    %v3412 = vpack.c.b16 %v2657, %v3380
    %v3413 = vpack.c.b16 %v2659, %v3381
    %v3414 = vpack.c.b16 %v2661, %v3382
    %v3415 = vpack.c.b16 %v2663, %v3383
    %v3416 = vpack.c.b16 %v2665, %v3384
    %v3417 = vpack.c.b16 %v2667, %v3385
    %v3418 = vpack.c.b16 %v2669, %v3386
    %v3419 = vpack.c.b16 %v2671, %v3387
    %v3420 = vpack.c.b16 %v2673, %v3388
    %v3421 = vpack.c.b16 %v2675, %v3389
    %v3422 = vpack.c.b16 %v2677, %v3390
    %v3423 = vpack.c.b16 %v2679, %v3391
    %v3424 = vpack.c.b16 %v2681, %v3392
    %v3425 = vpack.c.b16 %v2683, %v3393
    %v3426 = vpack.c.b16 %v2685, %v3394
    %v3427 = vpack.c.b16 %v2687, %v3395
    %v3428 = vpack.c.b16 %v2689, %v3396
    %v3429 = vpack.c.b16 %v2691, %v3397
    %v3430 = vpack.c.b16 %v2693, %v3398
    %v3431 = vpack.c.b16 %v2695, %v3399
    %v3432 = vrot.slane %v3400, 1
    %v3433 = vrot.slane %v2856, 1
    %v3434 = vsel %vm2407, %v3432, %v3433
    %v3435 = vrot.slane %v3401, 1
    %v3436 = vrot.slane %v2857, 1
    %v3437 = vsel %vm2407, %v3435, %v3436
    %v3438 = vrot.slane %v3402, 1
    %v3439 = vrot.slane %v2858, 1
    %v3440 = vsel %vm2407, %v3438, %v3439
    %v3441 = vrot.slane %v3403, 1
    %v3442 = vrot.slane %v2859, 1
    %v3443 = vsel %vm2407, %v3441, %v3442
    %v3444 = vrot.slane %v3404, 1
    %v3445 = vrot.slane %v2860, 1
    %v3446 = vsel %vm2407, %v3444, %v3445
    %v3447 = vrot.slane %v3405, 1
    %v3448 = vrot.slane %v2861, 1
    %v3449 = vsel %vm2407, %v3447, %v3448
    %v3450 = vrot.slane %v3406, 1
    %v3451 = vrot.slane %v2862, 1
    %v3452 = vsel %vm2407, %v3450, %v3451
    %v3453 = vrot.slane %v3407, 1
    %v3454 = vrot.slane %v2863, 1
    %v3455 = vsel %vm2407, %v3453, %v3454
    %v3456 = vrot.slane %v3408, 1
    %v3457 = vrot.slane %v2864, 1
    %v3458 = vsel %vm2407, %v3456, %v3457
    %v3459 = vrot.slane %v3409, 1
    %v3460 = vrot.slane %v2865, 1
    %v3461 = vsel %vm2407, %v3459, %v3460
    %v3462 = vrot.slane %v3410, 1
    %v3463 = vrot.slane %v2866, 1
    %v3464 = vsel %vm2407, %v3462, %v3463
    %v3465 = vrot.slane %v3411, 1
    %v3466 = vrot.slane %v2867, 1
    %v3467 = vsel %vm2407, %v3465, %v3466
    %v3468 = vrot.slane %v3412, 1
    %v3469 = vrot.slane %v2868, 1
    %v3470 = vsel %vm2407, %v3468, %v3469
    %v3471 = vrot.slane %v3413, 1
    %v3472 = vrot.slane %v2869, 1
    %v3473 = vsel %vm2407, %v3471, %v3472
    %v3474 = vrot.slane %v3414, 1
    %v3475 = vrot.slane %v2870, 1
    %v3476 = vsel %vm2407, %v3474, %v3475
    %v3477 = vrot.slane %v3415, 1
    %v3478 = vrot.slane %v2871, 1
    %v3479 = vsel %vm2407, %v3477, %v3478
    %v3480 = vrot.slane %v3416, 1
    %v3481 = vrot.slane %v2872, 1
    %v3482 = vsel %vm2407, %v3480, %v3481
    %v3483 = vrot.slane %v3417, 1
    %v3484 = vrot.slane %v2873, 1
    %v3485 = vsel %vm2407, %v3483, %v3484
    %v3486 = vrot.slane %v3418, 1
    %v3487 = vrot.slane %v2874, 1
    %v3488 = vsel %vm2407, %v3486, %v3487
    %v3489 = vrot.slane %v3419, 1
    %v3490 = vrot.slane %v2875, 1
    %v3491 = vsel %vm2407, %v3489, %v3490
    %v3492 = vrot.slane %v3420, 1
    %v3493 = vrot.slane %v2876, 1
    %v3494 = vsel %vm2407, %v3492, %v3493
    %v3495 = vrot.slane %v3421, 1
    %v3496 = vrot.slane %v2877, 1
    %v3497 = vsel %vm2407, %v3495, %v3496
    %v3498 = vrot.slane %v3422, 1
    %v3499 = vrot.slane %v2878, 1
    %v3500 = vsel %vm2407, %v3498, %v3499
    %v3501 = vrot.slane %v3423, 1
    %v3502 = vrot.slane %v2879, 1
    %v3503 = vsel %vm2407, %v3501, %v3502
    %v3504 = vrot.slane %v3424, 1
    %v3505 = vrot.slane %v2880, 1
    %v3506 = vsel %vm2407, %v3504, %v3505
    %v3507 = vrot.slane %v3425, 1
    %v3508 = vrot.slane %v2881, 1
    %v3509 = vsel %vm2407, %v3507, %v3508
    %v3510 = vrot.slane %v3426, 1
    %v3511 = vrot.slane %v2882, 1
    %v3512 = vsel %vm2407, %v3510, %v3511
    %v3513 = vrot.slane %v3427, 1
    %v3514 = vrot.slane %v2883, 1
    %v3515 = vsel %vm2407, %v3513, %v3514
    %v3516 = vrot.slane %v3428, 1
    %v3517 = vrot.slane %v2884, 1
    %v3518 = vsel %vm2407, %v3516, %v3517
    %v3519 = vrot.slane %v3429, 1
    %v3520 = vrot.slane %v2885, 1
    %v3521 = vsel %vm2407, %v3519, %v3520
    %v3522 = vrot.slane %v3430, 1
    %v3523 = vrot.slane %v2886, 1
    %v3524 = vsel %vm2407, %v3522, %v3523
    %v3525 = vrot.slane %v3431, 1
    %v3526 = vrot.slane %v2887, 1
    %v3527 = vsel %vm2407, %v3525, %v3526
    %3528 = vrot.lane.b32.xlu0 %v3434, 20
    %v3529 = vpop.permute.xlu0 %3528
    %3530 = vrot.lane.b32.xlu0 %v3437, 20
    %v3531 = vpop.permute.xlu0 %3530
    %3532 = vrot.lane.b32.xlu0 %v3440, 20
    %v3533 = vpop.permute.xlu0 %3532
    %3534 = vrot.lane.b32.xlu0 %v3443, 20
    %v3535 = vpop.permute.xlu0 %3534
    %3536 = vrot.lane.b32.xlu0 %v3446, 20
    %v3537 = vpop.permute.xlu0 %3536
    %3538 = vrot.lane.b32.xlu0 %v3449, 20
    %v3539 = vpop.permute.xlu0 %3538
    %3540 = vrot.lane.b32.xlu0 %v3452, 20
    %v3541 = vpop.permute.xlu0 %3540
    %3542 = vrot.lane.b32.xlu0 %v3455, 20
    %v3543 = vpop.permute.xlu0 %3542
    %3544 = vrot.lane.b32.xlu0 %v3458, 20
    %v3545 = vpop.permute.xlu0 %3544
    %3546 = vrot.lane.b32.xlu0 %v3461, 20
    %v3547 = vpop.permute.xlu0 %3546
    %3548 = vrot.lane.b32.xlu0 %v3464, 20
    %v3549 = vpop.permute.xlu0 %3548
    %3550 = vrot.lane.b32.xlu0 %v3467, 20
    %v3551 = vpop.permute.xlu0 %3550
    %3552 = vrot.lane.b32.xlu0 %v3470, 20
    %v3553 = vpop.permute.xlu0 %3552
    %3554 = vrot.lane.b32.xlu0 %v3473, 20
    %v3555 = vpop.permute.xlu0 %3554
    %3556 = vrot.lane.b32.xlu0 %v3476, 20
    %v3557 = vpop.permute.xlu0 %3556
    %3558 = vrot.lane.b32.xlu0 %v3479, 20
    %v3559 = vpop.permute.xlu0 %3558
    %3560 = vrot.lane.b32.xlu0 %v3482, 20
    %v3561 = vpop.permute.xlu0 %3560
    %3562 = vrot.lane.b32.xlu0 %v3485, 20
    %v3563 = vpop.permute.xlu0 %3562
    %3564 = vrot.lane.b32.xlu0 %v3488, 20
    %v3565 = vpop.permute.xlu0 %3564
    %3566 = vrot.lane.b32.xlu0 %v3491, 20
    %v3567 = vpop.permute.xlu0 %3566
    %3568 = vrot.lane.b32.xlu0 %v3494, 20
    %v3569 = vpop.permute.xlu0 %3568
    %3570 = vrot.lane.b32.xlu0 %v3497, 20
    %v3571 = vpop.permute.xlu0 %3570
    %3572 = vrot.lane.b32.xlu0 %v3500, 20
    %v3573 = vpop.permute.xlu0 %3572
    %3574 = vrot.lane.b32.xlu0 %v3503, 20
    %v3575 = vpop.permute.xlu0 %3574
    %3576 = vrot.lane.b32.xlu0 %v3506, 20
    %v3577 = vpop.permute.xlu0 %3576
    %3578 = vrot.lane.b32.xlu0 %v3509, 20
    %v3579 = vpop.permute.xlu0 %3578
    %3580 = vrot.lane.b32.xlu0 %v3512, 20
    %v3581 = vpop.permute.xlu0 %3580
    %3582 = vrot.lane.b32.xlu0 %v3515, 20
    %v3583 = vpop.permute.xlu0 %3582
    %3584 = vrot.lane.b32.xlu0 %v3518, 20
    %v3585 = vpop.permute.xlu0 %3584
    %3586 = vrot.lane.b32.xlu0 %v3521, 20
    %v3587 = vpop.permute.xlu0 %3586
    %3588 = vrot.lane.b32.xlu0 %v3524, 20
    %v3589 = vpop.permute.xlu0 %3588
    %3590 = vrot.lane.b32.xlu0 %v3527, 20
    %v3591 = vpop.permute.xlu0 %3590
    %v3656 = vunpack.c.l.b16 %v1478
    %v3657 = vunpack.c.l.b16 %v1479
    %v3658 = vunpack.c.l.b16 %v1480
    %v3659 = vunpack.c.l.b16 %v1481
    %v3660 = vunpack.c.l.b16 %v1482
    %v3661 = vunpack.c.l.b16 %v1483
    %v3662 = vunpack.c.l.b16 %v1484
    %v3663 = vunpack.c.l.b16 %v1485
    %v3664 = vunpack.c.l.b16 %v1486
    %v3665 = vunpack.c.l.b16 %v1487
    %v3666 = vunpack.c.l.b16 %v1488
    %v3667 = vunpack.c.l.b16 %v1489
    %v3668 = vunpack.c.l.b16 %v1490
    %v3669 = vunpack.c.l.b16 %v1491
    %v3670 = vunpack.c.l.b16 %v1492
    %v3671 = vunpack.c.l.b16 %v1493
    %v3672 = vunpack.c.l.b16 %v1494
    %v3673 = vunpack.c.l.b16 %v1495
    %v3674 = vunpack.c.l.b16 %v1496
    %v3675 = vunpack.c.l.b16 %v1497
    %v3676 = vunpack.c.l.b16 %v1498
    %v3677 = vunpack.c.l.b16 %v1499
    %v3678 = vunpack.c.l.b16 %v1500
    %v3679 = vunpack.c.l.b16 %v1501
    %v3680 = vunpack.c.l.b16 %v1502
    %v3681 = vunpack.c.l.b16 %v1503
    %v3682 = vunpack.c.l.b16 %v1504
    %v3683 = vunpack.c.l.b16 %v1505
    %v3684 = vunpack.c.l.b16 %v1506
    %v3685 = vunpack.c.l.b16 %v1507
    %v3686 = vunpack.c.l.b16 %v1508
    %v3687 = vunpack.c.l.b16 %v1509
    %v3688 = vunpack.c.l.b16 %v1510
    %v3689 = vunpack.c.l.b16 %v1511
    %v3690 = vunpack.c.l.b16 %v1512
    %v3691 = vunpack.c.l.b16 %v1513
    %v3692 = vunpack.c.l.b16 %v1514
    %v3693 = vunpack.c.l.b16 %v1515
    %v3694 = vunpack.c.l.b16 %v1516
    %v3695 = vunpack.c.l.b16 %v1517
    %v3696 = vunpack.c.l.b16 %v1518
    %v3697 = vunpack.c.l.b16 %v1519
    %v3698 = vunpack.c.l.b16 %v1520
    %v3699 = vunpack.c.l.b16 %v1521
    %v3700 = vunpack.c.l.b16 %v1522
    %v3701 = vunpack.c.l.b16 %v1523
    %v3702 = vunpack.c.l.b16 %v1524
    %v3703 = vunpack.c.l.b16 %v1525
    %v3704 = vunpack.c.l.b16 %v1526
    %v3705 = vunpack.c.l.b16 %v1527
    %v3706 = vunpack.c.l.b16 %v1528
    %v3707 = vunpack.c.l.b16 %v1529
    %v3708 = vunpack.c.l.b16 %v1530
    %v3709 = vunpack.c.l.b16 %v1531
    %v3710 = vunpack.c.l.b16 %v1532
    %v3711 = vunpack.c.l.b16 %v1533
    %v3712 = vunpack.c.l.b16 %v1534
    %v3713 = vunpack.c.l.b16 %v1535
    %v3714 = vunpack.c.l.b16 %v1536
    %v3715 = vunpack.c.l.b16 %v1537
    %v3716 = vunpack.c.l.b16 %v1538
    %v3717 = vunpack.c.l.b16 %v1539
    %v3718 = vunpack.c.l.b16 %v1540
    %v3719 = vunpack.c.l.b16 %v1541
    %v3720 = vpack.c.b16 %v3657, %v3656
    %v3721 = vpack.c.b16 %v3659, %v3658
    %v3722 = vpack.c.b16 %v3661, %v3660
    %v3723 = vpack.c.b16 %v3663, %v3662
    %v3724 = vpack.c.b16 %v3665, %v3664
    %v3725 = vpack.c.b16 %v3667, %v3666
    %v3726 = vpack.c.b16 %v3669, %v3668
    %v3727 = vpack.c.b16 %v3671, %v3670
    %v3728 = vpack.c.b16 %v3673, %v3672
    %v3729 = vpack.c.b16 %v3675, %v3674
    %v3730 = vpack.c.b16 %v3677, %v3676
    %v3731 = vpack.c.b16 %v3679, %v3678
    %v3732 = vpack.c.b16 %v3681, %v3680
    %v3733 = vpack.c.b16 %v3683, %v3682
    %v3734 = vpack.c.b16 %v3685, %v3684
    %v3735 = vpack.c.b16 %v3687, %v3686
    %v3736 = vpack.c.b16 %v3689, %v3688
    %v3737 = vpack.c.b16 %v3691, %v3690
    %v3738 = vpack.c.b16 %v3693, %v3692
    %v3739 = vpack.c.b16 %v3695, %v3694
    %v3740 = vpack.c.b16 %v3697, %v3696
    %v3741 = vpack.c.b16 %v3699, %v3698
    %v3742 = vpack.c.b16 %v3701, %v3700
    %v3743 = vpack.c.b16 %v3703, %v3702
    %v3744 = vpack.c.b16 %v3705, %v3704
    %v3745 = vpack.c.b16 %v3707, %v3706
    %v3746 = vpack.c.b16 %v3709, %v3708
    %v3747 = vpack.c.b16 %v3711, %v3710
    %v3748 = vpack.c.b16 %v3713, %v3712
    %v3749 = vpack.c.b16 %v3715, %v3714
    %v3750 = vpack.c.b16 %v3717, %v3716
    %v3751 = vpack.c.b16 %v3719, %v3718
    %3752 = vrot.lane.b32.xlu0 %v3720, 24
    %v3753 = vpop.permute.xlu0 %3752
    %3754 = vrot.lane.b32.xlu0 %v3721, 24
    %v3755 = vpop.permute.xlu0 %3754
    %3756 = vrot.lane.b32.xlu0 %v3722, 24
    %v3757 = vpop.permute.xlu0 %3756
    %3758 = vrot.lane.b32.xlu0 %v3723, 24
    %v3759 = vpop.permute.xlu0 %3758
    %3760 = vrot.lane.b32.xlu0 %v3724, 24
    %v3761 = vpop.permute.xlu0 %3760
    %3762 = vrot.lane.b32.xlu0 %v3725, 24
    %v3763 = vpop.permute.xlu0 %3762
    %3764 = vrot.lane.b32.xlu0 %v3726, 24
    %v3765 = vpop.permute.xlu0 %3764
    %3766 = vrot.lane.b32.xlu0 %v3727, 24
    %v3767 = vpop.permute.xlu0 %3766
    %3768 = vrot.lane.b32.xlu0 %v3728, 24
    %v3769 = vpop.permute.xlu0 %3768
    %3770 = vrot.lane.b32.xlu0 %v3729, 24
    %v3771 = vpop.permute.xlu0 %3770
    %3772 = vrot.lane.b32.xlu0 %v3730, 24
    %v3773 = vpop.permute.xlu0 %3772
    %3774 = vrot.lane.b32.xlu0 %v3731, 24
    %v3775 = vpop.permute.xlu0 %3774
    %3776 = vrot.lane.b32.xlu0 %v3732, 24
    %v3777 = vpop.permute.xlu0 %3776
    %3778 = vrot.lane.b32.xlu0 %v3733, 24
    %v3779 = vpop.permute.xlu0 %3778
    %3780 = vrot.lane.b32.xlu0 %v3734, 24
    %v3781 = vpop.permute.xlu0 %3780
    %3782 = vrot.lane.b32.xlu0 %v3735, 24
    %v3783 = vpop.permute.xlu0 %3782
    %3784 = vrot.lane.b32.xlu0 %v3736, 24
    %v3785 = vpop.permute.xlu0 %3784
    %3786 = vrot.lane.b32.xlu0 %v3737, 24
    %v3787 = vpop.permute.xlu0 %3786
    %3788 = vrot.lane.b32.xlu0 %v3738, 24
    %v3789 = vpop.permute.xlu0 %3788
    %3790 = vrot.lane.b32.xlu0 %v3739, 24
    %v3791 = vpop.permute.xlu0 %3790
    %3792 = vrot.lane.b32.xlu0 %v3740, 24
    %v3793 = vpop.permute.xlu0 %3792
    %3794 = vrot.lane.b32.xlu0 %v3741, 24
    %v3795 = vpop.permute.xlu0 %3794
    %3796 = vrot.lane.b32.xlu0 %v3742, 24
    %v3797 = vpop.permute.xlu0 %3796
    %3798 = vrot.lane.b32.xlu0 %v3743, 24
    %v3799 = vpop.permute.xlu0 %3798
    %3800 = vrot.lane.b32.xlu0 %v3744, 24
    %v3801 = vpop.permute.xlu0 %3800
    %3802 = vrot.lane.b32.xlu0 %v3745, 24
    %v3803 = vpop.permute.xlu0 %3802
    %3804 = vrot.lane.b32.xlu0 %v3746, 24
    %v3805 = vpop.permute.xlu0 %3804
    %3806 = vrot.lane.b32.xlu0 %v3747, 24
    %v3807 = vpop.permute.xlu0 %3806
    %3808 = vrot.lane.b32.xlu0 %v3748, 24
    %v3809 = vpop.permute.xlu0 %3808
    %3810 = vrot.lane.b32.xlu0 %v3749, 24
    %v3811 = vpop.permute.xlu0 %3810
    %3812 = vrot.lane.b32.xlu0 %v3750, 24
    %v3813 = vpop.permute.xlu0 %3812
    %3814 = vrot.lane.b32.xlu0 %v3751, 24
    %v3815 = vpop.permute.xlu0 %3814
    %v3848 = vunpack.c.l.b16 %v1542
    %v3849 = vunpack.c.l.b16 %v1543
    %v3850 = vunpack.c.l.b16 %v1544
    %v3851 = vunpack.c.l.b16 %v1545
    %v3852 = vunpack.c.l.b16 %v1546
    %v3853 = vunpack.c.l.b16 %v1547
    %v3854 = vunpack.c.l.b16 %v1548
    %v3855 = vunpack.c.l.b16 %v1549
    %v3856 = vunpack.c.l.b16 %v1550
    %v3857 = vunpack.c.l.b16 %v1551
    %v3858 = vunpack.c.l.b16 %v1552
    %v3859 = vunpack.c.l.b16 %v1553
    %v3860 = vunpack.c.l.b16 %v1554
    %v3861 = vunpack.c.l.b16 %v1555
    %v3862 = vunpack.c.l.b16 %v1556
    %v3863 = vunpack.c.l.b16 %v1557
    %v3864 = vunpack.c.l.b16 %v1558
    %v3865 = vunpack.c.l.b16 %v1559
    %v3866 = vunpack.c.l.b16 %v1560
    %v3867 = vunpack.c.l.b16 %v1561
    %v3868 = vunpack.c.l.b16 %v1562
    %v3869 = vunpack.c.l.b16 %v1563
    %v3870 = vunpack.c.l.b16 %v1564
    %v3871 = vunpack.c.l.b16 %v1565
    %v3872 = vunpack.c.l.b16 %v1566
    %v3873 = vunpack.c.l.b16 %v1567
    %v3874 = vunpack.c.l.b16 %v1568
    %v3875 = vunpack.c.l.b16 %v1569
    %v3876 = vunpack.c.l.b16 %v1570
    %v3877 = vunpack.c.l.b16 %v1571
    %v3878 = vunpack.c.l.b16 %v1572
    %v3879 = vunpack.c.l.b16 %v1573
    %v3880 = vpack.c.b16 %v3848, %v3848
    %v3881 = vpack.c.b16 %v3849, %v3849
    %v3882 = vpack.c.b16 %v3850, %v3850
    %v3883 = vpack.c.b16 %v3851, %v3851
    %v3884 = vpack.c.b16 %v3852, %v3852
    %v3885 = vpack.c.b16 %v3853, %v3853
    %v3886 = vpack.c.b16 %v3854, %v3854
    %v3887 = vpack.c.b16 %v3855, %v3855
    %v3888 = vpack.c.b16 %v3856, %v3856
    %v3889 = vpack.c.b16 %v3857, %v3857
    %v3890 = vpack.c.b16 %v3858, %v3858
    %v3891 = vpack.c.b16 %v3859, %v3859
    %v3892 = vpack.c.b16 %v3860, %v3860
    %v3893 = vpack.c.b16 %v3861, %v3861
    %v3894 = vpack.c.b16 %v3862, %v3862
    %v3895 = vpack.c.b16 %v3863, %v3863
    %v3896 = vpack.c.b16 %v3864, %v3864
    %v3897 = vpack.c.b16 %v3865, %v3865
    %v3898 = vpack.c.b16 %v3866, %v3866
    %v3899 = vpack.c.b16 %v3867, %v3867
    %v3900 = vpack.c.b16 %v3868, %v3868
    %v3901 = vpack.c.b16 %v3869, %v3869
    %v3902 = vpack.c.b16 %v3870, %v3870
    %v3903 = vpack.c.b16 %v3871, %v3871
    %v3904 = vpack.c.b16 %v3872, %v3872
    %v3905 = vpack.c.b16 %v3873, %v3873
    %v3906 = vpack.c.b16 %v3874, %v3874
    %v3907 = vpack.c.b16 %v3875, %v3875
    %v3908 = vpack.c.b16 %v3876, %v3876
    %v3909 = vpack.c.b16 %v3877, %v3877
    %v3910 = vpack.c.b16 %v3878, %v3878
    %v3911 = vpack.c.b16 %v3879, %v3879
    %v3913 = vshrl.u32 %v3720, 16
    %v3915 = vshll.u32 %v3720, 16
    %v3917 = vrot.slane %v3915, 1
    %v3918 = vor.u32 %v3913, %v3917
    %v3920 = vshll.u32 %v3880, 16
    %v3922 = vrot.slane %v3920, 1
    %v3923 = vsel %vm1862, %v3918, %v3922
    %v3925 = vshrl.u32 %v3721, 16
    %v3927 = vshll.u32 %v3721, 16
    %v3929 = vrot.slane %v3927, 1
    %v3930 = vor.u32 %v3925, %v3929
    %v3932 = vshll.u32 %v3881, 16
    %v3934 = vrot.slane %v3932, 1
    %v3935 = vsel %vm1862, %v3930, %v3934
    %v3937 = vshrl.u32 %v3722, 16
    %v3939 = vshll.u32 %v3722, 16
    %v3941 = vrot.slane %v3939, 1
    %v3942 = vor.u32 %v3937, %v3941
    %v3944 = vshll.u32 %v3882, 16
    %v3946 = vrot.slane %v3944, 1
    %v3947 = vsel %vm1862, %v3942, %v3946
    %v3949 = vshrl.u32 %v3723, 16
    %v3951 = vshll.u32 %v3723, 16
    %v3953 = vrot.slane %v3951, 1
    %v3954 = vor.u32 %v3949, %v3953
    %v3956 = vshll.u32 %v3883, 16
    %v3958 = vrot.slane %v3956, 1
    %v3959 = vsel %vm1862, %v3954, %v3958
    %v3961 = vshrl.u32 %v3724, 16
    %v3963 = vshll.u32 %v3724, 16
    %v3965 = vrot.slane %v3963, 1
    %v3966 = vor.u32 %v3961, %v3965
    %v3968 = vshll.u32 %v3884, 16
    %v3970 = vrot.slane %v3968, 1
    %v3971 = vsel %vm1862, %v3966, %v3970
    %v3973 = vshrl.u32 %v3725, 16
    %v3975 = vshll.u32 %v3725, 16
    %v3977 = vrot.slane %v3975, 1
    %v3978 = vor.u32 %v3973, %v3977
    %v3980 = vshll.u32 %v3885, 16
    %v3982 = vrot.slane %v3980, 1
    %v3983 = vsel %vm1862, %v3978, %v3982
    %v3985 = vshrl.u32 %v3726, 16
    %v3987 = vshll.u32 %v3726, 16
    %v3989 = vrot.slane %v3987, 1
    %v3990 = vor.u32 %v3985, %v3989
    %v3992 = vshll.u32 %v3886, 16
    %v3994 = vrot.slane %v3992, 1
    %v3995 = vsel %vm1862, %v3990, %v3994
    %v3997 = vshrl.u32 %v3727, 16
    %v3999 = vshll.u32 %v3727, 16
    %v4001 = vrot.slane %v3999, 1
    %v4002 = vor.u32 %v3997, %v4001
    %v4004 = vshll.u32 %v3887, 16
    %v4006 = vrot.slane %v4004, 1
    %v4007 = vsel %vm1862, %v4002, %v4006
    %v4009 = vshrl.u32 %v3728, 16
    %v4011 = vshll.u32 %v3728, 16
    %v4013 = vrot.slane %v4011, 1
    %v4014 = vor.u32 %v4009, %v4013
    %v4016 = vshll.u32 %v3888, 16
    %v4018 = vrot.slane %v4016, 1
    %v4019 = vsel %vm1862, %v4014, %v4018
    %v4021 = vshrl.u32 %v3729, 16
    %v4023 = vshll.u32 %v3729, 16
    %v4025 = vrot.slane %v4023, 1
    %v4026 = vor.u32 %v4021, %v4025
    %v4028 = vshll.u32 %v3889, 16
    %v4030 = vrot.slane %v4028, 1
    %v4031 = vsel %vm1862, %v4026, %v4030
    %v4033 = vshrl.u32 %v3730, 16
    %v4035 = vshll.u32 %v3730, 16
    %v4037 = vrot.slane %v4035, 1
    %v4038 = vor.u32 %v4033, %v4037
    %v4040 = vshll.u32 %v3890, 16
    %v4042 = vrot.slane %v4040, 1
    %v4043 = vsel %vm1862, %v4038, %v4042
    %v4045 = vshrl.u32 %v3731, 16
    %v4047 = vshll.u32 %v3731, 16
    %v4049 = vrot.slane %v4047, 1
    %v4050 = vor.u32 %v4045, %v4049
    %v4052 = vshll.u32 %v3891, 16
    %v4054 = vrot.slane %v4052, 1
    %v4055 = vsel %vm1862, %v4050, %v4054
    %v4057 = vshrl.u32 %v3732, 16
    %v4059 = vshll.u32 %v3732, 16
    %v4061 = vrot.slane %v4059, 1
    %v4062 = vor.u32 %v4057, %v4061
    %v4064 = vshll.u32 %v3892, 16
    %v4066 = vrot.slane %v4064, 1
    %v4067 = vsel %vm1862, %v4062, %v4066
    %v4069 = vshrl.u32 %v3733, 16
    %v4071 = vshll.u32 %v3733, 16
    %v4073 = vrot.slane %v4071, 1
    %v4074 = vor.u32 %v4069, %v4073
    %v4076 = vshll.u32 %v3893, 16
    %v4078 = vrot.slane %v4076, 1
    %v4079 = vsel %vm1862, %v4074, %v4078
    %v4081 = vshrl.u32 %v3734, 16
    %v4083 = vshll.u32 %v3734, 16
    %v4085 = vrot.slane %v4083, 1
    %v4086 = vor.u32 %v4081, %v4085
    %v4088 = vshll.u32 %v3894, 16
    %v4090 = vrot.slane %v4088, 1
    %v4091 = vsel %vm1862, %v4086, %v4090
    %v4093 = vshrl.u32 %v3735, 16
    %v4095 = vshll.u32 %v3735, 16
    %v4097 = vrot.slane %v4095, 1
    %v4098 = vor.u32 %v4093, %v4097
    %v4100 = vshll.u32 %v3895, 16
    %v4102 = vrot.slane %v4100, 1
    %v4103 = vsel %vm1862, %v4098, %v4102
    %v4105 = vshrl.u32 %v3736, 16
    %v4107 = vshll.u32 %v3736, 16
    %v4109 = vrot.slane %v4107, 1
    %v4110 = vor.u32 %v4105, %v4109
    %v4112 = vshll.u32 %v3896, 16
    %v4114 = vrot.slane %v4112, 1
    %v4115 = vsel %vm1862, %v4110, %v4114
    %v4117 = vshrl.u32 %v3737, 16
    %v4119 = vshll.u32 %v3737, 16
    %v4121 = vrot.slane %v4119, 1
    %v4122 = vor.u32 %v4117, %v4121
    %v4124 = vshll.u32 %v3897, 16
    %v4126 = vrot.slane %v4124, 1
    %v4127 = vsel %vm1862, %v4122, %v4126
    %v4129 = vshrl.u32 %v3738, 16
    %v4131 = vshll.u32 %v3738, 16
    %v4133 = vrot.slane %v4131, 1
    %v4134 = vor.u32 %v4129, %v4133
    %v4136 = vshll.u32 %v3898, 16
    %v4138 = vrot.slane %v4136, 1
    %v4139 = vsel %vm1862, %v4134, %v4138
    %v4141 = vshrl.u32 %v3739, 16
    %v4143 = vshll.u32 %v3739, 16
    %v4145 = vrot.slane %v4143, 1
    %v4146 = vor.u32 %v4141, %v4145
    %v4148 = vshll.u32 %v3899, 16
    %v4150 = vrot.slane %v4148, 1
    %v4151 = vsel %vm1862, %v4146, %v4150
    %v4153 = vshrl.u32 %v3740, 16
    %v4155 = vshll.u32 %v3740, 16
    %v4157 = vrot.slane %v4155, 1
    %v4158 = vor.u32 %v4153, %v4157
    %v4160 = vshll.u32 %v3900, 16
    %v4162 = vrot.slane %v4160, 1
    %v4163 = vsel %vm1862, %v4158, %v4162
    %v4165 = vshrl.u32 %v3741, 16
    %v4167 = vshll.u32 %v3741, 16
    %v4169 = vrot.slane %v4167, 1
    %v4170 = vor.u32 %v4165, %v4169
    %v4172 = vshll.u32 %v3901, 16
    %v4174 = vrot.slane %v4172, 1
    %v4175 = vsel %vm1862, %v4170, %v4174
    %v4177 = vshrl.u32 %v3742, 16
    %v4179 = vshll.u32 %v3742, 16
    %v4181 = vrot.slane %v4179, 1
    %v4182 = vor.u32 %v4177, %v4181
    %v4184 = vshll.u32 %v3902, 16
    %v4186 = vrot.slane %v4184, 1
    %v4187 = vsel %vm1862, %v4182, %v4186
    %v4189 = vshrl.u32 %v3743, 16
    %v4191 = vshll.u32 %v3743, 16
    %v4193 = vrot.slane %v4191, 1
    %v4194 = vor.u32 %v4189, %v4193
    %v4196 = vshll.u32 %v3903, 16
    %v4198 = vrot.slane %v4196, 1
    %v4199 = vsel %vm1862, %v4194, %v4198
    %v4201 = vshrl.u32 %v3744, 16
    %v4203 = vshll.u32 %v3744, 16
    %v4205 = vrot.slane %v4203, 1
    %v4206 = vor.u32 %v4201, %v4205
    %v4208 = vshll.u32 %v3904, 16
    %v4210 = vrot.slane %v4208, 1
    %v4211 = vsel %vm1862, %v4206, %v4210
    %v4213 = vshrl.u32 %v3745, 16
    %v4215 = vshll.u32 %v3745, 16
    %v4217 = vrot.slane %v4215, 1
    %v4218 = vor.u32 %v4213, %v4217
    %v4220 = vshll.u32 %v3905, 16
    %v4222 = vrot.slane %v4220, 1
    %v4223 = vsel %vm1862, %v4218, %v4222
    %v4225 = vshrl.u32 %v3746, 16
    %v4227 = vshll.u32 %v3746, 16
    %v4229 = vrot.slane %v4227, 1
    %v4230 = vor.u32 %v4225, %v4229
    %v4232 = vshll.u32 %v3906, 16
    %v4234 = vrot.slane %v4232, 1
    %v4235 = vsel %vm1862, %v4230, %v4234
    %v4237 = vshrl.u32 %v3747, 16
    %v4239 = vshll.u32 %v3747, 16
    %v4241 = vrot.slane %v4239, 1
    %v4242 = vor.u32 %v4237, %v4241
    %v4244 = vshll.u32 %v3907, 16
    %v4246 = vrot.slane %v4244, 1
    %v4247 = vsel %vm1862, %v4242, %v4246
    %v4249 = vshrl.u32 %v3748, 16
    %v4251 = vshll.u32 %v3748, 16
    %v4253 = vrot.slane %v4251, 1
    %v4254 = vor.u32 %v4249, %v4253
    %v4256 = vshll.u32 %v3908, 16
    %v4258 = vrot.slane %v4256, 1
    %v4259 = vsel %vm1862, %v4254, %v4258
    %v4261 = vshrl.u32 %v3749, 16
    %v4263 = vshll.u32 %v3749, 16
    %v4265 = vrot.slane %v4263, 1
    %v4266 = vor.u32 %v4261, %v4265
    %v4268 = vshll.u32 %v3909, 16
    %v4270 = vrot.slane %v4268, 1
    %v4271 = vsel %vm1862, %v4266, %v4270
    %v4273 = vshrl.u32 %v3750, 16
    %v4275 = vshll.u32 %v3750, 16
    %v4277 = vrot.slane %v4275, 1
    %v4278 = vor.u32 %v4273, %v4277
    %v4280 = vshll.u32 %v3910, 16
    %v4282 = vrot.slane %v4280, 1
    %v4283 = vsel %vm1862, %v4278, %v4282
    %v4285 = vshrl.u32 %v3751, 16
    %v4287 = vshll.u32 %v3751, 16
    %v4289 = vrot.slane %v4287, 1
    %v4290 = vor.u32 %v4285, %v4289
    %v4292 = vshll.u32 %v3911, 16
    %v4294 = vrot.slane %v4292, 1
    %v4295 = vsel %vm1862, %v4290, %v4294
    %4296 = vrot.lane.b32.xlu0 %v3923, 28
    %v4297 = vpop.permute.xlu0 %4296
    %4298 = vrot.lane.b32.xlu0 %v3935, 28
    %v4299 = vpop.permute.xlu0 %4298
    %4300 = vrot.lane.b32.xlu0 %v3947, 28
    %v4301 = vpop.permute.xlu0 %4300
    %4302 = vrot.lane.b32.xlu0 %v3959, 28
    %v4303 = vpop.permute.xlu0 %4302
    %4304 = vrot.lane.b32.xlu0 %v3971, 28
    %v4305 = vpop.permute.xlu0 %4304
    %4306 = vrot.lane.b32.xlu0 %v3983, 28
    %v4307 = vpop.permute.xlu0 %4306
    %4308 = vrot.lane.b32.xlu0 %v3995, 28
    %v4309 = vpop.permute.xlu0 %4308
    %4310 = vrot.lane.b32.xlu0 %v4007, 28
    %v4311 = vpop.permute.xlu0 %4310
    %4312 = vrot.lane.b32.xlu0 %v4019, 28
    %v4313 = vpop.permute.xlu0 %4312
    %4314 = vrot.lane.b32.xlu0 %v4031, 28
    %v4315 = vpop.permute.xlu0 %4314
    %4316 = vrot.lane.b32.xlu0 %v4043, 28
    %v4317 = vpop.permute.xlu0 %4316
    %4318 = vrot.lane.b32.xlu0 %v4055, 28
    %v4319 = vpop.permute.xlu0 %4318
    %4320 = vrot.lane.b32.xlu0 %v4067, 28
    %v4321 = vpop.permute.xlu0 %4320
    %4322 = vrot.lane.b32.xlu0 %v4079, 28
    %v4323 = vpop.permute.xlu0 %4322
    %4324 = vrot.lane.b32.xlu0 %v4091, 28
    %v4325 = vpop.permute.xlu0 %4324
    %4326 = vrot.lane.b32.xlu0 %v4103, 28
    %v4327 = vpop.permute.xlu0 %4326
    %4328 = vrot.lane.b32.xlu0 %v4115, 28
    %v4329 = vpop.permute.xlu0 %4328
    %4330 = vrot.lane.b32.xlu0 %v4127, 28
    %v4331 = vpop.permute.xlu0 %4330
    %4332 = vrot.lane.b32.xlu0 %v4139, 28
    %v4333 = vpop.permute.xlu0 %4332
    %4334 = vrot.lane.b32.xlu0 %v4151, 28
    %v4335 = vpop.permute.xlu0 %4334
    %4336 = vrot.lane.b32.xlu0 %v4163, 28
    %v4337 = vpop.permute.xlu0 %4336
    %4338 = vrot.lane.b32.xlu0 %v4175, 28
    %v4339 = vpop.permute.xlu0 %4338
    %4340 = vrot.lane.b32.xlu0 %v4187, 28
    %v4341 = vpop.permute.xlu0 %4340
    %4342 = vrot.lane.b32.xlu0 %v4199, 28
    %v4343 = vpop.permute.xlu0 %4342
    %4344 = vrot.lane.b32.xlu0 %v4211, 28
    %v4345 = vpop.permute.xlu0 %4344
    %4346 = vrot.lane.b32.xlu0 %v4223, 28
    %v4347 = vpop.permute.xlu0 %4346
    %4348 = vrot.lane.b32.xlu0 %v4235, 28
    %v4349 = vpop.permute.xlu0 %4348
    %4350 = vrot.lane.b32.xlu0 %v4247, 28
    %v4351 = vpop.permute.xlu0 %4350
    %4352 = vrot.lane.b32.xlu0 %v4259, 28
    %v4353 = vpop.permute.xlu0 %4352
    %4354 = vrot.lane.b32.xlu0 %v4271, 28
    %v4355 = vpop.permute.xlu0 %4354
    %4356 = vrot.lane.b32.xlu0 %v4283, 28
    %v4357 = vpop.permute.xlu0 %4356
    %4358 = vrot.lane.b32.xlu0 %v4295, 28
    %v4359 = vpop.permute.xlu0 %4358
    %v4392 = vunpack.c.l.b16 %v1574
    %v4393 = vunpack.c.l.b16 %v1575
    %v4394 = vunpack.c.l.b16 %v1576
    %v4395 = vunpack.c.l.b16 %v1577
    %v4396 = vunpack.c.l.b16 %v1578
    %v4397 = vunpack.c.l.b16 %v1579
    %v4398 = vunpack.c.l.b16 %v1580
    %v4399 = vunpack.c.l.b16 %v1581
    %v4400 = vunpack.c.l.b16 %v1582
    %v4401 = vunpack.c.l.b16 %v1583
    %v4402 = vunpack.c.l.b16 %v1584
    %v4403 = vunpack.c.l.b16 %v1585
    %v4404 = vunpack.c.l.b16 %v1586
    %v4405 = vunpack.c.l.b16 %v1587
    %v4406 = vunpack.c.l.b16 %v1588
    %v4407 = vunpack.c.l.b16 %v1589
    %v4408 = vunpack.c.l.b16 %v1590
    %v4409 = vunpack.c.l.b16 %v1591
    %v4410 = vunpack.c.l.b16 %v1592
    %v4411 = vunpack.c.l.b16 %v1593
    %v4412 = vunpack.c.l.b16 %v1594
    %v4413 = vunpack.c.l.b16 %v1595
    %v4414 = vunpack.c.l.b16 %v1596
    %v4415 = vunpack.c.l.b16 %v1597
    %v4416 = vunpack.c.l.b16 %v1598
    %v4417 = vunpack.c.l.b16 %v1599
    %v4418 = vunpack.c.l.b16 %v1600
    %v4419 = vunpack.c.l.b16 %v1601
    %v4420 = vunpack.c.l.b16 %v1602
    %v4421 = vunpack.c.l.b16 %v1603
    %v4422 = vunpack.c.l.b16 %v1604
    %v4423 = vunpack.c.l.b16 %v1605
    %v4424 = vpack.c.b16 %v3657, %v4392
    %v4425 = vpack.c.b16 %v3659, %v4393
    %v4426 = vpack.c.b16 %v3661, %v4394
    %v4427 = vpack.c.b16 %v3663, %v4395
    %v4428 = vpack.c.b16 %v3665, %v4396
    %v4429 = vpack.c.b16 %v3667, %v4397
    %v4430 = vpack.c.b16 %v3669, %v4398
    %v4431 = vpack.c.b16 %v3671, %v4399
    %v4432 = vpack.c.b16 %v3673, %v4400
    %v4433 = vpack.c.b16 %v3675, %v4401
    %v4434 = vpack.c.b16 %v3677, %v4402
    %v4435 = vpack.c.b16 %v3679, %v4403
    %v4436 = vpack.c.b16 %v3681, %v4404
    %v4437 = vpack.c.b16 %v3683, %v4405
    %v4438 = vpack.c.b16 %v3685, %v4406
    %v4439 = vpack.c.b16 %v3687, %v4407
    %v4440 = vpack.c.b16 %v3689, %v4408
    %v4441 = vpack.c.b16 %v3691, %v4409
    %v4442 = vpack.c.b16 %v3693, %v4410
    %v4443 = vpack.c.b16 %v3695, %v4411
    %v4444 = vpack.c.b16 %v3697, %v4412
    %v4445 = vpack.c.b16 %v3699, %v4413
    %v4446 = vpack.c.b16 %v3701, %v4414
    %v4447 = vpack.c.b16 %v3703, %v4415
    %v4448 = vpack.c.b16 %v3705, %v4416
    %v4449 = vpack.c.b16 %v3707, %v4417
    %v4450 = vpack.c.b16 %v3709, %v4418
    %v4451 = vpack.c.b16 %v3711, %v4419
    %v4452 = vpack.c.b16 %v3713, %v4420
    %v4453 = vpack.c.b16 %v3715, %v4421
    %v4454 = vpack.c.b16 %v3717, %v4422
    %v4455 = vpack.c.b16 %v3719, %v4423
    %v4456 = vrot.slane %v4424, 1
    %v4457 = vrot.slane %v3880, 1
    %v4458 = vsel %vm2407, %v4456, %v4457
    %v4459 = vrot.slane %v4425, 1
    %v4460 = vrot.slane %v3881, 1
    %v4461 = vsel %vm2407, %v4459, %v4460
    %v4462 = vrot.slane %v4426, 1
    %v4463 = vrot.slane %v3882, 1
    %v4464 = vsel %vm2407, %v4462, %v4463
    %v4465 = vrot.slane %v4427, 1
    %v4466 = vrot.slane %v3883, 1
    %v4467 = vsel %vm2407, %v4465, %v4466
    %v4468 = vrot.slane %v4428, 1
    %v4469 = vrot.slane %v3884, 1
    %v4470 = vsel %vm2407, %v4468, %v4469
    %v4471 = vrot.slane %v4429, 1
    %v4472 = vrot.slane %v3885, 1
    %v4473 = vsel %vm2407, %v4471, %v4472
    %v4474 = vrot.slane %v4430, 1
    %v4475 = vrot.slane %v3886, 1
    %v4476 = vsel %vm2407, %v4474, %v4475
    %v4477 = vrot.slane %v4431, 1
    %v4478 = vrot.slane %v3887, 1
    %v4479 = vsel %vm2407, %v4477, %v4478
    %v4480 = vrot.slane %v4432, 1
    %v4481 = vrot.slane %v3888, 1
    %v4482 = vsel %vm2407, %v4480, %v4481
    %v4483 = vrot.slane %v4433, 1
    %v4484 = vrot.slane %v3889, 1
    %v4485 = vsel %vm2407, %v4483, %v4484
    %v4486 = vrot.slane %v4434, 1
    %v4487 = vrot.slane %v3890, 1
    %v4488 = vsel %vm2407, %v4486, %v4487
    %v4489 = vrot.slane %v4435, 1
    %v4490 = vrot.slane %v3891, 1
    %v4491 = vsel %vm2407, %v4489, %v4490
    %v4492 = vrot.slane %v4436, 1
    %v4493 = vrot.slane %v3892, 1
    %v4494 = vsel %vm2407, %v4492, %v4493
    %v4495 = vrot.slane %v4437, 1
    %v4496 = vrot.slane %v3893, 1
    %v4497 = vsel %vm2407, %v4495, %v4496
    %v4498 = vrot.slane %v4438, 1
    %v4499 = vrot.slane %v3894, 1
    %v4500 = vsel %vm2407, %v4498, %v4499
    %v4501 = vrot.slane %v4439, 1
    %v4502 = vrot.slane %v3895, 1
    %v4503 = vsel %vm2407, %v4501, %v4502
    %v4504 = vrot.slane %v4440, 1
    %v4505 = vrot.slane %v3896, 1
    %v4506 = vsel %vm2407, %v4504, %v4505
    %v4507 = vrot.slane %v4441, 1
    %v4508 = vrot.slane %v3897, 1
    %v4509 = vsel %vm2407, %v4507, %v4508
    %v4510 = vrot.slane %v4442, 1
    %v4511 = vrot.slane %v3898, 1
    %v4512 = vsel %vm2407, %v4510, %v4511
    %v4513 = vrot.slane %v4443, 1
    %v4514 = vrot.slane %v3899, 1
    %v4515 = vsel %vm2407, %v4513, %v4514
    %v4516 = vrot.slane %v4444, 1
    %v4517 = vrot.slane %v3900, 1
    %v4518 = vsel %vm2407, %v4516, %v4517
    %v4519 = vrot.slane %v4445, 1
    %v4520 = vrot.slane %v3901, 1
    %v4521 = vsel %vm2407, %v4519, %v4520
    %v4522 = vrot.slane %v4446, 1
    %v4523 = vrot.slane %v3902, 1
    %v4524 = vsel %vm2407, %v4522, %v4523
    %v4525 = vrot.slane %v4447, 1
    %v4526 = vrot.slane %v3903, 1
    %v4527 = vsel %vm2407, %v4525, %v4526
    %v4528 = vrot.slane %v4448, 1
    %v4529 = vrot.slane %v3904, 1
    %v4530 = vsel %vm2407, %v4528, %v4529
    %v4531 = vrot.slane %v4449, 1
    %v4532 = vrot.slane %v3905, 1
    %v4533 = vsel %vm2407, %v4531, %v4532
    %v4534 = vrot.slane %v4450, 1
    %v4535 = vrot.slane %v3906, 1
    %v4536 = vsel %vm2407, %v4534, %v4535
    %v4537 = vrot.slane %v4451, 1
    %v4538 = vrot.slane %v3907, 1
    %v4539 = vsel %vm2407, %v4537, %v4538
    %v4540 = vrot.slane %v4452, 1
    %v4541 = vrot.slane %v3908, 1
    %v4542 = vsel %vm2407, %v4540, %v4541
    %v4543 = vrot.slane %v4453, 1
    %v4544 = vrot.slane %v3909, 1
    %v4545 = vsel %vm2407, %v4543, %v4544
    %v4546 = vrot.slane %v4454, 1
    %v4547 = vrot.slane %v3910, 1
    %v4548 = vsel %vm2407, %v4546, %v4547
    %v4549 = vrot.slane %v4455, 1
    %v4550 = vrot.slane %v3911, 1
    %v4551 = vsel %vm2407, %v4549, %v4550
    %4552 = vrot.lane.b32.xlu0 %v4458, 32
    %v4553 = vpop.permute.xlu0 %4552
    %4554 = vrot.lane.b32.xlu0 %v4461, 32
    %v4555 = vpop.permute.xlu0 %4554
    %4556 = vrot.lane.b32.xlu0 %v4464, 32
    %v4557 = vpop.permute.xlu0 %4556
    %4558 = vrot.lane.b32.xlu0 %v4467, 32
    %v4559 = vpop.permute.xlu0 %4558
    %4560 = vrot.lane.b32.xlu0 %v4470, 32
    %v4561 = vpop.permute.xlu0 %4560
    %4562 = vrot.lane.b32.xlu0 %v4473, 32
    %v4563 = vpop.permute.xlu0 %4562
    %4564 = vrot.lane.b32.xlu0 %v4476, 32
    %v4565 = vpop.permute.xlu0 %4564
    %4566 = vrot.lane.b32.xlu0 %v4479, 32
    %v4567 = vpop.permute.xlu0 %4566
    %4568 = vrot.lane.b32.xlu0 %v4482, 32
    %v4569 = vpop.permute.xlu0 %4568
    %4570 = vrot.lane.b32.xlu0 %v4485, 32
    %v4571 = vpop.permute.xlu0 %4570
    %4572 = vrot.lane.b32.xlu0 %v4488, 32
    %v4573 = vpop.permute.xlu0 %4572
    %4574 = vrot.lane.b32.xlu0 %v4491, 32
    %v4575 = vpop.permute.xlu0 %4574
    %4576 = vrot.lane.b32.xlu0 %v4494, 32
    %v4577 = vpop.permute.xlu0 %4576
    %4578 = vrot.lane.b32.xlu0 %v4497, 32
    %v4579 = vpop.permute.xlu0 %4578
    %4580 = vrot.lane.b32.xlu0 %v4500, 32
    %v4581 = vpop.permute.xlu0 %4580
    %4582 = vrot.lane.b32.xlu0 %v4503, 32
    %v4583 = vpop.permute.xlu0 %4582
    %4584 = vrot.lane.b32.xlu0 %v4506, 32
    %v4585 = vpop.permute.xlu0 %4584
    %4586 = vrot.lane.b32.xlu0 %v4509, 32
    %v4587 = vpop.permute.xlu0 %4586
    %4588 = vrot.lane.b32.xlu0 %v4512, 32
    %v4589 = vpop.permute.xlu0 %4588
    %4590 = vrot.lane.b32.xlu0 %v4515, 32
    %v4591 = vpop.permute.xlu0 %4590
    %4592 = vrot.lane.b32.xlu0 %v4518, 32
    %v4593 = vpop.permute.xlu0 %4592
    %4594 = vrot.lane.b32.xlu0 %v4521, 32
    %v4595 = vpop.permute.xlu0 %4594
    %4596 = vrot.lane.b32.xlu0 %v4524, 32
    %v4597 = vpop.permute.xlu0 %4596
    %4598 = vrot.lane.b32.xlu0 %v4527, 32
    %v4599 = vpop.permute.xlu0 %4598
    %4600 = vrot.lane.b32.xlu0 %v4530, 32
    %v4601 = vpop.permute.xlu0 %4600
    %4602 = vrot.lane.b32.xlu0 %v4533, 32
    %v4603 = vpop.permute.xlu0 %4602
    %4604 = vrot.lane.b32.xlu0 %v4536, 32
    %v4605 = vpop.permute.xlu0 %4604
    %4606 = vrot.lane.b32.xlu0 %v4539, 32
    %v4607 = vpop.permute.xlu0 %4606
    %4608 = vrot.lane.b32.xlu0 %v4542, 32
    %v4609 = vpop.permute.xlu0 %4608
    %4610 = vrot.lane.b32.xlu0 %v4545, 32
    %v4611 = vpop.permute.xlu0 %4610
    %4612 = vrot.lane.b32.xlu0 %v4548, 32
    %v4613 = vpop.permute.xlu0 %4612
    %4614 = vrot.lane.b32.xlu0 %v4551, 32
    %v4615 = vpop.permute.xlu0 %4614
    %vm4616 = vcmask 31744
    %v4618 = vsel %vm4616, %v1734, %v2248
    %v4620 = vsel %vm4616, %v1735, %v2250
    %v4622 = vsel %vm4616, %v1736, %v2252
    %v4624 = vsel %vm4616, %v1737, %v2254
    %v4626 = vsel %vm4616, %v1738, %v2256
    %v4628 = vsel %vm4616, %v1739, %v2258
    %v4630 = vsel %vm4616, %v1740, %v2260
    %v4632 = vsel %vm4616, %v1741, %v2262
    %v4634 = vsel %vm4616, %v1742, %v2264
    %v4636 = vsel %vm4616, %v1743, %v2266
    %v4638 = vsel %vm4616, %v1744, %v2268
    %v4640 = vsel %vm4616, %v1745, %v2270
    %v4642 = vsel %vm4616, %v1746, %v2272
    %v4644 = vsel %vm4616, %v1747, %v2274
    %v4646 = vsel %vm4616, %v1748, %v2276
    %v4648 = vsel %vm4616, %v1749, %v2278
    %v4650 = vsel %vm4616, %v1750, %v2280
    %v4652 = vsel %vm4616, %v1751, %v2282
    %v4654 = vsel %vm4616, %v1752, %v2284
    %v4656 = vsel %vm4616, %v1753, %v2286
    %v4658 = vsel %vm4616, %v1754, %v2288
    %v4660 = vsel %vm4616, %v1755, %v2290
    %v4662 = vsel %vm4616, %v1756, %v2292
    %v4664 = vsel %vm4616, %v1757, %v2294
    %v4666 = vsel %vm4616, %v1758, %v2296
    %v4668 = vsel %vm4616, %v1759, %v2298
    %v4670 = vsel %vm4616, %v1760, %v2300
    %v4672 = vsel %vm4616, %v1761, %v2302
    %v4674 = vsel %vm4616, %v1762, %v2304
    %v4676 = vsel %vm4616, %v1763, %v2306
    %v4678 = vsel %vm4616, %v1764, %v2308
    %v4680 = vsel %vm4616, %v1765, %v2310
    %vm4681 = vcmask 64512
    %v4683 = vsel %vm4681, %v4618, %v2505
    %v4685 = vsel %vm4681, %v4620, %v2507
    %v4687 = vsel %vm4681, %v4622, %v2509
    %v4689 = vsel %vm4681, %v4624, %v2511
    %v4691 = vsel %vm4681, %v4626, %v2513
    %v4693 = vsel %vm4681, %v4628, %v2515
    %v4695 = vsel %vm4681, %v4630, %v2517
    %v4697 = vsel %vm4681, %v4632, %v2519
    %v4699 = vsel %vm4681, %v4634, %v2521
    %v4701 = vsel %vm4681, %v4636, %v2523
    %v4703 = vsel %vm4681, %v4638, %v2525
    %v4705 = vsel %vm4681, %v4640, %v2527
    %v4707 = vsel %vm4681, %v4642, %v2529
    %v4709 = vsel %vm4681, %v4644, %v2531
    %v4711 = vsel %vm4681, %v4646, %v2533
    %v4713 = vsel %vm4681, %v4648, %v2535
    %v4715 = vsel %vm4681, %v4650, %v2537
    %v4717 = vsel %vm4681, %v4652, %v2539
    %v4719 = vsel %vm4681, %v4654, %v2541
    %v4721 = vsel %vm4681, %v4656, %v2543
    %v4723 = vsel %vm4681, %v4658, %v2545
    %v4725 = vsel %vm4681, %v4660, %v2547
    %v4727 = vsel %vm4681, %v4662, %v2549
    %v4729 = vsel %vm4681, %v4664, %v2551
    %v4731 = vsel %vm4681, %v4666, %v2553
    %v4733 = vsel %vm4681, %v4668, %v2555
    %v4735 = vsel %vm4681, %v4670, %v2557
    %v4737 = vsel %vm4681, %v4672, %v2559
    %v4739 = vsel %vm4681, %v4674, %v2561
    %v4741 = vsel %vm4681, %v4676, %v2563
    %v4743 = vsel %vm4681, %v4678, %v2565
    %v4745 = vsel %vm4681, %v4680, %v2567
    %vm4746 = vcmask 97280
    %v4748 = vsel %vm4746, %v4683, %v2729
    %v4750 = vsel %vm4746, %v4685, %v2731
    %v4752 = vsel %vm4746, %v4687, %v2733
    %v4754 = vsel %vm4746, %v4689, %v2735
    %v4756 = vsel %vm4746, %v4691, %v2737
    %v4758 = vsel %vm4746, %v4693, %v2739
    %v4760 = vsel %vm4746, %v4695, %v2741
    %v4762 = vsel %vm4746, %v4697, %v2743
    %v4764 = vsel %vm4746, %v4699, %v2745
    %v4766 = vsel %vm4746, %v4701, %v2747
    %v4768 = vsel %vm4746, %v4703, %v2749
    %v4770 = vsel %vm4746, %v4705, %v2751
    %v4772 = vsel %vm4746, %v4707, %v2753
    %v4774 = vsel %vm4746, %v4709, %v2755
    %v4776 = vsel %vm4746, %v4711, %v2757
    %v4778 = vsel %vm4746, %v4713, %v2759
    %v4780 = vsel %vm4746, %v4715, %v2761
    %v4782 = vsel %vm4746, %v4717, %v2763
    %v4784 = vsel %vm4746, %v4719, %v2765
    %v4786 = vsel %vm4746, %v4721, %v2767
    %v4788 = vsel %vm4746, %v4723, %v2769
    %v4790 = vsel %vm4746, %v4725, %v2771
    %v4792 = vsel %vm4746, %v4727, %v2773
    %v4794 = vsel %vm4746, %v4729, %v2775
    %v4796 = vsel %vm4746, %v4731, %v2777
    %v4798 = vsel %vm4746, %v4733, %v2779
    %v4800 = vsel %vm4746, %v4735, %v2781
    %v4802 = vsel %vm4746, %v4737, %v2783
    %v4804 = vsel %vm4746, %v4739, %v2785
    %v4806 = vsel %vm4746, %v4741, %v2787
    %v4808 = vsel %vm4746, %v4743, %v2789
    %v4810 = vsel %vm4746, %v4745, %v2791
    %vm4811 = vcmask 130048
    %v4813 = vsel %vm4811, %v4748, %v3273
    %v4815 = vsel %vm4811, %v4750, %v3275
    %v4817 = vsel %vm4811, %v4752, %v3277
    %v4819 = vsel %vm4811, %v4754, %v3279
    %v4821 = vsel %vm4811, %v4756, %v3281
    %v4823 = vsel %vm4811, %v4758, %v3283
    %v4825 = vsel %vm4811, %v4760, %v3285
    %v4827 = vsel %vm4811, %v4762, %v3287
    %v4829 = vsel %vm4811, %v4764, %v3289
    %v4831 = vsel %vm4811, %v4766, %v3291
    %v4833 = vsel %vm4811, %v4768, %v3293
    %v4835 = vsel %vm4811, %v4770, %v3295
    %v4837 = vsel %vm4811, %v4772, %v3297
    %v4839 = vsel %vm4811, %v4774, %v3299
    %v4841 = vsel %vm4811, %v4776, %v3301
    %v4843 = vsel %vm4811, %v4778, %v3303
    %v4845 = vsel %vm4811, %v4780, %v3305
    %v4847 = vsel %vm4811, %v4782, %v3307
    %v4849 = vsel %vm4811, %v4784, %v3309
    %v4851 = vsel %vm4811, %v4786, %v3311
    %v4853 = vsel %vm4811, %v4788, %v3313
    %v4855 = vsel %vm4811, %v4790, %v3315
    %v4857 = vsel %vm4811, %v4792, %v3317
    %v4859 = vsel %vm4811, %v4794, %v3319
    %v4861 = vsel %vm4811, %v4796, %v3321
    %v4863 = vsel %vm4811, %v4798, %v3323
    %v4865 = vsel %vm4811, %v4800, %v3325
    %v4867 = vsel %vm4811, %v4802, %v3327
    %v4869 = vsel %vm4811, %v4804, %v3329
    %v4871 = vsel %vm4811, %v4806, %v3331
    %v4873 = vsel %vm4811, %v4808, %v3333
    %v4875 = vsel %vm4811, %v4810, %v3335
    %vm4876 = vcmask 162816
    %v4878 = vsel %vm4876, %v4813, %v3529
    %v4880 = vsel %vm4876, %v4815, %v3531
    %v4882 = vsel %vm4876, %v4817, %v3533
    %v4884 = vsel %vm4876, %v4819, %v3535
    %v4886 = vsel %vm4876, %v4821, %v3537
    %v4888 = vsel %vm4876, %v4823, %v3539
    %v4890 = vsel %vm4876, %v4825, %v3541
    %v4892 = vsel %vm4876, %v4827, %v3543
    %v4894 = vsel %vm4876, %v4829, %v3545
    %v4896 = vsel %vm4876, %v4831, %v3547
    %v4898 = vsel %vm4876, %v4833, %v3549
    %v4900 = vsel %vm4876, %v4835, %v3551
    %v4902 = vsel %vm4876, %v4837, %v3553
    %v4904 = vsel %vm4876, %v4839, %v3555
    %v4906 = vsel %vm4876, %v4841, %v3557
    %v4908 = vsel %vm4876, %v4843, %v3559
    %v4910 = vsel %vm4876, %v4845, %v3561
    %v4912 = vsel %vm4876, %v4847, %v3563
    %v4914 = vsel %vm4876, %v4849, %v3565
    %v4916 = vsel %vm4876, %v4851, %v3567
    %v4918 = vsel %vm4876, %v4853, %v3569
    %v4920 = vsel %vm4876, %v4855, %v3571
    %v4922 = vsel %vm4876, %v4857, %v3573
    %v4924 = vsel %vm4876, %v4859, %v3575
    %v4926 = vsel %vm4876, %v4861, %v3577
    %v4928 = vsel %vm4876, %v4863, %v3579
    %v4930 = vsel %vm4876, %v4865, %v3581
    %v4932 = vsel %vm4876, %v4867, %v3583
    %v4934 = vsel %vm4876, %v4869, %v3585
    %v4936 = vsel %vm4876, %v4871, %v3587
    %v4938 = vsel %vm4876, %v4873, %v3589
    %v4940 = vsel %vm4876, %v4875, %v3591
    %vm4941 = vcmask 195584
    %v4943 = vsel %vm4941, %v4878, %v3753
    %v4945 = vsel %vm4941, %v4880, %v3755
    %v4947 = vsel %vm4941, %v4882, %v3757
    %v4949 = vsel %vm4941, %v4884, %v3759
    %v4951 = vsel %vm4941, %v4886, %v3761
    %v4953 = vsel %vm4941, %v4888, %v3763
    %v4955 = vsel %vm4941, %v4890, %v3765
    %v4957 = vsel %vm4941, %v4892, %v3767
    %v4959 = vsel %vm4941, %v4894, %v3769
    %v4961 = vsel %vm4941, %v4896, %v3771
    %v4963 = vsel %vm4941, %v4898, %v3773
    %v4965 = vsel %vm4941, %v4900, %v3775
    %v4967 = vsel %vm4941, %v4902, %v3777
    %v4969 = vsel %vm4941, %v4904, %v3779
    %v4971 = vsel %vm4941, %v4906, %v3781
    %v4973 = vsel %vm4941, %v4908, %v3783
    %v4975 = vsel %vm4941, %v4910, %v3785
    %v4977 = vsel %vm4941, %v4912, %v3787
    %v4979 = vsel %vm4941, %v4914, %v3789
    %v4981 = vsel %vm4941, %v4916, %v3791
    %v4983 = vsel %vm4941, %v4918, %v3793
    %v4985 = vsel %vm4941, %v4920, %v3795
    %v4987 = vsel %vm4941, %v4922, %v3797
    %v4989 = vsel %vm4941, %v4924, %v3799
    %v4991 = vsel %vm4941, %v4926, %v3801
    %v4993 = vsel %vm4941, %v4928, %v3803
    %v4995 = vsel %vm4941, %v4930, %v3805
    %v4997 = vsel %vm4941, %v4932, %v3807
    %v4999 = vsel %vm4941, %v4934, %v3809
    %v5001 = vsel %vm4941, %v4936, %v3811
    %v5003 = vsel %vm4941, %v4938, %v3813
    %v5005 = vsel %vm4941, %v4940, %v3815
    %vm5006 = vcmask 228352
    %v5008 = vsel %vm5006, %v4943, %v4297
    %v5010 = vsel %vm5006, %v4945, %v4299
    %v5012 = vsel %vm5006, %v4947, %v4301
    %v5014 = vsel %vm5006, %v4949, %v4303
    %v5016 = vsel %vm5006, %v4951, %v4305
    %v5018 = vsel %vm5006, %v4953, %v4307
    %v5020 = vsel %vm5006, %v4955, %v4309
    %v5022 = vsel %vm5006, %v4957, %v4311
    %v5024 = vsel %vm5006, %v4959, %v4313
    %v5026 = vsel %vm5006, %v4961, %v4315
    %v5028 = vsel %vm5006, %v4963, %v4317
    %v5030 = vsel %vm5006, %v4965, %v4319
    %v5032 = vsel %vm5006, %v4967, %v4321
    %v5034 = vsel %vm5006, %v4969, %v4323
    %v5036 = vsel %vm5006, %v4971, %v4325
    %v5038 = vsel %vm5006, %v4973, %v4327
    %v5040 = vsel %vm5006, %v4975, %v4329
    %v5042 = vsel %vm5006, %v4977, %v4331
    %v5044 = vsel %vm5006, %v4979, %v4333
    %v5046 = vsel %vm5006, %v4981, %v4335
    %v5048 = vsel %vm5006, %v4983, %v4337
    %v5050 = vsel %vm5006, %v4985, %v4339
    %v5052 = vsel %vm5006, %v4987, %v4341
    %v5054 = vsel %vm5006, %v4989, %v4343
    %v5056 = vsel %vm5006, %v4991, %v4345
    %v5058 = vsel %vm5006, %v4993, %v4347
    %v5060 = vsel %vm5006, %v4995, %v4349
    %v5062 = vsel %vm5006, %v4997, %v4351
    %v5064 = vsel %vm5006, %v4999, %v4353
    %v5066 = vsel %vm5006, %v5001, %v4355
    %v5068 = vsel %vm5006, %v5003, %v4357
    %v5070 = vsel %vm5006, %v5005, %v4359
    %vm5071 = vcmask 261120
    %v5073 = vsel %vm5071, %v5008, %v4553
    %v5075 = vsel %vm5071, %v5010, %v4555
    %v5077 = vsel %vm5071, %v5012, %v4557
    %v5079 = vsel %vm5071, %v5014, %v4559
    %v5081 = vsel %vm5071, %v5016, %v4561
    %v5083 = vsel %vm5071, %v5018, %v4563
    %v5085 = vsel %vm5071, %v5020, %v4565
    %v5087 = vsel %vm5071, %v5022, %v4567
    %v5089 = vsel %vm5071, %v5024, %v4569
    %v5091 = vsel %vm5071, %v5026, %v4571
    %v5093 = vsel %vm5071, %v5028, %v4573
    %v5095 = vsel %vm5071, %v5030, %v4575
    %v5097 = vsel %vm5071, %v5032, %v4577
    %v5099 = vsel %vm5071, %v5034, %v4579
    %v5101 = vsel %vm5071, %v5036, %v4581
    %v5103 = vsel %vm5071, %v5038, %v4583
    %v5105 = vsel %vm5071, %v5040, %v4585
    %v5107 = vsel %vm5071, %v5042, %v4587
    %v5109 = vsel %vm5071, %v5044, %v4589
    %v5111 = vsel %vm5071, %v5046, %v4591
    %v5113 = vsel %vm5071, %v5048, %v4593
    %v5115 = vsel %vm5071, %v5050, %v4595
    %v5117 = vsel %vm5071, %v5052, %v4597
    %v5119 = vsel %vm5071, %v5054, %v4599
    %v5121 = vsel %vm5071, %v5056, %v4601
    %v5123 = vsel %vm5071, %v5058, %v4603
    %v5125 = vsel %vm5071, %v5060, %v4605
    %v5127 = vsel %vm5071, %v5062, %v4607
    %v5129 = vsel %vm5071, %v5064, %v4609
    %v5131 = vsel %vm5071, %v5066, %v4611
    %v5133 = vsel %vm5071, %v5068, %v4613
    %v5135 = vsel %vm5071, %v5070, %v4615
    %v5136 = vld [vmem:[%s1] sm:$0xf]
    %v5137 = vld [vmem:[%s1 + $0x4] sm:$0xf]
    %v5138 = vld [vmem:[%s1 + $0x8] sm:$0xf]
    %v5139 = vld [vmem:[%s1 + $0xc] sm:$0xf]
    %v5140 = vld [vmem:[%s1 + $0x10] sm:$0x3]
    %v5146 = vunpack.c.l.b16 %v5136
    %v5147 = vunpack.c.l.b16 %v5137
    %v5148 = vunpack.c.l.b16 %v5138
    %v5149 = vunpack.c.l.b16 %v5139
    %v5150 = vunpack.c.l.b16 %v5140
    %v5151 = vpack.c.b16 %v5147, %v5146
    %v5152 = vpack.c.b16 %v5149, %v5148
    %v5153 = vpack.c.b16 %v5150, %v5150
    %vm5156 = vcmask 293888
    %v5157 = vsel %vm5156, %v5073, 0
    %v5159 = vsel %vm5156, %v5075, 0
    %v5161 = vsel %vm5156, %v5077, 0
    %v5163 = vsel %vm5156, %v5079, 0
    %v5165 = vsel %vm5156, %v5081, 0
    %v5167 = vsel %vm5156, %v5083, 0
    %v5169 = vsel %vm5156, %v5085, 0
    %v5171 = vsel %vm5156, %v5087, 0
    %v5173 = vsel %vm5156, %v5089, 0
    %v5175 = vsel %vm5156, %v5091, 0
    %v5177 = vsel %vm5156, %v5093, 0
    %v5179 = vsel %vm5156, %v5095, 0
    %v5181 = vsel %vm5156, %v5097, 0
    %v5183 = vsel %vm5156, %v5099, 0
    %v5185 = vsel %vm5156, %v5101, 0
    %v5187 = vsel %vm5156, %v5103, 0
    %v5189 = vsel %vm5156, %v5105, 0
    %v5191 = vsel %vm5156, %v5107, 0
    %v5193 = vsel %vm5156, %v5109, 0
    %v5195 = vsel %vm5156, %v5111, 0
    %v5197 = vsel %vm5156, %v5113, 0
    %v5199 = vsel %vm5156, %v5115, 0
    %v5201 = vsel %vm5156, %v5117, 0
    %v5203 = vsel %vm5156, %v5119, 0
    %v5205 = vsel %vm5156, %v5121, 0
    %v5207 = vsel %vm5156, %v5123, 0
    %v5209 = vsel %vm5156, %v5125, 0
    %v5211 = vsel %vm5156, %v5127, 0
    %v5213 = vsel %vm5156, %v5129, 0
    %v5215 = vsel %vm5156, %v5131, 0
    %v5217 = vsel %vm5156, %v5133, 0
    %v5219 = vsel %vm5156, %v5135, 0
    %vm5221 = vcmask 1041408
    %v5223 = vsel %vm5221, %v5153, 0
    %5225 = vmatprep.subr.bf16.mxu0 0
    %5226 = vmatpush1.bf16.msra.mxu0 0
    %5227 = vmatprep.subr.bf16.mxu0 0
    %5228 = vmatpush1.bf16.msra.mxu0 0
    %5229 = vmatprep.subr.bf16.mxu0 0
    %5230 = vmatpush1.bf16.msra.mxu0 0
    %5231 = vmatprep.subr.bf16.mxu0 0
    %5232 = vmatpush1.bf16.msra.mxu0 0
    %5233 = vmatprep.subr.bf16.mxu0 0
    %5234 = vmatpush1.bf16.msra.mxu0 0
    %5235 = vmatprep.subr.bf16.mxu0 0
    %5236 = vmatpush1.bf16.msra.mxu0 %v5223
    %5237 = vmatprep.subr.bf16.mxu0 0
    %5238 = vmatpush1.bf16.msra.mxu0 %v5152
    %5239 = vmatprep.subr.bf16.mxu0 0
    %5240 = vmatpush1.bf16.msra.mxu0 %v5151
    %5241 = vmatprep.subr.bf16.mxu0 0
    %5242 = vmatpush2.bf16.msra.mxu0 0
    %5243 = vmatprep.subr.bf16.mxu0 0
    %5244 = vmatpush2.bf16.msra.mxu0 0
    %5245 = vmatprep.subr.bf16.mxu0 0
    %5246 = vmatpush2.bf16.msra.mxu0 0
    %5247 = vmatprep.subr.bf16.mxu0 0
    %5248 = vmatpush2.bf16.msra.mxu0 0
    %5249 = vmatprep.subr.bf16.mxu0 0
    %5250 = vmatpush2.bf16.msra.mxu0 0
    %5251 = vmatprep.subr.bf16.mxu0 0
    %5252 = vmatpush2.bf16.msra.mxu0 0
    %5253 = vmatprep.subr.bf16.mxu0 0
    %5254 = vmatpush2.bf16.msra.mxu0 0
    %5255 = vmatprep.subr.bf16.mxu0 0
    %5256 = vmatpush2.bf16.msra.mxu0 0
    %5257 = vmatprep.mubr.bf16.mxu0 0
    %5258 = vmatmul.mubr.bf16.gmra.mxu0 %v5157
    %v5259 = vpop.f32.mrf.mxu0
    %v5260 = vadd.f32 0.0, %v5259
    %v5261 = vpop.f32.mrf.mxu0
    %v5262 = vpop.f32.mrf.mxu0
    %v5263 = vadd.f32 0.0, %v5262
    %v5264 = vpop.f32.mrf.mxu0
    %5265 = vmatprep.mubr.bf16.mxu0 0
    %5266 = vmatmul.mubr.bf16.gmra.mxu0 %v5159
    %v5267 = vpop.f32.mrf.mxu0
    %v5268 = vadd.f32 0.0, %v5267
    %v5269 = vpop.f32.mrf.mxu0
    %v5270 = vpop.f32.mrf.mxu0
    %v5271 = vadd.f32 0.0, %v5270
    %v5272 = vpop.f32.mrf.mxu0
    %5273 = vmatprep.mubr.bf16.mxu0 0
    %5274 = vmatmul.mubr.bf16.gmra.mxu0 %v5161
    %v5275 = vpop.f32.mrf.mxu0
    %v5276 = vadd.f32 0.0, %v5275
    %v5277 = vpop.f32.mrf.mxu0
    %v5278 = vpop.f32.mrf.mxu0
    %v5279 = vadd.f32 0.0, %v5278
    %v5280 = vpop.f32.mrf.mxu0
    %5281 = vmatprep.mubr.bf16.mxu0 0
    %5282 = vmatmul.mubr.bf16.gmra.mxu0 %v5163
    %v5283 = vpop.f32.mrf.mxu0
    %v5284 = vadd.f32 0.0, %v5283
    %v5285 = vpop.f32.mrf.mxu0
    %v5286 = vpop.f32.mrf.mxu0
    %v5287 = vadd.f32 0.0, %v5286
    %v5288 = vpop.f32.mrf.mxu0
    %5289 = vmatprep.mubr.bf16.mxu0 0
    %5290 = vmatmul.mubr.bf16.gmra.mxu0 %v5165
    %v5291 = vpop.f32.mrf.mxu0
    %v5292 = vadd.f32 0.0, %v5291
    %v5293 = vpop.f32.mrf.mxu0
    %v5294 = vpop.f32.mrf.mxu0
    %v5295 = vadd.f32 0.0, %v5294
    %v5296 = vpop.f32.mrf.mxu0
    %5297 = vmatprep.mubr.bf16.mxu0 0
    %5298 = vmatmul.mubr.bf16.gmra.mxu0 %v5167
    %v5299 = vpop.f32.mrf.mxu0
    %v5300 = vadd.f32 0.0, %v5299
    %v5301 = vpop.f32.mrf.mxu0
    %v5302 = vpop.f32.mrf.mxu0
    %v5303 = vadd.f32 0.0, %v5302
    %v5304 = vpop.f32.mrf.mxu0
    %5305 = vmatprep.mubr.bf16.mxu0 0
    %5306 = vmatmul.mubr.bf16.gmra.mxu0 %v5169
    %v5307 = vpop.f32.mrf.mxu0
    %v5308 = vadd.f32 0.0, %v5307
    %v5309 = vpop.f32.mrf.mxu0
    %v5310 = vpop.f32.mrf.mxu0
    %v5311 = vadd.f32 0.0, %v5310
    %v5312 = vpop.f32.mrf.mxu0
    %5313 = vmatprep.mubr.bf16.mxu0 0
    %5314 = vmatmul.mubr.bf16.gmra.mxu0 %v5171
    %v5315 = vpop.f32.mrf.mxu0
    %v5316 = vadd.f32 0.0, %v5315
    %v5317 = vpop.f32.mrf.mxu0
    %v5318 = vpop.f32.mrf.mxu0
    %v5319 = vadd.f32 0.0, %v5318
    %v5320 = vpop.f32.mrf.mxu0
    %5321 = vmatprep.mubr.bf16.mxu0 0
    %5322 = vmatmul.mubr.bf16.gmra.mxu0 %v5173
    %v5323 = vpop.f32.mrf.mxu0
    %v5324 = vadd.f32 0.0, %v5323
    %v5325 = vpop.f32.mrf.mxu0
    %v5326 = vpop.f32.mrf.mxu0
    %v5327 = vadd.f32 0.0, %v5326
    %v5328 = vpop.f32.mrf.mxu0
    %5329 = vmatprep.mubr.bf16.mxu0 0
    %5330 = vmatmul.mubr.bf16.gmra.mxu0 %v5175
    %v5331 = vpop.f32.mrf.mxu0
    %v5332 = vadd.f32 0.0, %v5331
    %v5333 = vpop.f32.mrf.mxu0
    %v5334 = vpop.f32.mrf.mxu0
    %v5335 = vadd.f32 0.0, %v5334
    %v5336 = vpop.f32.mrf.mxu0
    %5337 = vmatprep.mubr.bf16.mxu0 0
    %5338 = vmatmul.mubr.bf16.gmra.mxu0 %v5177
    %v5339 = vpop.f32.mrf.mxu0
    %v5340 = vadd.f32 0.0, %v5339
    %v5341 = vpop.f32.mrf.mxu0
    %v5342 = vpop.f32.mrf.mxu0
    %v5343 = vadd.f32 0.0, %v5342
    %v5344 = vpop.f32.mrf.mxu0
    %5345 = vmatprep.mubr.bf16.mxu0 0
    %5346 = vmatmul.mubr.bf16.gmra.mxu0 %v5179
    %v5347 = vpop.f32.mrf.mxu0
    %v5348 = vadd.f32 0.0, %v5347
    %v5349 = vpop.f32.mrf.mxu0
    %v5350 = vpop.f32.mrf.mxu0
    %v5351 = vadd.f32 0.0, %v5350
    %v5352 = vpop.f32.mrf.mxu0
    %5353 = vmatprep.mubr.bf16.mxu0 0
    %5354 = vmatmul.mubr.bf16.gmra.mxu0 %v5181
    %v5355 = vpop.f32.mrf.mxu0
    %v5356 = vadd.f32 0.0, %v5355
    %v5357 = vpop.f32.mrf.mxu0
    %v5358 = vpop.f32.mrf.mxu0
    %v5359 = vadd.f32 0.0, %v5358
    %v5360 = vpop.f32.mrf.mxu0
    %5361 = vmatprep.mubr.bf16.mxu0 0
    %5362 = vmatmul.mubr.bf16.gmra.mxu0 %v5183
    %v5363 = vpop.f32.mrf.mxu0
    %v5364 = vadd.f32 0.0, %v5363
    %v5365 = vpop.f32.mrf.mxu0
    %v5366 = vpop.f32.mrf.mxu0
    %v5367 = vadd.f32 0.0, %v5366
    %v5368 = vpop.f32.mrf.mxu0
    %5369 = vmatprep.mubr.bf16.mxu0 0
    %5370 = vmatmul.mubr.bf16.gmra.mxu0 %v5185
    %v5371 = vpop.f32.mrf.mxu0
    %v5372 = vadd.f32 0.0, %v5371
    %v5373 = vpop.f32.mrf.mxu0
    %v5374 = vpop.f32.mrf.mxu0
    %v5375 = vadd.f32 0.0, %v5374
    %v5376 = vpop.f32.mrf.mxu0
    %5377 = vmatprep.mubr.bf16.mxu0 0
    %5378 = vmatmul.mubr.bf16.gmra.mxu0 %v5187
    %v5379 = vpop.f32.mrf.mxu0
    %v5380 = vadd.f32 0.0, %v5379
    %v5381 = vpop.f32.mrf.mxu0
    %v5382 = vpop.f32.mrf.mxu0
    %v5383 = vadd.f32 0.0, %v5382
    %v5384 = vpop.f32.mrf.mxu0
    %5385 = vmatprep.mubr.bf16.mxu0 0
    %5386 = vmatmul.mubr.bf16.gmra.mxu0 %v5189
    %v5387 = vpop.f32.mrf.mxu0
    %v5388 = vadd.f32 0.0, %v5387
    %v5389 = vpop.f32.mrf.mxu0
    %v5390 = vpop.f32.mrf.mxu0
    %v5391 = vadd.f32 0.0, %v5390
    %v5392 = vpop.f32.mrf.mxu0
    %5393 = vmatprep.mubr.bf16.mxu0 0
    %5394 = vmatmul.mubr.bf16.gmra.mxu0 %v5191
    %v5395 = vpop.f32.mrf.mxu0
    %v5396 = vadd.f32 0.0, %v5395
    %v5397 = vpop.f32.mrf.mxu0
    %v5398 = vpop.f32.mrf.mxu0
    %v5399 = vadd.f32 0.0, %v5398
    %v5400 = vpop.f32.mrf.mxu0
    %5401 = vmatprep.mubr.bf16.mxu0 0
    %5402 = vmatmul.mubr.bf16.gmra.mxu0 %v5193
    %v5403 = vpop.f32.mrf.mxu0
    %v5404 = vadd.f32 0.0, %v5403
    %v5405 = vpop.f32.mrf.mxu0
    %v5406 = vpop.f32.mrf.mxu0
    %v5407 = vadd.f32 0.0, %v5406
    %v5408 = vpop.f32.mrf.mxu0
    %5409 = vmatprep.mubr.bf16.mxu0 0
    %5410 = vmatmul.mubr.bf16.gmra.mxu0 %v5195
    %v5411 = vpop.f32.mrf.mxu0
    %v5412 = vadd.f32 0.0, %v5411
    %v5413 = vpop.f32.mrf.mxu0
    %v5414 = vpop.f32.mrf.mxu0
    %v5415 = vadd.f32 0.0, %v5414
    %v5416 = vpop.f32.mrf.mxu0
    %5417 = vmatprep.mubr.bf16.mxu0 0
    %5418 = vmatmul.mubr.bf16.gmra.mxu0 %v5197
    %v5419 = vpop.f32.mrf.mxu0
    %v5420 = vadd.f32 0.0, %v5419
    %v5421 = vpop.f32.mrf.mxu0
    %v5422 = vpop.f32.mrf.mxu0
    %v5423 = vadd.f32 0.0, %v5422
    %v5424 = vpop.f32.mrf.mxu0
    %5425 = vmatprep.mubr.bf16.mxu0 0
    %5426 = vmatmul.mubr.bf16.gmra.mxu0 %v5199
    %v5427 = vpop.f32.mrf.mxu0
    %v5428 = vadd.f32 0.0, %v5427
    %v5429 = vpop.f32.mrf.mxu0
    %v5430 = vpop.f32.mrf.mxu0
    %v5431 = vadd.f32 0.0, %v5430
    %v5432 = vpop.f32.mrf.mxu0
    %5433 = vmatprep.mubr.bf16.mxu0 0
    %5434 = vmatmul.mubr.bf16.gmra.mxu0 %v5201
    %v5435 = vpop.f32.mrf.mxu0
    %v5436 = vadd.f32 0.0, %v5435
    %v5437 = vpop.f32.mrf.mxu0
    %v5438 = vpop.f32.mrf.mxu0
    %v5439 = vadd.f32 0.0, %v5438
    %v5440 = vpop.f32.mrf.mxu0
    %5441 = vmatprep.mubr.bf16.mxu0 0
    %5442 = vmatmul.mubr.bf16.gmra.mxu0 %v5203
    %v5443 = vpop.f32.mrf.mxu0
    %v5444 = vadd.f32 0.0, %v5443
    %v5445 = vpop.f32.mrf.mxu0
    %v5446 = vpop.f32.mrf.mxu0
    %v5447 = vadd.f32 0.0, %v5446
    %v5448 = vpop.f32.mrf.mxu0
    %5449 = vmatprep.mubr.bf16.mxu0 0
    %5450 = vmatmul.mubr.bf16.gmra.mxu0 %v5205
    %v5451 = vpop.f32.mrf.mxu0
    %v5452 = vadd.f32 0.0, %v5451
    %v5453 = vpop.f32.mrf.mxu0
    %v5454 = vpop.f32.mrf.mxu0
    %v5455 = vadd.f32 0.0, %v5454
    %v5456 = vpop.f32.mrf.mxu0
    %5457 = vmatprep.mubr.bf16.mxu0 0
    %5458 = vmatmul.mubr.bf16.gmra.mxu0 %v5207
    %v5459 = vpop.f32.mrf.mxu0
    %v5460 = vadd.f32 0.0, %v5459
    %v5461 = vpop.f32.mrf.mxu0
    %v5462 = vpop.f32.mrf.mxu0
    %v5463 = vadd.f32 0.0, %v5462
    %v5464 = vpop.f32.mrf.mxu0
    %5465 = vmatprep.mubr.bf16.mxu0 0
    %5466 = vmatmul.mubr.bf16.gmra.mxu0 %v5209
    %v5467 = vpop.f32.mrf.mxu0
    %v5468 = vadd.f32 0.0, %v5467
    %v5469 = vpop.f32.mrf.mxu0
    %v5470 = vpop.f32.mrf.mxu0
    %v5471 = vadd.f32 0.0, %v5470
    %v5472 = vpop.f32.mrf.mxu0
    %5473 = vmatprep.mubr.bf16.mxu0 0
    %5474 = vmatmul.mubr.bf16.gmra.mxu0 %v5211
    %v5475 = vpop.f32.mrf.mxu0
    %v5476 = vadd.f32 0.0, %v5475
    %v5477 = vpop.f32.mrf.mxu0
    %v5478 = vpop.f32.mrf.mxu0
    %v5479 = vadd.f32 0.0, %v5478
    %v5480 = vpop.f32.mrf.mxu0
    %5481 = vmatprep.mubr.bf16.mxu0 0
    %5482 = vmatmul.mubr.bf16.gmra.mxu0 %v5213
    %v5483 = vpop.f32.mrf.mxu0
    %v5484 = vadd.f32 0.0, %v5483
    %v5485 = vpop.f32.mrf.mxu0
    %v5486 = vpop.f32.mrf.mxu0
    %v5487 = vadd.f32 0.0, %v5486
    %v5488 = vpop.f32.mrf.mxu0
    %5489 = vmatprep.mubr.bf16.mxu0 0
    %5490 = vmatmul.mubr.bf16.gmra.mxu0 %v5215
    %v5491 = vpop.f32.mrf.mxu0
    %v5492 = vadd.f32 0.0, %v5491
    %v5493 = vpop.f32.mrf.mxu0
    %v5494 = vpop.f32.mrf.mxu0
    %v5495 = vadd.f32 0.0, %v5494
    %v5496 = vpop.f32.mrf.mxu0
    %5497 = vmatprep.mubr.bf16.mxu0 0
    %5498 = vmatmul.mubr.bf16.gmra.mxu0 %v5217
    %v5499 = vpop.f32.mrf.mxu0
    %v5500 = vadd.f32 0.0, %v5499
    %v5501 = vpop.f32.mrf.mxu0
    %v5502 = vpop.f32.mrf.mxu0
    %v5503 = vadd.f32 0.0, %v5502
    %v5504 = vpop.f32.mrf.mxu0
    %5505 = vmatprep.mubr.bf16.mxu0 0
    %5506 = vmatmul.mubr.bf16.gmra.mxu0 %v5219
    %v5507 = vpop.f32.mrf.mxu0
    %v5508 = vadd.f32 0.0, %v5507
    %v5509 = vpop.f32.mrf.mxu0
    %v5510 = vpop.f32.mrf.mxu0
    %v5511 = vadd.f32 0.0, %v5510
    %v5512 = vpop.f32.mrf.mxu0
    %5513 = vdwg.mxu0
    %vm5514 = vcmask 523264
    %v5515 = vsel %vm5514, %v5260, 0.0
    %v5516 = vsel %vm5514, %v5263, 0.0
    %v5517 = vadd.f32 %v5515, %v5516
    %v5518 = vsel %vm5514, %v5268, 0.0
    %v5519 = vadd.f32 %v5517, %v5518
    %v5520 = vsel %vm5514, %v5271, 0.0
    %v5521 = vadd.f32 %v5519, %v5520
    %v5522 = vsel %vm5514, %v5276, 0.0
    %v5523 = vadd.f32 %v5521, %v5522
    %v5524 = vsel %vm5514, %v5279, 0.0
    %v5525 = vadd.f32 %v5523, %v5524
    %v5526 = vsel %vm5514, %v5284, 0.0
    %v5527 = vadd.f32 %v5525, %v5526
    %v5528 = vsel %vm5514, %v5287, 0.0
    %v5529 = vadd.f32 %v5527, %v5528
    %v5530 = vsel %vm5514, %v5292, 0.0
    %v5531 = vadd.f32 %v5529, %v5530
    %v5532 = vsel %vm5514, %v5295, 0.0
    %v5533 = vadd.f32 %v5531, %v5532
    %v5534 = vsel %vm5514, %v5300, 0.0
    %v5535 = vadd.f32 %v5533, %v5534
    %v5536 = vsel %vm5514, %v5303, 0.0
    %v5537 = vadd.f32 %v5535, %v5536
    %v5538 = vsel %vm5514, %v5308, 0.0
    %v5539 = vadd.f32 %v5537, %v5538
    %v5540 = vsel %vm5514, %v5311, 0.0
    %v5541 = vadd.f32 %v5539, %v5540
    %v5542 = vsel %vm5514, %v5316, 0.0
    %v5543 = vadd.f32 %v5541, %v5542
    %v5544 = vsel %vm5514, %v5319, 0.0
    %v5545 = vadd.f32 %v5543, %v5544
    %v5546 = vsel %vm5514, %v5324, 0.0
    %v5547 = vadd.f32 %v5545, %v5546
    %v5548 = vsel %vm5514, %v5327, 0.0
    %v5549 = vadd.f32 %v5547, %v5548
    %v5550 = vsel %vm5514, %v5332, 0.0
    %v5551 = vadd.f32 %v5549, %v5550
    %v5552 = vsel %vm5514, %v5335, 0.0
    %v5553 = vadd.f32 %v5551, %v5552
    %v5554 = vsel %vm5514, %v5340, 0.0
    %v5555 = vadd.f32 %v5553, %v5554
    %v5556 = vsel %vm5514, %v5343, 0.0
    %v5557 = vadd.f32 %v5555, %v5556
    %v5558 = vsel %vm5514, %v5348, 0.0
    %v5559 = vadd.f32 %v5557, %v5558
    %v5560 = vsel %vm5514, %v5351, 0.0
    %v5561 = vadd.f32 %v5559, %v5560
    %v5562 = vsel %vm5514, %v5356, 0.0
    %v5563 = vadd.f32 %v5561, %v5562
    %v5564 = vsel %vm5514, %v5359, 0.0
    %v5565 = vadd.f32 %v5563, %v5564
    %v5566 = vsel %vm5514, %v5364, 0.0
    %v5567 = vadd.f32 %v5565, %v5566
    %v5568 = vsel %vm5514, %v5367, 0.0
    %v5569 = vadd.f32 %v5567, %v5568
    %v5570 = vsel %vm5514, %v5372, 0.0
    %v5571 = vadd.f32 %v5569, %v5570
    %v5572 = vsel %vm5514, %v5375, 0.0
    %v5573 = vadd.f32 %v5571, %v5572
    %v5574 = vsel %vm5514, %v5380, 0.0
    %v5575 = vadd.f32 %v5573, %v5574
    %v5576 = vsel %vm5514, %v5383, 0.0
    %v5577 = vadd.f32 %v5575, %v5576
    %v5578 = vsel %vm5514, %v5388, 0.0
    %v5579 = vadd.f32 %v5577, %v5578
    %v5580 = vsel %vm5514, %v5391, 0.0
    %v5581 = vadd.f32 %v5579, %v5580
    %v5582 = vsel %vm5514, %v5396, 0.0
    %v5583 = vadd.f32 %v5581, %v5582
    %v5584 = vsel %vm5514, %v5399, 0.0
    %v5585 = vadd.f32 %v5583, %v5584
    %v5586 = vsel %vm5514, %v5404, 0.0
    %v5587 = vadd.f32 %v5585, %v5586
    %v5588 = vsel %vm5514, %v5407, 0.0
    %v5589 = vadd.f32 %v5587, %v5588
    %v5590 = vsel %vm5514, %v5412, 0.0
    %v5591 = vadd.f32 %v5589, %v5590
    %v5592 = vsel %vm5514, %v5415, 0.0
    %v5593 = vadd.f32 %v5591, %v5592
    %v5594 = vsel %vm5514, %v5420, 0.0
    %v5595 = vadd.f32 %v5593, %v5594
    %v5596 = vsel %vm5514, %v5423, 0.0
    %v5597 = vadd.f32 %v5595, %v5596
    %v5598 = vsel %vm5514, %v5428, 0.0
    %v5599 = vadd.f32 %v5597, %v5598
    %v5600 = vsel %vm5514, %v5431, 0.0
    %v5601 = vadd.f32 %v5599, %v5600
    %v5602 = vsel %vm5514, %v5436, 0.0
    %v5603 = vadd.f32 %v5601, %v5602
    %v5604 = vsel %vm5514, %v5439, 0.0
    %v5605 = vadd.f32 %v5603, %v5604
    %v5606 = vsel %vm5514, %v5444, 0.0
    %v5607 = vadd.f32 %v5605, %v5606
    %v5608 = vsel %vm5514, %v5447, 0.0
    %v5609 = vadd.f32 %v5607, %v5608
    %v5610 = vsel %vm5514, %v5452, 0.0
    %v5611 = vadd.f32 %v5609, %v5610
    %v5612 = vsel %vm5514, %v5455, 0.0
    %v5613 = vadd.f32 %v5611, %v5612
    %v5614 = vsel %vm5514, %v5460, 0.0
    %v5615 = vadd.f32 %v5613, %v5614
    %v5616 = vsel %vm5514, %v5463, 0.0
    %v5617 = vadd.f32 %v5615, %v5616
    %v5618 = vsel %vm5514, %v5468, 0.0
    %v5619 = vadd.f32 %v5617, %v5618
    %v5620 = vsel %vm5514, %v5471, 0.0
    %v5621 = vadd.f32 %v5619, %v5620
    %v5622 = vsel %vm5514, %v5476, 0.0
    %v5623 = vadd.f32 %v5621, %v5622
    %v5624 = vsel %vm5514, %v5479, 0.0
    %v5625 = vadd.f32 %v5623, %v5624
    %v5626 = vsel %vm5514, %v5484, 0.0
    %v5627 = vadd.f32 %v5625, %v5626
    %v5628 = vsel %vm5514, %v5487, 0.0
    %v5629 = vadd.f32 %v5627, %v5628
    %v5630 = vsel %vm5514, %v5492, 0.0
    %v5631 = vadd.f32 %v5629, %v5630
    %v5632 = vsel %vm5514, %v5495, 0.0
    %v5633 = vadd.f32 %v5631, %v5632
    %v5634 = vsel %vm5514, %v5500, 0.0
    %v5635 = vadd.f32 %v5633, %v5634
    %v5636 = vsel %vm5514, %v5503, 0.0
    %v5637 = vadd.f32 %v5635, %v5636
    %v5638 = vsel %vm5514, %v5508, 0.0
    %v5639 = vadd.f32 %v5637, %v5638
    %v5640 = vsel %vm5514, %v5511, 0.0
    %v5641 = vadd.f32 %v5639, %v5640
    %v5642 = vrot.slane %v5641, 4
    %v5643 = vadd.f32 %v5641, %v5642
    %v5644 = vrot.slane %v5643, 2
    %v5645 = vadd.f32 %v5643, %v5644
    %v5646 = vrot.slane %v5645, 1
    %v5647 = vadd.f32 %v5645, %v5646
    %v5648 = vmul.f32 %v5260, %v5260
    %v5649 = vmul.f32 %v5263, %v5263
    %v5650 = vmul.f32 %v5268, %v5268
    %v5651 = vmul.f32 %v5271, %v5271
    %v5652 = vmul.f32 %v5276, %v5276
    %v5653 = vmul.f32 %v5279, %v5279
    %v5654 = vmul.f32 %v5284, %v5284
    %v5655 = vmul.f32 %v5287, %v5287
    %v5656 = vmul.f32 %v5292, %v5292
    %v5657 = vmul.f32 %v5295, %v5295
    %v5658 = vmul.f32 %v5300, %v5300
    %v5659 = vmul.f32 %v5303, %v5303
    %v5660 = vmul.f32 %v5308, %v5308
    %v5661 = vmul.f32 %v5311, %v5311
    %v5662 = vmul.f32 %v5316, %v5316
    %v5663 = vmul.f32 %v5319, %v5319
    %v5664 = vmul.f32 %v5324, %v5324
    %v5665 = vmul.f32 %v5327, %v5327
    %v5666 = vmul.f32 %v5332, %v5332
    %v5667 = vmul.f32 %v5335, %v5335
    %v5668 = vmul.f32 %v5340, %v5340
    %v5669 = vmul.f32 %v5343, %v5343
    %v5670 = vmul.f32 %v5348, %v5348
    %v5671 = vmul.f32 %v5351, %v5351
    %v5672 = vmul.f32 %v5356, %v5356
    %v5673 = vmul.f32 %v5359, %v5359
    %v5674 = vmul.f32 %v5364, %v5364
    %v5675 = vmul.f32 %v5367, %v5367
    %v5676 = vmul.f32 %v5372, %v5372
    %v5677 = vmul.f32 %v5375, %v5375
    %v5678 = vmul.f32 %v5380, %v5380
    %v5679 = vmul.f32 %v5383, %v5383
    %v5680 = vmul.f32 %v5388, %v5388
    %v5681 = vmul.f32 %v5391, %v5391
    %v5682 = vmul.f32 %v5396, %v5396
    %v5683 = vmul.f32 %v5399, %v5399
    %v5684 = vmul.f32 %v5404, %v5404
    %v5685 = vmul.f32 %v5407, %v5407
    %v5686 = vmul.f32 %v5412, %v5412
    %v5687 = vmul.f32 %v5415, %v5415
    %v5688 = vmul.f32 %v5420, %v5420
    %v5689 = vmul.f32 %v5423, %v5423
    %v5690 = vmul.f32 %v5428, %v5428
    %v5691 = vmul.f32 %v5431, %v5431
    %v5692 = vmul.f32 %v5436, %v5436
    %v5693 = vmul.f32 %v5439, %v5439
    %v5694 = vmul.f32 %v5444, %v5444
    %v5695 = vmul.f32 %v5447, %v5447
    %v5696 = vmul.f32 %v5452, %v5452
    %v5697 = vmul.f32 %v5455, %v5455
    %v5698 = vmul.f32 %v5460, %v5460
    %v5699 = vmul.f32 %v5463, %v5463
    %v5700 = vmul.f32 %v5468, %v5468
    %v5701 = vmul.f32 %v5471, %v5471
    %v5702 = vmul.f32 %v5476, %v5476
    %v5703 = vmul.f32 %v5479, %v5479
    %v5704 = vmul.f32 %v5484, %v5484
    %v5705 = vmul.f32 %v5487, %v5487
    %v5706 = vmul.f32 %v5492, %v5492
    %v5707 = vmul.f32 %v5495, %v5495
    %v5708 = vmul.f32 %v5500, %v5500
    %v5709 = vmul.f32 %v5503, %v5503
    %v5710 = vmul.f32 %v5508, %v5508
    %v5711 = vmul.f32 %v5511, %v5511
    %v5712 = vsel %vm5514, %v5648, 0.0
    %v5713 = vsel %vm5514, %v5649, 0.0
    %v5714 = vadd.f32 %v5712, %v5713
    %v5715 = vsel %vm5514, %v5650, 0.0
    %v5716 = vadd.f32 %v5714, %v5715
    %v5717 = vsel %vm5514, %v5651, 0.0
    %v5718 = vadd.f32 %v5716, %v5717
    %v5719 = vsel %vm5514, %v5652, 0.0
    %v5720 = vadd.f32 %v5718, %v5719
    %v5721 = vsel %vm5514, %v5653, 0.0
    %v5722 = vadd.f32 %v5720, %v5721
    %v5723 = vsel %vm5514, %v5654, 0.0
    %v5724 = vadd.f32 %v5722, %v5723
    %v5725 = vsel %vm5514, %v5655, 0.0
    %v5726 = vadd.f32 %v5724, %v5725
    %v5727 = vsel %vm5514, %v5656, 0.0
    %v5728 = vadd.f32 %v5726, %v5727
    %v5729 = vsel %vm5514, %v5657, 0.0
    %v5730 = vadd.f32 %v5728, %v5729
    %v5731 = vsel %vm5514, %v5658, 0.0
    %v5732 = vadd.f32 %v5730, %v5731
    %v5733 = vsel %vm5514, %v5659, 0.0
    %v5734 = vadd.f32 %v5732, %v5733
    %v5735 = vsel %vm5514, %v5660, 0.0
    %v5736 = vadd.f32 %v5734, %v5735
    %v5737 = vsel %vm5514, %v5661, 0.0
    %v5738 = vadd.f32 %v5736, %v5737
    %v5739 = vsel %vm5514, %v5662, 0.0
    %v5740 = vadd.f32 %v5738, %v5739
    %v5741 = vsel %vm5514, %v5663, 0.0
    %v5742 = vadd.f32 %v5740, %v5741
    %v5743 = vsel %vm5514, %v5664, 0.0
    %v5744 = vadd.f32 %v5742, %v5743
    %v5745 = vsel %vm5514, %v5665, 0.0
    %v5746 = vadd.f32 %v5744, %v5745
    %v5747 = vsel %vm5514, %v5666, 0.0
    %v5748 = vadd.f32 %v5746, %v5747
    %v5749 = vsel %vm5514, %v5667, 0.0
    %v5750 = vadd.f32 %v5748, %v5749
    %v5751 = vsel %vm5514, %v5668, 0.0
    %v5752 = vadd.f32 %v5750, %v5751
    %v5753 = vsel %vm5514, %v5669, 0.0
    %v5754 = vadd.f32 %v5752, %v5753
    %v5755 = vsel %vm5514, %v5670, 0.0
    %v5756 = vadd.f32 %v5754, %v5755
    %v5757 = vsel %vm5514, %v5671, 0.0
    %v5758 = vadd.f32 %v5756, %v5757
    %v5759 = vsel %vm5514, %v5672, 0.0
    %v5760 = vadd.f32 %v5758, %v5759
    %v5761 = vsel %vm5514, %v5673, 0.0
    %v5762 = vadd.f32 %v5760, %v5761
    %v5763 = vsel %vm5514, %v5674, 0.0
    %v5764 = vadd.f32 %v5762, %v5763
    %v5765 = vsel %vm5514, %v5675, 0.0
    %v5766 = vadd.f32 %v5764, %v5765
    %v5767 = vsel %vm5514, %v5676, 0.0
    %v5768 = vadd.f32 %v5766, %v5767
    %v5769 = vsel %vm5514, %v5677, 0.0
    %v5770 = vadd.f32 %v5768, %v5769
    %v5771 = vsel %vm5514, %v5678, 0.0
    %v5772 = vadd.f32 %v5770, %v5771
    %v5773 = vsel %vm5514, %v5679, 0.0
    %v5774 = vadd.f32 %v5772, %v5773
    %v5775 = vsel %vm5514, %v5680, 0.0
    %v5776 = vadd.f32 %v5774, %v5775
    %v5777 = vsel %vm5514, %v5681, 0.0
    %v5778 = vadd.f32 %v5776, %v5777
    %v5779 = vsel %vm5514, %v5682, 0.0
    %v5780 = vadd.f32 %v5778, %v5779
    %v5781 = vsel %vm5514, %v5683, 0.0
    %v5782 = vadd.f32 %v5780, %v5781
    %v5783 = vsel %vm5514, %v5684, 0.0
    %v5784 = vadd.f32 %v5782, %v5783
    %v5785 = vsel %vm5514, %v5685, 0.0
    %v5786 = vadd.f32 %v5784, %v5785
    %v5787 = vsel %vm5514, %v5686, 0.0
    %v5788 = vadd.f32 %v5786, %v5787
    %v5789 = vsel %vm5514, %v5687, 0.0
    %v5790 = vadd.f32 %v5788, %v5789
    %v5791 = vsel %vm5514, %v5688, 0.0
    %v5792 = vadd.f32 %v5790, %v5791
    %v5793 = vsel %vm5514, %v5689, 0.0
    %v5794 = vadd.f32 %v5792, %v5793
    %v5795 = vsel %vm5514, %v5690, 0.0
    %v5796 = vadd.f32 %v5794, %v5795
    %v5797 = vsel %vm5514, %v5691, 0.0
    %v5798 = vadd.f32 %v5796, %v5797
    %v5799 = vsel %vm5514, %v5692, 0.0
    %v5800 = vadd.f32 %v5798, %v5799
    %v5801 = vsel %vm5514, %v5693, 0.0
    %v5802 = vadd.f32 %v5800, %v5801
    %v5803 = vsel %vm5514, %v5694, 0.0
    %v5804 = vadd.f32 %v5802, %v5803
    %v5805 = vsel %vm5514, %v5695, 0.0
    %v5806 = vadd.f32 %v5804, %v5805
    %v5807 = vsel %vm5514, %v5696, 0.0
    %v5808 = vadd.f32 %v5806, %v5807
    %v5809 = vsel %vm5514, %v5697, 0.0
    %v5810 = vadd.f32 %v5808, %v5809
    %v5811 = vsel %vm5514, %v5698, 0.0
    %v5812 = vadd.f32 %v5810, %v5811
    %v5813 = vsel %vm5514, %v5699, 0.0
    %v5814 = vadd.f32 %v5812, %v5813
    %v5815 = vsel %vm5514, %v5700, 0.0
    %v5816 = vadd.f32 %v5814, %v5815
    %v5817 = vsel %vm5514, %v5701, 0.0
    %v5818 = vadd.f32 %v5816, %v5817
    %v5819 = vsel %vm5514, %v5702, 0.0
    %v5820 = vadd.f32 %v5818, %v5819
    %v5821 = vsel %vm5514, %v5703, 0.0
    %v5822 = vadd.f32 %v5820, %v5821
    %v5823 = vsel %vm5514, %v5704, 0.0
    %v5824 = vadd.f32 %v5822, %v5823
    %v5825 = vsel %vm5514, %v5705, 0.0
    %v5826 = vadd.f32 %v5824, %v5825
    %v5827 = vsel %vm5514, %v5706, 0.0
    %v5828 = vadd.f32 %v5826, %v5827
    %v5829 = vsel %vm5514, %v5707, 0.0
    %v5830 = vadd.f32 %v5828, %v5829
    %v5831 = vsel %vm5514, %v5708, 0.0
    %v5832 = vadd.f32 %v5830, %v5831
    %v5833 = vsel %vm5514, %v5709, 0.0
    %v5834 = vadd.f32 %v5832, %v5833
    %v5835 = vsel %vm5514, %v5710, 0.0
    %v5836 = vadd.f32 %v5834, %v5835
    %v5837 = vsel %vm5514, %v5711, 0.0
    %v5838 = vadd.f32 %v5836, %v5837
    %v5839 = vrot.slane %v5838, 4
    %v5840 = vadd.f32 %v5838, %v5839
    %v5841 = vrot.slane %v5840, 2
    %v5842 = vadd.f32 %v5840, %v5841
    %v5843 = vrot.slane %v5842, 1
    %v5844 = vadd.f32 %v5842, %v5843
    %v5845 = vrcp.pop 512.0
    %v5846 = vmul.f32 %v5647, %v5845
    %v5847 = vmul.f32 %v5844, %v5845
    %v5848 = vmul.f32 %v5846, %v5846
    %v5849 = vsub.f32 %v5847, %v5848
    %v5850 = vmax.f32 %v5849, 0.0
    %v5851 = vld [vmem:[%s2] sm:$0x1]
    %v5852 = vadd.f32 %v5850, 1e-05
    %v5853 = vrsqrt.pop %v5852
    %v5854 = vmul.f32 %v5851, %v5853
    %v5855 = vld [vmem:[%s3] sm:$0x1]
    %v5856 = vmul.f32 %v5846, %v5854
    %v5857 = vsub.f32 %v5855, %v5856
    %v5859 = vlaneseq
    %v5860 = vshrl.u32 %v5859, 7
    %v5861 = vsub.s32 0, %v5860
    %v5862 = vrot.slane %v5854, %v5861
    %v5864 = vmul.f32 %v5260, %v5862
    %v5865 = vmul.f32 %v5263, %v5862
    %v5866 = vmul.f32 %v5268, %v5862
    %v5867 = vmul.f32 %v5271, %v5862
    %v5868 = vmul.f32 %v5276, %v5862
    %v5869 = vmul.f32 %v5279, %v5862
    %v5870 = vmul.f32 %v5284, %v5862
    %v5871 = vmul.f32 %v5287, %v5862
    %v5872 = vmul.f32 %v5292, %v5862
    %v5873 = vmul.f32 %v5295, %v5862
    %v5874 = vmul.f32 %v5300, %v5862
    %v5875 = vmul.f32 %v5303, %v5862
    %v5876 = vmul.f32 %v5308, %v5862
    %v5877 = vmul.f32 %v5311, %v5862
    %v5878 = vmul.f32 %v5316, %v5862
    %v5879 = vmul.f32 %v5319, %v5862
    %v5880 = vmul.f32 %v5324, %v5862
    %v5881 = vmul.f32 %v5327, %v5862
    %v5882 = vmul.f32 %v5332, %v5862
    %v5883 = vmul.f32 %v5335, %v5862
    %v5884 = vmul.f32 %v5340, %v5862
    %v5885 = vmul.f32 %v5343, %v5862
    %v5886 = vmul.f32 %v5348, %v5862
    %v5887 = vmul.f32 %v5351, %v5862
    %v5888 = vmul.f32 %v5356, %v5862
    %v5889 = vmul.f32 %v5359, %v5862
    %v5890 = vmul.f32 %v5364, %v5862
    %v5891 = vmul.f32 %v5367, %v5862
    %v5892 = vmul.f32 %v5372, %v5862
    %v5893 = vmul.f32 %v5375, %v5862
    %v5894 = vmul.f32 %v5380, %v5862
    %v5895 = vmul.f32 %v5383, %v5862
    %v5896 = vmul.f32 %v5388, %v5862
    %v5897 = vmul.f32 %v5391, %v5862
    %v5898 = vmul.f32 %v5396, %v5862
    %v5899 = vmul.f32 %v5399, %v5862
    %v5900 = vmul.f32 %v5404, %v5862
    %v5901 = vmul.f32 %v5407, %v5862
    %v5902 = vmul.f32 %v5412, %v5862
    %v5903 = vmul.f32 %v5415, %v5862
    %v5904 = vmul.f32 %v5420, %v5862
    %v5905 = vmul.f32 %v5423, %v5862
    %v5906 = vmul.f32 %v5428, %v5862
    %v5907 = vmul.f32 %v5431, %v5862
    %v5908 = vmul.f32 %v5436, %v5862
    %v5909 = vmul.f32 %v5439, %v5862
    %v5910 = vmul.f32 %v5444, %v5862
    %v5911 = vmul.f32 %v5447, %v5862
    %v5912 = vmul.f32 %v5452, %v5862
    %v5913 = vmul.f32 %v5455, %v5862
    %v5914 = vmul.f32 %v5460, %v5862
    %v5915 = vmul.f32 %v5463, %v5862
    %v5916 = vmul.f32 %v5468, %v5862
    %v5917 = vmul.f32 %v5471, %v5862
    %v5918 = vmul.f32 %v5476, %v5862
    %v5919 = vmul.f32 %v5479, %v5862
    %v5920 = vmul.f32 %v5484, %v5862
    %v5921 = vmul.f32 %v5487, %v5862
    %v5922 = vmul.f32 %v5492, %v5862
    %v5923 = vmul.f32 %v5495, %v5862
    %v5924 = vmul.f32 %v5500, %v5862
    %v5925 = vmul.f32 %v5503, %v5862
    %v5926 = vmul.f32 %v5508, %v5862
    %v5927 = vmul.f32 %v5511, %v5862
    %v5929 = vlaneseq
    %v5930 = vshrl.u32 %v5929, 7
    %v5931 = vsub.s32 0, %v5930
    %v5932 = vrot.slane %v5857, %v5931
    %v5934 = vadd.f32 %v5864, %v5932
    %v5935 = vadd.f32 %v5865, %v5932
    %v5936 = vadd.f32 %v5866, %v5932
    %v5937 = vadd.f32 %v5867, %v5932
    %v5938 = vadd.f32 %v5868, %v5932
    %v5939 = vadd.f32 %v5869, %v5932
    %v5940 = vadd.f32 %v5870, %v5932
    %v5941 = vadd.f32 %v5871, %v5932
    %v5942 = vadd.f32 %v5872, %v5932
    %v5943 = vadd.f32 %v5873, %v5932
    %v5944 = vadd.f32 %v5874, %v5932
    %v5945 = vadd.f32 %v5875, %v5932
    %v5946 = vadd.f32 %v5876, %v5932
    %v5947 = vadd.f32 %v5877, %v5932
    %v5948 = vadd.f32 %v5878, %v5932
    %v5949 = vadd.f32 %v5879, %v5932
    %v5950 = vadd.f32 %v5880, %v5932
    %v5951 = vadd.f32 %v5881, %v5932
    %v5952 = vadd.f32 %v5882, %v5932
    %v5953 = vadd.f32 %v5883, %v5932
    %v5954 = vadd.f32 %v5884, %v5932
    %v5955 = vadd.f32 %v5885, %v5932
    %v5956 = vadd.f32 %v5886, %v5932
    %v5957 = vadd.f32 %v5887, %v5932
    %v5958 = vadd.f32 %v5888, %v5932
    %v5959 = vadd.f32 %v5889, %v5932
    %v5960 = vadd.f32 %v5890, %v5932
    %v5961 = vadd.f32 %v5891, %v5932
    %v5962 = vadd.f32 %v5892, %v5932
    %v5963 = vadd.f32 %v5893, %v5932
    %v5964 = vadd.f32 %v5894, %v5932
    %v5965 = vadd.f32 %v5895, %v5932
    %v5966 = vadd.f32 %v5896, %v5932
    %v5967 = vadd.f32 %v5897, %v5932
    %v5968 = vadd.f32 %v5898, %v5932
    %v5969 = vadd.f32 %v5899, %v5932
    %v5970 = vadd.f32 %v5900, %v5932
    %v5971 = vadd.f32 %v5901, %v5932
    %v5972 = vadd.f32 %v5902, %v5932
    %v5973 = vadd.f32 %v5903, %v5932
    %v5974 = vadd.f32 %v5904, %v5932
    %v5975 = vadd.f32 %v5905, %v5932
    %v5976 = vadd.f32 %v5906, %v5932
    %v5977 = vadd.f32 %v5907, %v5932
    %v5978 = vadd.f32 %v5908, %v5932
    %v5979 = vadd.f32 %v5909, %v5932
    %v5980 = vadd.f32 %v5910, %v5932
    %v5981 = vadd.f32 %v5911, %v5932
    %v5982 = vadd.f32 %v5912, %v5932
    %v5983 = vadd.f32 %v5913, %v5932
    %v5984 = vadd.f32 %v5914, %v5932
    %v5985 = vadd.f32 %v5915, %v5932
    %v5986 = vadd.f32 %v5916, %v5932
    %v5987 = vadd.f32 %v5917, %v5932
    %v5988 = vadd.f32 %v5918, %v5932
    %v5989 = vadd.f32 %v5919, %v5932
    %v5990 = vadd.f32 %v5920, %v5932
    %v5991 = vadd.f32 %v5921, %v5932
    %v5992 = vadd.f32 %v5922, %v5932
    %v5993 = vadd.f32 %v5923, %v5932
    %v5994 = vadd.f32 %v5924, %v5932
    %v5995 = vadd.f32 %v5925, %v5932
    %v5996 = vadd.f32 %v5926, %v5932
    %v5997 = vadd.f32 %v5927, %v5932
    %v5998 = vmax.f32 %v5934, %v5936
    %v5999 = vmax.f32 %v5935, %v5937
    %v6000 = vmax.f32 %v5938, %v5940
    %v6001 = vmax.f32 %v5939, %v5941
    %v6002 = vmax.f32 %v5942, %v5944
    %v6003 = vmax.f32 %v5943, %v5945
    %v6004 = vmax.f32 %v5946, %v5948
    %v6005 = vmax.f32 %v5947, %v5949
    %v6006 = vmax.f32 %v5950, %v5952
    %v6007 = vmax.f32 %v5951, %v5953
    %v6008 = vmax.f32 %v5954, %v5956
    %v6009 = vmax.f32 %v5955, %v5957
    %v6010 = vmax.f32 %v5958, %v5960
    %v6011 = vmax.f32 %v5959, %v5961
    %v6012 = vmax.f32 %v5962, %v5964
    %v6013 = vmax.f32 %v5963, %v5965
    %v6014 = vmax.f32 %v5966, %v5968
    %v6015 = vmax.f32 %v5967, %v5969
    %v6016 = vmax.f32 %v5970, %v5972
    %v6017 = vmax.f32 %v5971, %v5973
    %v6018 = vmax.f32 %v5974, %v5976
    %v6019 = vmax.f32 %v5975, %v5977
    %v6020 = vmax.f32 %v5978, %v5980
    %v6021 = vmax.f32 %v5979, %v5981
    %v6022 = vmax.f32 %v5982, %v5984
    %v6023 = vmax.f32 %v5983, %v5985
    %v6024 = vmax.f32 %v5986, %v5988
    %v6025 = vmax.f32 %v5987, %v5989
    %v6026 = vmax.f32 %v5990, %v5992
    %v6027 = vmax.f32 %v5991, %v5993
    %v6028 = vmax.f32 %v5994, %v5996
    %v6029 = vmax.f32 %v5995, %v5997
    %v6046 = vrot.slane %v5998, 1
    %v6047 = vrot.slane %v6000, 1
    %v6048 = vrot.slane %v6002, 1
    %v6049 = vrot.slane %v6004, 1
    %v6050 = vrot.slane %v6006, 1
    %v6051 = vrot.slane %v6008, 1
    %v6052 = vrot.slane %v6010, 1
    %v6053 = vrot.slane %v6012, 1
    %v6054 = vrot.slane %v6014, 1
    %v6055 = vrot.slane %v6016, 1
    %v6056 = vrot.slane %v6018, 1
    %v6057 = vrot.slane %v6020, 1
    %v6058 = vrot.slane %v6022, 1
    %v6059 = vrot.slane %v6024, 1
    %v6060 = vrot.slane %v6026, 1
    %v6061 = vrot.slane %v6028, 1
    %v6078 = vmax.f32 %v5998, %v6046
    %v6079 = vmax.f32 %v6000, %v6047
    %v6080 = vmax.f32 %v6002, %v6048
    %v6081 = vmax.f32 %v6004, %v6049
    %v6082 = vmax.f32 %v6006, %v6050
    %v6083 = vmax.f32 %v6008, %v6051
    %v6084 = vmax.f32 %v6010, %v6052
    %v6085 = vmax.f32 %v6012, %v6053
    %v6086 = vmax.f32 %v6014, %v6054
    %v6087 = vmax.f32 %v6016, %v6055
    %v6088 = vmax.f32 %v6018, %v6056
    %v6089 = vmax.f32 %v6020, %v6057
    %v6090 = vmax.f32 %v6022, %v6058
    %v6091 = vmax.f32 %v6024, %v6059
    %v6092 = vmax.f32 %v6026, %v6060
    %v6093 = vmax.f32 %v6028, %v6061
    %v6110 = vrot.slane %v5999, 1
    %v6111 = vrot.slane %v6001, 1
    %v6112 = vrot.slane %v6003, 1
    %v6113 = vrot.slane %v6005, 1
    %v6114 = vrot.slane %v6007, 1
    %v6115 = vrot.slane %v6009, 1
    %v6116 = vrot.slane %v6011, 1
    %v6117 = vrot.slane %v6013, 1
    %v6118 = vrot.slane %v6015, 1
    %v6119 = vrot.slane %v6017, 1
    %v6120 = vrot.slane %v6019, 1
    %v6121 = vrot.slane %v6021, 1
    %v6122 = vrot.slane %v6023, 1
    %v6123 = vrot.slane %v6025, 1
    %v6124 = vrot.slane %v6027, 1
    %v6125 = vrot.slane %v6029, 1
    %v6142 = vmax.f32 %v5999, %v6110
    %v6143 = vmax.f32 %v6001, %v6111
    %v6144 = vmax.f32 %v6003, %v6112
    %v6145 = vmax.f32 %v6005, %v6113
    %v6146 = vmax.f32 %v6007, %v6114
    %v6147 = vmax.f32 %v6009, %v6115
    %v6148 = vmax.f32 %v6011, %v6116
    %v6149 = vmax.f32 %v6013, %v6117
    %v6150 = vmax.f32 %v6015, %v6118
    %v6151 = vmax.f32 %v6017, %v6119
    %v6152 = vmax.f32 %v6019, %v6120
    %v6153 = vmax.f32 %v6021, %v6121
    %v6154 = vmax.f32 %v6023, %v6122
    %v6155 = vmax.f32 %v6025, %v6123
    %v6156 = vmax.f32 %v6027, %v6124
    %v6157 = vmax.f32 %v6029, %v6125
    %v6174 = vrot.slane %v6078, 1
    %v6175 = vrot.slane %v6079, 1
    %v6176 = vrot.slane %v6080, 1
    %v6177 = vrot.slane %v6081, 1
    %v6178 = vrot.slane %v6082, 1
    %v6179 = vrot.slane %v6083, 1
    %v6180 = vrot.slane %v6084, 1
    %v6181 = vrot.slane %v6085, 1
    %v6182 = vrot.slane %v6086, 1
    %v6183 = vrot.slane %v6087, 1
    %v6184 = vrot.slane %v6088, 1
    %v6185 = vrot.slane %v6089, 1
    %v6186 = vrot.slane %v6090, 1
    %v6187 = vrot.slane %v6091, 1
    %v6188 = vrot.slane %v6092, 1
    %v6189 = vrot.slane %v6093, 1
    %v6206 = vrot.slane %v6078, 2
    %v6207 = vrot.slane %v6079, 2
    %v6208 = vrot.slane %v6080, 2
    %v6209 = vrot.slane %v6081, 2
    %v6210 = vrot.slane %v6082, 2
    %v6211 = vrot.slane %v6083, 2
    %v6212 = vrot.slane %v6084, 2
    %v6213 = vrot.slane %v6085, 2
    %v6214 = vrot.slane %v6086, 2
    %v6215 = vrot.slane %v6087, 2
    %v6216 = vrot.slane %v6088, 2
    %v6217 = vrot.slane %v6089, 2
    %v6218 = vrot.slane %v6090, 2
    %v6219 = vrot.slane %v6091, 2
    %v6220 = vrot.slane %v6092, 2
    %v6221 = vrot.slane %v6093, 2
    %v6238 = vrot.slane %v6078, 3
    %v6239 = vrot.slane %v6079, 3
    %v6240 = vrot.slane %v6080, 3
    %v6241 = vrot.slane %v6081, 3
    %v6242 = vrot.slane %v6082, 3
    %v6243 = vrot.slane %v6083, 3
    %v6244 = vrot.slane %v6084, 3
    %v6245 = vrot.slane %v6085, 3
    %v6246 = vrot.slane %v6086, 3
    %v6247 = vrot.slane %v6087, 3
    %v6248 = vrot.slane %v6088, 3
    %v6249 = vrot.slane %v6089, 3
    %v6250 = vrot.slane %v6090, 3
    %v6251 = vrot.slane %v6091, 3
    %v6252 = vrot.slane %v6092, 3
    %v6253 = vrot.slane %v6093, 3
    %v6286 = vrot.slane %v6142, 4
    %v6287 = vrot.slane %v6143, 4
    %v6288 = vrot.slane %v6144, 4
    %v6289 = vrot.slane %v6145, 4
    %v6290 = vrot.slane %v6146, 4
    %v6291 = vrot.slane %v6147, 4
    %v6292 = vrot.slane %v6148, 4
    %v6293 = vrot.slane %v6149, 4
    %v6294 = vrot.slane %v6150, 4
    %v6295 = vrot.slane %v6151, 4
    %v6296 = vrot.slane %v6152, 4
    %v6297 = vrot.slane %v6153, 4
    %v6298 = vrot.slane %v6154, 4
    %v6299 = vrot.slane %v6155, 4
    %v6300 = vrot.slane %v6156, 4
    %v6301 = vrot.slane %v6157, 4
    %v6318 = vrot.slane %v6142, 5
    %v6319 = vrot.slane %v6143, 5
    %v6320 = vrot.slane %v6144, 5
    %v6321 = vrot.slane %v6145, 5
    %v6322 = vrot.slane %v6146, 5
    %v6323 = vrot.slane %v6147, 5
    %v6324 = vrot.slane %v6148, 5
    %v6325 = vrot.slane %v6149, 5
    %v6326 = vrot.slane %v6150, 5
    %v6327 = vrot.slane %v6151, 5
    %v6328 = vrot.slane %v6152, 5
    %v6329 = vrot.slane %v6153, 5
    %v6330 = vrot.slane %v6154, 5
    %v6331 = vrot.slane %v6155, 5
    %v6332 = vrot.slane %v6156, 5
    %v6333 = vrot.slane %v6157, 5
    %v6350 = vrot.slane %v6142, 6
    %v6351 = vrot.slane %v6143, 6
    %v6352 = vrot.slane %v6144, 6
    %v6353 = vrot.slane %v6145, 6
    %v6354 = vrot.slane %v6146, 6
    %v6355 = vrot.slane %v6147, 6
    %v6356 = vrot.slane %v6148, 6
    %v6357 = vrot.slane %v6149, 6
    %v6358 = vrot.slane %v6150, 6
    %v6359 = vrot.slane %v6151, 6
    %v6360 = vrot.slane %v6152, 6
    %v6361 = vrot.slane %v6153, 6
    %v6362 = vrot.slane %v6154, 6
    %v6363 = vrot.slane %v6155, 6
    %v6364 = vrot.slane %v6156, 6
    %v6365 = vrot.slane %v6157, 6
    %v6382 = vrot.slane %v6142, 7
    %v6383 = vrot.slane %v6143, 7
    %v6384 = vrot.slane %v6144, 7
    %v6385 = vrot.slane %v6145, 7
    %v6386 = vrot.slane %v6146, 7
    %v6387 = vrot.slane %v6147, 7
    %v6388 = vrot.slane %v6148, 7
    %v6389 = vrot.slane %v6149, 7
    %v6390 = vrot.slane %v6150, 7
    %v6391 = vrot.slane %v6151, 7
    %v6392 = vrot.slane %v6152, 7
    %v6393 = vrot.slane %v6153, 7
    %v6394 = vrot.slane %v6154, 7
    %v6395 = vrot.slane %v6155, 7
    %v6396 = vrot.slane %v6156, 7
    %v6397 = vrot.slane %v6157, 7
    %vm6414 = vcmask 1040384
    %v6415 = vsel %vm6414, %v6078, %v6174
    %v6416 = vsel %vm6414, %v6079, %v6175
    %v6417 = vsel %vm6414, %v6080, %v6176
    %v6418 = vsel %vm6414, %v6081, %v6177
    %v6419 = vsel %vm6414, %v6082, %v6178
    %v6420 = vsel %vm6414, %v6083, %v6179
    %v6421 = vsel %vm6414, %v6084, %v6180
    %v6422 = vsel %vm6414, %v6085, %v6181
    %v6423 = vsel %vm6414, %v6086, %v6182
    %v6424 = vsel %vm6414, %v6087, %v6183
    %v6425 = vsel %vm6414, %v6088, %v6184
    %v6426 = vsel %vm6414, %v6089, %v6185
    %v6427 = vsel %vm6414, %v6090, %v6186
    %v6428 = vsel %vm6414, %v6091, %v6187
    %v6429 = vsel %vm6414, %v6092, %v6188
    %v6430 = vsel %vm6414, %v6093, %v6189
    %v6431 = vsel %vm5221, %v6415, %v6206
    %v6432 = vsel %vm5221, %v6416, %v6207
    %v6433 = vsel %vm5221, %v6417, %v6208
    %v6434 = vsel %vm5221, %v6418, %v6209
    %v6435 = vsel %vm5221, %v6419, %v6210
    %v6436 = vsel %vm5221, %v6420, %v6211
    %v6437 = vsel %vm5221, %v6421, %v6212
    %v6438 = vsel %vm5221, %v6422, %v6213
    %v6439 = vsel %vm5221, %v6423, %v6214
    %v6440 = vsel %vm5221, %v6424, %v6215
    %v6441 = vsel %vm5221, %v6425, %v6216
    %v6442 = vsel %vm5221, %v6426, %v6217
    %v6443 = vsel %vm5221, %v6427, %v6218
    %v6444 = vsel %vm5221, %v6428, %v6219
    %v6445 = vsel %vm5221, %v6429, %v6220
    %v6446 = vsel %vm5221, %v6430, %v6221
    %vm6447 = vcmask 1042432
    %v6448 = vsel %vm6447, %v6431, %v6238
    %v6449 = vsel %vm6447, %v6432, %v6239
    %v6450 = vsel %vm6447, %v6433, %v6240
    %v6451 = vsel %vm6447, %v6434, %v6241
    %v6452 = vsel %vm6447, %v6435, %v6242
    %v6453 = vsel %vm6447, %v6436, %v6243
    %v6454 = vsel %vm6447, %v6437, %v6244
    %v6455 = vsel %vm6447, %v6438, %v6245
    %v6456 = vsel %vm6447, %v6439, %v6246
    %v6457 = vsel %vm6447, %v6440, %v6247
    %v6458 = vsel %vm6447, %v6441, %v6248
    %v6459 = vsel %vm6447, %v6442, %v6249
    %v6460 = vsel %vm6447, %v6443, %v6250
    %v6461 = vsel %vm6447, %v6444, %v6251
    %v6462 = vsel %vm6447, %v6445, %v6252
    %v6463 = vsel %vm6447, %v6446, %v6253
    %vm6464 = vcmask 1043456
    %v6465 = vsel %vm6464, %v6448, %v6286
    %v6466 = vsel %vm6464, %v6449, %v6287
    %v6467 = vsel %vm6464, %v6450, %v6288
    %v6468 = vsel %vm6464, %v6451, %v6289
    %v6469 = vsel %vm6464, %v6452, %v6290
    %v6470 = vsel %vm6464, %v6453, %v6291
    %v6471 = vsel %vm6464, %v6454, %v6292
    %v6472 = vsel %vm6464, %v6455, %v6293
    %v6473 = vsel %vm6464, %v6456, %v6294
    %v6474 = vsel %vm6464, %v6457, %v6295
    %v6475 = vsel %vm6464, %v6458, %v6296
    %v6476 = vsel %vm6464, %v6459, %v6297
    %v6477 = vsel %vm6464, %v6460, %v6298
    %v6478 = vsel %vm6464, %v6461, %v6299
    %v6479 = vsel %vm6464, %v6462, %v6300
    %v6480 = vsel %vm6464, %v6463, %v6301
    %vm6481 = vcmask 1044480
    %v6482 = vsel %vm6481, %v6465, %v6318
    %v6483 = vsel %vm6481, %v6466, %v6319
    %v6484 = vsel %vm6481, %v6467, %v6320
    %v6485 = vsel %vm6481, %v6468, %v6321
    %v6486 = vsel %vm6481, %v6469, %v6322
    %v6487 = vsel %vm6481, %v6470, %v6323
    %v6488 = vsel %vm6481, %v6471, %v6324
    %v6489 = vsel %vm6481, %v6472, %v6325
    %v6490 = vsel %vm6481, %v6473, %v6326
    %v6491 = vsel %vm6481, %v6474, %v6327
    %v6492 = vsel %vm6481, %v6475, %v6328
    %v6493 = vsel %vm6481, %v6476, %v6329
    %v6494 = vsel %vm6481, %v6477, %v6330
    %v6495 = vsel %vm6481, %v6478, %v6331
    %v6496 = vsel %vm6481, %v6479, %v6332
    %v6497 = vsel %vm6481, %v6480, %v6333
    %vm6498 = vcmask 1045504
    %v6499 = vsel %vm6498, %v6482, %v6350
    %v6500 = vsel %vm6498, %v6483, %v6351
    %v6501 = vsel %vm6498, %v6484, %v6352
    %v6502 = vsel %vm6498, %v6485, %v6353
    %v6503 = vsel %vm6498, %v6486, %v6354
    %v6504 = vsel %vm6498, %v6487, %v6355
    %v6505 = vsel %vm6498, %v6488, %v6356
    %v6506 = vsel %vm6498, %v6489, %v6357
    %v6507 = vsel %vm6498, %v6490, %v6358
    %v6508 = vsel %vm6498, %v6491, %v6359
    %v6509 = vsel %vm6498, %v6492, %v6360
    %v6510 = vsel %vm6498, %v6493, %v6361
    %v6511 = vsel %vm6498, %v6494, %v6362
    %v6512 = vsel %vm6498, %v6495, %v6363
    %v6513 = vsel %vm6498, %v6496, %v6364
    %v6514 = vsel %vm6498, %v6497, %v6365
    %vm6515 = vcmask 1046528
    %v6516 = vsel %vm6515, %v6499, %v6382
    %v6517 = vsel %vm6515, %v6500, %v6383
    %v6518 = vsel %vm6515, %v6501, %v6384
    %v6519 = vsel %vm6515, %v6502, %v6385
    %v6520 = vsel %vm6515, %v6503, %v6386
    %v6521 = vsel %vm6515, %v6504, %v6387
    %v6522 = vsel %vm6515, %v6505, %v6388
    %v6523 = vsel %vm6515, %v6506, %v6389
    %v6524 = vsel %vm6515, %v6507, %v6390
    %v6525 = vsel %vm6515, %v6508, %v6391
    %v6526 = vsel %vm6515, %v6509, %v6392
    %v6527 = vsel %vm6515, %v6510, %v6393
    %v6528 = vsel %vm6515, %v6511, %v6394
    %v6529 = vsel %vm6515, %v6512, %v6395
    %v6530 = vsel %vm6515, %v6513, %v6396
    %v6531 = vsel %vm6515, %v6514, %v6397
    %v6532 = vmax.f32 %v6516, 0.0
    %v6533 = vmax.f32 %v6517, 0.0
    %v6534 = vmax.f32 %v6518, 0.0
    %v6535 = vmax.f32 %v6519, 0.0
    %v6536 = vmax.f32 %v6520, 0.0
    %v6537 = vmax.f32 %v6521, 0.0
    %v6538 = vmax.f32 %v6522, 0.0
    %v6539 = vmax.f32 %v6523, 0.0
    %v6540 = vmax.f32 %v6524, 0.0
    %v6541 = vmax.f32 %v6525, 0.0
    %v6542 = vmax.f32 %v6526, 0.0
    %v6543 = vmax.f32 %v6527, 0.0
    %v6544 = vmax.f32 %v6528, 0.0
    %v6545 = vmax.f32 %v6529, 0.0
    %v6546 = vmax.f32 %v6530, 0.0
    %v6547 = vmax.f32 %v6531, 0.0
    %vm6548 = vcmask 519168
    %6549 = vst.msk [vmem:[#allocation3] sm:$0xf] %vm6548, 0
    %6550 = vst.msk [vmem:[#allocation3 + $0x4] sm:$0xf] %vm6548, 0
    %vm6551 = vcmask 516096
    %6552 = vst.msk [vmem:[#allocation3 + $0x8] sm:$0x1] %vm6551, 0
    %6553 = vst.msk [vmem:[#allocation3 + $0x78] sm:$0xf] %vm6548, 0
    %6554 = vst.msk [vmem:[#allocation3 + $0x7c] sm:$0xf] %vm6548, 0
    %6555 = vst.msk [vmem:[#allocation3 + $0x80] sm:$0x1] %vm6551, 0
    %s6556 = scalar_lea.vmem [#allocation3], 108
    %6557 = vst.msk [vmem:[%s6556] sm:$0xf] %vm6548, 0
    %6558 = vst.msk [vmem:[%s6556 + $0x4] sm:$0xf] %vm6548, 0
    %6559 = vst.msk [vmem:[%s6556 + $0x8] sm:$0x1] %vm6551, 0
    %6560 = vst.msk [vmem:[%s6556 + $0x78] sm:$0xf] %vm6548, 0
    %6561 = vst.msk [vmem:[%s6556 + $0x7c] sm:$0xf] %vm6548, 0
    %6562 = vst.msk [vmem:[%s6556 + $0x80] sm:$0x1] %vm6551, 0
    %vm6563 = vcmask 516096
    %vm6564 = vmand %vm6563, %vm68
    %v6565 = vld [vmem:[#allocation3] sm:$0x1]
    %v6566 = vsel %vm6564, 0, %v6565
    %6567 = vst [vmem:[#allocation3] sm:$0x1] %v6566
    %v6568 = vld [vmem:[#allocation3 + $0xc] sm:$0x1]
    %v6569 = vsel %vm6564, 0, %v6568
    %6570 = vst [vmem:[#allocation3 + $0xc] sm:$0x1] %v6569
    %v6571 = vld [vmem:[#allocation3 + $0x18] sm:$0x1]
    %v6572 = vsel %vm6564, 0, %v6571
    %6573 = vst [vmem:[#allocation3 + $0x18] sm:$0x1] %v6572
    %v6574 = vld [vmem:[#allocation3 + $0x24] sm:$0x1]
    %v6575 = vsel %vm6564, 0, %v6574
    %6576 = vst [vmem:[#allocation3 + $0x24] sm:$0x1] %v6575
    %v6577 = vld [vmem:[#allocation3 + $0x30] sm:$0x1]
    %v6578 = vsel %vm6564, 0, %v6577
    %6579 = vst [vmem:[#allocation3 + $0x30] sm:$0x1] %v6578
    %v6580 = vld [vmem:[#allocation3 + $0x3c] sm:$0x1]
    %v6581 = vsel %vm6564, 0, %v6580
    %6582 = vst [vmem:[#allocation3 + $0x3c] sm:$0x1] %v6581
    %v6583 = vld [vmem:[#allocation3 + $0x48] sm:$0x1]
    %v6584 = vsel %vm6564, 0, %v6583
    %6585 = vst [vmem:[#allocation3 + $0x48] sm:$0x1] %v6584
    %v6586 = vld [vmem:[#allocation3 + $0x54] sm:$0x1]
    %v6587 = vsel %vm6564, 0, %v6586
    %6588 = vst [vmem:[#allocation3 + $0x54] sm:$0x1] %v6587
    %v6589 = vld [vmem:[#allocation3 + $0x60] sm:$0x1]
    %v6590 = vsel %vm6564, 0, %v6589
    %6591 = vst [vmem:[#allocation3 + $0x60] sm:$0x1] %v6590
    %v6592 = vld [vmem:[#allocation3 + $0x6c] sm:$0x1]
    %v6593 = vsel %vm6564, 0, %v6592
    %6594 = vst [vmem:[#allocation3 + $0x6c] sm:$0x1] %v6593
    %v6595 = vld [vmem:[#allocation3 + $0x78] sm:$0x1]
    %v6596 = vsel %vm6564, 0, %v6595
    %6597 = vst [vmem:[#allocation3 + $0x78] sm:$0x1] %v6596
    %v6598 = vld [vmem:[#allocation3 + $0x84] sm:$0x1]
    %v6599 = vsel %vm6564, 0, %v6598
    %6600 = vst [vmem:[#allocation3 + $0x84] sm:$0x1] %v6599
    %v6601 = vld [vmem:[#allocation3 + $0x90] sm:$0x1]
    %v6602 = vsel %vm6564, 0, %v6601
    %6603 = vst [vmem:[#allocation3 + $0x90] sm:$0x1] %v6602
    %v6604 = vld [vmem:[#allocation3 + $0x9c] sm:$0x1]
    %v6605 = vsel %vm6564, 0, %v6604
    %6606 = vst [vmem:[#allocation3 + $0x9c] sm:$0x1] %v6605
    %v6607 = vld [vmem:[#allocation3 + $0xa8] sm:$0x1]
    %v6608 = vsel %vm6564, 0, %v6607
    %6609 = vst [vmem:[#allocation3 + $0xa8] sm:$0x1] %v6608
    %v6610 = vld [vmem:[#allocation3 + $0xb4] sm:$0x1]
    %v6611 = vsel %vm6564, 0, %v6610
    %6612 = vst [vmem:[#allocation3 + $0xb4] sm:$0x1] %v6611
    %v6613 = vld [vmem:[#allocation3 + $0xc0] sm:$0x1]
    %v6614 = vsel %vm6564, 0, %v6613
    %6615 = vst [vmem:[#allocation3 + $0xc0] sm:$0x1] %v6614
    %v6616 = vld [vmem:[#allocation3 + $0xcc] sm:$0x1]
    %v6617 = vsel %vm6564, 0, %v6616
    %6618 = vst [vmem:[#allocation3 + $0xcc] sm:$0x1] %v6617
    %v6619 = vld [vmem:[#allocation3 + $0xd8] sm:$0x1]
    %v6620 = vsel %vm6564, 0, %v6619
    %6621 = vst [vmem:[#allocation3 + $0xd8] sm:$0x1] %v6620
    %v6622 = vld [vmem:[#allocation3 + $0xe4] sm:$0x1]
    %v6623 = vsel %vm6564, 0, %v6622
    %6624 = vst [vmem:[#allocation3 + $0xe4] sm:$0x1] %v6623
    %vm6625 = vcmask 519168
    %vm6626 = vmand %vm6625, %vm178
    %v6627 = vld [vmem:[#allocation3 + $0x4] sm:$0xf]
    %v6628 = vsel %vm6626, 0, %v6627
    %6629 = vst [vmem:[#allocation3 + $0x4] sm:$0xf] %v6628
    %6630 = vst.msk [vmem:[#allocation3 + $0x8] sm:$0x1] %vm6551, 0
    %v6631 = vld [vmem:[#allocation3 + $0x10] sm:$0xf]
    %v6632 = vsel %vm6626, 0, %v6631
    %6633 = vst [vmem:[#allocation3 + $0x10] sm:$0xf] %v6632
    %6634 = vst.msk [vmem:[#allocation3 + $0x14] sm:$0x1] %vm6551, 0
    %v6635 = vld [vmem:[#allocation3 + $0x1c] sm:$0xf]
    %v6636 = vsel %vm6626, 0, %v6635
    %6637 = vst [vmem:[#allocation3 + $0x1c] sm:$0xf] %v6636
    %6638 = vst.msk [vmem:[#allocation3 + $0x20] sm:$0x1] %vm6551, 0
    %v6639 = vld [vmem:[#allocation3 + $0x28] sm:$0xf]
    %v6640 = vsel %vm6626, 0, %v6639
    %6641 = vst [vmem:[#allocation3 + $0x28] sm:$0xf] %v6640
    %6642 = vst.msk [vmem:[#allocation3 + $0x2c] sm:$0x1] %vm6551, 0
    %v6643 = vld [vmem:[#allocation3 + $0x34] sm:$0xf]
    %v6644 = vsel %vm6626, 0, %v6643
    %6645 = vst [vmem:[#allocation3 + $0x34] sm:$0xf] %v6644
    %6646 = vst.msk [vmem:[#allocation3 + $0x38] sm:$0x1] %vm6551, 0
    %v6647 = vld [vmem:[#allocation3 + $0x40] sm:$0xf]
    %v6648 = vsel %vm6626, 0, %v6647
    %6649 = vst [vmem:[#allocation3 + $0x40] sm:$0xf] %v6648
    %6650 = vst.msk [vmem:[#allocation3 + $0x44] sm:$0x1] %vm6551, 0
    %v6651 = vld [vmem:[#allocation3 + $0x4c] sm:$0xf]
    %v6652 = vsel %vm6626, 0, %v6651
    %6653 = vst [vmem:[#allocation3 + $0x4c] sm:$0xf] %v6652
    %6654 = vst.msk [vmem:[#allocation3 + $0x50] sm:$0x1] %vm6551, 0
    %v6655 = vld [vmem:[#allocation3 + $0x58] sm:$0xf]
    %v6656 = vsel %vm6626, 0, %v6655
    %6657 = vst [vmem:[#allocation3 + $0x58] sm:$0xf] %v6656
    %6658 = vst.msk [vmem:[#allocation3 + $0x5c] sm:$0x1] %vm6551, 0
    %v6659 = vld [vmem:[#allocation3 + $0x64] sm:$0xf]
    %v6660 = vsel %vm6626, 0, %v6659
    %6661 = vst [vmem:[#allocation3 + $0x64] sm:$0xf] %v6660
    %6662 = vst.msk [vmem:[#allocation3 + $0x68] sm:$0x1] %vm6551, 0
    %v6663 = vld [vmem:[#allocation3 + $0x70] sm:$0xf]
    %v6664 = vsel %vm6626, 0, %v6663
    %6665 = vst [vmem:[#allocation3 + $0x70] sm:$0xf] %v6664
    %6666 = vst.msk [vmem:[#allocation3 + $0x74] sm:$0x1] %vm6551, 0
    %v6667 = vld [vmem:[#allocation3 + $0x7c] sm:$0xf]
    %v6668 = vsel %vm6626, 0, %v6667
    %6669 = vst [vmem:[#allocation3 + $0x7c] sm:$0xf] %v6668
    %6670 = vst.msk [vmem:[#allocation3 + $0x80] sm:$0x1] %vm6551, 0
    %v6671 = vld [vmem:[#allocation3 + $0x88] sm:$0xf]
    %v6672 = vsel %vm6626, 0, %v6671
    %6673 = vst [vmem:[#allocation3 + $0x88] sm:$0xf] %v6672
    %6674 = vst.msk [vmem:[#allocation3 + $0x8c] sm:$0x1] %vm6551, 0
    %v6675 = vld [vmem:[#allocation3 + $0x94] sm:$0xf]
    %v6676 = vsel %vm6626, 0, %v6675
    %6677 = vst [vmem:[#allocation3 + $0x94] sm:$0xf] %v6676
    %6678 = vst.msk [vmem:[#allocation3 + $0x98] sm:$0x1] %vm6551, 0
    %v6679 = vld [vmem:[#allocation3 + $0xa0] sm:$0xf]
    %v6680 = vsel %vm6626, 0, %v6679
    %6681 = vst [vmem:[#allocation3 + $0xa0] sm:$0xf] %v6680
    %6682 = vst.msk [vmem:[#allocation3 + $0xa4] sm:$0x1] %vm6551, 0
    %v6683 = vld [vmem:[#allocation3 + $0xac] sm:$0xf]
    %v6684 = vsel %vm6626, 0, %v6683
    %6685 = vst [vmem:[#allocation3 + $0xac] sm:$0xf] %v6684
    %6686 = vst.msk [vmem:[#allocation3 + $0xb0] sm:$0x1] %vm6551, 0
    %v6687 = vld [vmem:[#allocation3 + $0xb8] sm:$0xf]
    %v6688 = vsel %vm6626, 0, %v6687
    %6689 = vst [vmem:[#allocation3 + $0xb8] sm:$0xf] %v6688
    %6690 = vst.msk [vmem:[#allocation3 + $0xbc] sm:$0x1] %vm6551, 0
    %v6691 = vld [vmem:[#allocation3 + $0xc4] sm:$0xf]
    %v6692 = vsel %vm6626, 0, %v6691
    %6693 = vst [vmem:[#allocation3 + $0xc4] sm:$0xf] %v6692
    %6694 = vst.msk [vmem:[#allocation3 + $0xc8] sm:$0x1] %vm6551, 0
    %v6695 = vld [vmem:[#allocation3 + $0xd0] sm:$0xf]
    %v6696 = vsel %vm6626, 0, %v6695
    %6697 = vst [vmem:[#allocation3 + $0xd0] sm:$0xf] %v6696
    %6698 = vst.msk [vmem:[#allocation3 + $0xd4] sm:$0x1] %vm6551, 0
    %v6699 = vld [vmem:[#allocation3 + $0xdc] sm:$0xf]
    %v6700 = vsel %vm6626, 0, %v6699
    %6701 = vst [vmem:[#allocation3 + $0xdc] sm:$0xf] %v6700
    %6702 = vst.msk [vmem:[#allocation3 + $0xe0] sm:$0x1] %vm6551, 0
    %v6703 = vld [vmem:[#allocation3 + $0xe8] sm:$0xf]
    %v6704 = vsel %vm6626, 0, %v6703
    %6705 = vst [vmem:[#allocation3 + $0xe8] sm:$0xf] %v6704
    %6706 = vst.msk [vmem:[#allocation3 + $0xec] sm:$0x1] %vm6551, 0
    %v6707 = vpack.c.bf16 %v6532, %v6532
    %v6708 = vpack.c.bf16 %v6533, %v6533
    %v6709 = vpack.c.bf16 %v6534, %v6534
    %v6710 = vpack.c.bf16 %v6535, %v6535
    %v6711 = vpack.c.bf16 %v6536, %v6536
    %v6712 = vpack.c.bf16 %v6537, %v6537
    %v6713 = vpack.c.bf16 %v6538, %v6538
    %v6714 = vpack.c.bf16 %v6539, %v6539
    %v6715 = vpack.c.bf16 %v6540, %v6540
    %v6716 = vpack.c.bf16 %v6541, %v6541
    %v6717 = vpack.c.bf16 %v6542, %v6542
    %v6718 = vpack.c.bf16 %v6543, %v6543
    %v6719 = vpack.c.bf16 %v6544, %v6544
    %v6720 = vpack.c.bf16 %v6545, %v6545
    %v6721 = vpack.c.bf16 %v6546, %v6546
    %v6722 = vpack.c.bf16 %v6547, %v6547
    %v6739 = vunpack.c.l.b16 %v6707
    %v6740 = vunpack.c.l.b16 %v6708
    %v6741 = vunpack.c.l.b16 %v6709
    %v6742 = vunpack.c.l.b16 %v6710
    %v6743 = vunpack.c.l.b16 %v6711
    %v6744 = vunpack.c.l.b16 %v6712
    %v6745 = vunpack.c.l.b16 %v6713
    %v6746 = vunpack.c.l.b16 %v6714
    %v6747 = vunpack.c.l.b16 %v6715
    %v6748 = vunpack.c.l.b16 %v6716
    %v6749 = vunpack.c.l.b16 %v6717
    %v6750 = vunpack.c.l.b16 %v6718
    %v6751 = vunpack.c.l.b16 %v6719
    %v6752 = vunpack.c.l.b16 %v6720
    %v6753 = vunpack.c.l.b16 %v6721
    %v6754 = vunpack.c.l.b16 %v6722
    %v6755 = vpack.c.b16 %v6739, %v6739
    %v6756 = vpack.c.b16 %v6740, %v6740
    %v6757 = vpack.c.b16 %v6741, %v6741
    %v6758 = vpack.c.b16 %v6742, %v6742
    %v6759 = vpack.c.b16 %v6743, %v6743
    %v6760 = vpack.c.b16 %v6744, %v6744
    %v6761 = vpack.c.b16 %v6745, %v6745
    %v6762 = vpack.c.b16 %v6746, %v6746
    %v6763 = vpack.c.b16 %v6747, %v6747
    %v6764 = vpack.c.b16 %v6748, %v6748
    %v6765 = vpack.c.b16 %v6749, %v6749
    %v6766 = vpack.c.b16 %v6750, %v6750
    %v6767 = vpack.c.b16 %v6751, %v6751
    %v6768 = vpack.c.b16 %v6752, %v6752
    %v6769 = vpack.c.b16 %v6753, %v6753
    %v6770 = vpack.c.b16 %v6754, %v6754
    %v6772 = vshrl.u32 %v6755, 16
    %v6774 = vrot.slane %v6772, 7
    %v6775 = vshll.u32 %v6755, 16
    %v6777 = vor.u32 %v6774, %v6775
    %v6778 = vrot.slane %v6774, 4
    %v6780 = vshrl.u32 %v6756, 16
    %v6782 = vrot.slane %v6780, 7
    %v6783 = vshll.u32 %v6756, 16
    %v6785 = vor.u32 %v6782, %v6783
    %v6786 = vrot.slane %v6782, 4
    %v6788 = vshrl.u32 %v6757, 16
    %v6790 = vrot.slane %v6788, 7
    %v6791 = vshll.u32 %v6757, 16
    %v6793 = vor.u32 %v6790, %v6791
    %v6794 = vrot.slane %v6790, 4
    %v6796 = vshrl.u32 %v6758, 16
    %v6798 = vrot.slane %v6796, 7
    %v6799 = vshll.u32 %v6758, 16
    %v6801 = vor.u32 %v6798, %v6799
    %v6802 = vrot.slane %v6798, 4
    %v6804 = vshrl.u32 %v6759, 16
    %v6806 = vrot.slane %v6804, 7
    %v6807 = vshll.u32 %v6759, 16
    %v6809 = vor.u32 %v6806, %v6807
    %v6810 = vrot.slane %v6806, 4
    %v6812 = vshrl.u32 %v6760, 16
    %v6814 = vrot.slane %v6812, 7
    %v6815 = vshll.u32 %v6760, 16
    %v6817 = vor.u32 %v6814, %v6815
    %v6818 = vrot.slane %v6814, 4
    %v6820 = vshrl.u32 %v6761, 16
    %v6822 = vrot.slane %v6820, 7
    %v6823 = vshll.u32 %v6761, 16
    %v6825 = vor.u32 %v6822, %v6823
    %v6826 = vrot.slane %v6822, 4
    %v6828 = vshrl.u32 %v6762, 16
    %v6830 = vrot.slane %v6828, 7
    %v6831 = vshll.u32 %v6762, 16
    %v6833 = vor.u32 %v6830, %v6831
    %v6834 = vrot.slane %v6830, 4
    %v6836 = vshrl.u32 %v6763, 16
    %v6838 = vrot.slane %v6836, 7
    %v6839 = vshll.u32 %v6763, 16
    %v6841 = vor.u32 %v6838, %v6839
    %v6842 = vrot.slane %v6838, 4
    %v6844 = vshrl.u32 %v6764, 16
    %v6846 = vrot.slane %v6844, 7
    %v6847 = vshll.u32 %v6764, 16
    %v6849 = vor.u32 %v6846, %v6847
    %v6850 = vrot.slane %v6846, 4
    %v6852 = vshrl.u32 %v6765, 16
    %v6854 = vrot.slane %v6852, 7
    %v6855 = vshll.u32 %v6765, 16
    %v6857 = vor.u32 %v6854, %v6855
    %v6858 = vrot.slane %v6854, 4
    %v6860 = vshrl.u32 %v6766, 16
    %v6862 = vrot.slane %v6860, 7
    %v6863 = vshll.u32 %v6766, 16
    %v6865 = vor.u32 %v6862, %v6863
    %v6866 = vrot.slane %v6862, 4
    %v6868 = vshrl.u32 %v6767, 16
    %v6870 = vrot.slane %v6868, 7
    %v6871 = vshll.u32 %v6767, 16
    %v6873 = vor.u32 %v6870, %v6871
    %v6874 = vrot.slane %v6870, 4
    %v6876 = vshrl.u32 %v6768, 16
    %v6878 = vrot.slane %v6876, 7
    %v6879 = vshll.u32 %v6768, 16
    %v6881 = vor.u32 %v6878, %v6879
    %v6882 = vrot.slane %v6878, 4
    %v6884 = vshrl.u32 %v6769, 16
    %v6886 = vrot.slane %v6884, 7
    %v6887 = vshll.u32 %v6769, 16
    %v6889 = vor.u32 %v6886, %v6887
    %v6890 = vrot.slane %v6886, 4
    %v6892 = vshrl.u32 %v6770, 16
    %v6894 = vrot.slane %v6892, 7
    %v6895 = vshll.u32 %v6770, 16
    %v6897 = vor.u32 %v6894, %v6895
    %v6898 = vrot.slane %v6894, 4
    %s6931 = scalar_lea.vmem [#allocation3], 12
    %v6932 = vld [vmem:[%s6931] sm:$0xf]
    %v6933 = vsel %vm6626, %v6777, %v6932
    %6934 = vst [vmem:[%s6931] sm:$0xf] %v6933
    %v6935 = vld [vmem:[%s6931 + $0x4] sm:$0x1]
    %v6936 = vsel %vm6564, %v6778, %v6935
    %6937 = vst [vmem:[%s6931 + $0x4] sm:$0x1] %v6936
    %v6938 = vld [vmem:[%s6931 + $0xc] sm:$0xf]
    %v6939 = vsel %vm6626, %v6785, %v6938
    %6940 = vst [vmem:[%s6931 + $0xc] sm:$0xf] %v6939
    %v6941 = vld [vmem:[%s6931 + $0x10] sm:$0x1]
    %v6942 = vsel %vm6564, %v6786, %v6941
    %6943 = vst [vmem:[%s6931 + $0x10] sm:$0x1] %v6942
    %v6944 = vld [vmem:[%s6931 + $0x18] sm:$0xf]
    %v6945 = vsel %vm6626, %v6793, %v6944
    %6946 = vst [vmem:[%s6931 + $0x18] sm:$0xf] %v6945
    %v6947 = vld [vmem:[%s6931 + $0x1c] sm:$0x1]
    %v6948 = vsel %vm6564, %v6794, %v6947
    %6949 = vst [vmem:[%s6931 + $0x1c] sm:$0x1] %v6948
    %v6950 = vld [vmem:[%s6931 + $0x24] sm:$0xf]
    %v6951 = vsel %vm6626, %v6801, %v6950
    %6952 = vst [vmem:[%s6931 + $0x24] sm:$0xf] %v6951
    %v6953 = vld [vmem:[%s6931 + $0x28] sm:$0x1]
    %v6954 = vsel %vm6564, %v6802, %v6953
    %6955 = vst [vmem:[%s6931 + $0x28] sm:$0x1] %v6954
    %v6956 = vld [vmem:[%s6931 + $0x30] sm:$0xf]
    %v6957 = vsel %vm6626, %v6809, %v6956
    %6958 = vst [vmem:[%s6931 + $0x30] sm:$0xf] %v6957
    %v6959 = vld [vmem:[%s6931 + $0x34] sm:$0x1]
    %v6960 = vsel %vm6564, %v6810, %v6959
    %6961 = vst [vmem:[%s6931 + $0x34] sm:$0x1] %v6960
    %v6962 = vld [vmem:[%s6931 + $0x3c] sm:$0xf]
    %v6963 = vsel %vm6626, %v6817, %v6962
    %6964 = vst [vmem:[%s6931 + $0x3c] sm:$0xf] %v6963
    %v6965 = vld [vmem:[%s6931 + $0x40] sm:$0x1]
    %v6966 = vsel %vm6564, %v6818, %v6965
    %6967 = vst [vmem:[%s6931 + $0x40] sm:$0x1] %v6966
    %v6968 = vld [vmem:[%s6931 + $0x48] sm:$0xf]
    %v6969 = vsel %vm6626, %v6825, %v6968
    %6970 = vst [vmem:[%s6931 + $0x48] sm:$0xf] %v6969
    %v6971 = vld [vmem:[%s6931 + $0x4c] sm:$0x1]
    %v6972 = vsel %vm6564, %v6826, %v6971
    %6973 = vst [vmem:[%s6931 + $0x4c] sm:$0x1] %v6972
    %v6974 = vld [vmem:[%s6931 + $0x54] sm:$0xf]
    %v6975 = vsel %vm6626, %v6833, %v6974
    %6976 = vst [vmem:[%s6931 + $0x54] sm:$0xf] %v6975
    %v6977 = vld [vmem:[%s6931 + $0x58] sm:$0x1]
    %v6978 = vsel %vm6564, %v6834, %v6977
    %6979 = vst [vmem:[%s6931 + $0x58] sm:$0x1] %v6978
    %v6980 = vld [vmem:[%s6931 + $0x78] sm:$0xf]
    %v6981 = vsel %vm6626, %v6841, %v6980
    %6982 = vst [vmem:[%s6931 + $0x78] sm:$0xf] %v6981
    %v6983 = vld [vmem:[%s6931 + $0x7c] sm:$0x1]
    %v6984 = vsel %vm6564, %v6842, %v6983
    %6985 = vst [vmem:[%s6931 + $0x7c] sm:$0x1] %v6984
    %v6986 = vld [vmem:[%s6931 + $0x84] sm:$0xf]
    %v6987 = vsel %vm6626, %v6849, %v6986
    %6988 = vst [vmem:[%s6931 + $0x84] sm:$0xf] %v6987
    %v6989 = vld [vmem:[%s6931 + $0x88] sm:$0x1]
    %v6990 = vsel %vm6564, %v6850, %v6989
    %6991 = vst [vmem:[%s6931 + $0x88] sm:$0x1] %v6990
    %v6992 = vld [vmem:[%s6931 + $0x90] sm:$0xf]
    %v6993 = vsel %vm6626, %v6857, %v6992
    %6994 = vst [vmem:[%s6931 + $0x90] sm:$0xf] %v6993
    %v6995 = vld [vmem:[%s6931 + $0x94] sm:$0x1]
    %v6996 = vsel %vm6564, %v6858, %v6995
    %6997 = vst [vmem:[%s6931 + $0x94] sm:$0x1] %v6996
    %v6998 = vld [vmem:[%s6931 + $0x9c] sm:$0xf]
    %v6999 = vsel %vm6626, %v6865, %v6998
    %7000 = vst [vmem:[%s6931 + $0x9c] sm:$0xf] %v6999
    %v7001 = vld [vmem:[%s6931 + $0xa0] sm:$0x1]
    %v7002 = vsel %vm6564, %v6866, %v7001
    %7003 = vst [vmem:[%s6931 + $0xa0] sm:$0x1] %v7002
    %v7004 = vld [vmem:[%s6931 + $0xa8] sm:$0xf]
    %v7005 = vsel %vm6626, %v6873, %v7004
    %7006 = vst [vmem:[%s6931 + $0xa8] sm:$0xf] %v7005
    %v7007 = vld [vmem:[%s6931 + $0xac] sm:$0x1]
    %v7008 = vsel %vm6564, %v6874, %v7007
    %7009 = vst [vmem:[%s6931 + $0xac] sm:$0x1] %v7008
    %v7010 = vld [vmem:[%s6931 + $0xb4] sm:$0xf]
    %v7011 = vsel %vm6626, %v6881, %v7010
    %7012 = vst [vmem:[%s6931 + $0xb4] sm:$0xf] %v7011
    %v7013 = vld [vmem:[%s6931 + $0xb8] sm:$0x1]
    %v7014 = vsel %vm6564, %v6882, %v7013
    %7015 = vst [vmem:[%s6931 + $0xb8] sm:$0x1] %v7014
    %v7016 = vld [vmem:[%s6931 + $0xc0] sm:$0xf]
    %v7017 = vsel %vm6626, %v6889, %v7016
    %7018 = vst [vmem:[%s6931 + $0xc0] sm:$0xf] %v7017
    %v7019 = vld [vmem:[%s6931 + $0xc4] sm:$0x1]
    %v7020 = vsel %vm6564, %v6890, %v7019
    %7021 = vst [vmem:[%s6931 + $0xc4] sm:$0x1] %v7020
    %v7022 = vld [vmem:[%s6931 + $0xcc] sm:$0xf]
    %v7023 = vsel %vm6626, %v6897, %v7022
    %7024 = vst [vmem:[%s6931 + $0xcc] sm:$0xf] %v7023
    %v7025 = vld [vmem:[%s6931 + $0xd0] sm:$0x1]
    %v7026 = vsel %vm6564, %v6898, %v7025
    %7027 = vst [vmem:[%s6931 + $0xd0] sm:$0x1] %v7026
    %v7028 = vld [vmem:[#allocation3] sm:$0xf]
    %v7029 = vld [vmem:[#allocation3 + $0x4] sm:$0xf]
    %v7030 = vld [vmem:[#allocation3 + $0xc] sm:$0xf]
    %v7031 = vld [vmem:[#allocation3 + $0x10] sm:$0xf]
    %v7032 = vld [vmem:[#allocation3 + $0x18] sm:$0xf]
    %v7033 = vld [vmem:[#allocation3 + $0x1c] sm:$0xf]
    %v7034 = vld [vmem:[#allocation3 + $0x24] sm:$0xf]
    %v7035 = vld [vmem:[#allocation3 + $0x28] sm:$0xf]
    %v7036 = vld [vmem:[#allocation3 + $0x30] sm:$0xf]
    %v7037 = vld [vmem:[#allocation3 + $0x34] sm:$0xf]
    %v7038 = vld [vmem:[#allocation3 + $0x3c] sm:$0xf]
    %v7039 = vld [vmem:[#allocation3 + $0x40] sm:$0xf]
    %v7040 = vld [vmem:[#allocation3 + $0x48] sm:$0xf]
    %v7041 = vld [vmem:[#allocation3 + $0x4c] sm:$0xf]
    %v7042 = vld [vmem:[#allocation3 + $0x54] sm:$0xf]
    %v7043 = vld [vmem:[#allocation3 + $0x58] sm:$0xf]
    %v7044 = vld [vmem:[#allocation3 + $0x78] sm:$0xf]
    %v7045 = vld [vmem:[#allocation3 + $0x7c] sm:$0xf]
    %v7046 = vld [vmem:[#allocation3 + $0x84] sm:$0xf]
    %v7047 = vld [vmem:[#allocation3 + $0x88] sm:$0xf]
    %v7048 = vld [vmem:[#allocation3 + $0x90] sm:$0xf]
    %v7049 = vld [vmem:[#allocation3 + $0x94] sm:$0xf]
    %v7050 = vld [vmem:[#allocation3 + $0x9c] sm:$0xf]
    %v7051 = vld [vmem:[#allocation3 + $0xa0] sm:$0xf]
    %v7052 = vld [vmem:[#allocation3 + $0xa8] sm:$0xf]
    %v7053 = vld [vmem:[#allocation3 + $0xac] sm:$0xf]
    %v7054 = vld [vmem:[#allocation3 + $0xb4] sm:$0xf]
    %v7055 = vld [vmem:[#allocation3 + $0xb8] sm:$0xf]
    %v7056 = vld [vmem:[#allocation3 + $0xc0] sm:$0xf]
    %v7057 = vld [vmem:[#allocation3 + $0xc4] sm:$0xf]
    %v7058 = vld [vmem:[#allocation3 + $0xcc] sm:$0xf]
    %v7059 = vld [vmem:[#allocation3 + $0xd0] sm:$0xf]
    %v7060 = vld [vmem:[#allocation3 + $0x8] sm:$0x1]
    %v7061 = vld [vmem:[#allocation3 + $0x14] sm:$0x1]
    %v7062 = vld [vmem:[#allocation3 + $0x20] sm:$0x1]
    %v7063 = vld [vmem:[#allocation3 + $0x2c] sm:$0x1]
    %v7064 = vld [vmem:[#allocation3 + $0x38] sm:$0x1]
    %v7065 = vld [vmem:[#allocation3 + $0x44] sm:$0x1]
    %v7066 = vld [vmem:[#allocation3 + $0x50] sm:$0x1]
    %v7067 = vld [vmem:[#allocation3 + $0x5c] sm:$0x1]
    %v7068 = vld [vmem:[#allocation3 + $0x80] sm:$0x1]
    %v7069 = vld [vmem:[#allocation3 + $0x8c] sm:$0x1]
    %v7070 = vld [vmem:[#allocation3 + $0x98] sm:$0x1]
    %v7071 = vld [vmem:[#allocation3 + $0xa4] sm:$0x1]
    %v7072 = vld [vmem:[#allocation3 + $0xb0] sm:$0x1]
    %v7073 = vld [vmem:[#allocation3 + $0xbc] sm:$0x1]
    %v7074 = vld [vmem:[#allocation3 + $0xc8] sm:$0x1]
    %v7075 = vld [vmem:[#allocation3 + $0xd4] sm:$0x1]
    %v7076 = vld [vmem:[#allocation3] sm:$0xe]
    %v7077 = vld [vmem:[#allocation3 + $0xc] sm:$0xe]
    %v7078 = vld [vmem:[#allocation3 + $0x18] sm:$0xe]
    %v7079 = vld [vmem:[#allocation3 + $0x24] sm:$0xe]
    %v7080 = vld [vmem:[#allocation3 + $0x30] sm:$0xe]
    %v7081 = vld [vmem:[#allocation3 + $0x3c] sm:$0xe]
    %v7082 = vld [vmem:[#allocation3 + $0x48] sm:$0xe]
    %v7083 = vld [vmem:[#allocation3 + $0x54] sm:$0xe]
    %v7084 = vld [vmem:[#allocation3 + $0x78] sm:$0xe]
    %v7085 = vld [vmem:[#allocation3 + $0x84] sm:$0xe]
    %v7086 = vld [vmem:[#allocation3 + $0x90] sm:$0xe]
    %v7087 = vld [vmem:[#allocation3 + $0x9c] sm:$0xe]
    %v7088 = vld [vmem:[#allocation3 + $0xa8] sm:$0xe]
    %v7089 = vld [vmem:[#allocation3 + $0xb4] sm:$0xe]
    %v7090 = vld [vmem:[#allocation3 + $0xc0] sm:$0xe]
    %v7091 = vld [vmem:[#allocation3 + $0xcc] sm:$0xe]
    %v7092 = vld [vmem:[%s6931] sm:$0xf]
    %v7093 = vld [vmem:[%s6931 + $0x4] sm:$0xf]
    %v7094 = vld [vmem:[%s6931 + $0xc] sm:$0xf]
    %v7095 = vld [vmem:[%s6931 + $0x10] sm:$0xf]
    %v7096 = vld [vmem:[%s6931 + $0x18] sm:$0xf]
    %v7097 = vld [vmem:[%s6931 + $0x1c] sm:$0xf]
    %v7098 = vld [vmem:[%s6931 + $0x24] sm:$0xf]
    %v7099 = vld [vmem:[%s6931 + $0x28] sm:$0xf]
    %v7100 = vld [vmem:[%s6931 + $0x30] sm:$0xf]
    %v7101 = vld [vmem:[%s6931 + $0x34] sm:$0xf]
    %v7102 = vld [vmem:[%s6931 + $0x3c] sm:$0xf]
    %v7103 = vld [vmem:[%s6931 + $0x40] sm:$0xf]
    %v7104 = vld [vmem:[%s6931 + $0x48] sm:$0xf]
    %v7105 = vld [vmem:[%s6931 + $0x4c] sm:$0xf]
    %v7106 = vld [vmem:[%s6931 + $0x54] sm:$0xf]
    %v7107 = vld [vmem:[%s6931 + $0x58] sm:$0xf]
    %v7108 = vld [vmem:[%s6931 + $0x78] sm:$0xf]
    %v7109 = vld [vmem:[%s6931 + $0x7c] sm:$0xf]
    %v7110 = vld [vmem:[%s6931 + $0x84] sm:$0xf]
    %v7111 = vld [vmem:[%s6931 + $0x88] sm:$0xf]
    %v7112 = vld [vmem:[%s6931 + $0x90] sm:$0xf]
    %v7113 = vld [vmem:[%s6931 + $0x94] sm:$0xf]
    %v7114 = vld [vmem:[%s6931 + $0x9c] sm:$0xf]
    %v7115 = vld [vmem:[%s6931 + $0xa0] sm:$0xf]
    %v7116 = vld [vmem:[%s6931 + $0xa8] sm:$0xf]
    %v7117 = vld [vmem:[%s6931 + $0xac] sm:$0xf]
    %v7118 = vld [vmem:[%s6931 + $0xb4] sm:$0xf]
    %v7119 = vld [vmem:[%s6931 + $0xb8] sm:$0xf]
    %v7120 = vld [vmem:[%s6931 + $0xc0] sm:$0xf]
    %v7121 = vld [vmem:[%s6931 + $0xc4] sm:$0xf]
    %v7122 = vld [vmem:[%s6931 + $0xcc] sm:$0xf]
    %v7123 = vld [vmem:[%s6931 + $0xd0] sm:$0xf]
    %v7124 = vld [vmem:[%s6931 + $0x8] sm:$0x1]
    %v7125 = vld [vmem:[%s6931 + $0x14] sm:$0x1]
    %v7126 = vld [vmem:[%s6931 + $0x20] sm:$0x1]
    %v7127 = vld [vmem:[%s6931 + $0x2c] sm:$0x1]
    %v7128 = vld [vmem:[%s6931 + $0x38] sm:$0x1]
    %v7129 = vld [vmem:[%s6931 + $0x44] sm:$0x1]
    %v7130 = vld [vmem:[%s6931 + $0x50] sm:$0x1]
    %v7131 = vld [vmem:[%s6931 + $0x5c] sm:$0x1]
    %v7132 = vld [vmem:[%s6931 + $0x80] sm:$0x1]
    %v7133 = vld [vmem:[%s6931 + $0x8c] sm:$0x1]
    %v7134 = vld [vmem:[%s6931 + $0x98] sm:$0x1]
    %v7135 = vld [vmem:[%s6931 + $0xa4] sm:$0x1]
    %v7136 = vld [vmem:[%s6931 + $0xb0] sm:$0x1]
    %v7137 = vld [vmem:[%s6931 + $0xbc] sm:$0x1]
    %v7138 = vld [vmem:[%s6931 + $0xc8] sm:$0x1]
    %v7139 = vld [vmem:[%s6931 + $0xd4] sm:$0x1]
    %v7140 = vld [vmem:[%s6931] sm:$0xe]
    %v7141 = vld [vmem:[%s6931 + $0xc] sm:$0xe]
    %v7142 = vld [vmem:[%s6931 + $0x18] sm:$0xe]
    %v7143 = vld [vmem:[%s6931 + $0x24] sm:$0xe]
    %v7144 = vld [vmem:[%s6931 + $0x30] sm:$0xe]
    %v7145 = vld [vmem:[%s6931 + $0x3c] sm:$0xe]
    %v7146 = vld [vmem:[%s6931 + $0x48] sm:$0xe]
    %v7147 = vld [vmem:[%s6931 + $0x54] sm:$0xe]
    %v7148 = vld [vmem:[%s6931 + $0x78] sm:$0xe]
    %v7149 = vld [vmem:[%s6931 + $0x84] sm:$0xe]
    %v7150 = vld [vmem:[%s6931 + $0x90] sm:$0xe]
    %v7151 = vld [vmem:[%s6931 + $0x9c] sm:$0xe]
    %v7152 = vld [vmem:[%s6931 + $0xa8] sm:$0xe]
    %v7153 = vld [vmem:[%s6931 + $0xb4] sm:$0xe]
    %v7154 = vld [vmem:[%s6931 + $0xc0] sm:$0xe]
    %v7155 = vld [vmem:[%s6931 + $0xcc] sm:$0xe]
    %s7156 = scalar_lea.vmem [#allocation3], 24
    %v7157 = vld [vmem:[%s7156] sm:$0xf]
    %v7158 = vld [vmem:[%s7156 + $0x4] sm:$0xf]
    %v7159 = vld [vmem:[%s7156 + $0xc] sm:$0xf]
    %v7160 = vld [vmem:[%s7156 + $0x10] sm:$0xf]
    %v7161 = vld [vmem:[%s7156 + $0x18] sm:$0xf]
    %v7162 = vld [vmem:[%s7156 + $0x1c] sm:$0xf]
    %v7163 = vld [vmem:[%s7156 + $0x24] sm:$0xf]
    %v7164 = vld [vmem:[%s7156 + $0x28] sm:$0xf]
    %v7165 = vld [vmem:[%s7156 + $0x30] sm:$0xf]
    %v7166 = vld [vmem:[%s7156 + $0x34] sm:$0xf]
    %v7167 = vld [vmem:[%s7156 + $0x3c] sm:$0xf]
    %v7168 = vld [vmem:[%s7156 + $0x40] sm:$0xf]
    %v7169 = vld [vmem:[%s7156 + $0x48] sm:$0xf]
    %v7170 = vld [vmem:[%s7156 + $0x4c] sm:$0xf]
    %v7171 = vld [vmem:[%s7156 + $0x54] sm:$0xf]
    %v7172 = vld [vmem:[%s7156 + $0x58] sm:$0xf]
    %v7173 = vld [vmem:[%s7156 + $0x78] sm:$0xf]
    %v7174 = vld [vmem:[%s7156 + $0x7c] sm:$0xf]
    %v7175 = vld [vmem:[%s7156 + $0x84] sm:$0xf]
    %v7176 = vld [vmem:[%s7156 + $0x88] sm:$0xf]
    %v7177 = vld [vmem:[%s7156 + $0x90] sm:$0xf]
    %v7178 = vld [vmem:[%s7156 + $0x94] sm:$0xf]
    %v7179 = vld [vmem:[%s7156 + $0x9c] sm:$0xf]
    %v7180 = vld [vmem:[%s7156 + $0xa0] sm:$0xf]
    %v7181 = vld [vmem:[%s7156 + $0xa8] sm:$0xf]
    %v7182 = vld [vmem:[%s7156 + $0xac] sm:$0xf]
    %v7183 = vld [vmem:[%s7156 + $0xb4] sm:$0xf]
    %v7184 = vld [vmem:[%s7156 + $0xb8] sm:$0xf]
    %v7185 = vld [vmem:[%s7156 + $0xc0] sm:$0xf]
    %v7186 = vld [vmem:[%s7156 + $0xc4] sm:$0xf]
    %v7187 = vld [vmem:[%s7156 + $0xcc] sm:$0xf]
    %v7188 = vld [vmem:[%s7156 + $0xd0] sm:$0xf]
    %v7189 = vld [vmem:[%s7156 + $0x8] sm:$0x1]
    %v7190 = vld [vmem:[%s7156 + $0x14] sm:$0x1]
    %v7191 = vld [vmem:[%s7156 + $0x20] sm:$0x1]
    %v7192 = vld [vmem:[%s7156 + $0x2c] sm:$0x1]
    %v7193 = vld [vmem:[%s7156 + $0x38] sm:$0x1]
    %v7194 = vld [vmem:[%s7156 + $0x44] sm:$0x1]
    %v7195 = vld [vmem:[%s7156 + $0x50] sm:$0x1]
    %v7196 = vld [vmem:[%s7156 + $0x5c] sm:$0x1]
    %v7197 = vld [vmem:[%s7156 + $0x80] sm:$0x1]
    %v7198 = vld [vmem:[%s7156 + $0x8c] sm:$0x1]
    %v7199 = vld [vmem:[%s7156 + $0x98] sm:$0x1]
    %v7200 = vld [vmem:[%s7156 + $0xa4] sm:$0x1]
    %v7201 = vld [vmem:[%s7156 + $0xb0] sm:$0x1]
    %v7202 = vld [vmem:[%s7156 + $0xbc] sm:$0x1]
    %v7203 = vld [vmem:[%s7156 + $0xc8] sm:$0x1]
    %v7204 = vld [vmem:[%s7156 + $0xd4] sm:$0x1]
    %v7205 = vld [vmem:[%s7156] sm:$0xe]
    %v7206 = vld [vmem:[%s7156 + $0xc] sm:$0xe]
    %v7207 = vld [vmem:[%s7156 + $0x18] sm:$0xe]
    %v7208 = vld [vmem:[%s7156 + $0x24] sm:$0xe]
    %v7209 = vld [vmem:[%s7156 + $0x30] sm:$0xe]
    %v7210 = vld [vmem:[%s7156 + $0x3c] sm:$0xe]
    %v7211 = vld [vmem:[%s7156 + $0x48] sm:$0xe]
    %v7212 = vld [vmem:[%s7156 + $0x54] sm:$0xe]
    %v7213 = vld [vmem:[%s7156 + $0x78] sm:$0xe]
    %v7214 = vld [vmem:[%s7156 + $0x84] sm:$0xe]
    %v7215 = vld [vmem:[%s7156 + $0x90] sm:$0xe]
    %v7216 = vld [vmem:[%s7156 + $0x9c] sm:$0xe]
    %v7217 = vld [vmem:[%s7156 + $0xa8] sm:$0xe]
    %v7218 = vld [vmem:[%s7156 + $0xb4] sm:$0xe]
    %v7219 = vld [vmem:[%s7156 + $0xc0] sm:$0xe]
    %v7220 = vld [vmem:[%s7156 + $0xcc] sm:$0xe]
    %v7253 = vunpack.c.l.b16 %v7028
    %v7254 = vunpack.c.l.b16 %v7029
    %v7255 = vunpack.c.l.b16 %v7030
    %v7256 = vunpack.c.l.b16 %v7031
    %v7257 = vunpack.c.l.b16 %v7032
    %v7258 = vunpack.c.l.b16 %v7033
    %v7259 = vunpack.c.l.b16 %v7034
    %v7260 = vunpack.c.l.b16 %v7035
    %v7261 = vunpack.c.l.b16 %v7036
    %v7262 = vunpack.c.l.b16 %v7037
    %v7263 = vunpack.c.l.b16 %v7038
    %v7264 = vunpack.c.l.b16 %v7039
    %v7265 = vunpack.c.l.b16 %v7040
    %v7266 = vunpack.c.l.b16 %v7041
    %v7267 = vunpack.c.l.b16 %v7042
    %v7268 = vunpack.c.l.b16 %v7043
    %v7269 = vunpack.c.l.b16 %v7044
    %v7270 = vunpack.c.l.b16 %v7045
    %v7271 = vunpack.c.l.b16 %v7046
    %v7272 = vunpack.c.l.b16 %v7047
    %v7273 = vunpack.c.l.b16 %v7048
    %v7274 = vunpack.c.l.b16 %v7049
    %v7275 = vunpack.c.l.b16 %v7050
    %v7276 = vunpack.c.l.b16 %v7051
    %v7277 = vunpack.c.l.b16 %v7052
    %v7278 = vunpack.c.l.b16 %v7053
    %v7279 = vunpack.c.l.b16 %v7054
    %v7280 = vunpack.c.l.b16 %v7055
    %v7281 = vunpack.c.l.b16 %v7056
    %v7282 = vunpack.c.l.b16 %v7057
    %v7283 = vunpack.c.l.b16 %v7058
    %v7284 = vunpack.c.l.b16 %v7059
    %v7285 = vpack.c.b16 %v7254, %v7253
    %v7286 = vpack.c.b16 %v7256, %v7255
    %v7287 = vpack.c.b16 %v7258, %v7257
    %v7288 = vpack.c.b16 %v7260, %v7259
    %v7289 = vpack.c.b16 %v7262, %v7261
    %v7290 = vpack.c.b16 %v7264, %v7263
    %v7291 = vpack.c.b16 %v7266, %v7265
    %v7292 = vpack.c.b16 %v7268, %v7267
    %v7293 = vpack.c.b16 %v7270, %v7269
    %v7294 = vpack.c.b16 %v7272, %v7271
    %v7295 = vpack.c.b16 %v7274, %v7273
    %v7296 = vpack.c.b16 %v7276, %v7275
    %v7297 = vpack.c.b16 %v7278, %v7277
    %v7298 = vpack.c.b16 %v7280, %v7279
    %v7299 = vpack.c.b16 %v7282, %v7281
    %v7300 = vpack.c.b16 %v7284, %v7283
    %v7317 = vunpack.c.l.b16 %v7060
    %v7318 = vunpack.c.l.b16 %v7061
    %v7319 = vunpack.c.l.b16 %v7062
    %v7320 = vunpack.c.l.b16 %v7063
    %v7321 = vunpack.c.l.b16 %v7064
    %v7322 = vunpack.c.l.b16 %v7065
    %v7323 = vunpack.c.l.b16 %v7066
    %v7324 = vunpack.c.l.b16 %v7067
    %v7325 = vunpack.c.l.b16 %v7068
    %v7326 = vunpack.c.l.b16 %v7069
    %v7327 = vunpack.c.l.b16 %v7070
    %v7328 = vunpack.c.l.b16 %v7071
    %v7329 = vunpack.c.l.b16 %v7072
    %v7330 = vunpack.c.l.b16 %v7073
    %v7331 = vunpack.c.l.b16 %v7074
    %v7332 = vunpack.c.l.b16 %v7075
    %v7333 = vpack.c.b16 %v7317, %v7317
    %v7334 = vpack.c.b16 %v7318, %v7318
    %v7335 = vpack.c.b16 %v7319, %v7319
    %v7336 = vpack.c.b16 %v7320, %v7320
    %v7337 = vpack.c.b16 %v7321, %v7321
    %v7338 = vpack.c.b16 %v7322, %v7322
    %v7339 = vpack.c.b16 %v7323, %v7323
    %v7340 = vpack.c.b16 %v7324, %v7324
    %v7341 = vpack.c.b16 %v7325, %v7325
    %v7342 = vpack.c.b16 %v7326, %v7326
    %v7343 = vpack.c.b16 %v7327, %v7327
    %v7344 = vpack.c.b16 %v7328, %v7328
    %v7345 = vpack.c.b16 %v7329, %v7329
    %v7346 = vpack.c.b16 %v7330, %v7330
    %v7347 = vpack.c.b16 %v7331, %v7331
    %v7348 = vpack.c.b16 %v7332, %v7332
    %v7350 = vshrl.u32 %v7285, 16
    %v7352 = vshll.u32 %v7285, 16
    %v7354 = vrot.slane %v7352, 1
    %v7355 = vor.u32 %v7350, %v7354
    %v7357 = vshll.u32 %v7333, 16
    %v7359 = vrot.slane %v7357, 1
    %v7360 = vsel %vm1862, %v7355, %v7359
    %v7362 = vshrl.u32 %v7286, 16
    %v7364 = vshll.u32 %v7286, 16
    %v7366 = vrot.slane %v7364, 1
    %v7367 = vor.u32 %v7362, %v7366
    %v7369 = vshll.u32 %v7334, 16
    %v7371 = vrot.slane %v7369, 1
    %v7372 = vsel %vm1862, %v7367, %v7371
    %v7374 = vshrl.u32 %v7287, 16
    %v7376 = vshll.u32 %v7287, 16
    %v7378 = vrot.slane %v7376, 1
    %v7379 = vor.u32 %v7374, %v7378
    %v7381 = vshll.u32 %v7335, 16
    %v7383 = vrot.slane %v7381, 1
    %v7384 = vsel %vm1862, %v7379, %v7383
    %v7386 = vshrl.u32 %v7288, 16
    %v7388 = vshll.u32 %v7288, 16
    %v7390 = vrot.slane %v7388, 1
    %v7391 = vor.u32 %v7386, %v7390
    %v7393 = vshll.u32 %v7336, 16
    %v7395 = vrot.slane %v7393, 1
    %v7396 = vsel %vm1862, %v7391, %v7395
    %v7398 = vshrl.u32 %v7289, 16
    %v7400 = vshll.u32 %v7289, 16
    %v7402 = vrot.slane %v7400, 1
    %v7403 = vor.u32 %v7398, %v7402
    %v7405 = vshll.u32 %v7337, 16
    %v7407 = vrot.slane %v7405, 1
    %v7408 = vsel %vm1862, %v7403, %v7407
    %v7410 = vshrl.u32 %v7290, 16
    %v7412 = vshll.u32 %v7290, 16
    %v7414 = vrot.slane %v7412, 1
    %v7415 = vor.u32 %v7410, %v7414
    %v7417 = vshll.u32 %v7338, 16
    %v7419 = vrot.slane %v7417, 1
    %v7420 = vsel %vm1862, %v7415, %v7419
    %v7422 = vshrl.u32 %v7291, 16
    %v7424 = vshll.u32 %v7291, 16
    %v7426 = vrot.slane %v7424, 1
    %v7427 = vor.u32 %v7422, %v7426
    %v7429 = vshll.u32 %v7339, 16
    %v7431 = vrot.slane %v7429, 1
    %v7432 = vsel %vm1862, %v7427, %v7431
    %v7434 = vshrl.u32 %v7292, 16
    %v7436 = vshll.u32 %v7292, 16
    %v7438 = vrot.slane %v7436, 1
    %v7439 = vor.u32 %v7434, %v7438
    %v7441 = vshll.u32 %v7340, 16
    %v7443 = vrot.slane %v7441, 1
    %v7444 = vsel %vm1862, %v7439, %v7443
    %v7446 = vshrl.u32 %v7293, 16
    %v7448 = vshll.u32 %v7293, 16
    %v7450 = vrot.slane %v7448, 1
    %v7451 = vor.u32 %v7446, %v7450
    %v7453 = vshll.u32 %v7341, 16
    %v7455 = vrot.slane %v7453, 1
    %v7456 = vsel %vm1862, %v7451, %v7455
    %v7458 = vshrl.u32 %v7294, 16
    %v7460 = vshll.u32 %v7294, 16
    %v7462 = vrot.slane %v7460, 1
    %v7463 = vor.u32 %v7458, %v7462
    %v7465 = vshll.u32 %v7342, 16
    %v7467 = vrot.slane %v7465, 1
    %v7468 = vsel %vm1862, %v7463, %v7467
    %v7470 = vshrl.u32 %v7295, 16
    %v7472 = vshll.u32 %v7295, 16
    %v7474 = vrot.slane %v7472, 1
    %v7475 = vor.u32 %v7470, %v7474
    %v7477 = vshll.u32 %v7343, 16
    %v7479 = vrot.slane %v7477, 1
    %v7480 = vsel %vm1862, %v7475, %v7479
    %v7482 = vshrl.u32 %v7296, 16
    %v7484 = vshll.u32 %v7296, 16
    %v7486 = vrot.slane %v7484, 1
    %v7487 = vor.u32 %v7482, %v7486
    %v7489 = vshll.u32 %v7344, 16
    %v7491 = vrot.slane %v7489, 1
    %v7492 = vsel %vm1862, %v7487, %v7491
    %v7494 = vshrl.u32 %v7297, 16
    %v7496 = vshll.u32 %v7297, 16
    %v7498 = vrot.slane %v7496, 1
    %v7499 = vor.u32 %v7494, %v7498
    %v7501 = vshll.u32 %v7345, 16
    %v7503 = vrot.slane %v7501, 1
    %v7504 = vsel %vm1862, %v7499, %v7503
    %v7506 = vshrl.u32 %v7298, 16
    %v7508 = vshll.u32 %v7298, 16
    %v7510 = vrot.slane %v7508, 1
    %v7511 = vor.u32 %v7506, %v7510
    %v7513 = vshll.u32 %v7346, 16
    %v7515 = vrot.slane %v7513, 1
    %v7516 = vsel %vm1862, %v7511, %v7515
    %v7518 = vshrl.u32 %v7299, 16
    %v7520 = vshll.u32 %v7299, 16
    %v7522 = vrot.slane %v7520, 1
    %v7523 = vor.u32 %v7518, %v7522
    %v7525 = vshll.u32 %v7347, 16
    %v7527 = vrot.slane %v7525, 1
    %v7528 = vsel %vm1862, %v7523, %v7527
    %v7530 = vshrl.u32 %v7300, 16
    %v7532 = vshll.u32 %v7300, 16
    %v7534 = vrot.slane %v7532, 1
    %v7535 = vor.u32 %v7530, %v7534
    %v7537 = vshll.u32 %v7348, 16
    %v7539 = vrot.slane %v7537, 1
    %v7540 = vsel %vm1862, %v7535, %v7539
    %7541 = vrot.lane.b32.xlu0 %v7360, 64
    %v7542 = vpop.permute.xlu0 %7541
    %7543 = vrot.lane.b32.xlu0 %v7372, 64
    %v7544 = vpop.permute.xlu0 %7543
    %7545 = vrot.lane.b32.xlu0 %v7384, 64
    %v7546 = vpop.permute.xlu0 %7545
    %7547 = vrot.lane.b32.xlu0 %v7396, 64
    %v7548 = vpop.permute.xlu0 %7547
    %7549 = vrot.lane.b32.xlu0 %v7408, 64
    %v7550 = vpop.permute.xlu0 %7549
    %7551 = vrot.lane.b32.xlu0 %v7420, 64
    %v7552 = vpop.permute.xlu0 %7551
    %7553 = vrot.lane.b32.xlu0 %v7432, 64
    %v7554 = vpop.permute.xlu0 %7553
    %7555 = vrot.lane.b32.xlu0 %v7444, 64
    %v7556 = vpop.permute.xlu0 %7555
    %7557 = vrot.lane.b32.xlu0 %v7456, 64
    %v7558 = vpop.permute.xlu0 %7557
    %7559 = vrot.lane.b32.xlu0 %v7468, 64
    %v7560 = vpop.permute.xlu0 %7559
    %7561 = vrot.lane.b32.xlu0 %v7480, 64
    %v7562 = vpop.permute.xlu0 %7561
    %7563 = vrot.lane.b32.xlu0 %v7492, 64
    %v7564 = vpop.permute.xlu0 %7563
    %7565 = vrot.lane.b32.xlu0 %v7504, 64
    %v7566 = vpop.permute.xlu0 %7565
    %7567 = vrot.lane.b32.xlu0 %v7516, 64
    %v7568 = vpop.permute.xlu0 %7567
    %7569 = vrot.lane.b32.xlu0 %v7528, 64
    %v7570 = vpop.permute.xlu0 %7569
    %7571 = vrot.lane.b32.xlu0 %v7540, 64
    %v7572 = vpop.permute.xlu0 %7571
    %v7589 = vunpack.c.l.b16 %v7076
    %v7590 = vunpack.c.l.b16 %v7077
    %v7591 = vunpack.c.l.b16 %v7078
    %v7592 = vunpack.c.l.b16 %v7079
    %v7593 = vunpack.c.l.b16 %v7080
    %v7594 = vunpack.c.l.b16 %v7081
    %v7595 = vunpack.c.l.b16 %v7082
    %v7596 = vunpack.c.l.b16 %v7083
    %v7597 = vunpack.c.l.b16 %v7084
    %v7598 = vunpack.c.l.b16 %v7085
    %v7599 = vunpack.c.l.b16 %v7086
    %v7600 = vunpack.c.l.b16 %v7087
    %v7601 = vunpack.c.l.b16 %v7088
    %v7602 = vunpack.c.l.b16 %v7089
    %v7603 = vunpack.c.l.b16 %v7090
    %v7604 = vunpack.c.l.b16 %v7091
    %v7605 = vpack.c.b16 %v7254, %v7589
    %v7606 = vpack.c.b16 %v7256, %v7590
    %v7607 = vpack.c.b16 %v7258, %v7591
    %v7608 = vpack.c.b16 %v7260, %v7592
    %v7609 = vpack.c.b16 %v7262, %v7593
    %v7610 = vpack.c.b16 %v7264, %v7594
    %v7611 = vpack.c.b16 %v7266, %v7595
    %v7612 = vpack.c.b16 %v7268, %v7596
    %v7613 = vpack.c.b16 %v7270, %v7597
    %v7614 = vpack.c.b16 %v7272, %v7598
    %v7615 = vpack.c.b16 %v7274, %v7599
    %v7616 = vpack.c.b16 %v7276, %v7600
    %v7617 = vpack.c.b16 %v7278, %v7601
    %v7618 = vpack.c.b16 %v7280, %v7602
    %v7619 = vpack.c.b16 %v7282, %v7603
    %v7620 = vpack.c.b16 %v7284, %v7604
    %v7621 = vrot.slane %v7605, 1
    %v7622 = vrot.slane %v7333, 1
    %v7623 = vsel %vm2407, %v7621, %v7622
    %v7624 = vrot.slane %v7606, 1
    %v7625 = vrot.slane %v7334, 1
    %v7626 = vsel %vm2407, %v7624, %v7625
    %v7627 = vrot.slane %v7607, 1
    %v7628 = vrot.slane %v7335, 1
    %v7629 = vsel %vm2407, %v7627, %v7628
    %v7630 = vrot.slane %v7608, 1
    %v7631 = vrot.slane %v7336, 1
    %v7632 = vsel %vm2407, %v7630, %v7631
    %v7633 = vrot.slane %v7609, 1
    %v7634 = vrot.slane %v7337, 1
    %v7635 = vsel %vm2407, %v7633, %v7634
    %v7636 = vrot.slane %v7610, 1
    %v7637 = vrot.slane %v7338, 1
    %v7638 = vsel %vm2407, %v7636, %v7637
    %v7639 = vrot.slane %v7611, 1
    %v7640 = vrot.slane %v7339, 1
    %v7641 = vsel %vm2407, %v7639, %v7640
    %v7642 = vrot.slane %v7612, 1
    %v7643 = vrot.slane %v7340, 1
    %v7644 = vsel %vm2407, %v7642, %v7643
    %v7645 = vrot.slane %v7613, 1
    %v7646 = vrot.slane %v7341, 1
    %v7647 = vsel %vm2407, %v7645, %v7646
    %v7648 = vrot.slane %v7614, 1
    %v7649 = vrot.slane %v7342, 1
    %v7650 = vsel %vm2407, %v7648, %v7649
    %v7651 = vrot.slane %v7615, 1
    %v7652 = vrot.slane %v7343, 1
    %v7653 = vsel %vm2407, %v7651, %v7652
    %v7654 = vrot.slane %v7616, 1
    %v7655 = vrot.slane %v7344, 1
    %v7656 = vsel %vm2407, %v7654, %v7655
    %v7657 = vrot.slane %v7617, 1
    %v7658 = vrot.slane %v7345, 1
    %v7659 = vsel %vm2407, %v7657, %v7658
    %v7660 = vrot.slane %v7618, 1
    %v7661 = vrot.slane %v7346, 1
    %v7662 = vsel %vm2407, %v7660, %v7661
    %v7663 = vrot.slane %v7619, 1
    %v7664 = vrot.slane %v7347, 1
    %v7665 = vsel %vm2407, %v7663, %v7664
    %v7666 = vrot.slane %v7620, 1
    %v7667 = vrot.slane %v7348, 1
    %v7668 = vsel %vm2407, %v7666, %v7667
    %v7701 = vunpack.c.l.b16 %v7092
    %v7702 = vunpack.c.l.b16 %v7093
    %v7703 = vunpack.c.l.b16 %v7094
    %v7704 = vunpack.c.l.b16 %v7095
    %v7705 = vunpack.c.l.b16 %v7096
    %v7706 = vunpack.c.l.b16 %v7097
    %v7707 = vunpack.c.l.b16 %v7098
    %v7708 = vunpack.c.l.b16 %v7099
    %v7709 = vunpack.c.l.b16 %v7100
    %v7710 = vunpack.c.l.b16 %v7101
    %v7711 = vunpack.c.l.b16 %v7102
    %v7712 = vunpack.c.l.b16 %v7103
    %v7713 = vunpack.c.l.b16 %v7104
    %v7714 = vunpack.c.l.b16 %v7105
    %v7715 = vunpack.c.l.b16 %v7106
    %v7716 = vunpack.c.l.b16 %v7107
    %v7717 = vunpack.c.l.b16 %v7108
    %v7718 = vunpack.c.l.b16 %v7109
    %v7719 = vunpack.c.l.b16 %v7110
    %v7720 = vunpack.c.l.b16 %v7111
    %v7721 = vunpack.c.l.b16 %v7112
    %v7722 = vunpack.c.l.b16 %v7113
    %v7723 = vunpack.c.l.b16 %v7114
    %v7724 = vunpack.c.l.b16 %v7115
    %v7725 = vunpack.c.l.b16 %v7116
    %v7726 = vunpack.c.l.b16 %v7117
    %v7727 = vunpack.c.l.b16 %v7118
    %v7728 = vunpack.c.l.b16 %v7119
    %v7729 = vunpack.c.l.b16 %v7120
    %v7730 = vunpack.c.l.b16 %v7121
    %v7731 = vunpack.c.l.b16 %v7122
    %v7732 = vunpack.c.l.b16 %v7123
    %v7733 = vpack.c.b16 %v7702, %v7701
    %v7734 = vpack.c.b16 %v7704, %v7703
    %v7735 = vpack.c.b16 %v7706, %v7705
    %v7736 = vpack.c.b16 %v7708, %v7707
    %v7737 = vpack.c.b16 %v7710, %v7709
    %v7738 = vpack.c.b16 %v7712, %v7711
    %v7739 = vpack.c.b16 %v7714, %v7713
    %v7740 = vpack.c.b16 %v7716, %v7715
    %v7741 = vpack.c.b16 %v7718, %v7717
    %v7742 = vpack.c.b16 %v7720, %v7719
    %v7743 = vpack.c.b16 %v7722, %v7721
    %v7744 = vpack.c.b16 %v7724, %v7723
    %v7745 = vpack.c.b16 %v7726, %v7725
    %v7746 = vpack.c.b16 %v7728, %v7727
    %v7747 = vpack.c.b16 %v7730, %v7729
    %v7748 = vpack.c.b16 %v7732, %v7731
    %7749 = vrot.lane.b32.xlu0 %v7733, 64
    %v7750 = vpop.permute.xlu0 %7749
    %7751 = vrot.lane.b32.xlu0 %v7734, 64
    %v7752 = vpop.permute.xlu0 %7751
    %7753 = vrot.lane.b32.xlu0 %v7735, 64
    %v7754 = vpop.permute.xlu0 %7753
    %7755 = vrot.lane.b32.xlu0 %v7736, 64
    %v7756 = vpop.permute.xlu0 %7755
    %7757 = vrot.lane.b32.xlu0 %v7737, 64
    %v7758 = vpop.permute.xlu0 %7757
    %7759 = vrot.lane.b32.xlu0 %v7738, 64
    %v7760 = vpop.permute.xlu0 %7759
    %7761 = vrot.lane.b32.xlu0 %v7739, 64
    %v7762 = vpop.permute.xlu0 %7761
    %7763 = vrot.lane.b32.xlu0 %v7740, 64
    %v7764 = vpop.permute.xlu0 %7763
    %7765 = vrot.lane.b32.xlu0 %v7741, 64
    %v7766 = vpop.permute.xlu0 %7765
    %7767 = vrot.lane.b32.xlu0 %v7742, 64
    %v7768 = vpop.permute.xlu0 %7767
    %7769 = vrot.lane.b32.xlu0 %v7743, 64
    %v7770 = vpop.permute.xlu0 %7769
    %7771 = vrot.lane.b32.xlu0 %v7744, 64
    %v7772 = vpop.permute.xlu0 %7771
    %7773 = vrot.lane.b32.xlu0 %v7745, 64
    %v7774 = vpop.permute.xlu0 %7773
    %7775 = vrot.lane.b32.xlu0 %v7746, 64
    %v7776 = vpop.permute.xlu0 %7775
    %7777 = vrot.lane.b32.xlu0 %v7747, 64
    %v7778 = vpop.permute.xlu0 %7777
    %7779 = vrot.lane.b32.xlu0 %v7748, 64
    %v7780 = vpop.permute.xlu0 %7779
    %v7797 = vunpack.c.l.b16 %v7124
    %v7798 = vunpack.c.l.b16 %v7125
    %v7799 = vunpack.c.l.b16 %v7126
    %v7800 = vunpack.c.l.b16 %v7127
    %v7801 = vunpack.c.l.b16 %v7128
    %v7802 = vunpack.c.l.b16 %v7129
    %v7803 = vunpack.c.l.b16 %v7130
    %v7804 = vunpack.c.l.b16 %v7131
    %v7805 = vunpack.c.l.b16 %v7132
    %v7806 = vunpack.c.l.b16 %v7133
    %v7807 = vunpack.c.l.b16 %v7134
    %v7808 = vunpack.c.l.b16 %v7135
    %v7809 = vunpack.c.l.b16 %v7136
    %v7810 = vunpack.c.l.b16 %v7137
    %v7811 = vunpack.c.l.b16 %v7138
    %v7812 = vunpack.c.l.b16 %v7139
    %v7813 = vpack.c.b16 %v7797, %v7797
    %v7814 = vpack.c.b16 %v7798, %v7798
    %v7815 = vpack.c.b16 %v7799, %v7799
    %v7816 = vpack.c.b16 %v7800, %v7800
    %v7817 = vpack.c.b16 %v7801, %v7801
    %v7818 = vpack.c.b16 %v7802, %v7802
    %v7819 = vpack.c.b16 %v7803, %v7803
    %v7820 = vpack.c.b16 %v7804, %v7804
    %v7821 = vpack.c.b16 %v7805, %v7805
    %v7822 = vpack.c.b16 %v7806, %v7806
    %v7823 = vpack.c.b16 %v7807, %v7807
    %v7824 = vpack.c.b16 %v7808, %v7808
    %v7825 = vpack.c.b16 %v7809, %v7809
    %v7826 = vpack.c.b16 %v7810, %v7810
    %v7827 = vpack.c.b16 %v7811, %v7811
    %v7828 = vpack.c.b16 %v7812, %v7812
    %v7830 = vshrl.u32 %v7733, 16
    %v7832 = vshll.u32 %v7733, 16
    %v7834 = vrot.slane %v7832, 1
    %v7835 = vor.u32 %v7830, %v7834
    %v7837 = vshll.u32 %v7813, 16
    %v7839 = vrot.slane %v7837, 1
    %v7840 = vsel %vm1862, %v7835, %v7839
    %v7842 = vshrl.u32 %v7734, 16
    %v7844 = vshll.u32 %v7734, 16
    %v7846 = vrot.slane %v7844, 1
    %v7847 = vor.u32 %v7842, %v7846
    %v7849 = vshll.u32 %v7814, 16
    %v7851 = vrot.slane %v7849, 1
    %v7852 = vsel %vm1862, %v7847, %v7851
    %v7854 = vshrl.u32 %v7735, 16
    %v7856 = vshll.u32 %v7735, 16
    %v7858 = vrot.slane %v7856, 1
    %v7859 = vor.u32 %v7854, %v7858
    %v7861 = vshll.u32 %v7815, 16
    %v7863 = vrot.slane %v7861, 1
    %v7864 = vsel %vm1862, %v7859, %v7863
    %v7866 = vshrl.u32 %v7736, 16
    %v7868 = vshll.u32 %v7736, 16
    %v7870 = vrot.slane %v7868, 1
    %v7871 = vor.u32 %v7866, %v7870
    %v7873 = vshll.u32 %v7816, 16
    %v7875 = vrot.slane %v7873, 1
    %v7876 = vsel %vm1862, %v7871, %v7875
    %v7878 = vshrl.u32 %v7737, 16
    %v7880 = vshll.u32 %v7737, 16
    %v7882 = vrot.slane %v7880, 1
    %v7883 = vor.u32 %v7878, %v7882
    %v7885 = vshll.u32 %v7817, 16
    %v7887 = vrot.slane %v7885, 1
    %v7888 = vsel %vm1862, %v7883, %v7887
    %v7890 = vshrl.u32 %v7738, 16
    %v7892 = vshll.u32 %v7738, 16
    %v7894 = vrot.slane %v7892, 1
    %v7895 = vor.u32 %v7890, %v7894
    %v7897 = vshll.u32 %v7818, 16
    %v7899 = vrot.slane %v7897, 1
    %v7900 = vsel %vm1862, %v7895, %v7899
    %v7902 = vshrl.u32 %v7739, 16
    %v7904 = vshll.u32 %v7739, 16
    %v7906 = vrot.slane %v7904, 1
    %v7907 = vor.u32 %v7902, %v7906
    %v7909 = vshll.u32 %v7819, 16
    %v7911 = vrot.slane %v7909, 1
    %v7912 = vsel %vm1862, %v7907, %v7911
    %v7914 = vshrl.u32 %v7740, 16
    %v7916 = vshll.u32 %v7740, 16
    %v7918 = vrot.slane %v7916, 1
    %v7919 = vor.u32 %v7914, %v7918
    %v7921 = vshll.u32 %v7820, 16
    %v7923 = vrot.slane %v7921, 1
    %v7924 = vsel %vm1862, %v7919, %v7923
    %v7926 = vshrl.u32 %v7741, 16
    %v7928 = vshll.u32 %v7741, 16
    %v7930 = vrot.slane %v7928, 1
    %v7931 = vor.u32 %v7926, %v7930
    %v7933 = vshll.u32 %v7821, 16
    %v7935 = vrot.slane %v7933, 1
    %v7936 = vsel %vm1862, %v7931, %v7935
    %v7938 = vshrl.u32 %v7742, 16
    %v7940 = vshll.u32 %v7742, 16
    %v7942 = vrot.slane %v7940, 1
    %v7943 = vor.u32 %v7938, %v7942
    %v7945 = vshll.u32 %v7822, 16
    %v7947 = vrot.slane %v7945, 1
    %v7948 = vsel %vm1862, %v7943, %v7947
    %v7950 = vshrl.u32 %v7743, 16
    %v7952 = vshll.u32 %v7743, 16
    %v7954 = vrot.slane %v7952, 1
    %v7955 = vor.u32 %v7950, %v7954
    %v7957 = vshll.u32 %v7823, 16
    %v7959 = vrot.slane %v7957, 1
    %v7960 = vsel %vm1862, %v7955, %v7959
    %v7962 = vshrl.u32 %v7744, 16
    %v7964 = vshll.u32 %v7744, 16
    %v7966 = vrot.slane %v7964, 1
    %v7967 = vor.u32 %v7962, %v7966
    %v7969 = vshll.u32 %v7824, 16
    %v7971 = vrot.slane %v7969, 1
    %v7972 = vsel %vm1862, %v7967, %v7971
    %v7974 = vshrl.u32 %v7745, 16
    %v7976 = vshll.u32 %v7745, 16
    %v7978 = vrot.slane %v7976, 1
    %v7979 = vor.u32 %v7974, %v7978
    %v7981 = vshll.u32 %v7825, 16
    %v7983 = vrot.slane %v7981, 1
    %v7984 = vsel %vm1862, %v7979, %v7983
    %v7986 = vshrl.u32 %v7746, 16
    %v7988 = vshll.u32 %v7746, 16
    %v7990 = vrot.slane %v7988, 1
    %v7991 = vor.u32 %v7986, %v7990
    %v7993 = vshll.u32 %v7826, 16
    %v7995 = vrot.slane %v7993, 1
    %v7996 = vsel %vm1862, %v7991, %v7995
    %v7998 = vshrl.u32 %v7747, 16
    %v8000 = vshll.u32 %v7747, 16
    %v8002 = vrot.slane %v8000, 1
    %v8003 = vor.u32 %v7998, %v8002
    %v8005 = vshll.u32 %v7827, 16
    %v8007 = vrot.slane %v8005, 1
    %v8008 = vsel %vm1862, %v8003, %v8007
    %v8010 = vshrl.u32 %v7748, 16
    %v8012 = vshll.u32 %v7748, 16
    %v8014 = vrot.slane %v8012, 1
    %v8015 = vor.u32 %v8010, %v8014
    %v8017 = vshll.u32 %v7828, 16
    %v8019 = vrot.slane %v8017, 1
    %v8020 = vsel %vm1862, %v8015, %v8019
    %v8037 = vunpack.c.l.b16 %v7140
    %v8038 = vunpack.c.l.b16 %v7141
    %v8039 = vunpack.c.l.b16 %v7142
    %v8040 = vunpack.c.l.b16 %v7143
    %v8041 = vunpack.c.l.b16 %v7144
    %v8042 = vunpack.c.l.b16 %v7145
    %v8043 = vunpack.c.l.b16 %v7146
    %v8044 = vunpack.c.l.b16 %v7147
    %v8045 = vunpack.c.l.b16 %v7148
    %v8046 = vunpack.c.l.b16 %v7149
    %v8047 = vunpack.c.l.b16 %v7150
    %v8048 = vunpack.c.l.b16 %v7151
    %v8049 = vunpack.c.l.b16 %v7152
    %v8050 = vunpack.c.l.b16 %v7153
    %v8051 = vunpack.c.l.b16 %v7154
    %v8052 = vunpack.c.l.b16 %v7155
    %v8053 = vpack.c.b16 %v7702, %v8037
    %v8054 = vpack.c.b16 %v7704, %v8038
    %v8055 = vpack.c.b16 %v7706, %v8039
    %v8056 = vpack.c.b16 %v7708, %v8040
    %v8057 = vpack.c.b16 %v7710, %v8041
    %v8058 = vpack.c.b16 %v7712, %v8042
    %v8059 = vpack.c.b16 %v7714, %v8043
    %v8060 = vpack.c.b16 %v7716, %v8044
    %v8061 = vpack.c.b16 %v7718, %v8045
    %v8062 = vpack.c.b16 %v7720, %v8046
    %v8063 = vpack.c.b16 %v7722, %v8047
    %v8064 = vpack.c.b16 %v7724, %v8048
    %v8065 = vpack.c.b16 %v7726, %v8049
    %v8066 = vpack.c.b16 %v7728, %v8050
    %v8067 = vpack.c.b16 %v7730, %v8051
    %v8068 = vpack.c.b16 %v7732, %v8052
    %v8069 = vrot.slane %v8053, 1
    %v8070 = vrot.slane %v7813, 1
    %v8071 = vsel %vm2407, %v8069, %v8070
    %v8072 = vrot.slane %v8054, 1
    %v8073 = vrot.slane %v7814, 1
    %v8074 = vsel %vm2407, %v8072, %v8073
    %v8075 = vrot.slane %v8055, 1
    %v8076 = vrot.slane %v7815, 1
    %v8077 = vsel %vm2407, %v8075, %v8076
    %v8078 = vrot.slane %v8056, 1
    %v8079 = vrot.slane %v7816, 1
    %v8080 = vsel %vm2407, %v8078, %v8079
    %v8081 = vrot.slane %v8057, 1
    %v8082 = vrot.slane %v7817, 1
    %v8083 = vsel %vm2407, %v8081, %v8082
    %v8084 = vrot.slane %v8058, 1
    %v8085 = vrot.slane %v7818, 1
    %v8086 = vsel %vm2407, %v8084, %v8085
    %v8087 = vrot.slane %v8059, 1
    %v8088 = vrot.slane %v7819, 1
    %v8089 = vsel %vm2407, %v8087, %v8088
    %v8090 = vrot.slane %v8060, 1
    %v8091 = vrot.slane %v7820, 1
    %v8092 = vsel %vm2407, %v8090, %v8091
    %v8093 = vrot.slane %v8061, 1
    %v8094 = vrot.slane %v7821, 1
    %v8095 = vsel %vm2407, %v8093, %v8094
    %v8096 = vrot.slane %v8062, 1
    %v8097 = vrot.slane %v7822, 1
    %v8098 = vsel %vm2407, %v8096, %v8097
    %v8099 = vrot.slane %v8063, 1
    %v8100 = vrot.slane %v7823, 1
    %v8101 = vsel %vm2407, %v8099, %v8100
    %v8102 = vrot.slane %v8064, 1
    %v8103 = vrot.slane %v7824, 1
    %v8104 = vsel %vm2407, %v8102, %v8103
    %v8105 = vrot.slane %v8065, 1
    %v8106 = vrot.slane %v7825, 1
    %v8107 = vsel %vm2407, %v8105, %v8106
    %v8108 = vrot.slane %v8066, 1
    %v8109 = vrot.slane %v7826, 1
    %v8110 = vsel %vm2407, %v8108, %v8109
    %v8111 = vrot.slane %v8067, 1
    %v8112 = vrot.slane %v7827, 1
    %v8113 = vsel %vm2407, %v8111, %v8112
    %v8114 = vrot.slane %v8068, 1
    %v8115 = vrot.slane %v7828, 1
    %v8116 = vsel %vm2407, %v8114, %v8115
    %8117 = vrot.lane.b32.xlu0 %v8071, 64
    %v8118 = vpop.permute.xlu0 %8117
    %8119 = vrot.lane.b32.xlu0 %v8074, 64
    %v8120 = vpop.permute.xlu0 %8119
    %8121 = vrot.lane.b32.xlu0 %v8077, 64
    %v8122 = vpop.permute.xlu0 %8121
    %8123 = vrot.lane.b32.xlu0 %v8080, 64
    %v8124 = vpop.permute.xlu0 %8123
    %8125 = vrot.lane.b32.xlu0 %v8083, 64
    %v8126 = vpop.permute.xlu0 %8125
    %8127 = vrot.lane.b32.xlu0 %v8086, 64
    %v8128 = vpop.permute.xlu0 %8127
    %8129 = vrot.lane.b32.xlu0 %v8089, 64
    %v8130 = vpop.permute.xlu0 %8129
    %8131 = vrot.lane.b32.xlu0 %v8092, 64
    %v8132 = vpop.permute.xlu0 %8131
    %8133 = vrot.lane.b32.xlu0 %v8095, 64
    %v8134 = vpop.permute.xlu0 %8133
    %8135 = vrot.lane.b32.xlu0 %v8098, 64
    %v8136 = vpop.permute.xlu0 %8135
    %8137 = vrot.lane.b32.xlu0 %v8101, 64
    %v8138 = vpop.permute.xlu0 %8137
    %8139 = vrot.lane.b32.xlu0 %v8104, 64
    %v8140 = vpop.permute.xlu0 %8139
    %8141 = vrot.lane.b32.xlu0 %v8107, 64
    %v8142 = vpop.permute.xlu0 %8141
    %8143 = vrot.lane.b32.xlu0 %v8110, 64
    %v8144 = vpop.permute.xlu0 %8143
    %8145 = vrot.lane.b32.xlu0 %v8113, 64
    %v8146 = vpop.permute.xlu0 %8145
    %8147 = vrot.lane.b32.xlu0 %v8116, 64
    %v8148 = vpop.permute.xlu0 %8147
    %v8181 = vunpack.c.l.b16 %v7157
    %v8182 = vunpack.c.l.b16 %v7158
    %v8183 = vunpack.c.l.b16 %v7159
    %v8184 = vunpack.c.l.b16 %v7160
    %v8185 = vunpack.c.l.b16 %v7161
    %v8186 = vunpack.c.l.b16 %v7162
    %v8187 = vunpack.c.l.b16 %v7163
    %v8188 = vunpack.c.l.b16 %v7164
    %v8189 = vunpack.c.l.b16 %v7165
    %v8190 = vunpack.c.l.b16 %v7166
    %v8191 = vunpack.c.l.b16 %v7167
    %v8192 = vunpack.c.l.b16 %v7168
    %v8193 = vunpack.c.l.b16 %v7169
    %v8194 = vunpack.c.l.b16 %v7170
    %v8195 = vunpack.c.l.b16 %v7171
    %v8196 = vunpack.c.l.b16 %v7172
    %v8197 = vunpack.c.l.b16 %v7173
    %v8198 = vunpack.c.l.b16 %v7174
    %v8199 = vunpack.c.l.b16 %v7175
    %v8200 = vunpack.c.l.b16 %v7176
    %v8201 = vunpack.c.l.b16 %v7177
    %v8202 = vunpack.c.l.b16 %v7178
    %v8203 = vunpack.c.l.b16 %v7179
    %v8204 = vunpack.c.l.b16 %v7180
    %v8205 = vunpack.c.l.b16 %v7181
    %v8206 = vunpack.c.l.b16 %v7182
    %v8207 = vunpack.c.l.b16 %v7183
    %v8208 = vunpack.c.l.b16 %v7184
    %v8209 = vunpack.c.l.b16 %v7185
    %v8210 = vunpack.c.l.b16 %v7186
    %v8211 = vunpack.c.l.b16 %v7187
    %v8212 = vunpack.c.l.b16 %v7188
    %v8213 = vpack.c.b16 %v8182, %v8181
    %v8214 = vpack.c.b16 %v8184, %v8183
    %v8215 = vpack.c.b16 %v8186, %v8185
    %v8216 = vpack.c.b16 %v8188, %v8187
    %v8217 = vpack.c.b16 %v8190, %v8189
    %v8218 = vpack.c.b16 %v8192, %v8191
    %v8219 = vpack.c.b16 %v8194, %v8193
    %v8220 = vpack.c.b16 %v8196, %v8195
    %v8221 = vpack.c.b16 %v8198, %v8197
    %v8222 = vpack.c.b16 %v8200, %v8199
    %v8223 = vpack.c.b16 %v8202, %v8201
    %v8224 = vpack.c.b16 %v8204, %v8203
    %v8225 = vpack.c.b16 %v8206, %v8205
    %v8226 = vpack.c.b16 %v8208, %v8207
    %v8227 = vpack.c.b16 %v8210, %v8209
    %v8228 = vpack.c.b16 %v8212, %v8211
    %v8245 = vunpack.c.l.b16 %v7189
    %v8246 = vunpack.c.l.b16 %v7190
    %v8247 = vunpack.c.l.b16 %v7191
    %v8248 = vunpack.c.l.b16 %v7192
    %v8249 = vunpack.c.l.b16 %v7193
    %v8250 = vunpack.c.l.b16 %v7194
    %v8251 = vunpack.c.l.b16 %v7195
    %v8252 = vunpack.c.l.b16 %v7196
    %v8253 = vunpack.c.l.b16 %v7197
    %v8254 = vunpack.c.l.b16 %v7198
    %v8255 = vunpack.c.l.b16 %v7199
    %v8256 = vunpack.c.l.b16 %v7200
    %v8257 = vunpack.c.l.b16 %v7201
    %v8258 = vunpack.c.l.b16 %v7202
    %v8259 = vunpack.c.l.b16 %v7203
    %v8260 = vunpack.c.l.b16 %v7204
    %v8261 = vpack.c.b16 %v8245, %v8245
    %v8262 = vpack.c.b16 %v8246, %v8246
    %v8263 = vpack.c.b16 %v8247, %v8247
    %v8264 = vpack.c.b16 %v8248, %v8248
    %v8265 = vpack.c.b16 %v8249, %v8249
    %v8266 = vpack.c.b16 %v8250, %v8250
    %v8267 = vpack.c.b16 %v8251, %v8251
    %v8268 = vpack.c.b16 %v8252, %v8252
    %v8269 = vpack.c.b16 %v8253, %v8253
    %v8270 = vpack.c.b16 %v8254, %v8254
    %v8271 = vpack.c.b16 %v8255, %v8255
    %v8272 = vpack.c.b16 %v8256, %v8256
    %v8273 = vpack.c.b16 %v8257, %v8257
    %v8274 = vpack.c.b16 %v8258, %v8258
    %v8275 = vpack.c.b16 %v8259, %v8259
    %v8276 = vpack.c.b16 %v8260, %v8260
    %v8278 = vshrl.u32 %v8213, 16
    %v8280 = vshll.u32 %v8213, 16
    %v8282 = vrot.slane %v8280, 1
    %v8283 = vor.u32 %v8278, %v8282
    %v8285 = vshll.u32 %v8261, 16
    %v8287 = vrot.slane %v8285, 1
    %v8288 = vsel %vm1862, %v8283, %v8287
    %v8290 = vshrl.u32 %v8214, 16
    %v8292 = vshll.u32 %v8214, 16
    %v8294 = vrot.slane %v8292, 1
    %v8295 = vor.u32 %v8290, %v8294
    %v8297 = vshll.u32 %v8262, 16
    %v8299 = vrot.slane %v8297, 1
    %v8300 = vsel %vm1862, %v8295, %v8299
    %v8302 = vshrl.u32 %v8215, 16
    %v8304 = vshll.u32 %v8215, 16
    %v8306 = vrot.slane %v8304, 1
    %v8307 = vor.u32 %v8302, %v8306
    %v8309 = vshll.u32 %v8263, 16
    %v8311 = vrot.slane %v8309, 1
    %v8312 = vsel %vm1862, %v8307, %v8311
    %v8314 = vshrl.u32 %v8216, 16
    %v8316 = vshll.u32 %v8216, 16
    %v8318 = vrot.slane %v8316, 1
    %v8319 = vor.u32 %v8314, %v8318
    %v8321 = vshll.u32 %v8264, 16
    %v8323 = vrot.slane %v8321, 1
    %v8324 = vsel %vm1862, %v8319, %v8323
    %v8326 = vshrl.u32 %v8217, 16
    %v8328 = vshll.u32 %v8217, 16
    %v8330 = vrot.slane %v8328, 1
    %v8331 = vor.u32 %v8326, %v8330
    %v8333 = vshll.u32 %v8265, 16
    %v8335 = vrot.slane %v8333, 1
    %v8336 = vsel %vm1862, %v8331, %v8335
    %v8338 = vshrl.u32 %v8218, 16
    %v8340 = vshll.u32 %v8218, 16
    %v8342 = vrot.slane %v8340, 1
    %v8343 = vor.u32 %v8338, %v8342
    %v8345 = vshll.u32 %v8266, 16
    %v8347 = vrot.slane %v8345, 1
    %v8348 = vsel %vm1862, %v8343, %v8347
    %v8350 = vshrl.u32 %v8219, 16
    %v8352 = vshll.u32 %v8219, 16
    %v8354 = vrot.slane %v8352, 1
    %v8355 = vor.u32 %v8350, %v8354
    %v8357 = vshll.u32 %v8267, 16
    %v8359 = vrot.slane %v8357, 1
    %v8360 = vsel %vm1862, %v8355, %v8359
    %v8362 = vshrl.u32 %v8220, 16
    %v8364 = vshll.u32 %v8220, 16
    %v8366 = vrot.slane %v8364, 1
    %v8367 = vor.u32 %v8362, %v8366
    %v8369 = vshll.u32 %v8268, 16
    %v8371 = vrot.slane %v8369, 1
    %v8372 = vsel %vm1862, %v8367, %v8371
    %v8374 = vshrl.u32 %v8221, 16
    %v8376 = vshll.u32 %v8221, 16
    %v8378 = vrot.slane %v8376, 1
    %v8379 = vor.u32 %v8374, %v8378
    %v8381 = vshll.u32 %v8269, 16
    %v8383 = vrot.slane %v8381, 1
    %v8384 = vsel %vm1862, %v8379, %v8383
    %v8386 = vshrl.u32 %v8222, 16
    %v8388 = vshll.u32 %v8222, 16
    %v8390 = vrot.slane %v8388, 1
    %v8391 = vor.u32 %v8386, %v8390
    %v8393 = vshll.u32 %v8270, 16
    %v8395 = vrot.slane %v8393, 1
    %v8396 = vsel %vm1862, %v8391, %v8395
    %v8398 = vshrl.u32 %v8223, 16
    %v8400 = vshll.u32 %v8223, 16
    %v8402 = vrot.slane %v8400, 1
    %v8403 = vor.u32 %v8398, %v8402
    %v8405 = vshll.u32 %v8271, 16
    %v8407 = vrot.slane %v8405, 1
    %v8408 = vsel %vm1862, %v8403, %v8407
    %v8410 = vshrl.u32 %v8224, 16
    %v8412 = vshll.u32 %v8224, 16
    %v8414 = vrot.slane %v8412, 1
    %v8415 = vor.u32 %v8410, %v8414
    %v8417 = vshll.u32 %v8272, 16
    %v8419 = vrot.slane %v8417, 1
    %v8420 = vsel %vm1862, %v8415, %v8419
    %v8422 = vshrl.u32 %v8225, 16
    %v8424 = vshll.u32 %v8225, 16
    %v8426 = vrot.slane %v8424, 1
    %v8427 = vor.u32 %v8422, %v8426
    %v8429 = vshll.u32 %v8273, 16
    %v8431 = vrot.slane %v8429, 1
    %v8432 = vsel %vm1862, %v8427, %v8431
    %v8434 = vshrl.u32 %v8226, 16
    %v8436 = vshll.u32 %v8226, 16
    %v8438 = vrot.slane %v8436, 1
    %v8439 = vor.u32 %v8434, %v8438
    %v8441 = vshll.u32 %v8274, 16
    %v8443 = vrot.slane %v8441, 1
    %v8444 = vsel %vm1862, %v8439, %v8443
    %v8446 = vshrl.u32 %v8227, 16
    %v8448 = vshll.u32 %v8227, 16
    %v8450 = vrot.slane %v8448, 1
    %v8451 = vor.u32 %v8446, %v8450
    %v8453 = vshll.u32 %v8275, 16
    %v8455 = vrot.slane %v8453, 1
    %v8456 = vsel %vm1862, %v8451, %v8455
    %v8458 = vshrl.u32 %v8228, 16
    %v8460 = vshll.u32 %v8228, 16
    %v8462 = vrot.slane %v8460, 1
    %v8463 = vor.u32 %v8458, %v8462
    %v8465 = vshll.u32 %v8276, 16
    %v8467 = vrot.slane %v8465, 1
    %v8468 = vsel %vm1862, %v8463, %v8467
    %8469 = vrot.lane.b32.xlu0 %v8288, 64
    %v8470 = vpop.permute.xlu0 %8469
    %8471 = vrot.lane.b32.xlu0 %v8300, 64
    %v8472 = vpop.permute.xlu0 %8471
    %8473 = vrot.lane.b32.xlu0 %v8312, 64
    %v8474 = vpop.permute.xlu0 %8473
    %8475 = vrot.lane.b32.xlu0 %v8324, 64
    %v8476 = vpop.permute.xlu0 %8475
    %8477 = vrot.lane.b32.xlu0 %v8336, 64
    %v8478 = vpop.permute.xlu0 %8477
    %8479 = vrot.lane.b32.xlu0 %v8348, 64
    %v8480 = vpop.permute.xlu0 %8479
    %8481 = vrot.lane.b32.xlu0 %v8360, 64
    %v8482 = vpop.permute.xlu0 %8481
    %8483 = vrot.lane.b32.xlu0 %v8372, 64
    %v8484 = vpop.permute.xlu0 %8483
    %8485 = vrot.lane.b32.xlu0 %v8384, 64
    %v8486 = vpop.permute.xlu0 %8485
    %8487 = vrot.lane.b32.xlu0 %v8396, 64
    %v8488 = vpop.permute.xlu0 %8487
    %8489 = vrot.lane.b32.xlu0 %v8408, 64
    %v8490 = vpop.permute.xlu0 %8489
    %8491 = vrot.lane.b32.xlu0 %v8420, 64
    %v8492 = vpop.permute.xlu0 %8491
    %8493 = vrot.lane.b32.xlu0 %v8432, 64
    %v8494 = vpop.permute.xlu0 %8493
    %8495 = vrot.lane.b32.xlu0 %v8444, 64
    %v8496 = vpop.permute.xlu0 %8495
    %8497 = vrot.lane.b32.xlu0 %v8456, 64
    %v8498 = vpop.permute.xlu0 %8497
    %8499 = vrot.lane.b32.xlu0 %v8468, 64
    %v8500 = vpop.permute.xlu0 %8499
    %v8517 = vunpack.c.l.b16 %v7205
    %v8518 = vunpack.c.l.b16 %v7206
    %v8519 = vunpack.c.l.b16 %v7207
    %v8520 = vunpack.c.l.b16 %v7208
    %v8521 = vunpack.c.l.b16 %v7209
    %v8522 = vunpack.c.l.b16 %v7210
    %v8523 = vunpack.c.l.b16 %v7211
    %v8524 = vunpack.c.l.b16 %v7212
    %v8525 = vunpack.c.l.b16 %v7213
    %v8526 = vunpack.c.l.b16 %v7214
    %v8527 = vunpack.c.l.b16 %v7215
    %v8528 = vunpack.c.l.b16 %v7216
    %v8529 = vunpack.c.l.b16 %v7217
    %v8530 = vunpack.c.l.b16 %v7218
    %v8531 = vunpack.c.l.b16 %v7219
    %v8532 = vunpack.c.l.b16 %v7220
    %v8533 = vpack.c.b16 %v8182, %v8517
    %v8534 = vpack.c.b16 %v8184, %v8518
    %v8535 = vpack.c.b16 %v8186, %v8519
    %v8536 = vpack.c.b16 %v8188, %v8520
    %v8537 = vpack.c.b16 %v8190, %v8521
    %v8538 = vpack.c.b16 %v8192, %v8522
    %v8539 = vpack.c.b16 %v8194, %v8523
    %v8540 = vpack.c.b16 %v8196, %v8524
    %v8541 = vpack.c.b16 %v8198, %v8525
    %v8542 = vpack.c.b16 %v8200, %v8526
    %v8543 = vpack.c.b16 %v8202, %v8527
    %v8544 = vpack.c.b16 %v8204, %v8528
    %v8545 = vpack.c.b16 %v8206, %v8529
    %v8546 = vpack.c.b16 %v8208, %v8530
    %v8547 = vpack.c.b16 %v8210, %v8531
    %v8548 = vpack.c.b16 %v8212, %v8532
    %v8549 = vrot.slane %v8533, 1
    %v8550 = vrot.slane %v8261, 1
    %v8551 = vsel %vm2407, %v8549, %v8550
    %v8552 = vrot.slane %v8534, 1
    %v8553 = vrot.slane %v8262, 1
    %v8554 = vsel %vm2407, %v8552, %v8553
    %v8555 = vrot.slane %v8535, 1
    %v8556 = vrot.slane %v8263, 1
    %v8557 = vsel %vm2407, %v8555, %v8556
    %v8558 = vrot.slane %v8536, 1
    %v8559 = vrot.slane %v8264, 1
    %v8560 = vsel %vm2407, %v8558, %v8559
    %v8561 = vrot.slane %v8537, 1
    %v8562 = vrot.slane %v8265, 1
    %v8563 = vsel %vm2407, %v8561, %v8562
    %v8564 = vrot.slane %v8538, 1
    %v8565 = vrot.slane %v8266, 1
    %v8566 = vsel %vm2407, %v8564, %v8565
    %v8567 = vrot.slane %v8539, 1
    %v8568 = vrot.slane %v8267, 1
    %v8569 = vsel %vm2407, %v8567, %v8568
    %v8570 = vrot.slane %v8540, 1
    %v8571 = vrot.slane %v8268, 1
    %v8572 = vsel %vm2407, %v8570, %v8571
    %v8573 = vrot.slane %v8541, 1
    %v8574 = vrot.slane %v8269, 1
    %v8575 = vsel %vm2407, %v8573, %v8574
    %v8576 = vrot.slane %v8542, 1
    %v8577 = vrot.slane %v8270, 1
    %v8578 = vsel %vm2407, %v8576, %v8577
    %v8579 = vrot.slane %v8543, 1
    %v8580 = vrot.slane %v8271, 1
    %v8581 = vsel %vm2407, %v8579, %v8580
    %v8582 = vrot.slane %v8544, 1
    %v8583 = vrot.slane %v8272, 1
    %v8584 = vsel %vm2407, %v8582, %v8583
    %v8585 = vrot.slane %v8545, 1
    %v8586 = vrot.slane %v8273, 1
    %v8587 = vsel %vm2407, %v8585, %v8586
    %v8588 = vrot.slane %v8546, 1
    %v8589 = vrot.slane %v8274, 1
    %v8590 = vsel %vm2407, %v8588, %v8589
    %v8591 = vrot.slane %v8547, 1
    %v8592 = vrot.slane %v8275, 1
    %v8593 = vsel %vm2407, %v8591, %v8592
    %v8594 = vrot.slane %v8548, 1
    %v8595 = vrot.slane %v8276, 1
    %v8596 = vsel %vm2407, %v8594, %v8595
    %v8598 = vsel %vm5514, %v7285, %v7542
    %v8601 = vsel %vm5514, %v7286, %v7544
    %v8604 = vsel %vm5514, %v7287, %v7546
    %v8607 = vsel %vm5514, %v7288, %v7548
    %v8610 = vsel %vm5514, %v7289, %v7550
    %v8613 = vsel %vm5514, %v7290, %v7552
    %v8616 = vsel %vm5514, %v7291, %v7554
    %v8619 = vsel %vm5514, %v7292, %v7556
    %v8622 = vsel %vm5514, %v7293, %v7558
    %v8625 = vsel %vm5514, %v7294, %v7560
    %v8628 = vsel %vm5514, %v7295, %v7562
    %v8631 = vsel %vm5514, %v7296, %v7564
    %v8634 = vsel %vm5514, %v7297, %v7566
    %v8637 = vsel %vm5514, %v7298, %v7568
    %v8640 = vsel %vm5514, %v7299, %v7570
    %v8643 = vsel %vm5514, %v7300, %v7572
    %v8647 = vsel %vm5514, %v7623, %v7750
    %v8651 = vsel %vm5514, %v7626, %v7752
    %v8655 = vsel %vm5514, %v7629, %v7754
    %v8659 = vsel %vm5514, %v7632, %v7756
    %v8663 = vsel %vm5514, %v7635, %v7758
    %v8667 = vsel %vm5514, %v7638, %v7760
    %v8671 = vsel %vm5514, %v7641, %v7762
    %v8675 = vsel %vm5514, %v7644, %v7764
    %v8679 = vsel %vm5514, %v7647, %v7766
    %v8683 = vsel %vm5514, %v7650, %v7768
    %v8687 = vsel %vm5514, %v7653, %v7770
    %v8691 = vsel %vm5514, %v7656, %v7772
    %v8695 = vsel %vm5514, %v7659, %v7774
    %v8699 = vsel %vm5514, %v7662, %v7776
    %v8703 = vsel %vm5514, %v7665, %v7778
    %v8707 = vsel %vm5514, %v7668, %v7780
    %v8711 = vsel %vm5514, %v7840, %v8118
    %v8715 = vsel %vm5514, %v7852, %v8120
    %v8719 = vsel %vm5514, %v7864, %v8122
    %v8723 = vsel %vm5514, %v7876, %v8124
    %v8727 = vsel %vm5514, %v7888, %v8126
    %v8731 = vsel %vm5514, %v7900, %v8128
    %v8735 = vsel %vm5514, %v7912, %v8130
    %v8739 = vsel %vm5514, %v7924, %v8132
    %v8743 = vsel %vm5514, %v7936, %v8134
    %v8747 = vsel %vm5514, %v7948, %v8136
    %v8751 = vsel %vm5514, %v7960, %v8138
    %v8755 = vsel %vm5514, %v7972, %v8140
    %v8759 = vsel %vm5514, %v7984, %v8142
    %v8763 = vsel %vm5514, %v7996, %v8144
    %v8767 = vsel %vm5514, %v8008, %v8146
    %v8771 = vsel %vm5514, %v8020, %v8148
    %v8774 = vsel %vm5514, %v8213, %v8470
    %v8777 = vsel %vm5514, %v8214, %v8472
    %v8780 = vsel %vm5514, %v8215, %v8474
    %v8783 = vsel %vm5514, %v8216, %v8476
    %v8786 = vsel %vm5514, %v8217, %v8478
    %v8789 = vsel %vm5514, %v8218, %v8480
    %v8792 = vsel %vm5514, %v8219, %v8482
    %v8795 = vsel %vm5514, %v8220, %v8484
    %v8798 = vsel %vm5514, %v8221, %v8486
    %v8801 = vsel %vm5514, %v8222, %v8488
    %v8804 = vsel %vm5514, %v8223, %v8490
    %v8807 = vsel %vm5514, %v8224, %v8492
    %v8810 = vsel %vm5514, %v8225, %v8494
    %v8813 = vsel %vm5514, %v8226, %v8496
    %v8816 = vsel %vm5514, %v8227, %v8498
    %v8819 = vsel %vm5514, %v8228, %v8500
    %v8821 = vld [vmem:[%s4] sm:$0xf]
    %v8822 = vld [vmem:[%s4 + $0x4] sm:$0xf]
    %v8823 = vld [vmem:[%s4 + $0x8] sm:$0xf]
    %v8824 = vld [vmem:[%s4 + $0xc] sm:$0xf]
    %v8825 = vld [vmem:[%s4 + $0x10] sm:$0xf]
    %v8826 = vld [vmem:[%s4 + $0x14] sm:$0xf]
    %v8827 = vld [vmem:[%s4 + $0x18] sm:$0xf]
    %v8828 = vld [vmem:[%s4 + $0x1c] sm:$0xf]
    %v8829 = vld [vmem:[%s4 + $0x20] sm:$0xf]
    %v8830 = vld [vmem:[%s4 + $0x24] sm:$0xf]
    %v8831 = vld [vmem:[%s4 + $0x28] sm:$0xf]
    %v8832 = vld [vmem:[%s4 + $0x2c] sm:$0xf]
    %v8833 = vld [vmem:[%s4 + $0x30] sm:$0xf]
    %v8834 = vld [vmem:[%s4 + $0x34] sm:$0xf]
    %v8835 = vld [vmem:[%s4 + $0x38] sm:$0xf]
    %v8836 = vld [vmem:[%s4 + $0x3c] sm:$0xf]
    %v8837 = vld [vmem:[%s4 + $0x40] sm:$0xf]
    %v8838 = vld [vmem:[%s4 + $0x44] sm:$0xf]
    %v8839 = vld [vmem:[%s4 + $0x48] sm:$0xf]
    %v8840 = vld [vmem:[%s4 + $0x4c] sm:$0xf]
    %v8841 = vld [vmem:[%s4 + $0x50] sm:$0xf]
    %v8842 = vld [vmem:[%s4 + $0x54] sm:$0xf]
    %v8843 = vld [vmem:[%s4 + $0x58] sm:$0xf]
    %v8844 = vld [vmem:[%s4 + $0x5c] sm:$0xf]
    %v8845 = vld [vmem:[%s4 + $0x60] sm:$0xf]
    %v8846 = vld [vmem:[%s4 + $0x64] sm:$0xf]
    %v8847 = vld [vmem:[%s4 + $0x68] sm:$0xf]
    %v8848 = vld [vmem:[%s4 + $0x6c] sm:$0xf]
    %v8849 = vld [vmem:[%s4 + $0x70] sm:$0xf]
    %v8850 = vld [vmem:[%s4 + $0x74] sm:$0xf]
    %v8851 = vld [vmem:[%s4 + $0x78] sm:$0xf]
    %v8852 = vld [vmem:[%s4 + $0x7c] sm:$0xf]
    %v8853 = vld [vmem:[%s4 + $0x80] sm:$0xf]
    %v8854 = vld [vmem:[%s4 + $0x84] sm:$0xf]
    %v8855 = vld [vmem:[%s4 + $0x88] sm:$0xf]
    %v8856 = vld [vmem:[%s4 + $0x8c] sm:$0xf]
    %v8857 = vld [vmem:[%s4 + $0x90] sm:$0xf]
    %v8858 = vld [vmem:[%s4 + $0x94] sm:$0xf]
    %v8859 = vld [vmem:[%s4 + $0x98] sm:$0xf]
    %v8860 = vld [vmem:[%s4 + $0x9c] sm:$0xf]
    %v8861 = vld [vmem:[%s4 + $0xa0] sm:$0xf]
    %v8862 = vld [vmem:[%s4 + $0xa4] sm:$0xf]
    %v8863 = vld [vmem:[%s4 + $0xa8] sm:$0xf]
    %v8864 = vld [vmem:[%s4 + $0xac] sm:$0xf]
    %v8865 = vld [vmem:[%s4 + $0xb0] sm:$0xf]
    %v8866 = vld [vmem:[%s4 + $0xb4] sm:$0xf]
    %v8867 = vld [vmem:[%s4 + $0xb8] sm:$0xf]
    %v8868 = vld [vmem:[%s4 + $0xbc] sm:$0xf]
    %v8869 = vld [vmem:[%s4 + $0xc0] sm:$0xf]
    %v8870 = vld [vmem:[%s4 + $0xc4] sm:$0xf]
    %v8871 = vld [vmem:[%s4 + $0xc8] sm:$0xf]
    %v8872 = vld [vmem:[%s4 + $0xcc] sm:$0xf]
    %v8873 = vld [vmem:[%s4 + $0xd0] sm:$0xf]
    %v8874 = vld [vmem:[%s4 + $0xd4] sm:$0xf]
    %v8875 = vld [vmem:[%s4 + $0xd8] sm:$0xf]
    %v8876 = vld [vmem:[%s4 + $0xdc] sm:$0xf]
    %v8877 = vld [vmem:[%s4 + $0xe0] sm:$0xf]
    %v8878 = vld [vmem:[%s4 + $0xe4] sm:$0xf]
    %v8879 = vld [vmem:[%s4 + $0xe8] sm:$0xf]
    %v8880 = vld [vmem:[%s4 + $0xec] sm:$0xf]
    %v8881 = vld [vmem:[%s4 + $0xf0] sm:$0xf]
    %v8882 = vld [vmem:[%s4 + $0xf4] sm:$0xf]
    %v8883 = vld [vmem:[%s4 + $0xf8] sm:$0xf]
    %v8884 = vld [vmem:[%s4 + $0xfc] sm:$0xf]
    %v8885 = vld [vmem:[%s4 + $0x100] sm:$0xf]
    %v8886 = vld [vmem:[%s4 + $0x104] sm:$0xf]
    %v8887 = vld [vmem:[%s4 + $0x108] sm:$0xf]
    %v8888 = vld [vmem:[%s4 + $0x10c] sm:$0xf]
    %v8889 = vld [vmem:[%s4 + $0x110] sm:$0xf]
    %v8890 = vld [vmem:[%s4 + $0x114] sm:$0xf]
    %v8891 = vld [vmem:[%s4 + $0x118] sm:$0xf]
    %v8892 = vld [vmem:[%s4 + $0x11c] sm:$0xf]
    %v8965 = vunpack.c.l.b16 %v8821
    %v8966 = vunpack.c.l.b16 %v8822
    %v8967 = vunpack.c.l.b16 %v8823
    %v8968 = vunpack.c.l.b16 %v8824
    %v8969 = vunpack.c.l.b16 %v8825
    %v8970 = vunpack.c.l.b16 %v8826
    %v8971 = vunpack.c.l.b16 %v8827
    %v8972 = vunpack.c.l.b16 %v8828
    %v8973 = vunpack.c.l.b16 %v8829
    %v8974 = vunpack.c.l.b16 %v8830
    %v8975 = vunpack.c.l.b16 %v8831
    %v8976 = vunpack.c.l.b16 %v8832
    %v8977 = vunpack.c.l.b16 %v8833
    %v8978 = vunpack.c.l.b16 %v8834
    %v8979 = vunpack.c.l.b16 %v8835
    %v8980 = vunpack.c.l.b16 %v8836
    %v8981 = vunpack.c.l.b16 %v8837
    %v8982 = vunpack.c.l.b16 %v8838
    %v8983 = vunpack.c.l.b16 %v8839
    %v8984 = vunpack.c.l.b16 %v8840
    %v8985 = vunpack.c.l.b16 %v8841
    %v8986 = vunpack.c.l.b16 %v8842
    %v8987 = vunpack.c.l.b16 %v8843
    %v8988 = vunpack.c.l.b16 %v8844
    %v8989 = vunpack.c.l.b16 %v8845
    %v8990 = vunpack.c.l.b16 %v8846
    %v8991 = vunpack.c.l.b16 %v8847
    %v8992 = vunpack.c.l.b16 %v8848
    %v8993 = vunpack.c.l.b16 %v8849
    %v8994 = vunpack.c.l.b16 %v8850
    %v8995 = vunpack.c.l.b16 %v8851
    %v8996 = vunpack.c.l.b16 %v8852
    %v8997 = vunpack.c.l.b16 %v8853
    %v8998 = vunpack.c.l.b16 %v8854
    %v8999 = vunpack.c.l.b16 %v8855
    %v9000 = vunpack.c.l.b16 %v8856
    %v9001 = vunpack.c.l.b16 %v8857
    %v9002 = vunpack.c.l.b16 %v8858
    %v9003 = vunpack.c.l.b16 %v8859
    %v9004 = vunpack.c.l.b16 %v8860
    %v9005 = vunpack.c.l.b16 %v8861
    %v9006 = vunpack.c.l.b16 %v8862
    %v9007 = vunpack.c.l.b16 %v8863
    %v9008 = vunpack.c.l.b16 %v8864
    %v9009 = vunpack.c.l.b16 %v8865
    %v9010 = vunpack.c.l.b16 %v8866
    %v9011 = vunpack.c.l.b16 %v8867
    %v9012 = vunpack.c.l.b16 %v8868
    %v9013 = vunpack.c.l.b16 %v8869
    %v9014 = vunpack.c.l.b16 %v8870
    %v9015 = vunpack.c.l.b16 %v8871
    %v9016 = vunpack.c.l.b16 %v8872
    %v9017 = vunpack.c.l.b16 %v8873
    %v9018 = vunpack.c.l.b16 %v8874
    %v9019 = vunpack.c.l.b16 %v8875
    %v9020 = vunpack.c.l.b16 %v8876
    %v9021 = vunpack.c.l.b16 %v8877
    %v9022 = vunpack.c.l.b16 %v8878
    %v9023 = vunpack.c.l.b16 %v8879
    %v9024 = vunpack.c.l.b16 %v8880
    %v9025 = vunpack.c.l.b16 %v8881
    %v9026 = vunpack.c.l.b16 %v8882
    %v9027 = vunpack.c.l.b16 %v8883
    %v9028 = vunpack.c.l.b16 %v8884
    %v9029 = vunpack.c.l.b16 %v8885
    %v9030 = vunpack.c.l.b16 %v8886
    %v9031 = vunpack.c.l.b16 %v8887
    %v9032 = vunpack.c.l.b16 %v8888
    %v9033 = vunpack.c.l.b16 %v8889
    %v9034 = vunpack.c.l.b16 %v8890
    %v9035 = vunpack.c.l.b16 %v8891
    %v9036 = vunpack.c.l.b16 %v8892
    %v9037 = vpack.c.b16 %v8966, %v8965
    %v9038 = vpack.c.b16 %v8968, %v8967
    %v9039 = vpack.c.b16 %v8970, %v8969
    %v9040 = vpack.c.b16 %v8972, %v8971
    %v9041 = vpack.c.b16 %v8974, %v8973
    %v9042 = vpack.c.b16 %v8976, %v8975
    %v9043 = vpack.c.b16 %v8978, %v8977
    %v9044 = vpack.c.b16 %v8980, %v8979
    %v9045 = vpack.c.b16 %v8982, %v8981
    %v9046 = vpack.c.b16 %v8984, %v8983
    %v9047 = vpack.c.b16 %v8986, %v8985
    %v9048 = vpack.c.b16 %v8988, %v8987
    %v9049 = vpack.c.b16 %v8990, %v8989
    %v9050 = vpack.c.b16 %v8992, %v8991
    %v9051 = vpack.c.b16 %v8994, %v8993
    %v9052 = vpack.c.b16 %v8996, %v8995
    %v9053 = vpack.c.b16 %v8998, %v8997
    %v9054 = vpack.c.b16 %v9000, %v8999
    %v9055 = vpack.c.b16 %v9002, %v9001
    %v9056 = vpack.c.b16 %v9004, %v9003
    %v9057 = vpack.c.b16 %v9006, %v9005
    %v9058 = vpack.c.b16 %v9008, %v9007
    %v9059 = vpack.c.b16 %v9010, %v9009
    %v9060 = vpack.c.b16 %v9012, %v9011
    %v9061 = vpack.c.b16 %v9014, %v9013
    %v9062 = vpack.c.b16 %v9016, %v9015
    %v9063 = vpack.c.b16 %v9018, %v9017
    %v9064 = vpack.c.b16 %v9020, %v9019
    %v9065 = vpack.c.b16 %v9022, %v9021
    %v9066 = vpack.c.b16 %v9024, %v9023
    %v9067 = vpack.c.b16 %v9026, %v9025
    %v9068 = vpack.c.b16 %v9028, %v9027
    %v9069 = vpack.c.b16 %v9030, %v9029
    %v9070 = vpack.c.b16 %v9032, %v9031
    %v9071 = vpack.c.b16 %v9034, %v9033
    %v9072 = vpack.c.b16 %v9036, %v9035
    %v9110 = vsel %vm5514, %v8551, 0
    %v9113 = vsel %vm5514, %v8554, 0
    %v9116 = vsel %vm5514, %v8557, 0
    %v9119 = vsel %vm5514, %v8560, 0
    %v9122 = vsel %vm5514, %v8563, 0
    %v9125 = vsel %vm5514, %v8566, 0
    %v9128 = vsel %vm5514, %v8569, 0
    %v9131 = vsel %vm5514, %v8572, 0
    %v9134 = vsel %vm5514, %v8575, 0
    %v9137 = vsel %vm5514, %v8578, 0
    %v9140 = vsel %vm5514, %v8581, 0
    %v9143 = vsel %vm5514, %v8584, 0
    %v9146 = vsel %vm5514, %v8587, 0
    %v9149 = vsel %vm5514, %v8590, 0
    %v9152 = vsel %vm5514, %v8593, 0
    %v9155 = vsel %vm5514, %v8596, 0
    %9157 = vmatprep.subr.bf16.mxu0 0
    %9158 = vmatpush1.bf16.msra.mxu0 %v9044
    %9159 = vmatprep.subr.bf16.mxu0 0
    %9160 = vmatpush1.bf16.msra.mxu0 %v9043
    %9161 = vmatprep.subr.bf16.mxu0 0
    %9162 = vmatpush1.bf16.msra.mxu0 %v9042
    %9163 = vmatprep.subr.bf16.mxu0 0
    %9164 = vmatpush1.bf16.msra.mxu0 %v9041
    %9165 = vmatprep.subr.bf16.mxu0 0
    %9166 = vmatpush1.bf16.msra.mxu0 %v9040
    %9167 = vmatprep.subr.bf16.mxu0 0
    %9168 = vmatpush1.bf16.msra.mxu0 %v9039
    %9169 = vmatprep.subr.bf16.mxu0 0
    %9170 = vmatpush1.bf16.msra.mxu0 %v9038
    %9171 = vmatprep.subr.bf16.mxu0 0
    %9172 = vmatpush1.bf16.msra.mxu0 %v9037
    %9173 = vmatprep.subr.bf16.mxu0 0
    %9174 = vmatpush2.bf16.msra.mxu0 %v9052
    %9175 = vmatprep.subr.bf16.mxu0 0
    %9176 = vmatpush2.bf16.msra.mxu0 %v9051
    %9177 = vmatprep.subr.bf16.mxu0 0
    %9178 = vmatpush2.bf16.msra.mxu0 %v9050
    %9179 = vmatprep.subr.bf16.mxu0 0
    %9180 = vmatpush2.bf16.msra.mxu0 %v9049
    %9181 = vmatprep.subr.bf16.mxu0 0
    %9182 = vmatpush2.bf16.msra.mxu0 %v9048
    %9183 = vmatprep.subr.bf16.mxu0 0
    %9184 = vmatpush2.bf16.msra.mxu0 %v9047
    %9185 = vmatprep.subr.bf16.mxu0 0
    %9186 = vmatpush2.bf16.msra.mxu0 %v9046
    %9187 = vmatprep.subr.bf16.mxu0 0
    %9188 = vmatpush2.bf16.msra.mxu0 %v9045
    %9189 = vmatprep.mubr.bf16.mxu0 %v8647
    %9190 = vmatmul.mubr.bf16.gmra.mxu0 %v8598
    %v9191 = vpop.f32.mrf.mxu0
    %v9192 = vadd.f32 0.0, %v9191
    %v9193 = vpop.f32.mrf.mxu0
    %v9194 = vpop.f32.mrf.mxu0
    %v9195 = vadd.f32 0.0, %v9194
    %v9196 = vpop.f32.mrf.mxu0
    %9197 = vmatprep.mubr.bf16.mxu0 %v8651
    %9198 = vmatmul.mubr.bf16.gmra.mxu0 %v8601
    %v9199 = vpop.f32.mrf.mxu0
    %v9200 = vadd.f32 0.0, %v9199
    %v9201 = vpop.f32.mrf.mxu0
    %v9202 = vpop.f32.mrf.mxu0
    %v9203 = vadd.f32 0.0, %v9202
    %v9204 = vpop.f32.mrf.mxu0
    %9205 = vmatprep.mubr.bf16.mxu0 %v8655
    %9206 = vmatmul.mubr.bf16.gmra.mxu0 %v8604
    %v9207 = vpop.f32.mrf.mxu0
    %v9208 = vadd.f32 0.0, %v9207
    %v9209 = vpop.f32.mrf.mxu0
    %v9210 = vpop.f32.mrf.mxu0
    %v9211 = vadd.f32 0.0, %v9210
    %v9212 = vpop.f32.mrf.mxu0
    %9213 = vmatprep.mubr.bf16.mxu0 %v8659
    %9214 = vmatmul.mubr.bf16.gmra.mxu0 %v8607
    %v9215 = vpop.f32.mrf.mxu0
    %v9216 = vadd.f32 0.0, %v9215
    %v9217 = vpop.f32.mrf.mxu0
    %v9218 = vpop.f32.mrf.mxu0
    %v9219 = vadd.f32 0.0, %v9218
    %v9220 = vpop.f32.mrf.mxu0
    %9221 = vmatprep.mubr.bf16.mxu0 %v8663
    %9222 = vmatmul.mubr.bf16.gmra.mxu0 %v8610
    %v9223 = vpop.f32.mrf.mxu0
    %v9224 = vadd.f32 0.0, %v9223
    %v9225 = vpop.f32.mrf.mxu0
    %v9226 = vpop.f32.mrf.mxu0
    %v9227 = vadd.f32 0.0, %v9226
    %v9228 = vpop.f32.mrf.mxu0
    %9229 = vmatprep.mubr.bf16.mxu0 %v8667
    %9230 = vmatmul.mubr.bf16.gmra.mxu0 %v8613
    %v9231 = vpop.f32.mrf.mxu0
    %v9232 = vadd.f32 0.0, %v9231
    %v9233 = vpop.f32.mrf.mxu0
    %v9234 = vpop.f32.mrf.mxu0
    %v9235 = vadd.f32 0.0, %v9234
    %v9236 = vpop.f32.mrf.mxu0
    %9237 = vmatprep.mubr.bf16.mxu0 %v8671
    %9238 = vmatmul.mubr.bf16.gmra.mxu0 %v8616
    %v9239 = vpop.f32.mrf.mxu0
    %v9240 = vadd.f32 0.0, %v9239
    %v9241 = vpop.f32.mrf.mxu0
    %v9242 = vpop.f32.mrf.mxu0
    %v9243 = vadd.f32 0.0, %v9242
    %v9244 = vpop.f32.mrf.mxu0
    %9245 = vmatprep.mubr.bf16.mxu0 %v8675
    %9246 = vmatmul.mubr.bf16.gmra.mxu0 %v8619
    %v9247 = vpop.f32.mrf.mxu0
    %v9248 = vadd.f32 0.0, %v9247
    %v9249 = vpop.f32.mrf.mxu0
    %v9250 = vpop.f32.mrf.mxu0
    %v9251 = vadd.f32 0.0, %v9250
    %v9252 = vpop.f32.mrf.mxu0
    %9253 = vmatprep.mubr.bf16.mxu0 %v8679
    %9254 = vmatmul.mubr.bf16.gmra.mxu0 %v8622
    %v9255 = vpop.f32.mrf.mxu0
    %v9256 = vadd.f32 0.0, %v9255
    %v9257 = vpop.f32.mrf.mxu0
    %v9258 = vpop.f32.mrf.mxu0
    %v9259 = vadd.f32 0.0, %v9258
    %v9260 = vpop.f32.mrf.mxu0
    %9261 = vmatprep.mubr.bf16.mxu0 %v8683
    %9262 = vmatmul.mubr.bf16.gmra.mxu0 %v8625
    %v9263 = vpop.f32.mrf.mxu0
    %v9264 = vadd.f32 0.0, %v9263
    %v9265 = vpop.f32.mrf.mxu0
    %v9266 = vpop.f32.mrf.mxu0
    %v9267 = vadd.f32 0.0, %v9266
    %v9268 = vpop.f32.mrf.mxu0
    %9269 = vmatprep.mubr.bf16.mxu0 %v8687
    %9270 = vmatmul.mubr.bf16.gmra.mxu0 %v8628
    %v9271 = vpop.f32.mrf.mxu0
    %v9272 = vadd.f32 0.0, %v9271
    %v9273 = vpop.f32.mrf.mxu0
    %v9274 = vpop.f32.mrf.mxu0
    %v9275 = vadd.f32 0.0, %v9274
    %v9276 = vpop.f32.mrf.mxu0
    %9277 = vmatprep.mubr.bf16.mxu0 %v8691
    %9278 = vmatmul.mubr.bf16.gmra.mxu0 %v8631
    %v9279 = vpop.f32.mrf.mxu0
    %v9280 = vadd.f32 0.0, %v9279
    %v9281 = vpop.f32.mrf.mxu0
    %v9282 = vpop.f32.mrf.mxu0
    %v9283 = vadd.f32 0.0, %v9282
    %v9284 = vpop.f32.mrf.mxu0
    %9285 = vmatprep.mubr.bf16.mxu0 %v8695
    %9286 = vmatmul.mubr.bf16.gmra.mxu0 %v8634
    %v9287 = vpop.f32.mrf.mxu0
    %v9288 = vadd.f32 0.0, %v9287
    %v9289 = vpop.f32.mrf.mxu0
    %v9290 = vpop.f32.mrf.mxu0
    %v9291 = vadd.f32 0.0, %v9290
    %v9292 = vpop.f32.mrf.mxu0
    %9293 = vmatprep.mubr.bf16.mxu0 %v8699
    %9294 = vmatmul.mubr.bf16.gmra.mxu0 %v8637
    %v9295 = vpop.f32.mrf.mxu0
    %v9296 = vadd.f32 0.0, %v9295
    %v9297 = vpop.f32.mrf.mxu0
    %v9298 = vpop.f32.mrf.mxu0
    %v9299 = vadd.f32 0.0, %v9298
    %v9300 = vpop.f32.mrf.mxu0
    %9301 = vmatprep.mubr.bf16.mxu0 %v8703
    %9302 = vmatmul.mubr.bf16.gmra.mxu0 %v8640
    %v9303 = vpop.f32.mrf.mxu0
    %v9304 = vadd.f32 0.0, %v9303
    %v9305 = vpop.f32.mrf.mxu0
    %v9306 = vpop.f32.mrf.mxu0
    %v9307 = vadd.f32 0.0, %v9306
    %v9308 = vpop.f32.mrf.mxu0
    %9309 = vmatprep.mubr.bf16.mxu0 %v8707
    %9310 = vmatmul.mubr.bf16.gmra.mxu0 %v8643
    %v9311 = vpop.f32.mrf.mxu0
    %v9312 = vadd.f32 0.0, %v9311
    %v9313 = vpop.f32.mrf.mxu0
    %v9314 = vpop.f32.mrf.mxu0
    %v9315 = vadd.f32 0.0, %v9314
    %v9316 = vpop.f32.mrf.mxu0
    %9317 = vdwg.mxu0
    %9318 = vmatprep.subr.bf16.mxu0 0
    %9319 = vmatpush1.bf16.msra.mxu0 %v9060
    %9320 = vmatprep.subr.bf16.mxu0 0
    %9321 = vmatpush1.bf16.msra.mxu0 %v9059
    %9322 = vmatprep.subr.bf16.mxu0 0
    %9323 = vmatpush1.bf16.msra.mxu0 %v9058
    %9324 = vmatprep.subr.bf16.mxu0 0
    %9325 = vmatpush1.bf16.msra.mxu0 %v9057
    %9326 = vmatprep.subr.bf16.mxu0 0
    %9327 = vmatpush1.bf16.msra.mxu0 %v9056
    %9328 = vmatprep.subr.bf16.mxu0 0
    %9329 = vmatpush1.bf16.msra.mxu0 %v9055
    %9330 = vmatprep.subr.bf16.mxu0 0
    %9331 = vmatpush1.bf16.msra.mxu0 %v9054
    %9332 = vmatprep.subr.bf16.mxu0 0
    %9333 = vmatpush1.bf16.msra.mxu0 %v9053
    %9334 = vmatprep.subr.bf16.mxu0 0
    %9335 = vmatpush2.bf16.msra.mxu0 %v9068
    %9336 = vmatprep.subr.bf16.mxu0 0
    %9337 = vmatpush2.bf16.msra.mxu0 %v9067
    %9338 = vmatprep.subr.bf16.mxu0 0
    %9339 = vmatpush2.bf16.msra.mxu0 %v9066
    %9340 = vmatprep.subr.bf16.mxu0 0
    %9341 = vmatpush2.bf16.msra.mxu0 %v9065
    %9342 = vmatprep.subr.bf16.mxu0 0
    %9343 = vmatpush2.bf16.msra.mxu0 %v9064
    %9344 = vmatprep.subr.bf16.mxu0 0
    %9345 = vmatpush2.bf16.msra.mxu0 %v9063
    %9346 = vmatprep.subr.bf16.mxu0 0
    %9347 = vmatpush2.bf16.msra.mxu0 %v9062
    %9348 = vmatprep.subr.bf16.mxu0 0
    %9349 = vmatpush2.bf16.msra.mxu0 %v9061
    %9350 = vmatprep.mubr.bf16.mxu0 %v8774
    %9351 = vmatmul.mubr.bf16.gmra.mxu0 %v8711
    %v9352 = vpop.f32.mrf.mxu0
    %v9353 = vadd.f32 %v9192, %v9352
    %v9354 = vpop.f32.mrf.mxu0
    %v9355 = vpop.f32.mrf.mxu0
    %v9356 = vadd.f32 %v9195, %v9355
    %v9357 = vpop.f32.mrf.mxu0
    %9358 = vmatprep.mubr.bf16.mxu0 %v8777
    %9359 = vmatmul.mubr.bf16.gmra.mxu0 %v8715
    %v9360 = vpop.f32.mrf.mxu0
    %v9361 = vadd.f32 %v9200, %v9360
    %v9362 = vpop.f32.mrf.mxu0
    %v9363 = vpop.f32.mrf.mxu0
    %v9364 = vadd.f32 %v9203, %v9363
    %v9365 = vpop.f32.mrf.mxu0
    %9366 = vmatprep.mubr.bf16.mxu0 %v8780
    %9367 = vmatmul.mubr.bf16.gmra.mxu0 %v8719
    %v9368 = vpop.f32.mrf.mxu0
    %v9369 = vadd.f32 %v9208, %v9368
    %v9370 = vpop.f32.mrf.mxu0
    %v9371 = vpop.f32.mrf.mxu0
    %v9372 = vadd.f32 %v9211, %v9371
    %v9373 = vpop.f32.mrf.mxu0
    %9374 = vmatprep.mubr.bf16.mxu0 %v8783
    %9375 = vmatmul.mubr.bf16.gmra.mxu0 %v8723
    %v9376 = vpop.f32.mrf.mxu0
    %v9377 = vadd.f32 %v9216, %v9376
    %v9378 = vpop.f32.mrf.mxu0
    %v9379 = vpop.f32.mrf.mxu0
    %v9380 = vadd.f32 %v9219, %v9379
    %v9381 = vpop.f32.mrf.mxu0
    %9382 = vmatprep.mubr.bf16.mxu0 %v8786
    %9383 = vmatmul.mubr.bf16.gmra.mxu0 %v8727
    %v9384 = vpop.f32.mrf.mxu0
    %v9385 = vadd.f32 %v9224, %v9384
    %v9386 = vpop.f32.mrf.mxu0
    %v9387 = vpop.f32.mrf.mxu0
    %v9388 = vadd.f32 %v9227, %v9387
    %v9389 = vpop.f32.mrf.mxu0
    %9390 = vmatprep.mubr.bf16.mxu0 %v8789
    %9391 = vmatmul.mubr.bf16.gmra.mxu0 %v8731
    %v9392 = vpop.f32.mrf.mxu0
    %v9393 = vadd.f32 %v9232, %v9392
    %v9394 = vpop.f32.mrf.mxu0
    %v9395 = vpop.f32.mrf.mxu0
    %v9396 = vadd.f32 %v9235, %v9395
    %v9397 = vpop.f32.mrf.mxu0
    %9398 = vmatprep.mubr.bf16.mxu0 %v8792
    %9399 = vmatmul.mubr.bf16.gmra.mxu0 %v8735
    %v9400 = vpop.f32.mrf.mxu0
    %v9401 = vadd.f32 %v9240, %v9400
    %v9402 = vpop.f32.mrf.mxu0
    %v9403 = vpop.f32.mrf.mxu0
    %v9404 = vadd.f32 %v9243, %v9403
    %v9405 = vpop.f32.mrf.mxu0
    %9406 = vmatprep.mubr.bf16.mxu0 %v8795
    %9407 = vmatmul.mubr.bf16.gmra.mxu0 %v8739
    %v9408 = vpop.f32.mrf.mxu0
    %v9409 = vadd.f32 %v9248, %v9408
    %v9410 = vpop.f32.mrf.mxu0
    %v9411 = vpop.f32.mrf.mxu0
    %v9412 = vadd.f32 %v9251, %v9411
    %v9413 = vpop.f32.mrf.mxu0
    %9414 = vmatprep.mubr.bf16.mxu0 %v8798
    %9415 = vmatmul.mubr.bf16.gmra.mxu0 %v8743
    %v9416 = vpop.f32.mrf.mxu0
    %v9417 = vadd.f32 %v9256, %v9416
    %v9418 = vpop.f32.mrf.mxu0
    %v9419 = vpop.f32.mrf.mxu0
    %v9420 = vadd.f32 %v9259, %v9419
    %v9421 = vpop.f32.mrf.mxu0
    %9422 = vmatprep.mubr.bf16.mxu0 %v8801
    %9423 = vmatmul.mubr.bf16.gmra.mxu0 %v8747
    %v9424 = vpop.f32.mrf.mxu0
    %v9425 = vadd.f32 %v9264, %v9424
    %v9426 = vpop.f32.mrf.mxu0
    %v9427 = vpop.f32.mrf.mxu0
    %v9428 = vadd.f32 %v9267, %v9427
    %v9429 = vpop.f32.mrf.mxu0
    %9430 = vmatprep.mubr.bf16.mxu0 %v8804
    %9431 = vmatmul.mubr.bf16.gmra.mxu0 %v8751
    %v9432 = vpop.f32.mrf.mxu0
    %v9433 = vadd.f32 %v9272, %v9432
    %v9434 = vpop.f32.mrf.mxu0
    %v9435 = vpop.f32.mrf.mxu0
    %v9436 = vadd.f32 %v9275, %v9435
    %v9437 = vpop.f32.mrf.mxu0
    %9438 = vmatprep.mubr.bf16.mxu0 %v8807
    %9439 = vmatmul.mubr.bf16.gmra.mxu0 %v8755
    %v9440 = vpop.f32.mrf.mxu0
    %v9441 = vadd.f32 %v9280, %v9440
    %v9442 = vpop.f32.mrf.mxu0
    %v9443 = vpop.f32.mrf.mxu0
    %v9444 = vadd.f32 %v9283, %v9443
    %v9445 = vpop.f32.mrf.mxu0
    %9446 = vmatprep.mubr.bf16.mxu0 %v8810
    %9447 = vmatmul.mubr.bf16.gmra.mxu0 %v8759
    %v9448 = vpop.f32.mrf.mxu0
    %v9449 = vadd.f32 %v9288, %v9448
    %v9450 = vpop.f32.mrf.mxu0
    %v9451 = vpop.f32.mrf.mxu0
    %v9452 = vadd.f32 %v9291, %v9451
    %v9453 = vpop.f32.mrf.mxu0
    %9454 = vmatprep.mubr.bf16.mxu0 %v8813
    %9455 = vmatmul.mubr.bf16.gmra.mxu0 %v8763
    %v9456 = vpop.f32.mrf.mxu0
    %v9457 = vadd.f32 %v9296, %v9456
    %v9458 = vpop.f32.mrf.mxu0
    %v9459 = vpop.f32.mrf.mxu0
    %v9460 = vadd.f32 %v9299, %v9459
    %v9461 = vpop.f32.mrf.mxu0
    %9462 = vmatprep.mubr.bf16.mxu0 %v8816
    %9463 = vmatmul.mubr.bf16.gmra.mxu0 %v8767
    %v9464 = vpop.f32.mrf.mxu0
    %v9465 = vadd.f32 %v9304, %v9464
    %v9466 = vpop.f32.mrf.mxu0
    %v9467 = vpop.f32.mrf.mxu0
    %v9468 = vadd.f32 %v9307, %v9467
    %v9469 = vpop.f32.mrf.mxu0
    %9470 = vmatprep.mubr.bf16.mxu0 %v8819
    %9471 = vmatmul.mubr.bf16.gmra.mxu0 %v8771
    %v9472 = vpop.f32.mrf.mxu0
    %v9473 = vadd.f32 %v9312, %v9472
    %v9474 = vpop.f32.mrf.mxu0
    %v9475 = vpop.f32.mrf.mxu0
    %v9476 = vadd.f32 %v9315, %v9475
    %v9477 = vpop.f32.mrf.mxu0
    %9478 = vdwg.mxu0
    %9479 = vmatprep.subr.bf16.mxu0 0
    %9480 = vmatpush1.bf16.msra.mxu0 0
    %9481 = vmatprep.subr.bf16.mxu0 0
    %9482 = vmatpush1.bf16.msra.mxu0 0
    %9483 = vmatprep.subr.bf16.mxu0 0
    %9484 = vmatpush1.bf16.msra.mxu0 0
    %9485 = vmatprep.subr.bf16.mxu0 0
    %9486 = vmatpush1.bf16.msra.mxu0 0
    %9487 = vmatprep.subr.bf16.mxu0 0
    %9488 = vmatpush1.bf16.msra.mxu0 %v9072
    %9489 = vmatprep.subr.bf16.mxu0 0
    %9490 = vmatpush1.bf16.msra.mxu0 %v9071
    %9491 = vmatprep.subr.bf16.mxu0 0
    %9492 = vmatpush1.bf16.msra.mxu0 %v9070
    %9493 = vmatprep.subr.bf16.mxu0 0
    %9494 = vmatpush1.bf16.msra.mxu0 %v9069
    %9495 = vmatprep.subr.bf16.mxu0 0
    %9496 = vmatpush2.bf16.msra.mxu0 0
    %9497 = vmatprep.subr.bf16.mxu0 0
    %9498 = vmatpush2.bf16.msra.mxu0 0
    %9499 = vmatprep.subr.bf16.mxu0 0
    %9500 = vmatpush2.bf16.msra.mxu0 0
    %9501 = vmatprep.subr.bf16.mxu0 0
    %9502 = vmatpush2.bf16.msra.mxu0 0
    %9503 = vmatprep.subr.bf16.mxu0 0
    %9504 = vmatpush2.bf16.msra.mxu0 0
    %9505 = vmatprep.subr.bf16.mxu0 0
    %9506 = vmatpush2.bf16.msra.mxu0 0
    %9507 = vmatprep.subr.bf16.mxu0 0
    %9508 = vmatpush2.bf16.msra.mxu0 0
    %9509 = vmatprep.subr.bf16.mxu0 0
    %9510 = vmatpush2.bf16.msra.mxu0 0
    %9511 = vmatprep.mubr.bf16.mxu0 0
    %9512 = vmatmul.mubr.bf16.gmra.mxu0 %v9110
    %v9513 = vpop.f32.mrf.mxu0
    %v9514 = vadd.f32 %v9353, %v9513
    %v9515 = vpop.f32.mrf.mxu0
    %v9516 = vpop.f32.mrf.mxu0
    %v9517 = vadd.f32 %v9356, %v9516
    %v9518 = vpop.f32.mrf.mxu0
    %9519 = vmatprep.mubr.bf16.mxu0 0
    %9520 = vmatmul.mubr.bf16.gmra.mxu0 %v9113
    %v9521 = vpop.f32.mrf.mxu0
    %v9522 = vadd.f32 %v9361, %v9521
    %v9523 = vpop.f32.mrf.mxu0
    %v9524 = vpop.f32.mrf.mxu0
    %v9525 = vadd.f32 %v9364, %v9524
    %v9526 = vpop.f32.mrf.mxu0
    %9527 = vmatprep.mubr.bf16.mxu0 0
    %9528 = vmatmul.mubr.bf16.gmra.mxu0 %v9116
    %v9529 = vpop.f32.mrf.mxu0
    %v9530 = vadd.f32 %v9369, %v9529
    %v9531 = vpop.f32.mrf.mxu0
    %v9532 = vpop.f32.mrf.mxu0
    %v9533 = vadd.f32 %v9372, %v9532
    %v9534 = vpop.f32.mrf.mxu0
    %9535 = vmatprep.mubr.bf16.mxu0 0
    %9536 = vmatmul.mubr.bf16.gmra.mxu0 %v9119
    %v9537 = vpop.f32.mrf.mxu0
    %v9538 = vadd.f32 %v9377, %v9537
    %v9539 = vpop.f32.mrf.mxu0
    %v9540 = vpop.f32.mrf.mxu0
    %v9541 = vadd.f32 %v9380, %v9540
    %v9542 = vpop.f32.mrf.mxu0
    %9543 = vmatprep.mubr.bf16.mxu0 0
    %9544 = vmatmul.mubr.bf16.gmra.mxu0 %v9122
    %v9545 = vpop.f32.mrf.mxu0
    %v9546 = vadd.f32 %v9385, %v9545
    %v9547 = vpop.f32.mrf.mxu0
    %v9548 = vpop.f32.mrf.mxu0
    %v9549 = vadd.f32 %v9388, %v9548
    %v9550 = vpop.f32.mrf.mxu0
    %9551 = vmatprep.mubr.bf16.mxu0 0
    %9552 = vmatmul.mubr.bf16.gmra.mxu0 %v9125
    %v9553 = vpop.f32.mrf.mxu0
    %v9554 = vadd.f32 %v9393, %v9553
    %v9555 = vpop.f32.mrf.mxu0
    %v9556 = vpop.f32.mrf.mxu0
    %v9557 = vadd.f32 %v9396, %v9556
    %v9558 = vpop.f32.mrf.mxu0
    %9559 = vmatprep.mubr.bf16.mxu0 0
    %9560 = vmatmul.mubr.bf16.gmra.mxu0 %v9128
    %v9561 = vpop.f32.mrf.mxu0
    %v9562 = vadd.f32 %v9401, %v9561
    %v9563 = vpop.f32.mrf.mxu0
    %v9564 = vpop.f32.mrf.mxu0
    %v9565 = vadd.f32 %v9404, %v9564
    %v9566 = vpop.f32.mrf.mxu0
    %9567 = vmatprep.mubr.bf16.mxu0 0
    %9568 = vmatmul.mubr.bf16.gmra.mxu0 %v9131
    %v9569 = vpop.f32.mrf.mxu0
    %v9570 = vadd.f32 %v9409, %v9569
    %v9571 = vpop.f32.mrf.mxu0
    %v9572 = vpop.f32.mrf.mxu0
    %v9573 = vadd.f32 %v9412, %v9572
    %v9574 = vpop.f32.mrf.mxu0
    %9575 = vmatprep.mubr.bf16.mxu0 0
    %9576 = vmatmul.mubr.bf16.gmra.mxu0 %v9134
    %v9577 = vpop.f32.mrf.mxu0
    %v9578 = vadd.f32 %v9417, %v9577
    %v9579 = vpop.f32.mrf.mxu0
    %v9580 = vpop.f32.mrf.mxu0
    %v9581 = vadd.f32 %v9420, %v9580
    %v9582 = vpop.f32.mrf.mxu0
    %9583 = vmatprep.mubr.bf16.mxu0 0
    %9584 = vmatmul.mubr.bf16.gmra.mxu0 %v9137
    %v9585 = vpop.f32.mrf.mxu0
    %v9586 = vadd.f32 %v9425, %v9585
    %v9587 = vpop.f32.mrf.mxu0
    %v9588 = vpop.f32.mrf.mxu0
    %v9589 = vadd.f32 %v9428, %v9588
    %v9590 = vpop.f32.mrf.mxu0
    %9591 = vmatprep.mubr.bf16.mxu0 0
    %9592 = vmatmul.mubr.bf16.gmra.mxu0 %v9140
    %v9593 = vpop.f32.mrf.mxu0
    %v9594 = vadd.f32 %v9433, %v9593
    %v9595 = vpop.f32.mrf.mxu0
    %v9596 = vpop.f32.mrf.mxu0
    %v9597 = vadd.f32 %v9436, %v9596
    %v9598 = vpop.f32.mrf.mxu0
    %9599 = vmatprep.mubr.bf16.mxu0 0
    %9600 = vmatmul.mubr.bf16.gmra.mxu0 %v9143
    %v9601 = vpop.f32.mrf.mxu0
    %v9602 = vadd.f32 %v9441, %v9601
    %v9603 = vpop.f32.mrf.mxu0
    %v9604 = vpop.f32.mrf.mxu0
    %v9605 = vadd.f32 %v9444, %v9604
    %v9606 = vpop.f32.mrf.mxu0
    %9607 = vmatprep.mubr.bf16.mxu0 0
    %9608 = vmatmul.mubr.bf16.gmra.mxu0 %v9146
    %v9609 = vpop.f32.mrf.mxu0
    %v9610 = vadd.f32 %v9449, %v9609
    %v9611 = vpop.f32.mrf.mxu0
    %v9612 = vpop.f32.mrf.mxu0
    %v9613 = vadd.f32 %v9452, %v9612
    %v9614 = vpop.f32.mrf.mxu0
    %9615 = vmatprep.mubr.bf16.mxu0 0
    %9616 = vmatmul.mubr.bf16.gmra.mxu0 %v9149
    %v9617 = vpop.f32.mrf.mxu0
    %v9618 = vadd.f32 %v9457, %v9617
    %v9619 = vpop.f32.mrf.mxu0
    %v9620 = vpop.f32.mrf.mxu0
    %v9621 = vadd.f32 %v9460, %v9620
    %v9622 = vpop.f32.mrf.mxu0
    %9623 = vmatprep.mubr.bf16.mxu0 0
    %9624 = vmatmul.mubr.bf16.gmra.mxu0 %v9152
    %v9625 = vpop.f32.mrf.mxu0
    %v9626 = vadd.f32 %v9465, %v9625
    %v9627 = vpop.f32.mrf.mxu0
    %v9628 = vpop.f32.mrf.mxu0
    %v9629 = vadd.f32 %v9468, %v9628
    %v9630 = vpop.f32.mrf.mxu0
    %9631 = vmatprep.mubr.bf16.mxu0 0
    %9632 = vmatmul.mubr.bf16.gmra.mxu0 %v9155
    %v9633 = vpop.f32.mrf.mxu0
    %v9634 = vadd.f32 %v9473, %v9633
    %v9635 = vpop.f32.mrf.mxu0
    %v9636 = vpop.f32.mrf.mxu0
    %v9637 = vadd.f32 %v9476, %v9636
    %v9638 = vpop.f32.mrf.mxu0
    %9639 = vdwg.mxu0
    %v9640 = vlaneseq
    %v9641 = vshrl.u32 %v9640, 7
    %v9642 = vadd.s32 %v9641, 8
    %vm9643 = vcmp.lt.s32.totalorder %v9641, 8
    %vm9644 = vcmp.lt.s32.totalorder %v9642, 8
    %v9645 = vsel %vm9643, 1, 0
    %v9646 = vsel %vm9644, 1, 0
    %v9647 = vcvt.s32.f32 %v9645
    %v9648 = vcvt.s32.f32 %v9646
    %v9649 = vmul.f32 %v9514, %v9647
    %v9650 = vmul.f32 %v9517, %v9648
    %v9651 = vmul.f32 %v9522, %v9647
    %v9652 = vmul.f32 %v9525, %v9648
    %v9653 = vmul.f32 %v9530, %v9647
    %v9654 = vmul.f32 %v9533, %v9648
    %v9655 = vmul.f32 %v9538, %v9647
    %v9656 = vmul.f32 %v9541, %v9648
    %v9657 = vmul.f32 %v9546, %v9647
    %v9658 = vmul.f32 %v9549, %v9648
    %v9659 = vmul.f32 %v9554, %v9647
    %v9660 = vmul.f32 %v9557, %v9648
    %v9661 = vmul.f32 %v9562, %v9647
    %v9662 = vmul.f32 %v9565, %v9648
    %v9663 = vmul.f32 %v9570, %v9647
    %v9664 = vmul.f32 %v9573, %v9648
    %v9665 = vmul.f32 %v9578, %v9647
    %v9666 = vmul.f32 %v9581, %v9648
    %v9667 = vmul.f32 %v9586, %v9647
    %v9668 = vmul.f32 %v9589, %v9648
    %v9669 = vmul.f32 %v9594, %v9647
    %v9670 = vmul.f32 %v9597, %v9648
    %v9671 = vmul.f32 %v9602, %v9647
    %v9672 = vmul.f32 %v9605, %v9648
    %v9673 = vmul.f32 %v9610, %v9647
    %v9674 = vmul.f32 %v9613, %v9648
    %v9675 = vmul.f32 %v9618, %v9647
    %v9676 = vmul.f32 %v9621, %v9648
    %v9677 = vmul.f32 %v9626, %v9647
    %v9678 = vmul.f32 %v9629, %v9648
    %v9679 = vmul.f32 %v9634, %v9647
    %v9680 = vmul.f32 %v9637, %v9648
    %v9681 = vsel %vm5514, %v9649, 0.0
    %v9682 = vsel %vm5514, %v9650, 0.0
    %v9683 = vadd.f32 %v9681, %v9682
    %v9684 = vsel %vm5514, %v9651, 0.0
    %v9685 = vadd.f32 %v9683, %v9684
    %v9686 = vsel %vm5514, %v9652, 0.0
    %v9687 = vadd.f32 %v9685, %v9686
    %v9688 = vsel %vm5514, %v9653, 0.0
    %v9689 = vadd.f32 %v9687, %v9688
    %v9690 = vsel %vm5514, %v9654, 0.0
    %v9691 = vadd.f32 %v9689, %v9690
    %v9692 = vsel %vm5514, %v9655, 0.0
    %v9693 = vadd.f32 %v9691, %v9692
    %v9694 = vsel %vm5514, %v9656, 0.0
    %v9695 = vadd.f32 %v9693, %v9694
    %v9696 = vsel %vm5514, %v9657, 0.0
    %v9697 = vadd.f32 %v9695, %v9696
    %v9698 = vsel %vm5514, %v9658, 0.0
    %v9699 = vadd.f32 %v9697, %v9698
    %v9700 = vsel %vm5514, %v9659, 0.0
    %v9701 = vadd.f32 %v9699, %v9700
    %v9702 = vsel %vm5514, %v9660, 0.0
    %v9703 = vadd.f32 %v9701, %v9702
    %v9704 = vsel %vm5514, %v9661, 0.0
    %v9705 = vadd.f32 %v9703, %v9704
    %v9706 = vsel %vm5514, %v9662, 0.0
    %v9707 = vadd.f32 %v9705, %v9706
    %v9708 = vsel %vm5514, %v9663, 0.0
    %v9709 = vadd.f32 %v9707, %v9708
    %v9710 = vsel %vm5514, %v9664, 0.0
    %v9711 = vadd.f32 %v9709, %v9710
    %v9712 = vsel %vm5514, %v9665, 0.0
    %v9713 = vadd.f32 %v9711, %v9712
    %v9714 = vsel %vm5514, %v9666, 0.0
    %v9715 = vadd.f32 %v9713, %v9714
    %v9716 = vsel %vm5514, %v9667, 0.0
    %v9717 = vadd.f32 %v9715, %v9716
    %v9718 = vsel %vm5514, %v9668, 0.0
    %v9719 = vadd.f32 %v9717, %v9718
    %v9720 = vsel %vm5514, %v9669, 0.0
    %v9721 = vadd.f32 %v9719, %v9720
    %v9722 = vsel %vm5514, %v9670, 0.0
    %v9723 = vadd.f32 %v9721, %v9722
    %v9724 = vsel %vm5514, %v9671, 0.0
    %v9725 = vadd.f32 %v9723, %v9724
    %v9726 = vsel %vm5514, %v9672, 0.0
    %v9727 = vadd.f32 %v9725, %v9726
    %v9728 = vsel %vm5514, %v9673, 0.0
    %v9729 = vadd.f32 %v9727, %v9728
    %v9730 = vsel %vm5514, %v9674, 0.0
    %v9731 = vadd.f32 %v9729, %v9730
    %v9732 = vsel %vm5514, %v9675, 0.0
    %v9733 = vadd.f32 %v9731, %v9732
    %v9734 = vsel %vm5514, %v9676, 0.0
    %v9735 = vadd.f32 %v9733, %v9734
    %v9736 = vsel %vm5514, %v9677, 0.0
    %v9737 = vadd.f32 %v9735, %v9736
    %v9738 = vsel %vm5514, %v9678, 0.0
    %v9739 = vadd.f32 %v9737, %v9738
    %v9740 = vsel %vm5514, %v9679, 0.0
    %v9741 = vadd.f32 %v9739, %v9740
    %v9742 = vsel %vm5514, %v9680, 0.0
    %v9743 = vadd.f32 %v9741, %v9742
    %v9744 = vrot.slane %v9743, 4
    %v9745 = vadd.f32 %v9743, %v9744
    %v9746 = vrot.slane %v9745, 2
    %v9747 = vadd.f32 %v9745, %v9746
    %v9748 = vrot.slane %v9747, 1
    %v9749 = vadd.f32 %v9747, %v9748
    %v9750 = vmul.f32 %v9649, %v9649
    %v9751 = vmul.f32 %v9650, %v9650
    %v9752 = vmul.f32 %v9651, %v9651
    %v9753 = vmul.f32 %v9652, %v9652
    %v9754 = vmul.f32 %v9653, %v9653
    %v9755 = vmul.f32 %v9654, %v9654
    %v9756 = vmul.f32 %v9655, %v9655
    %v9757 = vmul.f32 %v9656, %v9656
    %v9758 = vmul.f32 %v9657, %v9657
    %v9759 = vmul.f32 %v9658, %v9658
    %v9760 = vmul.f32 %v9659, %v9659
    %v9761 = vmul.f32 %v9660, %v9660
    %v9762 = vmul.f32 %v9661, %v9661
    %v9763 = vmul.f32 %v9662, %v9662
    %v9764 = vmul.f32 %v9663, %v9663
    %v9765 = vmul.f32 %v9664, %v9664
    %v9766 = vmul.f32 %v9665, %v9665
    %v9767 = vmul.f32 %v9666, %v9666
    %v9768 = vmul.f32 %v9667, %v9667
    %v9769 = vmul.f32 %v9668, %v9668
    %v9770 = vmul.f32 %v9669, %v9669
    %v9771 = vmul.f32 %v9670, %v9670
    %v9772 = vmul.f32 %v9671, %v9671
    %v9773 = vmul.f32 %v9672, %v9672
    %v9774 = vmul.f32 %v9673, %v9673
    %v9775 = vmul.f32 %v9674, %v9674
    %v9776 = vmul.f32 %v9675, %v9675
    %v9777 = vmul.f32 %v9676, %v9676
    %v9778 = vmul.f32 %v9677, %v9677
    %v9779 = vmul.f32 %v9678, %v9678
    %v9780 = vmul.f32 %v9679, %v9679
    %v9781 = vmul.f32 %v9680, %v9680
    %v9782 = vsel %vm5514, %v9750, 0.0
    %v9783 = vsel %vm5514, %v9751, 0.0
    %v9784 = vadd.f32 %v9782, %v9783
    %v9785 = vsel %vm5514, %v9752, 0.0
    %v9786 = vadd.f32 %v9784, %v9785
    %v9787 = vsel %vm5514, %v9753, 0.0
    %v9788 = vadd.f32 %v9786, %v9787
    %v9789 = vsel %vm5514, %v9754, 0.0
    %v9790 = vadd.f32 %v9788, %v9789
    %v9791 = vsel %vm5514, %v9755, 0.0
    %v9792 = vadd.f32 %v9790, %v9791
    %v9793 = vsel %vm5514, %v9756, 0.0
    %v9794 = vadd.f32 %v9792, %v9793
    %v9795 = vsel %vm5514, %v9757, 0.0
    %v9796 = vadd.f32 %v9794, %v9795
    %v9797 = vsel %vm5514, %v9758, 0.0
    %v9798 = vadd.f32 %v9796, %v9797
    %v9799 = vsel %vm5514, %v9759, 0.0
    %v9800 = vadd.f32 %v9798, %v9799
    %v9801 = vsel %vm5514, %v9760, 0.0
    %v9802 = vadd.f32 %v9800, %v9801
    %v9803 = vsel %vm5514, %v9761, 0.0
    %v9804 = vadd.f32 %v9802, %v9803
    %v9805 = vsel %vm5514, %v9762, 0.0
    %v9806 = vadd.f32 %v9804, %v9805
    %v9807 = vsel %vm5514, %v9763, 0.0
    %v9808 = vadd.f32 %v9806, %v9807
    %v9809 = vsel %vm5514, %v9764, 0.0
    %v9810 = vadd.f32 %v9808, %v9809
    %v9811 = vsel %vm5514, %v9765, 0.0
    %v9812 = vadd.f32 %v9810, %v9811
    %v9813 = vsel %vm5514, %v9766, 0.0
    %v9814 = vadd.f32 %v9812, %v9813
    %v9815 = vsel %vm5514, %v9767, 0.0
    %v9816 = vadd.f32 %v9814, %v9815
    %v9817 = vsel %vm5514, %v9768, 0.0
    %v9818 = vadd.f32 %v9816, %v9817
    %v9819 = vsel %vm5514, %v9769, 0.0
    %v9820 = vadd.f32 %v9818, %v9819
    %v9821 = vsel %vm5514, %v9770, 0.0
    %v9822 = vadd.f32 %v9820, %v9821
    %v9823 = vsel %vm5514, %v9771, 0.0
    %v9824 = vadd.f32 %v9822, %v9823
    %v9825 = vsel %vm5514, %v9772, 0.0
    %v9826 = vadd.f32 %v9824, %v9825
    %v9827 = vsel %vm5514, %v9773, 0.0
    %v9828 = vadd.f32 %v9826, %v9827
    %v9829 = vsel %vm5514, %v9774, 0.0
    %v9830 = vadd.f32 %v9828, %v9829
    %v9831 = vsel %vm5514, %v9775, 0.0
    %v9832 = vadd.f32 %v9830, %v9831
    %v9833 = vsel %vm5514, %v9776, 0.0
    %v9834 = vadd.f32 %v9832, %v9833
    %v9835 = vsel %vm5514, %v9777, 0.0
    %v9836 = vadd.f32 %v9834, %v9835
    %v9837 = vsel %vm5514, %v9778, 0.0
    %v9838 = vadd.f32 %v9836, %v9837
    %v9839 = vsel %vm5514, %v9779, 0.0
    %v9840 = vadd.f32 %v9838, %v9839
    %v9841 = vsel %vm5514, %v9780, 0.0
    %v9842 = vadd.f32 %v9840, %v9841
    %v9843 = vsel %vm5514, %v9781, 0.0
    %v9844 = vadd.f32 %v9842, %v9843
    %v9845 = vrot.slane %v9844, 4
    %v9846 = vadd.f32 %v9844, %v9845
    %v9847 = vrot.slane %v9846, 2
    %v9848 = vadd.f32 %v9846, %v9847
    %v9849 = vrot.slane %v9848, 1
    %v9850 = vadd.f32 %v9848, %v9849
    %v9851 = vrcp.pop 128.0
    %v9852 = vmul.f32 %v9749, %v9851
    %v9853 = vmul.f32 %v9850, %v9851
    %v9854 = vmul.f32 %v9852, %v9852
    %v9855 = vsub.f32 %v9853, %v9854
    %v9856 = vmax.f32 %v9855, 0.0
    %v9857 = vld [vmem:[%s5] sm:$0x1]
    %v9858 = vadd.f32 %v9856, 1e-05
    %v9859 = vrsqrt.pop %v9858
    %v9860 = vmul.f32 %v9857, %v9859
    %v9861 = vld [vmem:[%s6] sm:$0x1]
    %v9862 = vmul.f32 %v9852, %v9860
    %v9863 = vsub.f32 %v9861, %v9862
    %v9865 = vlaneseq
    %v9866 = vshrl.u32 %v9865, 7
    %v9867 = vsub.s32 0, %v9866
    %v9868 = vrot.slane %v9860, %v9867
    %v9870 = vmul.f32 %v9514, %v9868
    %v9871 = vmul.f32 %v9522, %v9868
    %v9872 = vmul.f32 %v9530, %v9868
    %v9873 = vmul.f32 %v9538, %v9868
    %v9874 = vmul.f32 %v9546, %v9868
    %v9875 = vmul.f32 %v9554, %v9868
    %v9876 = vmul.f32 %v9562, %v9868
    %v9877 = vmul.f32 %v9570, %v9868
    %v9878 = vmul.f32 %v9578, %v9868
    %v9879 = vmul.f32 %v9586, %v9868
    %v9880 = vmul.f32 %v9594, %v9868
    %v9881 = vmul.f32 %v9602, %v9868
    %v9882 = vmul.f32 %v9610, %v9868
    %v9883 = vmul.f32 %v9618, %v9868
    %v9884 = vmul.f32 %v9626, %v9868
    %v9885 = vmul.f32 %v9634, %v9868
    %v9887 = vlaneseq
    %v9888 = vshrl.u32 %v9887, 7
    %v9889 = vsub.s32 0, %v9888
    %v9890 = vrot.slane %v9863, %v9889
    %v9892 = vadd.f32 %v9870, %v9890
    %v9893 = vadd.f32 %v9871, %v9890
    %v9894 = vadd.f32 %v9872, %v9890
    %v9895 = vadd.f32 %v9873, %v9890
    %v9896 = vadd.f32 %v9874, %v9890
    %v9897 = vadd.f32 %v9875, %v9890
    %v9898 = vadd.f32 %v9876, %v9890
    %v9899 = vadd.f32 %v9877, %v9890
    %v9900 = vadd.f32 %v9878, %v9890
    %v9901 = vadd.f32 %v9879, %v9890
    %v9902 = vadd.f32 %v9880, %v9890
    %v9903 = vadd.f32 %v9881, %v9890
    %v9904 = vadd.f32 %v9882, %v9890
    %v9905 = vadd.f32 %v9883, %v9890
    %v9906 = vadd.f32 %v9884, %v9890
    %v9907 = vadd.f32 %v9885, %v9890
    %v9908 = vmax.f32 %v9892, %v9893
    %v9909 = vmax.f32 %v9894, %v9895
    %v9910 = vmax.f32 %v9896, %v9897
    %v9911 = vmax.f32 %v9898, %v9899
    %v9912 = vmax.f32 %v9900, %v9901
    %v9913 = vmax.f32 %v9902, %v9903
    %v9914 = vmax.f32 %v9904, %v9905
    %v9915 = vmax.f32 %v9906, %v9907
    %v9924 = vrot.slane %v9908, 1
    %v9925 = vrot.slane %v9909, 1
    %v9926 = vrot.slane %v9910, 1
    %v9927 = vrot.slane %v9911, 1
    %v9928 = vrot.slane %v9912, 1
    %v9929 = vrot.slane %v9913, 1
    %v9930 = vrot.slane %v9914, 1
    %v9931 = vrot.slane %v9915, 1
    %v9940 = vmax.f32 %v9908, %v9924
    %v9941 = vmax.f32 %v9909, %v9925
    %v9942 = vmax.f32 %v9910, %v9926
    %v9943 = vmax.f32 %v9911, %v9927
    %v9944 = vmax.f32 %v9912, %v9928
    %v9945 = vmax.f32 %v9913, %v9929
    %v9946 = vmax.f32 %v9914, %v9930
    %v9947 = vmax.f32 %v9915, %v9931
    %v9956 = vrot.slane %v9940, 1
    %v9957 = vrot.slane %v9941, 1
    %v9958 = vrot.slane %v9942, 1
    %v9959 = vrot.slane %v9943, 1
    %v9960 = vrot.slane %v9944, 1
    %v9961 = vrot.slane %v9945, 1
    %v9962 = vrot.slane %v9946, 1
    %v9963 = vrot.slane %v9947, 1
    %v9972 = vrot.slane %v9940, 2
    %v9973 = vrot.slane %v9941, 2
    %v9974 = vrot.slane %v9942, 2
    %v9975 = vrot.slane %v9943, 2
    %v9976 = vrot.slane %v9944, 2
    %v9977 = vrot.slane %v9945, 2
    %v9978 = vrot.slane %v9946, 2
    %v9979 = vrot.slane %v9947, 2
    %v9988 = vrot.slane %v9940, 3
    %v9989 = vrot.slane %v9941, 3
    %v9990 = vrot.slane %v9942, 3
    %v9991 = vrot.slane %v9943, 3
    %v9992 = vrot.slane %v9944, 3
    %v9993 = vrot.slane %v9945, 3
    %v9994 = vrot.slane %v9946, 3
    %v9995 = vrot.slane %v9947, 3
    %v10004 = vsel %vm6414, %v9940, %v9956
    %v10005 = vsel %vm6414, %v9941, %v9957
    %v10006 = vsel %vm6414, %v9942, %v9958
    %v10007 = vsel %vm6414, %v9943, %v9959
    %v10008 = vsel %vm6414, %v9944, %v9960
    %v10009 = vsel %vm6414, %v9945, %v9961
    %v10010 = vsel %vm6414, %v9946, %v9962
    %v10011 = vsel %vm6414, %v9947, %v9963
    %v10012 = vsel %vm5221, %v10004, %v9972
    %v10013 = vsel %vm5221, %v10005, %v9973
    %v10014 = vsel %vm5221, %v10006, %v9974
    %v10015 = vsel %vm5221, %v10007, %v9975
    %v10016 = vsel %vm5221, %v10008, %v9976
    %v10017 = vsel %vm5221, %v10009, %v9977
    %v10018 = vsel %vm5221, %v10010, %v9978
    %v10019 = vsel %vm5221, %v10011, %v9979
    %v10020 = vsel %vm6447, %v10012, %v9988
    %v10021 = vsel %vm6447, %v10013, %v9989
    %v10022 = vsel %vm6447, %v10014, %v9990
    %v10023 = vsel %vm6447, %v10015, %v9991
    %v10024 = vsel %vm6447, %v10016, %v9992
    %v10025 = vsel %vm6447, %v10017, %v9993
    %v10026 = vsel %vm6447, %v10018, %v9994
    %v10027 = vsel %vm6447, %v10019, %v9995
    %v10028 = vmax.f32 %v10020, 0.0
    %v10029 = vmax.f32 %v10021, 0.0
    %v10030 = vmax.f32 %v10022, 0.0
    %v10031 = vmax.f32 %v10023, 0.0
    %v10032 = vmax.f32 %v10024, 0.0
    %v10033 = vmax.f32 %v10025, 0.0
    %v10034 = vmax.f32 %v10026, 0.0
    %v10035 = vmax.f32 %v10027, 0.0
    %10036 = vst.msk [vmem:[#allocation4] sm:$0xf] %vm6548, 0
    %10037 = vst.msk [vmem:[#allocation4 + $0x4] sm:$0xf] %vm6548, 0
    %10038 = vst.msk [vmem:[#allocation4 + $0x8] sm:$0x1] %vm6551, 0
    %10039 = vst.msk [vmem:[#allocation4 + $0x48] sm:$0xf] %vm6548, 0
    %10040 = vst.msk [vmem:[#allocation4 + $0x4c] sm:$0xf] %vm6548, 0
    %10041 = vst.msk [vmem:[#allocation4 + $0x50] sm:$0x1] %vm6551, 0
    %s10042 = scalar_lea.vmem [#allocation4], 60
    %10043 = vst.msk [vmem:[%s10042] sm:$0xf] %vm6548, 0
    %10044 = vst.msk [vmem:[%s10042 + $0x4] sm:$0xf] %vm6548, 0
    %10045 = vst.msk [vmem:[%s10042 + $0x8] sm:$0x1] %vm6551, 0
    %10046 = vst.msk [vmem:[%s10042 + $0x48] sm:$0xf] %vm6548, 0
    %10047 = vst.msk [vmem:[%s10042 + $0x4c] sm:$0xf] %vm6548, 0
    %10048 = vst.msk [vmem:[%s10042 + $0x50] sm:$0x1] %vm6551, 0
    %v10049 = vld [vmem:[#allocation4] sm:$0x1]
    %v10050 = vsel %vm6564, 0, %v10049
    %10051 = vst [vmem:[#allocation4] sm:$0x1] %v10050
    %v10052 = vld [vmem:[#allocation4 + $0xc] sm:$0x1]
    %v10053 = vsel %vm6564, 0, %v10052
    %10054 = vst [vmem:[#allocation4 + $0xc] sm:$0x1] %v10053
    %v10055 = vld [vmem:[#allocation4 + $0x18] sm:$0x1]
    %v10056 = vsel %vm6564, 0, %v10055
    %10057 = vst [vmem:[#allocation4 + $0x18] sm:$0x1] %v10056
    %v10058 = vld [vmem:[#allocation4 + $0x24] sm:$0x1]
    %v10059 = vsel %vm6564, 0, %v10058
    %10060 = vst [vmem:[#allocation4 + $0x24] sm:$0x1] %v10059
    %v10061 = vld [vmem:[#allocation4 + $0x30] sm:$0x1]
    %v10062 = vsel %vm6564, 0, %v10061
    %10063 = vst [vmem:[#allocation4 + $0x30] sm:$0x1] %v10062
    %v10064 = vld [vmem:[#allocation4 + $0x3c] sm:$0x1]
    %v10065 = vsel %vm6564, 0, %v10064
    %10066 = vst [vmem:[#allocation4 + $0x3c] sm:$0x1] %v10065
    %v10067 = vld [vmem:[#allocation4 + $0x48] sm:$0x1]
    %v10068 = vsel %vm6564, 0, %v10067
    %10069 = vst [vmem:[#allocation4 + $0x48] sm:$0x1] %v10068
    %v10070 = vld [vmem:[#allocation4 + $0x54] sm:$0x1]
    %v10071 = vsel %vm6564, 0, %v10070
    %10072 = vst [vmem:[#allocation4 + $0x54] sm:$0x1] %v10071
    %v10073 = vld [vmem:[#allocation4 + $0x60] sm:$0x1]
    %v10074 = vsel %vm6564, 0, %v10073
    %10075 = vst [vmem:[#allocation4 + $0x60] sm:$0x1] %v10074
    %v10076 = vld [vmem:[#allocation4 + $0x6c] sm:$0x1]
    %v10077 = vsel %vm6564, 0, %v10076
    %10078 = vst [vmem:[#allocation4 + $0x6c] sm:$0x1] %v10077
    %v10079 = vld [vmem:[#allocation4 + $0x78] sm:$0x1]
    %v10080 = vsel %vm6564, 0, %v10079
    %10081 = vst [vmem:[#allocation4 + $0x78] sm:$0x1] %v10080
    %v10082 = vld [vmem:[#allocation4 + $0x84] sm:$0x1]
    %v10083 = vsel %vm6564, 0, %v10082
    %10084 = vst [vmem:[#allocation4 + $0x84] sm:$0x1] %v10083
    %vm10085 = vcmask 519170
    %vm10086 = vsmask.f32 7946
    %vm10087 = vmand %vm10085, %vm10086
    %v10088 = vld [vmem:[#allocation4] sm:$0xc]
    %v10089 = vsel %vm10087, 0, %v10088
    %10090 = vst [vmem:[#allocation4] sm:$0xc] %v10089
    %10091 = vst.msk [vmem:[#allocation4 + $0x4] sm:$0xf] %vm6548, 0
    %10092 = vst.msk [vmem:[#allocation4 + $0x8] sm:$0x1] %vm6551, 0
    %v10093 = vld [vmem:[#allocation4 + $0xc] sm:$0xc]
    %v10094 = vsel %vm10087, 0, %v10093
    %10095 = vst [vmem:[#allocation4 + $0xc] sm:$0xc] %v10094
    %10096 = vst.msk [vmem:[#allocation4 + $0x10] sm:$0xf] %vm6548, 0
    %10097 = vst.msk [vmem:[#allocation4 + $0x14] sm:$0x1] %vm6551, 0
    %v10098 = vld [vmem:[#allocation4 + $0x18] sm:$0xc]
    %v10099 = vsel %vm10087, 0, %v10098
    %10100 = vst [vmem:[#allocation4 + $0x18] sm:$0xc] %v10099
    %10101 = vst.msk [vmem:[#allocation4 + $0x1c] sm:$0xf] %vm6548, 0
    %10102 = vst.msk [vmem:[#allocation4 + $0x20] sm:$0x1] %vm6551, 0
    %v10103 = vld [vmem:[#allocation4 + $0x24] sm:$0xc]
    %v10104 = vsel %vm10087, 0, %v10103
    %10105 = vst [vmem:[#allocation4 + $0x24] sm:$0xc] %v10104
    %10106 = vst.msk [vmem:[#allocation4 + $0x28] sm:$0xf] %vm6548, 0
    %10107 = vst.msk [vmem:[#allocation4 + $0x2c] sm:$0x1] %vm6551, 0
    %v10108 = vld [vmem:[#allocation4 + $0x30] sm:$0xc]
    %v10109 = vsel %vm10087, 0, %v10108
    %10110 = vst [vmem:[#allocation4 + $0x30] sm:$0xc] %v10109
    %10111 = vst.msk [vmem:[#allocation4 + $0x34] sm:$0xf] %vm6548, 0
    %10112 = vst.msk [vmem:[#allocation4 + $0x38] sm:$0x1] %vm6551, 0
    %v10113 = vld [vmem:[#allocation4 + $0x3c] sm:$0xc]
    %v10114 = vsel %vm10087, 0, %v10113
    %10115 = vst [vmem:[#allocation4 + $0x3c] sm:$0xc] %v10114
    %10116 = vst.msk [vmem:[#allocation4 + $0x40] sm:$0xf] %vm6548, 0
    %10117 = vst.msk [vmem:[#allocation4 + $0x44] sm:$0x1] %vm6551, 0
    %v10118 = vld [vmem:[#allocation4 + $0x48] sm:$0xc]
    %v10119 = vsel %vm10087, 0, %v10118
    %10120 = vst [vmem:[#allocation4 + $0x48] sm:$0xc] %v10119
    %10121 = vst.msk [vmem:[#allocation4 + $0x4c] sm:$0xf] %vm6548, 0
    %10122 = vst.msk [vmem:[#allocation4 + $0x50] sm:$0x1] %vm6551, 0
    %v10123 = vld [vmem:[#allocation4 + $0x54] sm:$0xc]
    %v10124 = vsel %vm10087, 0, %v10123
    %10125 = vst [vmem:[#allocation4 + $0x54] sm:$0xc] %v10124
    %10126 = vst.msk [vmem:[#allocation4 + $0x58] sm:$0xf] %vm6548, 0
    %10127 = vst.msk [vmem:[#allocation4 + $0x5c] sm:$0x1] %vm6551, 0
    %v10128 = vld [vmem:[#allocation4 + $0x60] sm:$0xc]
    %v10129 = vsel %vm10087, 0, %v10128
    %10130 = vst [vmem:[#allocation4 + $0x60] sm:$0xc] %v10129
    %10131 = vst.msk [vmem:[#allocation4 + $0x64] sm:$0xf] %vm6548, 0
    %10132 = vst.msk [vmem:[#allocation4 + $0x68] sm:$0x1] %vm6551, 0
    %v10133 = vld [vmem:[#allocation4 + $0x6c] sm:$0xc]
    %v10134 = vsel %vm10087, 0, %v10133
    %10135 = vst [vmem:[#allocation4 + $0x6c] sm:$0xc] %v10134
    %10136 = vst.msk [vmem:[#allocation4 + $0x70] sm:$0xf] %vm6548, 0
    %10137 = vst.msk [vmem:[#allocation4 + $0x74] sm:$0x1] %vm6551, 0
    %v10138 = vld [vmem:[#allocation4 + $0x78] sm:$0xc]
    %v10139 = vsel %vm10087, 0, %v10138
    %10140 = vst [vmem:[#allocation4 + $0x78] sm:$0xc] %v10139
    %10141 = vst.msk [vmem:[#allocation4 + $0x7c] sm:$0xf] %vm6548, 0
    %10142 = vst.msk [vmem:[#allocation4 + $0x80] sm:$0x1] %vm6551, 0
    %v10143 = vld [vmem:[#allocation4 + $0x84] sm:$0xc]
    %v10144 = vsel %vm10087, 0, %v10143
    %10145 = vst [vmem:[#allocation4 + $0x84] sm:$0xc] %v10144
    %10146 = vst.msk [vmem:[#allocation4 + $0x88] sm:$0xf] %vm6548, 0
    %10147 = vst.msk [vmem:[#allocation4 + $0x8c] sm:$0x1] %vm6551, 0
    %v10148 = vpack.c.bf16 %v10028, %v10028
    %v10149 = vpack.c.bf16 %v10029, %v10029
    %v10150 = vpack.c.bf16 %v10030, %v10030
    %v10151 = vpack.c.bf16 %v10031, %v10031
    %v10152 = vpack.c.bf16 %v10032, %v10032
    %v10153 = vpack.c.bf16 %v10033, %v10033
    %v10154 = vpack.c.bf16 %v10034, %v10034
    %v10155 = vpack.c.bf16 %v10035, %v10035
    %v10164 = vunpack.c.l.b16 %v10148
    %v10165 = vunpack.c.l.b16 %v10149
    %v10166 = vunpack.c.l.b16 %v10150
    %v10167 = vunpack.c.l.b16 %v10151
    %v10168 = vunpack.c.l.b16 %v10152
    %v10169 = vunpack.c.l.b16 %v10153
    %v10170 = vunpack.c.l.b16 %v10154
    %v10171 = vunpack.c.l.b16 %v10155
    %v10172 = vpack.c.b16 %v10164, %v10164
    %v10173 = vpack.c.b16 %v10165, %v10165
    %v10174 = vpack.c.b16 %v10166, %v10166
    %v10175 = vpack.c.b16 %v10167, %v10167
    %v10176 = vpack.c.b16 %v10168, %v10168
    %v10177 = vpack.c.b16 %v10169, %v10169
    %v10178 = vpack.c.b16 %v10170, %v10170
    %v10179 = vpack.c.b16 %v10171, %v10171
    %v10181 = vshrl.u32 %v10172, 16
    %v10183 = vrot.slane %v10181, 7
    %v10184 = vshll.u32 %v10172, 16
    %v10186 = vor.u32 %v10183, %v10184
    %v10188 = vshrl.u32 %v10173, 16
    %v10190 = vrot.slane %v10188, 7
    %v10191 = vshll.u32 %v10173, 16
    %v10193 = vor.u32 %v10190, %v10191
    %v10195 = vshrl.u32 %v10174, 16
    %v10197 = vrot.slane %v10195, 7
    %v10198 = vshll.u32 %v10174, 16
    %v10200 = vor.u32 %v10197, %v10198
    %v10202 = vshrl.u32 %v10175, 16
    %v10204 = vrot.slane %v10202, 7
    %v10205 = vshll.u32 %v10175, 16
    %v10207 = vor.u32 %v10204, %v10205
    %v10209 = vshrl.u32 %v10176, 16
    %v10211 = vrot.slane %v10209, 7
    %v10212 = vshll.u32 %v10176, 16
    %v10214 = vor.u32 %v10211, %v10212
    %v10216 = vshrl.u32 %v10177, 16
    %v10218 = vrot.slane %v10216, 7
    %v10219 = vshll.u32 %v10177, 16
    %v10221 = vor.u32 %v10218, %v10219
    %v10223 = vshrl.u32 %v10178, 16
    %v10225 = vrot.slane %v10223, 7
    %v10226 = vshll.u32 %v10178, 16
    %v10228 = vor.u32 %v10225, %v10226
    %v10230 = vshrl.u32 %v10179, 16
    %v10232 = vrot.slane %v10230, 7
    %v10233 = vshll.u32 %v10179, 16
    %v10235 = vor.u32 %v10232, %v10233
    %s10244 = scalar_lea.vmem [#allocation4], 12
    %vm10245 = vcmask 518144
    %vm10246 = vsmask.f32 2306
    %vm10247 = vmand %vm10245, %vm10246
    %v10248 = vld [vmem:[%s10244] sm:$0x7]
    %v10249 = vsel %vm10247, %v10186, %v10248
    %10250 = vst [vmem:[%s10244] sm:$0x7] %v10249
    %v10251 = vld [vmem:[%s10244 + $0xc] sm:$0x7]
    %v10252 = vsel %vm10247, %v10193, %v10251
    %10253 = vst [vmem:[%s10244 + $0xc] sm:$0x7] %v10252
    %v10254 = vld [vmem:[%s10244 + $0x18] sm:$0x7]
    %v10255 = vsel %vm10247, %v10200, %v10254
    %10256 = vst [vmem:[%s10244 + $0x18] sm:$0x7] %v10255
    %v10257 = vld [vmem:[%s10244 + $0x24] sm:$0x7]
    %v10258 = vsel %vm10247, %v10207, %v10257
    %10259 = vst [vmem:[%s10244 + $0x24] sm:$0x7] %v10258
    %v10260 = vld [vmem:[%s10244 + $0x48] sm:$0x7]
    %v10261 = vsel %vm10247, %v10214, %v10260
    %10262 = vst [vmem:[%s10244 + $0x48] sm:$0x7] %v10261
    %v10263 = vld [vmem:[%s10244 + $0x54] sm:$0x7]
    %v10264 = vsel %vm10247, %v10221, %v10263
    %10265 = vst [vmem:[%s10244 + $0x54] sm:$0x7] %v10264
    %v10266 = vld [vmem:[%s10244 + $0x60] sm:$0x7]
    %v10267 = vsel %vm10247, %v10228, %v10266
    %10268 = vst [vmem:[%s10244 + $0x60] sm:$0x7] %v10267
    %v10269 = vld [vmem:[%s10244 + $0x6c] sm:$0x7]
    %v10270 = vsel %vm10247, %v10235, %v10269
    %10271 = vst [vmem:[%s10244 + $0x6c] sm:$0x7] %v10270
    %v10272 = vld [vmem:[#allocation4] sm:$0xf]
    %v10273 = vld [vmem:[#allocation4 + $0x4] sm:$0xf]
    %v10274 = vld [vmem:[#allocation4 + $0xc] sm:$0xf]
    %v10275 = vld [vmem:[#allocation4 + $0x10] sm:$0xf]
    %v10276 = vld [vmem:[#allocation4 + $0x18] sm:$0xf]
    %v10277 = vld [vmem:[#allocation4 + $0x1c] sm:$0xf]
    %v10278 = vld [vmem:[#allocation4 + $0x24] sm:$0xf]
    %v10279 = vld [vmem:[#allocation4 + $0x28] sm:$0xf]
    %v10280 = vld [vmem:[#allocation4 + $0x48] sm:$0xf]
    %v10281 = vld [vmem:[#allocation4 + $0x4c] sm:$0xf]
    %v10282 = vld [vmem:[#allocation4 + $0x54] sm:$0xf]
    %v10283 = vld [vmem:[#allocation4 + $0x58] sm:$0xf]
    %v10284 = vld [vmem:[#allocation4 + $0x60] sm:$0xf]
    %v10285 = vld [vmem:[#allocation4 + $0x64] sm:$0xf]
    %v10286 = vld [vmem:[#allocation4 + $0x6c] sm:$0xf]
    %v10287 = vld [vmem:[#allocation4 + $0x70] sm:$0xf]
    %v10288 = vld [vmem:[#allocation4 + $0x8] sm:$0x1]
    %v10289 = vld [vmem:[#allocation4 + $0x14] sm:$0x1]
    %v10290 = vld [vmem:[#allocation4 + $0x20] sm:$0x1]
    %v10291 = vld [vmem:[#allocation4 + $0x2c] sm:$0x1]
    %v10292 = vld [vmem:[#allocation4 + $0x50] sm:$0x1]
    %v10293 = vld [vmem:[#allocation4 + $0x5c] sm:$0x1]
    %v10294 = vld [vmem:[#allocation4 + $0x68] sm:$0x1]
    %v10295 = vld [vmem:[#allocation4 + $0x74] sm:$0x1]
    %v10296 = vld [vmem:[#allocation4] sm:$0xe]
    %v10297 = vld [vmem:[#allocation4 + $0xc] sm:$0xe]
    %v10298 = vld [vmem:[#allocation4 + $0x18] sm:$0xe]
    %v10299 = vld [vmem:[#allocation4 + $0x24] sm:$0xe]
    %v10300 = vld [vmem:[#allocation4 + $0x48] sm:$0xe]
    %v10301 = vld [vmem:[#allocation4 + $0x54] sm:$0xe]
    %v10302 = vld [vmem:[#allocation4 + $0x60] sm:$0xe]
    %v10303 = vld [vmem:[#allocation4 + $0x6c] sm:$0xe]
    %v10304 = vld [vmem:[%s10244] sm:$0xf]
    %v10305 = vld [vmem:[%s10244 + $0x4] sm:$0xf]
    %v10306 = vld [vmem:[%s10244 + $0xc] sm:$0xf]
    %v10307 = vld [vmem:[%s10244 + $0x10] sm:$0xf]
    %v10308 = vld [vmem:[%s10244 + $0x18] sm:$0xf]
    %v10309 = vld [vmem:[%s10244 + $0x1c] sm:$0xf]
    %v10310 = vld [vmem:[%s10244 + $0x24] sm:$0xf]
    %v10311 = vld [vmem:[%s10244 + $0x28] sm:$0xf]
    %v10312 = vld [vmem:[%s10244 + $0x48] sm:$0xf]
    %v10313 = vld [vmem:[%s10244 + $0x4c] sm:$0xf]
    %v10314 = vld [vmem:[%s10244 + $0x54] sm:$0xf]
    %v10315 = vld [vmem:[%s10244 + $0x58] sm:$0xf]
    %v10316 = vld [vmem:[%s10244 + $0x60] sm:$0xf]
    %v10317 = vld [vmem:[%s10244 + $0x64] sm:$0xf]
    %v10318 = vld [vmem:[%s10244 + $0x6c] sm:$0xf]
    %v10319 = vld [vmem:[%s10244 + $0x70] sm:$0xf]
    %v10320 = vld [vmem:[%s10244 + $0x8] sm:$0x1]
    %v10321 = vld [vmem:[%s10244 + $0x14] sm:$0x1]
    %v10322 = vld [vmem:[%s10244 + $0x20] sm:$0x1]
    %v10323 = vld [vmem:[%s10244 + $0x2c] sm:$0x1]
    %v10324 = vld [vmem:[%s10244 + $0x50] sm:$0x1]
    %v10325 = vld [vmem:[%s10244 + $0x5c] sm:$0x1]
    %v10326 = vld [vmem:[%s10244 + $0x68] sm:$0x1]
    %v10327 = vld [vmem:[%s10244 + $0x74] sm:$0x1]
    %v10328 = vld [vmem:[%s10244] sm:$0xe]
    %v10329 = vld [vmem:[%s10244 + $0xc] sm:$0xe]
    %v10330 = vld [vmem:[%s10244 + $0x18] sm:$0xe]
    %v10331 = vld [vmem:[%s10244 + $0x24] sm:$0xe]
    %v10332 = vld [vmem:[%s10244 + $0x48] sm:$0xe]
    %v10333 = vld [vmem:[%s10244 + $0x54] sm:$0xe]
    %v10334 = vld [vmem:[%s10244 + $0x60] sm:$0xe]
    %v10335 = vld [vmem:[%s10244 + $0x6c] sm:$0xe]
    %s10336 = scalar_lea.vmem [#allocation4], 24
    %v10337 = vld [vmem:[%s10336] sm:$0xf]
    %v10338 = vld [vmem:[%s10336 + $0x4] sm:$0xf]
    %v10339 = vld [vmem:[%s10336 + $0xc] sm:$0xf]
    %v10340 = vld [vmem:[%s10336 + $0x10] sm:$0xf]
    %v10341 = vld [vmem:[%s10336 + $0x18] sm:$0xf]
    %v10342 = vld [vmem:[%s10336 + $0x1c] sm:$0xf]
    %v10343 = vld [vmem:[%s10336 + $0x24] sm:$0xf]
    %v10344 = vld [vmem:[%s10336 + $0x28] sm:$0xf]
    %v10345 = vld [vmem:[%s10336 + $0x48] sm:$0xf]
    %v10346 = vld [vmem:[%s10336 + $0x4c] sm:$0xf]
    %v10347 = vld [vmem:[%s10336 + $0x54] sm:$0xf]
    %v10348 = vld [vmem:[%s10336 + $0x58] sm:$0xf]
    %v10349 = vld [vmem:[%s10336 + $0x60] sm:$0xf]
    %v10350 = vld [vmem:[%s10336 + $0x64] sm:$0xf]
    %v10351 = vld [vmem:[%s10336 + $0x6c] sm:$0xf]
    %v10352 = vld [vmem:[%s10336 + $0x70] sm:$0xf]
    %v10353 = vld [vmem:[%s10336 + $0x8] sm:$0x1]
    %v10354 = vld [vmem:[%s10336 + $0x14] sm:$0x1]
    %v10355 = vld [vmem:[%s10336 + $0x20] sm:$0x1]
    %v10356 = vld [vmem:[%s10336 + $0x2c] sm:$0x1]
    %v10357 = vld [vmem:[%s10336 + $0x50] sm:$0x1]
    %v10358 = vld [vmem:[%s10336 + $0x5c] sm:$0x1]
    %v10359 = vld [vmem:[%s10336 + $0x68] sm:$0x1]
    %v10360 = vld [vmem:[%s10336 + $0x74] sm:$0x1]
    %v10361 = vld [vmem:[%s10336] sm:$0xe]
    %v10362 = vld [vmem:[%s10336 + $0xc] sm:$0xe]
    %v10363 = vld [vmem:[%s10336 + $0x18] sm:$0xe]
    %v10364 = vld [vmem:[%s10336 + $0x24] sm:$0xe]
    %v10365 = vld [vmem:[%s10336 + $0x48] sm:$0xe]
    %v10366 = vld [vmem:[%s10336 + $0x54] sm:$0xe]
    %v10367 = vld [vmem:[%s10336 + $0x60] sm:$0xe]
    %v10368 = vld [vmem:[%s10336 + $0x6c] sm:$0xe]
    %v10385 = vunpack.c.l.b16 %v10272
    %v10386 = vunpack.c.l.b16 %v10273
    %v10387 = vunpack.c.l.b16 %v10274
    %v10388 = vunpack.c.l.b16 %v10275
    %v10389 = vunpack.c.l.b16 %v10276
    %v10390 = vunpack.c.l.b16 %v10277
    %v10391 = vunpack.c.l.b16 %v10278
    %v10392 = vunpack.c.l.b16 %v10279
    %v10393 = vunpack.c.l.b16 %v10280
    %v10394 = vunpack.c.l.b16 %v10281
    %v10395 = vunpack.c.l.b16 %v10282
    %v10396 = vunpack.c.l.b16 %v10283
    %v10397 = vunpack.c.l.b16 %v10284
    %v10398 = vunpack.c.l.b16 %v10285
    %v10399 = vunpack.c.l.b16 %v10286
    %v10400 = vunpack.c.l.b16 %v10287
    %v10401 = vpack.c.b16 %v10386, %v10385
    %v10402 = vpack.c.b16 %v10388, %v10387
    %v10403 = vpack.c.b16 %v10390, %v10389
    %v10404 = vpack.c.b16 %v10392, %v10391
    %v10405 = vpack.c.b16 %v10394, %v10393
    %v10406 = vpack.c.b16 %v10396, %v10395
    %v10407 = vpack.c.b16 %v10398, %v10397
    %v10408 = vpack.c.b16 %v10400, %v10399
    %v10417 = vunpack.c.l.b16 %v10288
    %v10418 = vunpack.c.l.b16 %v10289
    %v10419 = vunpack.c.l.b16 %v10290
    %v10420 = vunpack.c.l.b16 %v10291
    %v10421 = vunpack.c.l.b16 %v10292
    %v10422 = vunpack.c.l.b16 %v10293
    %v10423 = vunpack.c.l.b16 %v10294
    %v10424 = vunpack.c.l.b16 %v10295
    %v10425 = vpack.c.b16 %v10417, %v10417
    %v10426 = vpack.c.b16 %v10418, %v10418
    %v10427 = vpack.c.b16 %v10419, %v10419
    %v10428 = vpack.c.b16 %v10420, %v10420
    %v10429 = vpack.c.b16 %v10421, %v10421
    %v10430 = vpack.c.b16 %v10422, %v10422
    %v10431 = vpack.c.b16 %v10423, %v10423
    %v10432 = vpack.c.b16 %v10424, %v10424
    %v10434 = vshrl.u32 %v10401, 16
    %v10436 = vshll.u32 %v10401, 16
    %v10438 = vrot.slane %v10436, 1
    %v10439 = vor.u32 %v10434, %v10438
    %v10441 = vshll.u32 %v10425, 16
    %v10443 = vrot.slane %v10441, 1
    %v10444 = vsel %vm1862, %v10439, %v10443
    %v10446 = vshrl.u32 %v10402, 16
    %v10448 = vshll.u32 %v10402, 16
    %v10450 = vrot.slane %v10448, 1
    %v10451 = vor.u32 %v10446, %v10450
    %v10453 = vshll.u32 %v10426, 16
    %v10455 = vrot.slane %v10453, 1
    %v10456 = vsel %vm1862, %v10451, %v10455
    %v10458 = vshrl.u32 %v10403, 16
    %v10460 = vshll.u32 %v10403, 16
    %v10462 = vrot.slane %v10460, 1
    %v10463 = vor.u32 %v10458, %v10462
    %v10465 = vshll.u32 %v10427, 16
    %v10467 = vrot.slane %v10465, 1
    %v10468 = vsel %vm1862, %v10463, %v10467
    %v10470 = vshrl.u32 %v10404, 16
    %v10472 = vshll.u32 %v10404, 16
    %v10474 = vrot.slane %v10472, 1
    %v10475 = vor.u32 %v10470, %v10474
    %v10477 = vshll.u32 %v10428, 16
    %v10479 = vrot.slane %v10477, 1
    %v10480 = vsel %vm1862, %v10475, %v10479
    %v10482 = vshrl.u32 %v10405, 16
    %v10484 = vshll.u32 %v10405, 16
    %v10486 = vrot.slane %v10484, 1
    %v10487 = vor.u32 %v10482, %v10486
    %v10489 = vshll.u32 %v10429, 16
    %v10491 = vrot.slane %v10489, 1
    %v10492 = vsel %vm1862, %v10487, %v10491
    %v10494 = vshrl.u32 %v10406, 16
    %v10496 = vshll.u32 %v10406, 16
    %v10498 = vrot.slane %v10496, 1
    %v10499 = vor.u32 %v10494, %v10498
    %v10501 = vshll.u32 %v10430, 16
    %v10503 = vrot.slane %v10501, 1
    %v10504 = vsel %vm1862, %v10499, %v10503
    %v10506 = vshrl.u32 %v10407, 16
    %v10508 = vshll.u32 %v10407, 16
    %v10510 = vrot.slane %v10508, 1
    %v10511 = vor.u32 %v10506, %v10510
    %v10513 = vshll.u32 %v10431, 16
    %v10515 = vrot.slane %v10513, 1
    %v10516 = vsel %vm1862, %v10511, %v10515
    %v10518 = vshrl.u32 %v10408, 16
    %v10520 = vshll.u32 %v10408, 16
    %v10522 = vrot.slane %v10520, 1
    %v10523 = vor.u32 %v10518, %v10522
    %v10525 = vshll.u32 %v10432, 16
    %v10527 = vrot.slane %v10525, 1
    %v10528 = vsel %vm1862, %v10523, %v10527
    %10529 = vrot.lane.b32.xlu0 %v10444, 64
    %v10530 = vpop.permute.xlu0 %10529
    %10531 = vrot.lane.b32.xlu0 %v10456, 64
    %v10532 = vpop.permute.xlu0 %10531
    %10533 = vrot.lane.b32.xlu0 %v10468, 64
    %v10534 = vpop.permute.xlu0 %10533
    %10535 = vrot.lane.b32.xlu0 %v10480, 64
    %v10536 = vpop.permute.xlu0 %10535
    %10537 = vrot.lane.b32.xlu0 %v10492, 64
    %v10538 = vpop.permute.xlu0 %10537
    %10539 = vrot.lane.b32.xlu0 %v10504, 64
    %v10540 = vpop.permute.xlu0 %10539
    %10541 = vrot.lane.b32.xlu0 %v10516, 64
    %v10542 = vpop.permute.xlu0 %10541
    %10543 = vrot.lane.b32.xlu0 %v10528, 64
    %v10544 = vpop.permute.xlu0 %10543
    %v10553 = vunpack.c.l.b16 %v10296
    %v10554 = vunpack.c.l.b16 %v10297
    %v10555 = vunpack.c.l.b16 %v10298
    %v10556 = vunpack.c.l.b16 %v10299
    %v10557 = vunpack.c.l.b16 %v10300
    %v10558 = vunpack.c.l.b16 %v10301
    %v10559 = vunpack.c.l.b16 %v10302
    %v10560 = vunpack.c.l.b16 %v10303
    %v10561 = vpack.c.b16 %v10386, %v10553
    %v10562 = vpack.c.b16 %v10388, %v10554
    %v10563 = vpack.c.b16 %v10390, %v10555
    %v10564 = vpack.c.b16 %v10392, %v10556
    %v10565 = vpack.c.b16 %v10394, %v10557
    %v10566 = vpack.c.b16 %v10396, %v10558
    %v10567 = vpack.c.b16 %v10398, %v10559
    %v10568 = vpack.c.b16 %v10400, %v10560
    %v10569 = vrot.slane %v10561, 1
    %v10570 = vrot.slane %v10425, 1
    %v10571 = vsel %vm2407, %v10569, %v10570
    %v10572 = vrot.slane %v10562, 1
    %v10573 = vrot.slane %v10426, 1
    %v10574 = vsel %vm2407, %v10572, %v10573
    %v10575 = vrot.slane %v10563, 1
    %v10576 = vrot.slane %v10427, 1
    %v10577 = vsel %vm2407, %v10575, %v10576
    %v10578 = vrot.slane %v10564, 1
    %v10579 = vrot.slane %v10428, 1
    %v10580 = vsel %vm2407, %v10578, %v10579
    %v10581 = vrot.slane %v10565, 1
    %v10582 = vrot.slane %v10429, 1
    %v10583 = vsel %vm2407, %v10581, %v10582
    %v10584 = vrot.slane %v10566, 1
    %v10585 = vrot.slane %v10430, 1
    %v10586 = vsel %vm2407, %v10584, %v10585
    %v10587 = vrot.slane %v10567, 1
    %v10588 = vrot.slane %v10431, 1
    %v10589 = vsel %vm2407, %v10587, %v10588
    %v10590 = vrot.slane %v10568, 1
    %v10591 = vrot.slane %v10432, 1
    %v10592 = vsel %vm2407, %v10590, %v10591
    %v10609 = vunpack.c.l.b16 %v10304
    %v10610 = vunpack.c.l.b16 %v10305
    %v10611 = vunpack.c.l.b16 %v10306
    %v10612 = vunpack.c.l.b16 %v10307
    %v10613 = vunpack.c.l.b16 %v10308
    %v10614 = vunpack.c.l.b16 %v10309
    %v10615 = vunpack.c.l.b16 %v10310
    %v10616 = vunpack.c.l.b16 %v10311
    %v10617 = vunpack.c.l.b16 %v10312
    %v10618 = vunpack.c.l.b16 %v10313
    %v10619 = vunpack.c.l.b16 %v10314
    %v10620 = vunpack.c.l.b16 %v10315
    %v10621 = vunpack.c.l.b16 %v10316
    %v10622 = vunpack.c.l.b16 %v10317
    %v10623 = vunpack.c.l.b16 %v10318
    %v10624 = vunpack.c.l.b16 %v10319
    %v10625 = vpack.c.b16 %v10610, %v10609
    %v10626 = vpack.c.b16 %v10612, %v10611
    %v10627 = vpack.c.b16 %v10614, %v10613
    %v10628 = vpack.c.b16 %v10616, %v10615
    %v10629 = vpack.c.b16 %v10618, %v10617
    %v10630 = vpack.c.b16 %v10620, %v10619
    %v10631 = vpack.c.b16 %v10622, %v10621
    %v10632 = vpack.c.b16 %v10624, %v10623
    %10633 = vrot.lane.b32.xlu0 %v10625, 64
    %v10634 = vpop.permute.xlu0 %10633
    %10635 = vrot.lane.b32.xlu0 %v10626, 64
    %v10636 = vpop.permute.xlu0 %10635
    %10637 = vrot.lane.b32.xlu0 %v10627, 64
    %v10638 = vpop.permute.xlu0 %10637
    %10639 = vrot.lane.b32.xlu0 %v10628, 64
    %v10640 = vpop.permute.xlu0 %10639
    %10641 = vrot.lane.b32.xlu0 %v10629, 64
    %v10642 = vpop.permute.xlu0 %10641
    %10643 = vrot.lane.b32.xlu0 %v10630, 64
    %v10644 = vpop.permute.xlu0 %10643
    %10645 = vrot.lane.b32.xlu0 %v10631, 64
    %v10646 = vpop.permute.xlu0 %10645
    %10647 = vrot.lane.b32.xlu0 %v10632, 64
    %v10648 = vpop.permute.xlu0 %10647
    %v10657 = vunpack.c.l.b16 %v10320
    %v10658 = vunpack.c.l.b16 %v10321
    %v10659 = vunpack.c.l.b16 %v10322
    %v10660 = vunpack.c.l.b16 %v10323
    %v10661 = vunpack.c.l.b16 %v10324
    %v10662 = vunpack.c.l.b16 %v10325
    %v10663 = vunpack.c.l.b16 %v10326
    %v10664 = vunpack.c.l.b16 %v10327
    %v10665 = vpack.c.b16 %v10657, %v10657
    %v10666 = vpack.c.b16 %v10658, %v10658
    %v10667 = vpack.c.b16 %v10659, %v10659
    %v10668 = vpack.c.b16 %v10660, %v10660
    %v10669 = vpack.c.b16 %v10661, %v10661
    %v10670 = vpack.c.b16 %v10662, %v10662
    %v10671 = vpack.c.b16 %v10663, %v10663
    %v10672 = vpack.c.b16 %v10664, %v10664
    %v10674 = vshrl.u32 %v10625, 16
    %v10676 = vshll.u32 %v10625, 16
    %v10678 = vrot.slane %v10676, 1
    %v10679 = vor.u32 %v10674, %v10678
    %v10681 = vshll.u32 %v10665, 16
    %v10683 = vrot.slane %v10681, 1
    %v10684 = vsel %vm1862, %v10679, %v10683
    %v10686 = vshrl.u32 %v10626, 16
    %v10688 = vshll.u32 %v10626, 16
    %v10690 = vrot.slane %v10688, 1
    %v10691 = vor.u32 %v10686, %v10690
    %v10693 = vshll.u32 %v10666, 16
    %v10695 = vrot.slane %v10693, 1
    %v10696 = vsel %vm1862, %v10691, %v10695
    %v10698 = vshrl.u32 %v10627, 16
    %v10700 = vshll.u32 %v10627, 16
    %v10702 = vrot.slane %v10700, 1
    %v10703 = vor.u32 %v10698, %v10702
    %v10705 = vshll.u32 %v10667, 16
    %v10707 = vrot.slane %v10705, 1
    %v10708 = vsel %vm1862, %v10703, %v10707
    %v10710 = vshrl.u32 %v10628, 16
    %v10712 = vshll.u32 %v10628, 16
    %v10714 = vrot.slane %v10712, 1
    %v10715 = vor.u32 %v10710, %v10714
    %v10717 = vshll.u32 %v10668, 16
    %v10719 = vrot.slane %v10717, 1
    %v10720 = vsel %vm1862, %v10715, %v10719
    %v10722 = vshrl.u32 %v10629, 16
    %v10724 = vshll.u32 %v10629, 16
    %v10726 = vrot.slane %v10724, 1
    %v10727 = vor.u32 %v10722, %v10726
    %v10729 = vshll.u32 %v10669, 16
    %v10731 = vrot.slane %v10729, 1
    %v10732 = vsel %vm1862, %v10727, %v10731
    %v10734 = vshrl.u32 %v10630, 16
    %v10736 = vshll.u32 %v10630, 16
    %v10738 = vrot.slane %v10736, 1
    %v10739 = vor.u32 %v10734, %v10738
    %v10741 = vshll.u32 %v10670, 16
    %v10743 = vrot.slane %v10741, 1
    %v10744 = vsel %vm1862, %v10739, %v10743
    %v10746 = vshrl.u32 %v10631, 16
    %v10748 = vshll.u32 %v10631, 16
    %v10750 = vrot.slane %v10748, 1
    %v10751 = vor.u32 %v10746, %v10750
    %v10753 = vshll.u32 %v10671, 16
    %v10755 = vrot.slane %v10753, 1
    %v10756 = vsel %vm1862, %v10751, %v10755
    %v10758 = vshrl.u32 %v10632, 16
    %v10760 = vshll.u32 %v10632, 16
    %v10762 = vrot.slane %v10760, 1
    %v10763 = vor.u32 %v10758, %v10762
    %v10765 = vshll.u32 %v10672, 16
    %v10767 = vrot.slane %v10765, 1
    %v10768 = vsel %vm1862, %v10763, %v10767
    %v10777 = vunpack.c.l.b16 %v10328
    %v10778 = vunpack.c.l.b16 %v10329
    %v10779 = vunpack.c.l.b16 %v10330
    %v10780 = vunpack.c.l.b16 %v10331
    %v10781 = vunpack.c.l.b16 %v10332
    %v10782 = vunpack.c.l.b16 %v10333
    %v10783 = vunpack.c.l.b16 %v10334
    %v10784 = vunpack.c.l.b16 %v10335
    %v10785 = vpack.c.b16 %v10610, %v10777
    %v10786 = vpack.c.b16 %v10612, %v10778
    %v10787 = vpack.c.b16 %v10614, %v10779
    %v10788 = vpack.c.b16 %v10616, %v10780
    %v10789 = vpack.c.b16 %v10618, %v10781
    %v10790 = vpack.c.b16 %v10620, %v10782
    %v10791 = vpack.c.b16 %v10622, %v10783
    %v10792 = vpack.c.b16 %v10624, %v10784
    %v10793 = vrot.slane %v10785, 1
    %v10794 = vrot.slane %v10665, 1
    %v10795 = vsel %vm2407, %v10793, %v10794
    %v10796 = vrot.slane %v10786, 1
    %v10797 = vrot.slane %v10666, 1
    %v10798 = vsel %vm2407, %v10796, %v10797
    %v10799 = vrot.slane %v10787, 1
    %v10800 = vrot.slane %v10667, 1
    %v10801 = vsel %vm2407, %v10799, %v10800
    %v10802 = vrot.slane %v10788, 1
    %v10803 = vrot.slane %v10668, 1
    %v10804 = vsel %vm2407, %v10802, %v10803
    %v10805 = vrot.slane %v10789, 1
    %v10806 = vrot.slane %v10669, 1
    %v10807 = vsel %vm2407, %v10805, %v10806
    %v10808 = vrot.slane %v10790, 1
    %v10809 = vrot.slane %v10670, 1
    %v10810 = vsel %vm2407, %v10808, %v10809
    %v10811 = vrot.slane %v10791, 1
    %v10812 = vrot.slane %v10671, 1
    %v10813 = vsel %vm2407, %v10811, %v10812
    %v10814 = vrot.slane %v10792, 1
    %v10815 = vrot.slane %v10672, 1
    %v10816 = vsel %vm2407, %v10814, %v10815
    %10817 = vrot.lane.b32.xlu0 %v10795, 64
    %v10818 = vpop.permute.xlu0 %10817
    %10819 = vrot.lane.b32.xlu0 %v10798, 64
    %v10820 = vpop.permute.xlu0 %10819
    %10821 = vrot.lane.b32.xlu0 %v10801, 64
    %v10822 = vpop.permute.xlu0 %10821
    %10823 = vrot.lane.b32.xlu0 %v10804, 64
    %v10824 = vpop.permute.xlu0 %10823
    %10825 = vrot.lane.b32.xlu0 %v10807, 64
    %v10826 = vpop.permute.xlu0 %10825
    %10827 = vrot.lane.b32.xlu0 %v10810, 64
    %v10828 = vpop.permute.xlu0 %10827
    %10829 = vrot.lane.b32.xlu0 %v10813, 64
    %v10830 = vpop.permute.xlu0 %10829
    %10831 = vrot.lane.b32.xlu0 %v10816, 64
    %v10832 = vpop.permute.xlu0 %10831
    %v10849 = vunpack.c.l.b16 %v10337
    %v10850 = vunpack.c.l.b16 %v10338
    %v10851 = vunpack.c.l.b16 %v10339
    %v10852 = vunpack.c.l.b16 %v10340
    %v10853 = vunpack.c.l.b16 %v10341
    %v10854 = vunpack.c.l.b16 %v10342
    %v10855 = vunpack.c.l.b16 %v10343
    %v10856 = vunpack.c.l.b16 %v10344
    %v10857 = vunpack.c.l.b16 %v10345
    %v10858 = vunpack.c.l.b16 %v10346
    %v10859 = vunpack.c.l.b16 %v10347
    %v10860 = vunpack.c.l.b16 %v10348
    %v10861 = vunpack.c.l.b16 %v10349
    %v10862 = vunpack.c.l.b16 %v10350
    %v10863 = vunpack.c.l.b16 %v10351
    %v10864 = vunpack.c.l.b16 %v10352
    %v10865 = vpack.c.b16 %v10850, %v10849
    %v10866 = vpack.c.b16 %v10852, %v10851
    %v10867 = vpack.c.b16 %v10854, %v10853
    %v10868 = vpack.c.b16 %v10856, %v10855
    %v10869 = vpack.c.b16 %v10858, %v10857
    %v10870 = vpack.c.b16 %v10860, %v10859
    %v10871 = vpack.c.b16 %v10862, %v10861
    %v10872 = vpack.c.b16 %v10864, %v10863
    %v10881 = vunpack.c.l.b16 %v10353
    %v10882 = vunpack.c.l.b16 %v10354
    %v10883 = vunpack.c.l.b16 %v10355
    %v10884 = vunpack.c.l.b16 %v10356
    %v10885 = vunpack.c.l.b16 %v10357
    %v10886 = vunpack.c.l.b16 %v10358
    %v10887 = vunpack.c.l.b16 %v10359
    %v10888 = vunpack.c.l.b16 %v10360
    %v10889 = vpack.c.b16 %v10881, %v10881
    %v10890 = vpack.c.b16 %v10882, %v10882
    %v10891 = vpack.c.b16 %v10883, %v10883
    %v10892 = vpack.c.b16 %v10884, %v10884
    %v10893 = vpack.c.b16 %v10885, %v10885
    %v10894 = vpack.c.b16 %v10886, %v10886
    %v10895 = vpack.c.b16 %v10887, %v10887
    %v10896 = vpack.c.b16 %v10888, %v10888
    %v10898 = vshrl.u32 %v10865, 16
    %v10900 = vshll.u32 %v10865, 16
    %v10902 = vrot.slane %v10900, 1
    %v10903 = vor.u32 %v10898, %v10902
    %v10905 = vshll.u32 %v10889, 16
    %v10907 = vrot.slane %v10905, 1
    %v10908 = vsel %vm1862, %v10903, %v10907
    %v10910 = vshrl.u32 %v10866, 16
    %v10912 = vshll.u32 %v10866, 16
    %v10914 = vrot.slane %v10912, 1
    %v10915 = vor.u32 %v10910, %v10914
    %v10917 = vshll.u32 %v10890, 16
    %v10919 = vrot.slane %v10917, 1
    %v10920 = vsel %vm1862, %v10915, %v10919
    %v10922 = vshrl.u32 %v10867, 16
    %v10924 = vshll.u32 %v10867, 16
    %v10926 = vrot.slane %v10924, 1
    %v10927 = vor.u32 %v10922, %v10926
    %v10929 = vshll.u32 %v10891, 16
    %v10931 = vrot.slane %v10929, 1
    %v10932 = vsel %vm1862, %v10927, %v10931
    %v10934 = vshrl.u32 %v10868, 16
    %v10936 = vshll.u32 %v10868, 16
    %v10938 = vrot.slane %v10936, 1
    %v10939 = vor.u32 %v10934, %v10938
    %v10941 = vshll.u32 %v10892, 16
    %v10943 = vrot.slane %v10941, 1
    %v10944 = vsel %vm1862, %v10939, %v10943
    %v10946 = vshrl.u32 %v10869, 16
    %v10948 = vshll.u32 %v10869, 16
    %v10950 = vrot.slane %v10948, 1
    %v10951 = vor.u32 %v10946, %v10950
    %v10953 = vshll.u32 %v10893, 16
    %v10955 = vrot.slane %v10953, 1
    %v10956 = vsel %vm1862, %v10951, %v10955
    %v10958 = vshrl.u32 %v10870, 16
    %v10960 = vshll.u32 %v10870, 16
    %v10962 = vrot.slane %v10960, 1
    %v10963 = vor.u32 %v10958, %v10962
    %v10965 = vshll.u32 %v10894, 16
    %v10967 = vrot.slane %v10965, 1
    %v10968 = vsel %vm1862, %v10963, %v10967
    %v10970 = vshrl.u32 %v10871, 16
    %v10972 = vshll.u32 %v10871, 16
    %v10974 = vrot.slane %v10972, 1
    %v10975 = vor.u32 %v10970, %v10974
    %v10977 = vshll.u32 %v10895, 16
    %v10979 = vrot.slane %v10977, 1
    %v10980 = vsel %vm1862, %v10975, %v10979
    %v10982 = vshrl.u32 %v10872, 16
    %v10984 = vshll.u32 %v10872, 16
    %v10986 = vrot.slane %v10984, 1
    %v10987 = vor.u32 %v10982, %v10986
    %v10989 = vshll.u32 %v10896, 16
    %v10991 = vrot.slane %v10989, 1
    %v10992 = vsel %vm1862, %v10987, %v10991
    %10993 = vrot.lane.b32.xlu0 %v10908, 64
    %v10994 = vpop.permute.xlu0 %10993
    %10995 = vrot.lane.b32.xlu0 %v10920, 64
    %v10996 = vpop.permute.xlu0 %10995
    %10997 = vrot.lane.b32.xlu0 %v10932, 64
    %v10998 = vpop.permute.xlu0 %10997
    %10999 = vrot.lane.b32.xlu0 %v10944, 64
    %v11000 = vpop.permute.xlu0 %10999
    %11001 = vrot.lane.b32.xlu0 %v10956, 64
    %v11002 = vpop.permute.xlu0 %11001
    %11003 = vrot.lane.b32.xlu0 %v10968, 64
    %v11004 = vpop.permute.xlu0 %11003
    %11005 = vrot.lane.b32.xlu0 %v10980, 64
    %v11006 = vpop.permute.xlu0 %11005
    %11007 = vrot.lane.b32.xlu0 %v10992, 64
    %v11008 = vpop.permute.xlu0 %11007
    %v11017 = vunpack.c.l.b16 %v10361
    %v11018 = vunpack.c.l.b16 %v10362
    %v11019 = vunpack.c.l.b16 %v10363
    %v11020 = vunpack.c.l.b16 %v10364
    %v11021 = vunpack.c.l.b16 %v10365
    %v11022 = vunpack.c.l.b16 %v10366
    %v11023 = vunpack.c.l.b16 %v10367
    %v11024 = vunpack.c.l.b16 %v10368
    %v11025 = vpack.c.b16 %v10850, %v11017
    %v11026 = vpack.c.b16 %v10852, %v11018
    %v11027 = vpack.c.b16 %v10854, %v11019
    %v11028 = vpack.c.b16 %v10856, %v11020
    %v11029 = vpack.c.b16 %v10858, %v11021
    %v11030 = vpack.c.b16 %v10860, %v11022
    %v11031 = vpack.c.b16 %v10862, %v11023
    %v11032 = vpack.c.b16 %v10864, %v11024
    %v11033 = vrot.slane %v11025, 1
    %v11034 = vrot.slane %v10889, 1
    %v11035 = vsel %vm2407, %v11033, %v11034
    %v11036 = vrot.slane %v11026, 1
    %v11037 = vrot.slane %v10890, 1
    %v11038 = vsel %vm2407, %v11036, %v11037
    %v11039 = vrot.slane %v11027, 1
    %v11040 = vrot.slane %v10891, 1
    %v11041 = vsel %vm2407, %v11039, %v11040
    %v11042 = vrot.slane %v11028, 1
    %v11043 = vrot.slane %v10892, 1
    %v11044 = vsel %vm2407, %v11042, %v11043
    %v11045 = vrot.slane %v11029, 1
    %v11046 = vrot.slane %v10893, 1
    %v11047 = vsel %vm2407, %v11045, %v11046
    %v11048 = vrot.slane %v11030, 1
    %v11049 = vrot.slane %v10894, 1
    %v11050 = vsel %vm2407, %v11048, %v11049
    %v11051 = vrot.slane %v11031, 1
    %v11052 = vrot.slane %v10895, 1
    %v11053 = vsel %vm2407, %v11051, %v11052
    %v11054 = vrot.slane %v11032, 1
    %v11055 = vrot.slane %v10896, 1
    %v11056 = vsel %vm2407, %v11054, %v11055
    %v11058 = vsel %vm5514, %v10401, %v10530
    %v11061 = vsel %vm5514, %v10402, %v10532
    %v11064 = vsel %vm5514, %v10403, %v10534
    %v11067 = vsel %vm5514, %v10404, %v10536
    %v11070 = vsel %vm5514, %v10405, %v10538
    %v11073 = vsel %vm5514, %v10406, %v10540
    %v11076 = vsel %vm5514, %v10407, %v10542
    %v11079 = vsel %vm5514, %v10408, %v10544
    %v11083 = vsel %vm5514, %v10571, %v10634
    %v11087 = vsel %vm5514, %v10574, %v10636
    %v11091 = vsel %vm5514, %v10577, %v10638
    %v11095 = vsel %vm5514, %v10580, %v10640
    %v11099 = vsel %vm5514, %v10583, %v10642
    %v11103 = vsel %vm5514, %v10586, %v10644
    %v11107 = vsel %vm5514, %v10589, %v10646
    %v11111 = vsel %vm5514, %v10592, %v10648
    %v11115 = vsel %vm5514, %v10684, %v10818
    %v11119 = vsel %vm5514, %v10696, %v10820
    %v11123 = vsel %vm5514, %v10708, %v10822
    %v11127 = vsel %vm5514, %v10720, %v10824
    %v11131 = vsel %vm5514, %v10732, %v10826
    %v11135 = vsel %vm5514, %v10744, %v10828
    %v11139 = vsel %vm5514, %v10756, %v10830
    %v11143 = vsel %vm5514, %v10768, %v10832
    %v11146 = vsel %vm5514, %v10865, %v10994
    %v11149 = vsel %vm5514, %v10866, %v10996
    %v11152 = vsel %vm5514, %v10867, %v10998
    %v11155 = vsel %vm5514, %v10868, %v11000
    %v11158 = vsel %vm5514, %v10869, %v11002
    %v11161 = vsel %vm5514, %v10870, %v11004
    %v11164 = vsel %vm5514, %v10871, %v11006
    %v11167 = vsel %vm5514, %v10872, %v11008
    %v11169 = vld [vmem:[%s7] sm:$0xf]
    %v11170 = vld [vmem:[%s7 + $0x4] sm:$0xf]
    %v11171 = vld [vmem:[%s7 + $0x8] sm:$0xf]
    %v11172 = vld [vmem:[%s7 + $0xc] sm:$0xf]
    %v11173 = vld [vmem:[%s7 + $0x10] sm:$0xf]
    %v11174 = vld [vmem:[%s7 + $0x14] sm:$0xf]
    %v11175 = vld [vmem:[%s7 + $0x18] sm:$0xf]
    %v11176 = vld [vmem:[%s7 + $0x1c] sm:$0xf]
    %v11177 = vld [vmem:[%s7 + $0x20] sm:$0xf]
    %v11178 = vld [vmem:[%s7 + $0x24] sm:$0xf]
    %v11179 = vld [vmem:[%s7 + $0x28] sm:$0xf]
    %v11180 = vld [vmem:[%s7 + $0x2c] sm:$0xf]
    %v11181 = vld [vmem:[%s7 + $0x30] sm:$0xf]
    %v11182 = vld [vmem:[%s7 + $0x34] sm:$0xf]
    %v11183 = vld [vmem:[%s7 + $0x38] sm:$0xf]
    %v11184 = vld [vmem:[%s7 + $0x3c] sm:$0xf]
    %v11185 = vld [vmem:[%s7 + $0x40] sm:$0xf]
    %v11186 = vld [vmem:[%s7 + $0x44] sm:$0xf]
    %v11187 = vld [vmem:[%s7 + $0x48] sm:$0xf]
    %v11188 = vld [vmem:[%s7 + $0x4c] sm:$0xf]
    %v11189 = vld [vmem:[%s7 + $0x50] sm:$0xf]
    %v11190 = vld [vmem:[%s7 + $0x54] sm:$0xf]
    %v11191 = vld [vmem:[%s7 + $0x58] sm:$0xf]
    %v11192 = vld [vmem:[%s7 + $0x5c] sm:$0xf]
    %v11193 = vld [vmem:[%s7 + $0x60] sm:$0xf]
    %v11194 = vld [vmem:[%s7 + $0x64] sm:$0xf]
    %v11195 = vld [vmem:[%s7 + $0x68] sm:$0xf]
    %v11196 = vld [vmem:[%s7 + $0x6c] sm:$0xf]
    %v11197 = vld [vmem:[%s7 + $0x70] sm:$0xf]
    %v11198 = vld [vmem:[%s7 + $0x74] sm:$0xf]
    %v11199 = vld [vmem:[%s7 + $0x78] sm:$0xf]
    %v11200 = vld [vmem:[%s7 + $0x7c] sm:$0xf]
    %v11201 = vld [vmem:[%s7 + $0x80] sm:$0xf]
    %v11202 = vld [vmem:[%s7 + $0x84] sm:$0xf]
    %v11203 = vld [vmem:[%s7 + $0x88] sm:$0xf]
    %v11204 = vld [vmem:[%s7 + $0x8c] sm:$0xf]
    %v11205 = vld [vmem:[%s7 + $0x90] sm:$0xf]
    %v11206 = vld [vmem:[%s7 + $0x94] sm:$0xf]
    %v11207 = vld [vmem:[%s7 + $0x98] sm:$0xf]
    %v11208 = vld [vmem:[%s7 + $0x9c] sm:$0xf]
    %v11209 = vld [vmem:[%s7 + $0xa0] sm:$0xf]
    %v11210 = vld [vmem:[%s7 + $0xa4] sm:$0xf]
    %v11211 = vld [vmem:[%s7 + $0xa8] sm:$0xf]
    %v11212 = vld [vmem:[%s7 + $0xac] sm:$0xf]
    %v11213 = vld [vmem:[%s7 + $0xb0] sm:$0xf]
    %v11214 = vld [vmem:[%s7 + $0xb4] sm:$0xf]
    %v11215 = vld [vmem:[%s7 + $0xb8] sm:$0xf]
    %v11216 = vld [vmem:[%s7 + $0xbc] sm:$0xf]
    %v11217 = vld [vmem:[%s7 + $0xc0] sm:$0xf]
    %v11218 = vld [vmem:[%s7 + $0xc4] sm:$0xf]
    %v11219 = vld [vmem:[%s7 + $0xc8] sm:$0xf]
    %v11220 = vld [vmem:[%s7 + $0xcc] sm:$0xf]
    %v11221 = vld [vmem:[%s7 + $0xd0] sm:$0xf]
    %v11222 = vld [vmem:[%s7 + $0xd4] sm:$0xf]
    %v11223 = vld [vmem:[%s7 + $0xd8] sm:$0xf]
    %v11224 = vld [vmem:[%s7 + $0xdc] sm:$0xf]
    %v11225 = vld [vmem:[%s7 + $0xe0] sm:$0xf]
    %v11226 = vld [vmem:[%s7 + $0xe4] sm:$0xf]
    %v11227 = vld [vmem:[%s7 + $0xe8] sm:$0xf]
    %v11228 = vld [vmem:[%s7 + $0xec] sm:$0xf]
    %v11229 = vld [vmem:[%s7 + $0xf0] sm:$0xf]
    %v11230 = vld [vmem:[%s7 + $0xf4] sm:$0xf]
    %v11231 = vld [vmem:[%s7 + $0xf8] sm:$0xf]
    %v11232 = vld [vmem:[%s7 + $0xfc] sm:$0xf]
    %v11233 = vld [vmem:[%s7 + $0x100] sm:$0xf]
    %v11234 = vld [vmem:[%s7 + $0x104] sm:$0xf]
    %v11235 = vld [vmem:[%s7 + $0x108] sm:$0xf]
    %v11236 = vld [vmem:[%s7 + $0x10c] sm:$0xf]
    %v11237 = vld [vmem:[%s7 + $0x110] sm:$0xf]
    %v11238 = vld [vmem:[%s7 + $0x114] sm:$0xf]
    %v11239 = vld [vmem:[%s7 + $0x118] sm:$0xf]
    %v11240 = vld [vmem:[%s7 + $0x11c] sm:$0xf]
    %v11313 = vunpack.c.l.b16 %v11169
    %v11314 = vunpack.c.l.b16 %v11170
    %v11315 = vunpack.c.l.b16 %v11171
    %v11316 = vunpack.c.l.b16 %v11172
    %v11317 = vunpack.c.l.b16 %v11173
    %v11318 = vunpack.c.l.b16 %v11174
    %v11319 = vunpack.c.l.b16 %v11175
    %v11320 = vunpack.c.l.b16 %v11176
    %v11321 = vunpack.c.l.b16 %v11177
    %v11322 = vunpack.c.l.b16 %v11178
    %v11323 = vunpack.c.l.b16 %v11179
    %v11324 = vunpack.c.l.b16 %v11180
    %v11325 = vunpack.c.l.b16 %v11181
    %v11326 = vunpack.c.l.b16 %v11182
    %v11327 = vunpack.c.l.b16 %v11183
    %v11328 = vunpack.c.l.b16 %v11184
    %v11329 = vunpack.c.l.b16 %v11185
    %v11330 = vunpack.c.l.b16 %v11186
    %v11331 = vunpack.c.l.b16 %v11187
    %v11332 = vunpack.c.l.b16 %v11188
    %v11333 = vunpack.c.l.b16 %v11189
    %v11334 = vunpack.c.l.b16 %v11190
    %v11335 = vunpack.c.l.b16 %v11191
    %v11336 = vunpack.c.l.b16 %v11192
    %v11337 = vunpack.c.l.b16 %v11193
    %v11338 = vunpack.c.l.b16 %v11194
    %v11339 = vunpack.c.l.b16 %v11195
    %v11340 = vunpack.c.l.b16 %v11196
    %v11341 = vunpack.c.l.b16 %v11197
    %v11342 = vunpack.c.l.b16 %v11198
    %v11343 = vunpack.c.l.b16 %v11199
    %v11344 = vunpack.c.l.b16 %v11200
    %v11345 = vunpack.c.l.b16 %v11201
    %v11346 = vunpack.c.l.b16 %v11202
    %v11347 = vunpack.c.l.b16 %v11203
    %v11348 = vunpack.c.l.b16 %v11204
    %v11349 = vunpack.c.l.b16 %v11205
    %v11350 = vunpack.c.l.b16 %v11206
    %v11351 = vunpack.c.l.b16 %v11207
    %v11352 = vunpack.c.l.b16 %v11208
    %v11353 = vunpack.c.l.b16 %v11209
    %v11354 = vunpack.c.l.b16 %v11210
    %v11355 = vunpack.c.l.b16 %v11211
    %v11356 = vunpack.c.l.b16 %v11212
    %v11357 = vunpack.c.l.b16 %v11213
    %v11358 = vunpack.c.l.b16 %v11214
    %v11359 = vunpack.c.l.b16 %v11215
    %v11360 = vunpack.c.l.b16 %v11216
    %v11361 = vunpack.c.l.b16 %v11217
    %v11362 = vunpack.c.l.b16 %v11218
    %v11363 = vunpack.c.l.b16 %v11219
    %v11364 = vunpack.c.l.b16 %v11220
    %v11365 = vunpack.c.l.b16 %v11221
    %v11366 = vunpack.c.l.b16 %v11222
    %v11367 = vunpack.c.l.b16 %v11223
    %v11368 = vunpack.c.l.b16 %v11224
    %v11369 = vunpack.c.l.b16 %v11225
    %v11370 = vunpack.c.l.b16 %v11226
    %v11371 = vunpack.c.l.b16 %v11227
    %v11372 = vunpack.c.l.b16 %v11228
    %v11373 = vunpack.c.l.b16 %v11229
    %v11374 = vunpack.c.l.b16 %v11230
    %v11375 = vunpack.c.l.b16 %v11231
    %v11376 = vunpack.c.l.b16 %v11232
    %v11377 = vunpack.c.l.b16 %v11233
    %v11378 = vunpack.c.l.b16 %v11234
    %v11379 = vunpack.c.l.b16 %v11235
    %v11380 = vunpack.c.l.b16 %v11236
    %v11381 = vunpack.c.l.b16 %v11237
    %v11382 = vunpack.c.l.b16 %v11238
    %v11383 = vunpack.c.l.b16 %v11239
    %v11384 = vunpack.c.l.b16 %v11240
    %v11385 = vpack.c.b16 %v11314, %v11313
    %v11386 = vpack.c.b16 %v11316, %v11315
    %v11387 = vpack.c.b16 %v11318, %v11317
    %v11388 = vpack.c.b16 %v11320, %v11319
    %v11389 = vpack.c.b16 %v11322, %v11321
    %v11390 = vpack.c.b16 %v11324, %v11323
    %v11391 = vpack.c.b16 %v11326, %v11325
    %v11392 = vpack.c.b16 %v11328, %v11327
    %v11393 = vpack.c.b16 %v11330, %v11329
    %v11394 = vpack.c.b16 %v11332, %v11331
    %v11395 = vpack.c.b16 %v11334, %v11333
    %v11396 = vpack.c.b16 %v11336, %v11335
    %v11397 = vpack.c.b16 %v11338, %v11337
    %v11398 = vpack.c.b16 %v11340, %v11339
    %v11399 = vpack.c.b16 %v11342, %v11341
    %v11400 = vpack.c.b16 %v11344, %v11343
    %v11401 = vpack.c.b16 %v11346, %v11345
    %v11402 = vpack.c.b16 %v11348, %v11347
    %v11403 = vpack.c.b16 %v11350, %v11349
    %v11404 = vpack.c.b16 %v11352, %v11351
    %v11405 = vpack.c.b16 %v11354, %v11353
    %v11406 = vpack.c.b16 %v11356, %v11355
    %v11407 = vpack.c.b16 %v11358, %v11357
    %v11408 = vpack.c.b16 %v11360, %v11359
    %v11409 = vpack.c.b16 %v11362, %v11361
    %v11410 = vpack.c.b16 %v11364, %v11363
    %v11411 = vpack.c.b16 %v11366, %v11365
    %v11412 = vpack.c.b16 %v11368, %v11367
    %v11413 = vpack.c.b16 %v11370, %v11369
    %v11414 = vpack.c.b16 %v11372, %v11371
    %v11415 = vpack.c.b16 %v11374, %v11373
    %v11416 = vpack.c.b16 %v11376, %v11375
    %v11417 = vpack.c.b16 %v11378, %v11377
    %v11418 = vpack.c.b16 %v11380, %v11379
    %v11419 = vpack.c.b16 %v11382, %v11381
    %v11420 = vpack.c.b16 %v11384, %v11383
    %v11458 = vsel %vm5514, %v11035, 0
    %v11461 = vsel %vm5514, %v11038, 0
    %v11464 = vsel %vm5514, %v11041, 0
    %v11467 = vsel %vm5514, %v11044, 0
    %v11470 = vsel %vm5514, %v11047, 0
    %v11473 = vsel %vm5514, %v11050, 0
    %v11476 = vsel %vm5514, %v11053, 0
    %v11479 = vsel %vm5514, %v11056, 0
    %11481 = vmatprep.subr.bf16.mxu0 0
    %11482 = vmatpush1.bf16.msra.mxu0 %v11392
    %11483 = vmatprep.subr.bf16.mxu0 0
    %11484 = vmatpush1.bf16.msra.mxu0 %v11391
    %11485 = vmatprep.subr.bf16.mxu0 0
    %11486 = vmatpush1.bf16.msra.mxu0 %v11390
    %11487 = vmatprep.subr.bf16.mxu0 0
    %11488 = vmatpush1.bf16.msra.mxu0 %v11389
    %11489 = vmatprep.subr.bf16.mxu0 0
    %11490 = vmatpush1.bf16.msra.mxu0 %v11388
    %11491 = vmatprep.subr.bf16.mxu0 0
    %11492 = vmatpush1.bf16.msra.mxu0 %v11387
    %11493 = vmatprep.subr.bf16.mxu0 0
    %11494 = vmatpush1.bf16.msra.mxu0 %v11386
    %11495 = vmatprep.subr.bf16.mxu0 0
    %11496 = vmatpush1.bf16.msra.mxu0 %v11385
    %11497 = vmatprep.subr.bf16.mxu0 0
    %11498 = vmatpush2.bf16.msra.mxu0 %v11400
    %11499 = vmatprep.subr.bf16.mxu0 0
    %11500 = vmatpush2.bf16.msra.mxu0 %v11399
    %11501 = vmatprep.subr.bf16.mxu0 0
    %11502 = vmatpush2.bf16.msra.mxu0 %v11398
    %11503 = vmatprep.subr.bf16.mxu0 0
    %11504 = vmatpush2.bf16.msra.mxu0 %v11397
    %11505 = vmatprep.subr.bf16.mxu0 0
    %11506 = vmatpush2.bf16.msra.mxu0 %v11396
    %11507 = vmatprep.subr.bf16.mxu0 0
    %11508 = vmatpush2.bf16.msra.mxu0 %v11395
    %11509 = vmatprep.subr.bf16.mxu0 0
    %11510 = vmatpush2.bf16.msra.mxu0 %v11394
    %11511 = vmatprep.subr.bf16.mxu0 0
    %11512 = vmatpush2.bf16.msra.mxu0 %v11393
    %11513 = vmatprep.mubr.bf16.mxu0 %v11083
    %11514 = vmatmul.mubr.bf16.gmra.mxu0 %v11058
    %v11515 = vpop.f32.mrf.mxu0
    %v11516 = vadd.f32 0.0, %v11515
    %v11517 = vpop.f32.mrf.mxu0
    %v11518 = vpop.f32.mrf.mxu0
    %v11519 = vadd.f32 0.0, %v11518
    %v11520 = vpop.f32.mrf.mxu0
    %11521 = vmatprep.mubr.bf16.mxu0 %v11087
    %11522 = vmatmul.mubr.bf16.gmra.mxu0 %v11061
    %v11523 = vpop.f32.mrf.mxu0
    %v11524 = vadd.f32 0.0, %v11523
    %v11525 = vpop.f32.mrf.mxu0
    %v11526 = vpop.f32.mrf.mxu0
    %v11527 = vadd.f32 0.0, %v11526
    %v11528 = vpop.f32.mrf.mxu0
    %11529 = vmatprep.mubr.bf16.mxu0 %v11091
    %11530 = vmatmul.mubr.bf16.gmra.mxu0 %v11064
    %v11531 = vpop.f32.mrf.mxu0
    %v11532 = vadd.f32 0.0, %v11531
    %v11533 = vpop.f32.mrf.mxu0
    %v11534 = vpop.f32.mrf.mxu0
    %v11535 = vadd.f32 0.0, %v11534
    %v11536 = vpop.f32.mrf.mxu0
    %11537 = vmatprep.mubr.bf16.mxu0 %v11095
    %11538 = vmatmul.mubr.bf16.gmra.mxu0 %v11067
    %v11539 = vpop.f32.mrf.mxu0
    %v11540 = vadd.f32 0.0, %v11539
    %v11541 = vpop.f32.mrf.mxu0
    %v11542 = vpop.f32.mrf.mxu0
    %v11543 = vadd.f32 0.0, %v11542
    %v11544 = vpop.f32.mrf.mxu0
    %11545 = vmatprep.mubr.bf16.mxu0 %v11099
    %11546 = vmatmul.mubr.bf16.gmra.mxu0 %v11070
    %v11547 = vpop.f32.mrf.mxu0
    %v11548 = vadd.f32 0.0, %v11547
    %v11549 = vpop.f32.mrf.mxu0
    %v11550 = vpop.f32.mrf.mxu0
    %v11551 = vadd.f32 0.0, %v11550
    %v11552 = vpop.f32.mrf.mxu0
    %11553 = vmatprep.mubr.bf16.mxu0 %v11103
    %11554 = vmatmul.mubr.bf16.gmra.mxu0 %v11073
    %v11555 = vpop.f32.mrf.mxu0
    %v11556 = vadd.f32 0.0, %v11555
    %v11557 = vpop.f32.mrf.mxu0
    %v11558 = vpop.f32.mrf.mxu0
    %v11559 = vadd.f32 0.0, %v11558
    %v11560 = vpop.f32.mrf.mxu0
    %11561 = vmatprep.mubr.bf16.mxu0 %v11107
    %11562 = vmatmul.mubr.bf16.gmra.mxu0 %v11076
    %v11563 = vpop.f32.mrf.mxu0
    %v11564 = vadd.f32 0.0, %v11563
    %v11565 = vpop.f32.mrf.mxu0
    %v11566 = vpop.f32.mrf.mxu0
    %v11567 = vadd.f32 0.0, %v11566
    %v11568 = vpop.f32.mrf.mxu0
    %11569 = vmatprep.mubr.bf16.mxu0 %v11111
    %11570 = vmatmul.mubr.bf16.gmra.mxu0 %v11079
    %v11571 = vpop.f32.mrf.mxu0
    %v11572 = vadd.f32 0.0, %v11571
    %v11573 = vpop.f32.mrf.mxu0
    %v11574 = vpop.f32.mrf.mxu0
    %v11575 = vadd.f32 0.0, %v11574
    %v11576 = vpop.f32.mrf.mxu0
    %11577 = vdwg.mxu0
    %11578 = vmatprep.subr.bf16.mxu0 0
    %11579 = vmatpush1.bf16.msra.mxu0 %v11408
    %11580 = vmatprep.subr.bf16.mxu0 0
    %11581 = vmatpush1.bf16.msra.mxu0 %v11407
    %11582 = vmatprep.subr.bf16.mxu0 0
    %11583 = vmatpush1.bf16.msra.mxu0 %v11406
    %11584 = vmatprep.subr.bf16.mxu0 0
    %11585 = vmatpush1.bf16.msra.mxu0 %v11405
    %11586 = vmatprep.subr.bf16.mxu0 0
    %11587 = vmatpush1.bf16.msra.mxu0 %v11404
    %11588 = vmatprep.subr.bf16.mxu0 0
    %11589 = vmatpush1.bf16.msra.mxu0 %v11403
    %11590 = vmatprep.subr.bf16.mxu0 0
    %11591 = vmatpush1.bf16.msra.mxu0 %v11402
    %11592 = vmatprep.subr.bf16.mxu0 0
    %11593 = vmatpush1.bf16.msra.mxu0 %v11401
    %11594 = vmatprep.subr.bf16.mxu0 0
    %11595 = vmatpush2.bf16.msra.mxu0 %v11416
    %11596 = vmatprep.subr.bf16.mxu0 0
    %11597 = vmatpush2.bf16.msra.mxu0 %v11415
    %11598 = vmatprep.subr.bf16.mxu0 0
    %11599 = vmatpush2.bf16.msra.mxu0 %v11414
    %11600 = vmatprep.subr.bf16.mxu0 0
    %11601 = vmatpush2.bf16.msra.mxu0 %v11413
    %11602 = vmatprep.subr.bf16.mxu0 0
    %11603 = vmatpush2.bf16.msra.mxu0 %v11412
    %11604 = vmatprep.subr.bf16.mxu0 0
    %11605 = vmatpush2.bf16.msra.mxu0 %v11411
    %11606 = vmatprep.subr.bf16.mxu0 0
    %11607 = vmatpush2.bf16.msra.mxu0 %v11410
    %11608 = vmatprep.subr.bf16.mxu0 0
    %11609 = vmatpush2.bf16.msra.mxu0 %v11409
    %11610 = vmatprep.mubr.bf16.mxu0 %v11146
    %11611 = vmatmul.mubr.bf16.gmra.mxu0 %v11115
    %v11612 = vpop.f32.mrf.mxu0
    %v11613 = vadd.f32 %v11516, %v11612
    %v11614 = vpop.f32.mrf.mxu0
    %v11615 = vpop.f32.mrf.mxu0
    %v11616 = vadd.f32 %v11519, %v11615
    %v11617 = vpop.f32.mrf.mxu0
    %11618 = vmatprep.mubr.bf16.mxu0 %v11149
    %11619 = vmatmul.mubr.bf16.gmra.mxu0 %v11119
    %v11620 = vpop.f32.mrf.mxu0
    %v11621 = vadd.f32 %v11524, %v11620
    %v11622 = vpop.f32.mrf.mxu0
    %v11623 = vpop.f32.mrf.mxu0
    %v11624 = vadd.f32 %v11527, %v11623
    %v11625 = vpop.f32.mrf.mxu0
    %11626 = vmatprep.mubr.bf16.mxu0 %v11152
    %11627 = vmatmul.mubr.bf16.gmra.mxu0 %v11123
    %v11628 = vpop.f32.mrf.mxu0
    %v11629 = vadd.f32 %v11532, %v11628
    %v11630 = vpop.f32.mrf.mxu0
    %v11631 = vpop.f32.mrf.mxu0
    %v11632 = vadd.f32 %v11535, %v11631
    %v11633 = vpop.f32.mrf.mxu0
    %11634 = vmatprep.mubr.bf16.mxu0 %v11155
    %11635 = vmatmul.mubr.bf16.gmra.mxu0 %v11127
    %v11636 = vpop.f32.mrf.mxu0
    %v11637 = vadd.f32 %v11540, %v11636
    %v11638 = vpop.f32.mrf.mxu0
    %v11639 = vpop.f32.mrf.mxu0
    %v11640 = vadd.f32 %v11543, %v11639
    %v11641 = vpop.f32.mrf.mxu0
    %11642 = vmatprep.mubr.bf16.mxu0 %v11158
    %11643 = vmatmul.mubr.bf16.gmra.mxu0 %v11131
    %v11644 = vpop.f32.mrf.mxu0
    %v11645 = vadd.f32 %v11548, %v11644
    %v11646 = vpop.f32.mrf.mxu0
    %v11647 = vpop.f32.mrf.mxu0
    %v11648 = vadd.f32 %v11551, %v11647
    %v11649 = vpop.f32.mrf.mxu0
    %11650 = vmatprep.mubr.bf16.mxu0 %v11161
    %11651 = vmatmul.mubr.bf16.gmra.mxu0 %v11135
    %v11652 = vpop.f32.mrf.mxu0
    %v11653 = vadd.f32 %v11556, %v11652
    %v11654 = vpop.f32.mrf.mxu0
    %v11655 = vpop.f32.mrf.mxu0
    %v11656 = vadd.f32 %v11559, %v11655
    %v11657 = vpop.f32.mrf.mxu0
    %11658 = vmatprep.mubr.bf16.mxu0 %v11164
    %11659 = vmatmul.mubr.bf16.gmra.mxu0 %v11139
    %v11660 = vpop.f32.mrf.mxu0
    %v11661 = vadd.f32 %v11564, %v11660
    %v11662 = vpop.f32.mrf.mxu0
    %v11663 = vpop.f32.mrf.mxu0
    %v11664 = vadd.f32 %v11567, %v11663
    %v11665 = vpop.f32.mrf.mxu0
    %11666 = vmatprep.mubr.bf16.mxu0 %v11167
    %11667 = vmatmul.mubr.bf16.gmra.mxu0 %v11143
    %v11668 = vpop.f32.mrf.mxu0
    %v11669 = vadd.f32 %v11572, %v11668
    %v11670 = vpop.f32.mrf.mxu0
    %v11671 = vpop.f32.mrf.mxu0
    %v11672 = vadd.f32 %v11575, %v11671
    %v11673 = vpop.f32.mrf.mxu0
    %11674 = vdwg.mxu0
    %11675 = vmatprep.subr.bf16.mxu0 0
    %11676 = vmatpush1.bf16.msra.mxu0 0
    %11677 = vmatprep.subr.bf16.mxu0 0
    %11678 = vmatpush1.bf16.msra.mxu0 0
    %11679 = vmatprep.subr.bf16.mxu0 0
    %11680 = vmatpush1.bf16.msra.mxu0 0
    %11681 = vmatprep.subr.bf16.mxu0 0
    %11682 = vmatpush1.bf16.msra.mxu0 0
    %11683 = vmatprep.subr.bf16.mxu0 0
    %11684 = vmatpush1.bf16.msra.mxu0 %v11420
    %11685 = vmatprep.subr.bf16.mxu0 0
    %11686 = vmatpush1.bf16.msra.mxu0 %v11419
    %11687 = vmatprep.subr.bf16.mxu0 0
    %11688 = vmatpush1.bf16.msra.mxu0 %v11418
    %11689 = vmatprep.subr.bf16.mxu0 0
    %11690 = vmatpush1.bf16.msra.mxu0 %v11417
    %11691 = vmatprep.subr.bf16.mxu0 0
    %11692 = vmatpush2.bf16.msra.mxu0 0
    %11693 = vmatprep.subr.bf16.mxu0 0
    %11694 = vmatpush2.bf16.msra.mxu0 0
    %11695 = vmatprep.subr.bf16.mxu0 0
    %11696 = vmatpush2.bf16.msra.mxu0 0
    %11697 = vmatprep.subr.bf16.mxu0 0
    %11698 = vmatpush2.bf16.msra.mxu0 0
    %11699 = vmatprep.subr.bf16.mxu0 0
    %11700 = vmatpush2.bf16.msra.mxu0 0
    %11701 = vmatprep.subr.bf16.mxu0 0
    %11702 = vmatpush2.bf16.msra.mxu0 0
    %11703 = vmatprep.subr.bf16.mxu0 0
    %11704 = vmatpush2.bf16.msra.mxu0 0
    %11705 = vmatprep.subr.bf16.mxu0 0
    %11706 = vmatpush2.bf16.msra.mxu0 0
    %11707 = vmatprep.mubr.bf16.mxu0 0
    %11708 = vmatmul.mubr.bf16.gmra.mxu0 %v11458
    %v11709 = vpop.f32.mrf.mxu0
    %v11710 = vadd.f32 %v11613, %v11709
    %v11711 = vpop.f32.mrf.mxu0
    %v11712 = vpop.f32.mrf.mxu0
    %v11713 = vadd.f32 %v11616, %v11712
    %v11714 = vpop.f32.mrf.mxu0
    %11715 = vmatprep.mubr.bf16.mxu0 0
    %11716 = vmatmul.mubr.bf16.gmra.mxu0 %v11461
    %v11717 = vpop.f32.mrf.mxu0
    %v11718 = vadd.f32 %v11621, %v11717
    %v11719 = vpop.f32.mrf.mxu0
    %v11720 = vpop.f32.mrf.mxu0
    %v11721 = vadd.f32 %v11624, %v11720
    %v11722 = vpop.f32.mrf.mxu0
    %11723 = vmatprep.mubr.bf16.mxu0 0
    %11724 = vmatmul.mubr.bf16.gmra.mxu0 %v11464
    %v11725 = vpop.f32.mrf.mxu0
    %v11726 = vadd.f32 %v11629, %v11725
    %v11727 = vpop.f32.mrf.mxu0
    %v11728 = vpop.f32.mrf.mxu0
    %v11729 = vadd.f32 %v11632, %v11728
    %v11730 = vpop.f32.mrf.mxu0
    %11731 = vmatprep.mubr.bf16.mxu0 0
    %11732 = vmatmul.mubr.bf16.gmra.mxu0 %v11467
    %v11733 = vpop.f32.mrf.mxu0
    %v11734 = vadd.f32 %v11637, %v11733
    %v11735 = vpop.f32.mrf.mxu0
    %v11736 = vpop.f32.mrf.mxu0
    %v11737 = vadd.f32 %v11640, %v11736
    %v11738 = vpop.f32.mrf.mxu0
    %11739 = vmatprep.mubr.bf16.mxu0 0
    %11740 = vmatmul.mubr.bf16.gmra.mxu0 %v11470
    %v11741 = vpop.f32.mrf.mxu0
    %v11742 = vadd.f32 %v11645, %v11741
    %v11743 = vpop.f32.mrf.mxu0
    %v11744 = vpop.f32.mrf.mxu0
    %v11745 = vadd.f32 %v11648, %v11744
    %v11746 = vpop.f32.mrf.mxu0
    %11747 = vmatprep.mubr.bf16.mxu0 0
    %11748 = vmatmul.mubr.bf16.gmra.mxu0 %v11473
    %v11749 = vpop.f32.mrf.mxu0
    %v11750 = vadd.f32 %v11653, %v11749
    %v11751 = vpop.f32.mrf.mxu0
    %v11752 = vpop.f32.mrf.mxu0
    %v11753 = vadd.f32 %v11656, %v11752
    %v11754 = vpop.f32.mrf.mxu0
    %11755 = vmatprep.mubr.bf16.mxu0 0
    %11756 = vmatmul.mubr.bf16.gmra.mxu0 %v11476
    %v11757 = vpop.f32.mrf.mxu0
    %v11758 = vadd.f32 %v11661, %v11757
    %v11759 = vpop.f32.mrf.mxu0
    %v11760 = vpop.f32.mrf.mxu0
    %v11761 = vadd.f32 %v11664, %v11760
    %v11762 = vpop.f32.mrf.mxu0
    %11763 = vmatprep.mubr.bf16.mxu0 0
    %11764 = vmatmul.mubr.bf16.gmra.mxu0 %v11479
    %v11765 = vpop.f32.mrf.mxu0
    %v11766 = vadd.f32 %v11669, %v11765
    %v11767 = vpop.f32.mrf.mxu0
    %v11768 = vpop.f32.mrf.mxu0
    %v11769 = vadd.f32 %v11672, %v11768
    %v11770 = vpop.f32.mrf.mxu0
    %11771 = vdwg.mxu0
    %vm11772 = vcmp.lt.s32.totalorder %v9641, 4
    %vm11773 = vcmp.lt.s32.totalorder %v9642, 4
    %v11774 = vsel %vm11772, 1, 0
    %v11775 = vsel %vm11773, 1, 0
    %v11776 = vcvt.s32.f32 %v11774
    %v11777 = vcvt.s32.f32 %v11775
    %v11778 = vmul.f32 %v11710, %v11776
    %v11779 = vmul.f32 %v11713, %v11777
    %v11780 = vmul.f32 %v11718, %v11776
    %v11781 = vmul.f32 %v11721, %v11777
    %v11782 = vmul.f32 %v11726, %v11776
    %v11783 = vmul.f32 %v11729, %v11777
    %v11784 = vmul.f32 %v11734, %v11776
    %v11785 = vmul.f32 %v11737, %v11777
    %v11786 = vmul.f32 %v11742, %v11776
    %v11787 = vmul.f32 %v11745, %v11777
    %v11788 = vmul.f32 %v11750, %v11776
    %v11789 = vmul.f32 %v11753, %v11777
    %v11790 = vmul.f32 %v11758, %v11776
    %v11791 = vmul.f32 %v11761, %v11777
    %v11792 = vmul.f32 %v11766, %v11776
    %v11793 = vmul.f32 %v11769, %v11777
    %v11794 = vsel %vm5514, %v11778, 0.0
    %v11795 = vsel %vm5514, %v11779, 0.0
    %v11796 = vadd.f32 %v11794, %v11795
    %v11797 = vsel %vm5514, %v11780, 0.0
    %v11798 = vadd.f32 %v11796, %v11797
    %v11799 = vsel %vm5514, %v11781, 0.0
    %v11800 = vadd.f32 %v11798, %v11799
    %v11801 = vsel %vm5514, %v11782, 0.0
    %v11802 = vadd.f32 %v11800, %v11801
    %v11803 = vsel %vm5514, %v11783, 0.0
    %v11804 = vadd.f32 %v11802, %v11803
    %v11805 = vsel %vm5514, %v11784, 0.0
    %v11806 = vadd.f32 %v11804, %v11805
    %v11807 = vsel %vm5514, %v11785, 0.0
    %v11808 = vadd.f32 %v11806, %v11807
    %v11809 = vsel %vm5514, %v11786, 0.0
    %v11810 = vadd.f32 %v11808, %v11809
    %v11811 = vsel %vm5514, %v11787, 0.0
    %v11812 = vadd.f32 %v11810, %v11811
    %v11813 = vsel %vm5514, %v11788, 0.0
    %v11814 = vadd.f32 %v11812, %v11813
    %v11815 = vsel %vm5514, %v11789, 0.0
    %v11816 = vadd.f32 %v11814, %v11815
    %v11817 = vsel %vm5514, %v11790, 0.0
    %v11818 = vadd.f32 %v11816, %v11817
    %v11819 = vsel %vm5514, %v11791, 0.0
    %v11820 = vadd.f32 %v11818, %v11819
    %v11821 = vsel %vm5514, %v11792, 0.0
    %v11822 = vadd.f32 %v11820, %v11821
    %v11823 = vsel %vm5514, %v11793, 0.0
    %v11824 = vadd.f32 %v11822, %v11823
    %v11825 = vrot.slane %v11824, 4
    %v11826 = vadd.f32 %v11824, %v11825
    %v11827 = vrot.slane %v11826, 2
    %v11828 = vadd.f32 %v11826, %v11827
    %v11829 = vrot.slane %v11828, 1
    %v11830 = vadd.f32 %v11828, %v11829
    %v11831 = vmul.f32 %v11778, %v11778
    %v11832 = vmul.f32 %v11779, %v11779
    %v11833 = vmul.f32 %v11780, %v11780
    %v11834 = vmul.f32 %v11781, %v11781
    %v11835 = vmul.f32 %v11782, %v11782
    %v11836 = vmul.f32 %v11783, %v11783
    %v11837 = vmul.f32 %v11784, %v11784
    %v11838 = vmul.f32 %v11785, %v11785
    %v11839 = vmul.f32 %v11786, %v11786
    %v11840 = vmul.f32 %v11787, %v11787
    %v11841 = vmul.f32 %v11788, %v11788
    %v11842 = vmul.f32 %v11789, %v11789
    %v11843 = vmul.f32 %v11790, %v11790
    %v11844 = vmul.f32 %v11791, %v11791
    %v11845 = vmul.f32 %v11792, %v11792
    %v11846 = vmul.f32 %v11793, %v11793
    %v11847 = vsel %vm5514, %v11831, 0.0
    %v11848 = vsel %vm5514, %v11832, 0.0
    %v11849 = vadd.f32 %v11847, %v11848
    %v11850 = vsel %vm5514, %v11833, 0.0
    %v11851 = vadd.f32 %v11849, %v11850
    %v11852 = vsel %vm5514, %v11834, 0.0
    %v11853 = vadd.f32 %v11851, %v11852
    %v11854 = vsel %vm5514, %v11835, 0.0
    %v11855 = vadd.f32 %v11853, %v11854
    %v11856 = vsel %vm5514, %v11836, 0.0
    %v11857 = vadd.f32 %v11855, %v11856
    %v11858 = vsel %vm5514, %v11837, 0.0
    %v11859 = vadd.f32 %v11857, %v11858
    %v11860 = vsel %vm5514, %v11838, 0.0
    %v11861 = vadd.f32 %v11859, %v11860
    %v11862 = vsel %vm5514, %v11839, 0.0
    %v11863 = vadd.f32 %v11861, %v11862
    %v11864 = vsel %vm5514, %v11840, 0.0
    %v11865 = vadd.f32 %v11863, %v11864
    %v11866 = vsel %vm5514, %v11841, 0.0
    %v11867 = vadd.f32 %v11865, %v11866
    %v11868 = vsel %vm5514, %v11842, 0.0
    %v11869 = vadd.f32 %v11867, %v11868
    %v11870 = vsel %vm5514, %v11843, 0.0
    %v11871 = vadd.f32 %v11869, %v11870
    %v11872 = vsel %vm5514, %v11844, 0.0
    %v11873 = vadd.f32 %v11871, %v11872
    %v11874 = vsel %vm5514, %v11845, 0.0
    %v11875 = vadd.f32 %v11873, %v11874
    %v11876 = vsel %vm5514, %v11846, 0.0
    %v11877 = vadd.f32 %v11875, %v11876
    %v11878 = vrot.slane %v11877, 4
    %v11879 = vadd.f32 %v11877, %v11878
    %v11880 = vrot.slane %v11879, 2
    %v11881 = vadd.f32 %v11879, %v11880
    %v11882 = vrot.slane %v11881, 1
    %v11883 = vadd.f32 %v11881, %v11882
    %v11884 = vrcp.pop 32.0
    %v11885 = vmul.f32 %v11830, %v11884
    %v11886 = vmul.f32 %v11883, %v11884
    %v11887 = vmul.f32 %v11885, %v11885
    %v11888 = vsub.f32 %v11886, %v11887
    %v11889 = vmax.f32 %v11888, 0.0
    %v11890 = vld [vmem:[%s8] sm:$0x1]
    %v11891 = vadd.f32 %v11889, 1e-05
    %v11892 = vrsqrt.pop %v11891
    %v11893 = vmul.f32 %v11890, %v11892
    %v11894 = vld [vmem:[%s9] sm:$0x1]
    %v11895 = vmul.f32 %v11885, %v11893
    %v11896 = vsub.f32 %v11894, %v11895
    %v11898 = vlaneseq
    %v11899 = vshrl.u32 %v11898, 7
    %v11900 = vsub.s32 0, %v11899
    %v11901 = vrot.slane %v11893, %v11900
    %v11903 = vmul.f32 %v11710, %v11901
    %v11904 = vmul.f32 %v11718, %v11901
    %v11905 = vmul.f32 %v11726, %v11901
    %v11906 = vmul.f32 %v11734, %v11901
    %v11907 = vmul.f32 %v11742, %v11901
    %v11908 = vmul.f32 %v11750, %v11901
    %v11909 = vmul.f32 %v11758, %v11901
    %v11910 = vmul.f32 %v11766, %v11901
    %v11912 = vlaneseq
    %v11913 = vshrl.u32 %v11912, 7
    %v11914 = vsub.s32 0, %v11913
    %v11915 = vrot.slane %v11896, %v11914
    %v11917 = vadd.f32 %v11903, %v11915
    %v11918 = vadd.f32 %v11904, %v11915
    %v11919 = vadd.f32 %v11905, %v11915
    %v11920 = vadd.f32 %v11906, %v11915
    %v11921 = vadd.f32 %v11907, %v11915
    %v11922 = vadd.f32 %v11908, %v11915
    %v11923 = vadd.f32 %v11909, %v11915
    %v11924 = vadd.f32 %v11910, %v11915
    %v11925 = vmax.f32 %v11917, %v11918
    %v11926 = vmax.f32 %v11919, %v11920
    %v11927 = vmax.f32 %v11921, %v11922
    %v11928 = vmax.f32 %v11923, %v11924
    %v11933 = vrot.slane %v11925, 1
    %v11934 = vrot.slane %v11926, 1
    %v11935 = vrot.slane %v11927, 1
    %v11936 = vrot.slane %v11928, 1
    %v11941 = vmax.f32 %v11925, %v11933
    %v11942 = vmax.f32 %v11926, %v11934
    %v11943 = vmax.f32 %v11927, %v11935
    %v11944 = vmax.f32 %v11928, %v11936
    %v11949 = vrot.slane %v11941, 1
    %v11950 = vrot.slane %v11942, 1
    %v11951 = vrot.slane %v11943, 1
    %v11952 = vrot.slane %v11944, 1
    %v11957 = vsel %vm6414, %v11941, %v11949
    %v11958 = vsel %vm6414, %v11942, %v11950
    %v11959 = vsel %vm6414, %v11943, %v11951
    %v11960 = vsel %vm6414, %v11944, %v11952
    %v11961 = vmax.f32 %v11957, 0.0
    %v11962 = vmax.f32 %v11958, 0.0
    %v11963 = vmax.f32 %v11959, 0.0
    %v11964 = vmax.f32 %v11960, 0.0
    %11965 = vst.msk [vmem:[#allocation5] sm:$0xf] %vm6548, 0
    %11966 = vst.msk [vmem:[#allocation5 + $0x4] sm:$0xf] %vm6548, 0
    %11967 = vst.msk [vmem:[#allocation5 + $0x8] sm:$0x1] %vm6551, 0
    %11968 = vst.msk [vmem:[#allocation5 + $0x30] sm:$0xf] %vm6548, 0
    %11969 = vst.msk [vmem:[#allocation5 + $0x34] sm:$0xf] %vm6548, 0
    %11970 = vst.msk [vmem:[#allocation5 + $0x38] sm:$0x1] %vm6551, 0
    %s11971 = scalar_lea.vmem [#allocation5], 36
    %11972 = vst.msk [vmem:[%s11971] sm:$0xf] %vm6548, 0
    %11973 = vst.msk [vmem:[%s11971 + $0x4] sm:$0xf] %vm6548, 0
    %11974 = vst.msk [vmem:[%s11971 + $0x8] sm:$0x1] %vm6551, 0
    %11975 = vst.msk [vmem:[%s11971 + $0x30] sm:$0xf] %vm6548, 0
    %11976 = vst.msk [vmem:[%s11971 + $0x34] sm:$0xf] %vm6548, 0
    %11977 = vst.msk [vmem:[%s11971 + $0x38] sm:$0x1] %vm6551, 0
    %v11978 = vld [vmem:[#allocation5] sm:$0x1]
    %v11979 = vsel %vm6564, 0, %v11978
    %11980 = vst [vmem:[#allocation5] sm:$0x1] %v11979
    %v11981 = vld [vmem:[#allocation5 + $0xc] sm:$0x1]
    %v11982 = vsel %vm6564, 0, %v11981
    %11983 = vst [vmem:[#allocation5 + $0xc] sm:$0x1] %v11982
    %v11984 = vld [vmem:[#allocation5 + $0x18] sm:$0x1]
    %v11985 = vsel %vm6564, 0, %v11984
    %11986 = vst [vmem:[#allocation5 + $0x18] sm:$0x1] %v11985
    %v11987 = vld [vmem:[#allocation5 + $0x24] sm:$0x1]
    %v11988 = vsel %vm6564, 0, %v11987
    %11989 = vst [vmem:[#allocation5 + $0x24] sm:$0x1] %v11988
    %v11990 = vld [vmem:[#allocation5 + $0x30] sm:$0x1]
    %v11991 = vsel %vm6564, 0, %v11990
    %11992 = vst [vmem:[#allocation5 + $0x30] sm:$0x1] %v11991
    %v11993 = vld [vmem:[#allocation5 + $0x3c] sm:$0x1]
    %v11994 = vsel %vm6564, 0, %v11993
    %11995 = vst [vmem:[#allocation5 + $0x3c] sm:$0x1] %v11994
    %v11996 = vld [vmem:[#allocation5 + $0x48] sm:$0x1]
    %v11997 = vsel %vm6564, 0, %v11996
    %11998 = vst [vmem:[#allocation5 + $0x48] sm:$0x1] %v11997
    %v11999 = vld [vmem:[#allocation5 + $0x54] sm:$0x1]
    %v12000 = vsel %vm6564, 0, %v11999
    %12001 = vst [vmem:[#allocation5 + $0x54] sm:$0x1] %v12000
    %vm12002 = vcmask 519169
    %vm12003 = vsmask.f32 7942
    %vm12004 = vmand %vm12002, %vm12003
    %v12005 = vld [vmem:[#allocation5] sm:$0xe]
    %v12006 = vsel %vm12004, 0, %v12005
    %12007 = vst [vmem:[#allocation5] sm:$0xe] %v12006
    %12008 = vst.msk [vmem:[#allocation5 + $0x4] sm:$0xf] %vm6548, 0
    %12009 = vst.msk [vmem:[#allocation5 + $0x8] sm:$0x1] %vm6551, 0
    %v12010 = vld [vmem:[#allocation5 + $0xc] sm:$0xe]
    %v12011 = vsel %vm12004, 0, %v12010
    %12012 = vst [vmem:[#allocation5 + $0xc] sm:$0xe] %v12011
    %12013 = vst.msk [vmem:[#allocation5 + $0x10] sm:$0xf] %vm6548, 0
    %12014 = vst.msk [vmem:[#allocation5 + $0x14] sm:$0x1] %vm6551, 0
    %v12015 = vld [vmem:[#allocation5 + $0x18] sm:$0xe]
    %v12016 = vsel %vm12004, 0, %v12015
    %12017 = vst [vmem:[#allocation5 + $0x18] sm:$0xe] %v12016
    %12018 = vst.msk [vmem:[#allocation5 + $0x1c] sm:$0xf] %vm6548, 0
    %12019 = vst.msk [vmem:[#allocation5 + $0x20] sm:$0x1] %vm6551, 0
    %v12020 = vld [vmem:[#allocation5 + $0x24] sm:$0xe]
    %v12021 = vsel %vm12004, 0, %v12020
    %12022 = vst [vmem:[#allocation5 + $0x24] sm:$0xe] %v12021
    %12023 = vst.msk [vmem:[#allocation5 + $0x28] sm:$0xf] %vm6548, 0
    %12024 = vst.msk [vmem:[#allocation5 + $0x2c] sm:$0x1] %vm6551, 0
    %v12025 = vld [vmem:[#allocation5 + $0x30] sm:$0xe]
    %v12026 = vsel %vm12004, 0, %v12025
    %12027 = vst [vmem:[#allocation5 + $0x30] sm:$0xe] %v12026
    %12028 = vst.msk [vmem:[#allocation5 + $0x34] sm:$0xf] %vm6548, 0
    %12029 = vst.msk [vmem:[#allocation5 + $0x38] sm:$0x1] %vm6551, 0
    %v12030 = vld [vmem:[#allocation5 + $0x3c] sm:$0xe]
    %v12031 = vsel %vm12004, 0, %v12030
    %12032 = vst [vmem:[#allocation5 + $0x3c] sm:$0xe] %v12031
    %12033 = vst.msk [vmem:[#allocation5 + $0x40] sm:$0xf] %vm6548, 0
    %12034 = vst.msk [vmem:[#allocation5 + $0x44] sm:$0x1] %vm6551, 0
    %v12035 = vld [vmem:[#allocation5 + $0x48] sm:$0xe]
    %v12036 = vsel %vm12004, 0, %v12035
    %12037 = vst [vmem:[#allocation5 + $0x48] sm:$0xe] %v12036
    %12038 = vst.msk [vmem:[#allocation5 + $0x4c] sm:$0xf] %vm6548, 0
    %12039 = vst.msk [vmem:[#allocation5 + $0x50] sm:$0x1] %vm6551, 0
    %v12040 = vld [vmem:[#allocation5 + $0x54] sm:$0xe]
    %v12041 = vsel %vm12004, 0, %v12040
    %12042 = vst [vmem:[#allocation5 + $0x54] sm:$0xe] %v12041
    %12043 = vst.msk [vmem:[#allocation5 + $0x58] sm:$0xf] %vm6548, 0
    %12044 = vst.msk [vmem:[#allocation5 + $0x5c] sm:$0x1] %vm6551, 0
    %v12045 = vpack.c.bf16 %v11961, %v11961
    %v12046 = vpack.c.bf16 %v11962, %v11962
    %v12047 = vpack.c.bf16 %v11963, %v11963
    %v12048 = vpack.c.bf16 %v11964, %v11964
    %v12053 = vunpack.c.l.b16 %v12045
    %v12054 = vunpack.c.l.b16 %v12046
    %v12055 = vunpack.c.l.b16 %v12047
    %v12056 = vunpack.c.l.b16 %v12048
    %v12057 = vpack.c.b16 %v12053, %v12053
    %v12058 = vpack.c.b16 %v12054, %v12054
    %v12059 = vpack.c.b16 %v12055, %v12055
    %v12060 = vpack.c.b16 %v12056, %v12056
    %v12062 = vshrl.u32 %v12057, 16
    %v12064 = vrot.slane %v12062, 7
    %v12065 = vshll.u32 %v12057, 16
    %v12067 = vor.u32 %v12064, %v12065
    %v12069 = vshrl.u32 %v12058, 16
    %v12071 = vrot.slane %v12069, 7
    %v12072 = vshll.u32 %v12058, 16
    %v12074 = vor.u32 %v12071, %v12072
    %v12076 = vshrl.u32 %v12059, 16
    %v12078 = vrot.slane %v12076, 7
    %v12079 = vshll.u32 %v12059, 16
    %v12081 = vor.u32 %v12078, %v12079
    %v12083 = vshrl.u32 %v12060, 16
    %v12085 = vrot.slane %v12083, 7
    %v12086 = vshll.u32 %v12060, 16
    %v12088 = vor.u32 %v12085, %v12086
    %s12093 = scalar_lea.vmem [#allocation5], 12
    %vm12094 = vcmask 517120
    %vm12095 = vsmask.f32 1282
    %vm12096 = vmand %vm12094, %vm12095
    %v12097 = vld [vmem:[%s12093] sm:$0x3]
    %v12098 = vsel %vm12096, %v12067, %v12097
    %12099 = vst [vmem:[%s12093] sm:$0x3] %v12098
    %v12100 = vld [vmem:[%s12093 + $0xc] sm:$0x3]
    %v12101 = vsel %vm12096, %v12074, %v12100
    %12102 = vst [vmem:[%s12093 + $0xc] sm:$0x3] %v12101
    %v12103 = vld [vmem:[%s12093 + $0x30] sm:$0x3]
    %v12104 = vsel %vm12096, %v12081, %v12103
    %12105 = vst [vmem:[%s12093 + $0x30] sm:$0x3] %v12104
    %v12106 = vld [vmem:[%s12093 + $0x3c] sm:$0x3]
    %v12107 = vsel %vm12096, %v12088, %v12106
    %12108 = vst [vmem:[%s12093 + $0x3c] sm:$0x3] %v12107
    %v12109 = vld [vmem:[#allocation5] sm:$0xf]
    %v12110 = vld [vmem:[#allocation5 + $0x4] sm:$0xf]
    %v12111 = vld [vmem:[#allocation5 + $0xc] sm:$0xf]
    %v12112 = vld [vmem:[#allocation5 + $0x10] sm:$0xf]
    %v12113 = vld [vmem:[#allocation5 + $0x30] sm:$0xf]
    %v12114 = vld [vmem:[#allocation5 + $0x34] sm:$0xf]
    %v12115 = vld [vmem:[#allocation5 + $0x3c] sm:$0xf]
    %v12116 = vld [vmem:[#allocation5 + $0x40] sm:$0xf]
    %v12117 = vld [vmem:[#allocation5 + $0x8] sm:$0x1]
    %v12118 = vld [vmem:[#allocation5 + $0x14] sm:$0x1]
    %v12119 = vld [vmem:[#allocation5 + $0x38] sm:$0x1]
    %v12120 = vld [vmem:[#allocation5 + $0x44] sm:$0x1]
    %v12121 = vld [vmem:[#allocation5] sm:$0xe]
    %v12122 = vld [vmem:[#allocation5 + $0xc] sm:$0xe]
    %v12123 = vld [vmem:[#allocation5 + $0x30] sm:$0xe]
    %v12124 = vld [vmem:[#allocation5 + $0x3c] sm:$0xe]
    %v12125 = vld [vmem:[%s12093] sm:$0xf]
    %v12126 = vld [vmem:[%s12093 + $0x4] sm:$0xf]
    %v12127 = vld [vmem:[%s12093 + $0xc] sm:$0xf]
    %v12128 = vld [vmem:[%s12093 + $0x10] sm:$0xf]
    %v12129 = vld [vmem:[%s12093 + $0x30] sm:$0xf]
    %v12130 = vld [vmem:[%s12093 + $0x34] sm:$0xf]
    %v12131 = vld [vmem:[%s12093 + $0x3c] sm:$0xf]
    %v12132 = vld [vmem:[%s12093 + $0x40] sm:$0xf]
    %v12133 = vld [vmem:[%s12093 + $0x8] sm:$0x1]
    %v12134 = vld [vmem:[%s12093 + $0x14] sm:$0x1]
    %v12135 = vld [vmem:[%s12093 + $0x38] sm:$0x1]
    %v12136 = vld [vmem:[%s12093 + $0x44] sm:$0x1]
    %v12137 = vld [vmem:[%s12093] sm:$0xe]
    %v12138 = vld [vmem:[%s12093 + $0xc] sm:$0xe]
    %v12139 = vld [vmem:[%s12093 + $0x30] sm:$0xe]
    %v12140 = vld [vmem:[%s12093 + $0x3c] sm:$0xe]
    %s12141 = scalar_lea.vmem [#allocation5], 24
    %v12142 = vld [vmem:[%s12141] sm:$0xf]
    %v12143 = vld [vmem:[%s12141 + $0x4] sm:$0xf]
    %v12144 = vld [vmem:[%s12141 + $0xc] sm:$0xf]
    %v12145 = vld [vmem:[%s12141 + $0x10] sm:$0xf]
    %v12146 = vld [vmem:[%s12141 + $0x30] sm:$0xf]
    %v12147 = vld [vmem:[%s12141 + $0x34] sm:$0xf]
    %v12148 = vld [vmem:[%s12141 + $0x3c] sm:$0xf]
    %v12149 = vld [vmem:[%s12141 + $0x40] sm:$0xf]
    %v12150 = vld [vmem:[%s12141 + $0x8] sm:$0x1]
    %v12151 = vld [vmem:[%s12141 + $0x14] sm:$0x1]
    %v12152 = vld [vmem:[%s12141 + $0x38] sm:$0x1]
    %v12153 = vld [vmem:[%s12141 + $0x44] sm:$0x1]
    %v12154 = vld [vmem:[%s12141] sm:$0xe]
    %v12155 = vld [vmem:[%s12141 + $0xc] sm:$0xe]
    %v12156 = vld [vmem:[%s12141 + $0x30] sm:$0xe]
    %v12157 = vld [vmem:[%s12141 + $0x3c] sm:$0xe]
    %v12166 = vunpack.c.l.b16 %v12109
    %v12167 = vunpack.c.l.b16 %v12110
    %v12168 = vunpack.c.l.b16 %v12111
    %v12169 = vunpack.c.l.b16 %v12112
    %v12170 = vunpack.c.l.b16 %v12113
    %v12171 = vunpack.c.l.b16 %v12114
    %v12172 = vunpack.c.l.b16 %v12115
    %v12173 = vunpack.c.l.b16 %v12116
    %v12174 = vpack.c.b16 %v12167, %v12166
    %v12175 = vpack.c.b16 %v12169, %v12168
    %v12176 = vpack.c.b16 %v12171, %v12170
    %v12177 = vpack.c.b16 %v12173, %v12172
    %v12182 = vunpack.c.l.b16 %v12117
    %v12183 = vunpack.c.l.b16 %v12118
    %v12184 = vunpack.c.l.b16 %v12119
    %v12185 = vunpack.c.l.b16 %v12120
    %v12186 = vpack.c.b16 %v12182, %v12182
    %v12187 = vpack.c.b16 %v12183, %v12183
    %v12188 = vpack.c.b16 %v12184, %v12184
    %v12189 = vpack.c.b16 %v12185, %v12185
    %v12191 = vshrl.u32 %v12174, 16
    %v12193 = vshll.u32 %v12174, 16
    %v12195 = vrot.slane %v12193, 1
    %v12196 = vor.u32 %v12191, %v12195
    %v12198 = vshll.u32 %v12186, 16
    %v12200 = vrot.slane %v12198, 1
    %v12201 = vsel %vm1862, %v12196, %v12200
    %v12203 = vshrl.u32 %v12175, 16
    %v12205 = vshll.u32 %v12175, 16
    %v12207 = vrot.slane %v12205, 1
    %v12208 = vor.u32 %v12203, %v12207
    %v12210 = vshll.u32 %v12187, 16
    %v12212 = vrot.slane %v12210, 1
    %v12213 = vsel %vm1862, %v12208, %v12212
    %v12215 = vshrl.u32 %v12176, 16
    %v12217 = vshll.u32 %v12176, 16
    %v12219 = vrot.slane %v12217, 1
    %v12220 = vor.u32 %v12215, %v12219
    %v12222 = vshll.u32 %v12188, 16
    %v12224 = vrot.slane %v12222, 1
    %v12225 = vsel %vm1862, %v12220, %v12224
    %v12227 = vshrl.u32 %v12177, 16
    %v12229 = vshll.u32 %v12177, 16
    %v12231 = vrot.slane %v12229, 1
    %v12232 = vor.u32 %v12227, %v12231
    %v12234 = vshll.u32 %v12189, 16
    %v12236 = vrot.slane %v12234, 1
    %v12237 = vsel %vm1862, %v12232, %v12236
    %12238 = vrot.lane.b32.xlu0 %v12201, 64
    %v12239 = vpop.permute.xlu0 %12238
    %12240 = vrot.lane.b32.xlu0 %v12213, 64
    %v12241 = vpop.permute.xlu0 %12240
    %12242 = vrot.lane.b32.xlu0 %v12225, 64
    %v12243 = vpop.permute.xlu0 %12242
    %12244 = vrot.lane.b32.xlu0 %v12237, 64
    %v12245 = vpop.permute.xlu0 %12244
    %v12250 = vunpack.c.l.b16 %v12121
    %v12251 = vunpack.c.l.b16 %v12122
    %v12252 = vunpack.c.l.b16 %v12123
    %v12253 = vunpack.c.l.b16 %v12124
    %v12254 = vpack.c.b16 %v12167, %v12250
    %v12255 = vpack.c.b16 %v12169, %v12251
    %v12256 = vpack.c.b16 %v12171, %v12252
    %v12257 = vpack.c.b16 %v12173, %v12253
    %v12258 = vrot.slane %v12254, 1
    %v12259 = vrot.slane %v12186, 1
    %v12260 = vsel %vm2407, %v12258, %v12259
    %v12261 = vrot.slane %v12255, 1
    %v12262 = vrot.slane %v12187, 1
    %v12263 = vsel %vm2407, %v12261, %v12262
    %v12264 = vrot.slane %v12256, 1
    %v12265 = vrot.slane %v12188, 1
    %v12266 = vsel %vm2407, %v12264, %v12265
    %v12267 = vrot.slane %v12257, 1
    %v12268 = vrot.slane %v12189, 1
    %v12269 = vsel %vm2407, %v12267, %v12268
    %v12278 = vunpack.c.l.b16 %v12125
    %v12279 = vunpack.c.l.b16 %v12126
    %v12280 = vunpack.c.l.b16 %v12127
    %v12281 = vunpack.c.l.b16 %v12128
    %v12282 = vunpack.c.l.b16 %v12129
    %v12283 = vunpack.c.l.b16 %v12130
    %v12284 = vunpack.c.l.b16 %v12131
    %v12285 = vunpack.c.l.b16 %v12132
    %v12286 = vpack.c.b16 %v12279, %v12278
    %v12287 = vpack.c.b16 %v12281, %v12280
    %v12288 = vpack.c.b16 %v12283, %v12282
    %v12289 = vpack.c.b16 %v12285, %v12284
    %12290 = vrot.lane.b32.xlu0 %v12286, 64
    %v12291 = vpop.permute.xlu0 %12290
    %12292 = vrot.lane.b32.xlu0 %v12287, 64
    %v12293 = vpop.permute.xlu0 %12292
    %12294 = vrot.lane.b32.xlu0 %v12288, 64
    %v12295 = vpop.permute.xlu0 %12294
    %12296 = vrot.lane.b32.xlu0 %v12289, 64
    %v12297 = vpop.permute.xlu0 %12296
    %v12302 = vunpack.c.l.b16 %v12133
    %v12303 = vunpack.c.l.b16 %v12134
    %v12304 = vunpack.c.l.b16 %v12135
    %v12305 = vunpack.c.l.b16 %v12136
    %v12306 = vpack.c.b16 %v12302, %v12302
    %v12307 = vpack.c.b16 %v12303, %v12303
    %v12308 = vpack.c.b16 %v12304, %v12304
    %v12309 = vpack.c.b16 %v12305, %v12305
    %v12311 = vshrl.u32 %v12286, 16
    %v12313 = vshll.u32 %v12286, 16
    %v12315 = vrot.slane %v12313, 1
    %v12316 = vor.u32 %v12311, %v12315
    %v12318 = vshll.u32 %v12306, 16
    %v12320 = vrot.slane %v12318, 1
    %v12321 = vsel %vm1862, %v12316, %v12320
    %v12323 = vshrl.u32 %v12287, 16
    %v12325 = vshll.u32 %v12287, 16
    %v12327 = vrot.slane %v12325, 1
    %v12328 = vor.u32 %v12323, %v12327
    %v12330 = vshll.u32 %v12307, 16
    %v12332 = vrot.slane %v12330, 1
    %v12333 = vsel %vm1862, %v12328, %v12332
    %v12335 = vshrl.u32 %v12288, 16
    %v12337 = vshll.u32 %v12288, 16
    %v12339 = vrot.slane %v12337, 1
    %v12340 = vor.u32 %v12335, %v12339
    %v12342 = vshll.u32 %v12308, 16
    %v12344 = vrot.slane %v12342, 1
    %v12345 = vsel %vm1862, %v12340, %v12344
    %v12347 = vshrl.u32 %v12289, 16
    %v12349 = vshll.u32 %v12289, 16
    %v12351 = vrot.slane %v12349, 1
    %v12352 = vor.u32 %v12347, %v12351
    %v12354 = vshll.u32 %v12309, 16
    %v12356 = vrot.slane %v12354, 1
    %v12357 = vsel %vm1862, %v12352, %v12356
    %v12362 = vunpack.c.l.b16 %v12137
    %v12363 = vunpack.c.l.b16 %v12138
    %v12364 = vunpack.c.l.b16 %v12139
    %v12365 = vunpack.c.l.b16 %v12140
    %v12366 = vpack.c.b16 %v12279, %v12362
    %v12367 = vpack.c.b16 %v12281, %v12363
    %v12368 = vpack.c.b16 %v12283, %v12364
    %v12369 = vpack.c.b16 %v12285, %v12365
    %v12370 = vrot.slane %v12366, 1
    %v12371 = vrot.slane %v12306, 1
    %v12372 = vsel %vm2407, %v12370, %v12371
    %v12373 = vrot.slane %v12367, 1
    %v12374 = vrot.slane %v12307, 1
    %v12375 = vsel %vm2407, %v12373, %v12374
    %v12376 = vrot.slane %v12368, 1
    %v12377 = vrot.slane %v12308, 1
    %v12378 = vsel %vm2407, %v12376, %v12377
    %v12379 = vrot.slane %v12369, 1
    %v12380 = vrot.slane %v12309, 1
    %v12381 = vsel %vm2407, %v12379, %v12380
    %12382 = vrot.lane.b32.xlu0 %v12372, 64
    %v12383 = vpop.permute.xlu0 %12382
    %12384 = vrot.lane.b32.xlu0 %v12375, 64
    %v12385 = vpop.permute.xlu0 %12384
    %12386 = vrot.lane.b32.xlu0 %v12378, 64
    %v12387 = vpop.permute.xlu0 %12386
    %12388 = vrot.lane.b32.xlu0 %v12381, 64
    %v12389 = vpop.permute.xlu0 %12388
    %v12398 = vunpack.c.l.b16 %v12142
    %v12399 = vunpack.c.l.b16 %v12143
    %v12400 = vunpack.c.l.b16 %v12144
    %v12401 = vunpack.c.l.b16 %v12145
    %v12402 = vunpack.c.l.b16 %v12146
    %v12403 = vunpack.c.l.b16 %v12147
    %v12404 = vunpack.c.l.b16 %v12148
    %v12405 = vunpack.c.l.b16 %v12149
    %v12406 = vpack.c.b16 %v12399, %v12398
    %v12407 = vpack.c.b16 %v12401, %v12400
    %v12408 = vpack.c.b16 %v12403, %v12402
    %v12409 = vpack.c.b16 %v12405, %v12404
    %v12414 = vunpack.c.l.b16 %v12150
    %v12415 = vunpack.c.l.b16 %v12151
    %v12416 = vunpack.c.l.b16 %v12152
    %v12417 = vunpack.c.l.b16 %v12153
    %v12418 = vpack.c.b16 %v12414, %v12414
    %v12419 = vpack.c.b16 %v12415, %v12415
    %v12420 = vpack.c.b16 %v12416, %v12416
    %v12421 = vpack.c.b16 %v12417, %v12417
    %v12423 = vshrl.u32 %v12406, 16
    %v12425 = vshll.u32 %v12406, 16
    %v12427 = vrot.slane %v12425, 1
    %v12428 = vor.u32 %v12423, %v12427
    %v12430 = vshll.u32 %v12418, 16
    %v12432 = vrot.slane %v12430, 1
    %v12433 = vsel %vm1862, %v12428, %v12432
    %v12435 = vshrl.u32 %v12407, 16
    %v12437 = vshll.u32 %v12407, 16
    %v12439 = vrot.slane %v12437, 1
    %v12440 = vor.u32 %v12435, %v12439
    %v12442 = vshll.u32 %v12419, 16
    %v12444 = vrot.slane %v12442, 1
    %v12445 = vsel %vm1862, %v12440, %v12444
    %v12447 = vshrl.u32 %v12408, 16
    %v12449 = vshll.u32 %v12408, 16
    %v12451 = vrot.slane %v12449, 1
    %v12452 = vor.u32 %v12447, %v12451
    %v12454 = vshll.u32 %v12420, 16
    %v12456 = vrot.slane %v12454, 1
    %v12457 = vsel %vm1862, %v12452, %v12456
    %v12459 = vshrl.u32 %v12409, 16
    %v12461 = vshll.u32 %v12409, 16
    %v12463 = vrot.slane %v12461, 1
    %v12464 = vor.u32 %v12459, %v12463
    %v12466 = vshll.u32 %v12421, 16
    %v12468 = vrot.slane %v12466, 1
    %v12469 = vsel %vm1862, %v12464, %v12468
    %12470 = vrot.lane.b32.xlu0 %v12433, 64
    %v12471 = vpop.permute.xlu0 %12470
    %12472 = vrot.lane.b32.xlu0 %v12445, 64
    %v12473 = vpop.permute.xlu0 %12472
    %12474 = vrot.lane.b32.xlu0 %v12457, 64
    %v12475 = vpop.permute.xlu0 %12474
    %12476 = vrot.lane.b32.xlu0 %v12469, 64
    %v12477 = vpop.permute.xlu0 %12476
    %v12482 = vunpack.c.l.b16 %v12154
    %v12483 = vunpack.c.l.b16 %v12155
    %v12484 = vunpack.c.l.b16 %v12156
    %v12485 = vunpack.c.l.b16 %v12157
    %v12486 = vpack.c.b16 %v12399, %v12482
    %v12487 = vpack.c.b16 %v12401, %v12483
    %v12488 = vpack.c.b16 %v12403, %v12484
    %v12489 = vpack.c.b16 %v12405, %v12485
    %v12490 = vrot.slane %v12486, 1
    %v12491 = vrot.slane %v12418, 1
    %v12492 = vsel %vm2407, %v12490, %v12491
    %v12493 = vrot.slane %v12487, 1
    %v12494 = vrot.slane %v12419, 1
    %v12495 = vsel %vm2407, %v12493, %v12494
    %v12496 = vrot.slane %v12488, 1
    %v12497 = vrot.slane %v12420, 1
    %v12498 = vsel %vm2407, %v12496, %v12497
    %v12499 = vrot.slane %v12489, 1
    %v12500 = vrot.slane %v12421, 1
    %v12501 = vsel %vm2407, %v12499, %v12500
    %v12503 = vsel %vm5514, %v12174, %v12239
    %v12506 = vsel %vm5514, %v12175, %v12241
    %v12509 = vsel %vm5514, %v12176, %v12243
    %v12512 = vsel %vm5514, %v12177, %v12245
    %v12516 = vsel %vm5514, %v12260, %v12291
    %v12520 = vsel %vm5514, %v12263, %v12293
    %v12524 = vsel %vm5514, %v12266, %v12295
    %v12528 = vsel %vm5514, %v12269, %v12297
    %v12532 = vsel %vm5514, %v12321, %v12383
    %v12536 = vsel %vm5514, %v12333, %v12385
    %v12540 = vsel %vm5514, %v12345, %v12387
    %v12544 = vsel %vm5514, %v12357, %v12389
    %v12547 = vsel %vm5514, %v12406, %v12471
    %v12550 = vsel %vm5514, %v12407, %v12473
    %v12553 = vsel %vm5514, %v12408, %v12475
    %v12556 = vsel %vm5514, %v12409, %v12477
    %v12558 = vld [vmem:[%s10] sm:$0xf]
    %v12559 = vld [vmem:[%s10 + $0x4] sm:$0xf]
    %v12560 = vld [vmem:[%s10 + $0x8] sm:$0xf]
    %v12561 = vld [vmem:[%s10 + $0xc] sm:$0xf]
    %v12562 = vld [vmem:[%s10 + $0x10] sm:$0xf]
    %v12563 = vld [vmem:[%s10 + $0x14] sm:$0xf]
    %v12564 = vld [vmem:[%s10 + $0x18] sm:$0xf]
    %v12565 = vld [vmem:[%s10 + $0x1c] sm:$0xf]
    %v12566 = vld [vmem:[%s10 + $0x20] sm:$0xf]
    %v12567 = vld [vmem:[%s10 + $0x24] sm:$0xf]
    %v12568 = vld [vmem:[%s10 + $0x28] sm:$0xf]
    %v12569 = vld [vmem:[%s10 + $0x2c] sm:$0xf]
    %v12570 = vld [vmem:[%s10 + $0x30] sm:$0xf]
    %v12571 = vld [vmem:[%s10 + $0x34] sm:$0xf]
    %v12572 = vld [vmem:[%s10 + $0x38] sm:$0xf]
    %v12573 = vld [vmem:[%s10 + $0x3c] sm:$0xf]
    %v12574 = vld [vmem:[%s10 + $0x40] sm:$0xf]
    %v12575 = vld [vmem:[%s10 + $0x44] sm:$0xf]
    %v12576 = vld [vmem:[%s10 + $0x48] sm:$0xf]
    %v12577 = vld [vmem:[%s10 + $0x4c] sm:$0xf]
    %v12578 = vld [vmem:[%s10 + $0x50] sm:$0xf]
    %v12579 = vld [vmem:[%s10 + $0x54] sm:$0xf]
    %v12580 = vld [vmem:[%s10 + $0x58] sm:$0xf]
    %v12581 = vld [vmem:[%s10 + $0x5c] sm:$0xf]
    %v12582 = vld [vmem:[%s10 + $0x60] sm:$0xf]
    %v12583 = vld [vmem:[%s10 + $0x64] sm:$0xf]
    %v12584 = vld [vmem:[%s10 + $0x68] sm:$0xf]
    %v12585 = vld [vmem:[%s10 + $0x6c] sm:$0xf]
    %v12586 = vld [vmem:[%s10 + $0x70] sm:$0xf]
    %v12587 = vld [vmem:[%s10 + $0x74] sm:$0xf]
    %v12588 = vld [vmem:[%s10 + $0x78] sm:$0xf]
    %v12589 = vld [vmem:[%s10 + $0x7c] sm:$0xf]
    %v12590 = vld [vmem:[%s10 + $0x80] sm:$0xf]
    %v12591 = vld [vmem:[%s10 + $0x84] sm:$0xf]
    %v12592 = vld [vmem:[%s10 + $0x88] sm:$0xf]
    %v12593 = vld [vmem:[%s10 + $0x8c] sm:$0xf]
    %v12594 = vld [vmem:[%s10 + $0x90] sm:$0xf]
    %v12595 = vld [vmem:[%s10 + $0x94] sm:$0xf]
    %v12596 = vld [vmem:[%s10 + $0x98] sm:$0xf]
    %v12597 = vld [vmem:[%s10 + $0x9c] sm:$0xf]
    %v12598 = vld [vmem:[%s10 + $0xa0] sm:$0xf]
    %v12599 = vld [vmem:[%s10 + $0xa4] sm:$0xf]
    %v12600 = vld [vmem:[%s10 + $0xa8] sm:$0xf]
    %v12601 = vld [vmem:[%s10 + $0xac] sm:$0xf]
    %v12602 = vld [vmem:[%s10 + $0xb0] sm:$0xf]
    %v12603 = vld [vmem:[%s10 + $0xb4] sm:$0xf]
    %v12604 = vld [vmem:[%s10 + $0xb8] sm:$0xf]
    %v12605 = vld [vmem:[%s10 + $0xbc] sm:$0xf]
    %v12606 = vld [vmem:[%s10 + $0xc0] sm:$0xf]
    %v12607 = vld [vmem:[%s10 + $0xc4] sm:$0xf]
    %v12608 = vld [vmem:[%s10 + $0xc8] sm:$0xf]
    %v12609 = vld [vmem:[%s10 + $0xcc] sm:$0xf]
    %v12610 = vld [vmem:[%s10 + $0xd0] sm:$0xf]
    %v12611 = vld [vmem:[%s10 + $0xd4] sm:$0xf]
    %v12612 = vld [vmem:[%s10 + $0xd8] sm:$0xf]
    %v12613 = vld [vmem:[%s10 + $0xdc] sm:$0xf]
    %v12614 = vld [vmem:[%s10 + $0xe0] sm:$0xf]
    %v12615 = vld [vmem:[%s10 + $0xe4] sm:$0xf]
    %v12616 = vld [vmem:[%s10 + $0xe8] sm:$0xf]
    %v12617 = vld [vmem:[%s10 + $0xec] sm:$0xf]
    %v12618 = vld [vmem:[%s10 + $0xf0] sm:$0xf]
    %v12619 = vld [vmem:[%s10 + $0xf4] sm:$0xf]
    %v12620 = vld [vmem:[%s10 + $0xf8] sm:$0xf]
    %v12621 = vld [vmem:[%s10 + $0xfc] sm:$0xf]
    %v12622 = vld [vmem:[%s10 + $0x100] sm:$0xf]
    %v12623 = vld [vmem:[%s10 + $0x104] sm:$0xf]
    %v12624 = vld [vmem:[%s10 + $0x108] sm:$0xf]
    %v12625 = vld [vmem:[%s10 + $0x10c] sm:$0xf]
    %v12626 = vld [vmem:[%s10 + $0x110] sm:$0xf]
    %v12627 = vld [vmem:[%s10 + $0x114] sm:$0xf]
    %v12628 = vld [vmem:[%s10 + $0x118] sm:$0xf]
    %v12629 = vld [vmem:[%s10 + $0x11c] sm:$0xf]
    %v12702 = vunpack.c.l.b16 %v12558
    %v12703 = vunpack.c.l.b16 %v12559
    %v12704 = vunpack.c.l.b16 %v12560
    %v12705 = vunpack.c.l.b16 %v12561
    %v12706 = vunpack.c.l.b16 %v12562
    %v12707 = vunpack.c.l.b16 %v12563
    %v12708 = vunpack.c.l.b16 %v12564
    %v12709 = vunpack.c.l.b16 %v12565
    %v12710 = vunpack.c.l.b16 %v12566
    %v12711 = vunpack.c.l.b16 %v12567
    %v12712 = vunpack.c.l.b16 %v12568
    %v12713 = vunpack.c.l.b16 %v12569
    %v12714 = vunpack.c.l.b16 %v12570
    %v12715 = vunpack.c.l.b16 %v12571
    %v12716 = vunpack.c.l.b16 %v12572
    %v12717 = vunpack.c.l.b16 %v12573
    %v12718 = vunpack.c.l.b16 %v12574
    %v12719 = vunpack.c.l.b16 %v12575
    %v12720 = vunpack.c.l.b16 %v12576
    %v12721 = vunpack.c.l.b16 %v12577
    %v12722 = vunpack.c.l.b16 %v12578
    %v12723 = vunpack.c.l.b16 %v12579
    %v12724 = vunpack.c.l.b16 %v12580
    %v12725 = vunpack.c.l.b16 %v12581
    %v12726 = vunpack.c.l.b16 %v12582
    %v12727 = vunpack.c.l.b16 %v12583
    %v12728 = vunpack.c.l.b16 %v12584
    %v12729 = vunpack.c.l.b16 %v12585
    %v12730 = vunpack.c.l.b16 %v12586
    %v12731 = vunpack.c.l.b16 %v12587
    %v12732 = vunpack.c.l.b16 %v12588
    %v12733 = vunpack.c.l.b16 %v12589
    %v12734 = vunpack.c.l.b16 %v12590
    %v12735 = vunpack.c.l.b16 %v12591
    %v12736 = vunpack.c.l.b16 %v12592
    %v12737 = vunpack.c.l.b16 %v12593
    %v12738 = vunpack.c.l.b16 %v12594
    %v12739 = vunpack.c.l.b16 %v12595
    %v12740 = vunpack.c.l.b16 %v12596
    %v12741 = vunpack.c.l.b16 %v12597
    %v12742 = vunpack.c.l.b16 %v12598
    %v12743 = vunpack.c.l.b16 %v12599
    %v12744 = vunpack.c.l.b16 %v12600
    %v12745 = vunpack.c.l.b16 %v12601
    %v12746 = vunpack.c.l.b16 %v12602
    %v12747 = vunpack.c.l.b16 %v12603
    %v12748 = vunpack.c.l.b16 %v12604
    %v12749 = vunpack.c.l.b16 %v12605
    %v12750 = vunpack.c.l.b16 %v12606
    %v12751 = vunpack.c.l.b16 %v12607
    %v12752 = vunpack.c.l.b16 %v12608
    %v12753 = vunpack.c.l.b16 %v12609
    %v12754 = vunpack.c.l.b16 %v12610
    %v12755 = vunpack.c.l.b16 %v12611
    %v12756 = vunpack.c.l.b16 %v12612
    %v12757 = vunpack.c.l.b16 %v12613
    %v12758 = vunpack.c.l.b16 %v12614
    %v12759 = vunpack.c.l.b16 %v12615
    %v12760 = vunpack.c.l.b16 %v12616
    %v12761 = vunpack.c.l.b16 %v12617
    %v12762 = vunpack.c.l.b16 %v12618
    %v12763 = vunpack.c.l.b16 %v12619
    %v12764 = vunpack.c.l.b16 %v12620
    %v12765 = vunpack.c.l.b16 %v12621
    %v12766 = vunpack.c.l.b16 %v12622
    %v12767 = vunpack.c.l.b16 %v12623
    %v12768 = vunpack.c.l.b16 %v12624
    %v12769 = vunpack.c.l.b16 %v12625
    %v12770 = vunpack.c.l.b16 %v12626
    %v12771 = vunpack.c.l.b16 %v12627
    %v12772 = vunpack.c.l.b16 %v12628
    %v12773 = vunpack.c.l.b16 %v12629
    %v12774 = vpack.c.b16 %v12703, %v12702
    %v12775 = vpack.c.b16 %v12705, %v12704
    %v12776 = vpack.c.b16 %v12707, %v12706
    %v12777 = vpack.c.b16 %v12709, %v12708
    %v12778 = vpack.c.b16 %v12711, %v12710
    %v12779 = vpack.c.b16 %v12713, %v12712
    %v12780 = vpack.c.b16 %v12715, %v12714
    %v12781 = vpack.c.b16 %v12717, %v12716
    %v12782 = vpack.c.b16 %v12719, %v12718
    %v12783 = vpack.c.b16 %v12721, %v12720
    %v12784 = vpack.c.b16 %v12723, %v12722
    %v12785 = vpack.c.b16 %v12725, %v12724
    %v12786 = vpack.c.b16 %v12727, %v12726
    %v12787 = vpack.c.b16 %v12729, %v12728
    %v12788 = vpack.c.b16 %v12731, %v12730
    %v12789 = vpack.c.b16 %v12733, %v12732
    %v12790 = vpack.c.b16 %v12735, %v12734
    %v12791 = vpack.c.b16 %v12737, %v12736
    %v12792 = vpack.c.b16 %v12739, %v12738
    %v12793 = vpack.c.b16 %v12741, %v12740
    %v12794 = vpack.c.b16 %v12743, %v12742
    %v12795 = vpack.c.b16 %v12745, %v12744
    %v12796 = vpack.c.b16 %v12747, %v12746
    %v12797 = vpack.c.b16 %v12749, %v12748
    %v12798 = vpack.c.b16 %v12751, %v12750
    %v12799 = vpack.c.b16 %v12753, %v12752
    %v12800 = vpack.c.b16 %v12755, %v12754
    %v12801 = vpack.c.b16 %v12757, %v12756
    %v12802 = vpack.c.b16 %v12759, %v12758
    %v12803 = vpack.c.b16 %v12761, %v12760
    %v12804 = vpack.c.b16 %v12763, %v12762
    %v12805 = vpack.c.b16 %v12765, %v12764
    %v12806 = vpack.c.b16 %v12767, %v12766
    %v12807 = vpack.c.b16 %v12769, %v12768
    %v12808 = vpack.c.b16 %v12771, %v12770
    %v12809 = vpack.c.b16 %v12773, %v12772
    %v12847 = vsel %vm5514, %v12492, 0
    %v12850 = vsel %vm5514, %v12495, 0
    %v12853 = vsel %vm5514, %v12498, 0
    %v12856 = vsel %vm5514, %v12501, 0
    %12858 = vmatprep.subr.bf16.mxu0 0
    %12859 = vmatpush1.bf16.msra.mxu0 %v12781
    %12860 = vmatprep.subr.bf16.mxu0 0
    %12861 = vmatpush1.bf16.msra.mxu0 %v12780
    %12862 = vmatprep.subr.bf16.mxu0 0
    %12863 = vmatpush1.bf16.msra.mxu0 %v12779
    %12864 = vmatprep.subr.bf16.mxu0 0
    %12865 = vmatpush1.bf16.msra.mxu0 %v12778
    %12866 = vmatprep.subr.bf16.mxu0 0
    %12867 = vmatpush1.bf16.msra.mxu0 %v12777
    %12868 = vmatprep.subr.bf16.mxu0 0
    %12869 = vmatpush1.bf16.msra.mxu0 %v12776
    %12870 = vmatprep.subr.bf16.mxu0 0
    %12871 = vmatpush1.bf16.msra.mxu0 %v12775
    %12872 = vmatprep.subr.bf16.mxu0 0
    %12873 = vmatpush1.bf16.msra.mxu0 %v12774
    %12874 = vmatprep.subr.bf16.mxu0 0
    %12875 = vmatpush2.bf16.msra.mxu0 %v12789
    %12876 = vmatprep.subr.bf16.mxu0 0
    %12877 = vmatpush2.bf16.msra.mxu0 %v12788
    %12878 = vmatprep.subr.bf16.mxu0 0
    %12879 = vmatpush2.bf16.msra.mxu0 %v12787
    %12880 = vmatprep.subr.bf16.mxu0 0
    %12881 = vmatpush2.bf16.msra.mxu0 %v12786
    %12882 = vmatprep.subr.bf16.mxu0 0
    %12883 = vmatpush2.bf16.msra.mxu0 %v12785
    %12884 = vmatprep.subr.bf16.mxu0 0
    %12885 = vmatpush2.bf16.msra.mxu0 %v12784
    %12886 = vmatprep.subr.bf16.mxu0 0
    %12887 = vmatpush2.bf16.msra.mxu0 %v12783
    %12888 = vmatprep.subr.bf16.mxu0 0
    %12889 = vmatpush2.bf16.msra.mxu0 %v12782
    %12890 = vmatprep.mubr.bf16.mxu0 %v12516
    %12891 = vmatmul.mubr.bf16.gmra.mxu0 %v12503
    %v12892 = vpop.f32.mrf.mxu0
    %v12893 = vadd.f32 0.0, %v12892
    %v12894 = vpop.f32.mrf.mxu0
    %v12895 = vpop.f32.mrf.mxu0
    %v12896 = vadd.f32 0.0, %v12895
    %v12897 = vpop.f32.mrf.mxu0
    %12898 = vmatprep.mubr.bf16.mxu0 %v12520
    %12899 = vmatmul.mubr.bf16.gmra.mxu0 %v12506
    %v12900 = vpop.f32.mrf.mxu0
    %v12901 = vadd.f32 0.0, %v12900
    %v12902 = vpop.f32.mrf.mxu0
    %v12903 = vpop.f32.mrf.mxu0
    %v12904 = vadd.f32 0.0, %v12903
    %v12905 = vpop.f32.mrf.mxu0
    %12906 = vmatprep.mubr.bf16.mxu0 %v12524
    %12907 = vmatmul.mubr.bf16.gmra.mxu0 %v12509
    %v12908 = vpop.f32.mrf.mxu0
    %v12909 = vadd.f32 0.0, %v12908
    %v12910 = vpop.f32.mrf.mxu0
    %v12911 = vpop.f32.mrf.mxu0
    %v12912 = vadd.f32 0.0, %v12911
    %v12913 = vpop.f32.mrf.mxu0
    %12914 = vmatprep.mubr.bf16.mxu0 %v12528
    %12915 = vmatmul.mubr.bf16.gmra.mxu0 %v12512
    %v12916 = vpop.f32.mrf.mxu0
    %v12917 = vadd.f32 0.0, %v12916
    %v12918 = vpop.f32.mrf.mxu0
    %v12919 = vpop.f32.mrf.mxu0
    %v12920 = vadd.f32 0.0, %v12919
    %v12921 = vpop.f32.mrf.mxu0
    %12922 = vdwg.mxu0
    %12923 = vmatprep.subr.bf16.mxu0 0
    %12924 = vmatpush1.bf16.msra.mxu0 %v12797
    %12925 = vmatprep.subr.bf16.mxu0 0
    %12926 = vmatpush1.bf16.msra.mxu0 %v12796
    %12927 = vmatprep.subr.bf16.mxu0 0
    %12928 = vmatpush1.bf16.msra.mxu0 %v12795
    %12929 = vmatprep.subr.bf16.mxu0 0
    %12930 = vmatpush1.bf16.msra.mxu0 %v12794
    %12931 = vmatprep.subr.bf16.mxu0 0
    %12932 = vmatpush1.bf16.msra.mxu0 %v12793
    %12933 = vmatprep.subr.bf16.mxu0 0
    %12934 = vmatpush1.bf16.msra.mxu0 %v12792
    %12935 = vmatprep.subr.bf16.mxu0 0
    %12936 = vmatpush1.bf16.msra.mxu0 %v12791
    %12937 = vmatprep.subr.bf16.mxu0 0
    %12938 = vmatpush1.bf16.msra.mxu0 %v12790
    %12939 = vmatprep.subr.bf16.mxu0 0
    %12940 = vmatpush2.bf16.msra.mxu0 %v12805
    %12941 = vmatprep.subr.bf16.mxu0 0
    %12942 = vmatpush2.bf16.msra.mxu0 %v12804
    %12943 = vmatprep.subr.bf16.mxu0 0
    %12944 = vmatpush2.bf16.msra.mxu0 %v12803
    %12945 = vmatprep.subr.bf16.mxu0 0
    %12946 = vmatpush2.bf16.msra.mxu0 %v12802
    %12947 = vmatprep.subr.bf16.mxu0 0
    %12948 = vmatpush2.bf16.msra.mxu0 %v12801
    %12949 = vmatprep.subr.bf16.mxu0 0
    %12950 = vmatpush2.bf16.msra.mxu0 %v12800
    %12951 = vmatprep.subr.bf16.mxu0 0
    %12952 = vmatpush2.bf16.msra.mxu0 %v12799
    %12953 = vmatprep.subr.bf16.mxu0 0
    %12954 = vmatpush2.bf16.msra.mxu0 %v12798
    %12955 = vmatprep.mubr.bf16.mxu0 %v12547
    %12956 = vmatmul.mubr.bf16.gmra.mxu0 %v12532
    %v12957 = vpop.f32.mrf.mxu0
    %v12958 = vadd.f32 %v12893, %v12957
    %v12959 = vpop.f32.mrf.mxu0
    %v12960 = vpop.f32.mrf.mxu0
    %v12961 = vadd.f32 %v12896, %v12960
    %v12962 = vpop.f32.mrf.mxu0
    %12963 = vmatprep.mubr.bf16.mxu0 %v12550
    %12964 = vmatmul.mubr.bf16.gmra.mxu0 %v12536
    %v12965 = vpop.f32.mrf.mxu0
    %v12966 = vadd.f32 %v12901, %v12965
    %v12967 = vpop.f32.mrf.mxu0
    %v12968 = vpop.f32.mrf.mxu0
    %v12969 = vadd.f32 %v12904, %v12968
    %v12970 = vpop.f32.mrf.mxu0
    %12971 = vmatprep.mubr.bf16.mxu0 %v12553
    %12972 = vmatmul.mubr.bf16.gmra.mxu0 %v12540
    %v12973 = vpop.f32.mrf.mxu0
    %v12974 = vadd.f32 %v12909, %v12973
    %v12975 = vpop.f32.mrf.mxu0
    %v12976 = vpop.f32.mrf.mxu0
    %v12977 = vadd.f32 %v12912, %v12976
    %v12978 = vpop.f32.mrf.mxu0
    %12979 = vmatprep.mubr.bf16.mxu0 %v12556
    %12980 = vmatmul.mubr.bf16.gmra.mxu0 %v12544
    %v12981 = vpop.f32.mrf.mxu0
    %v12982 = vadd.f32 %v12917, %v12981
    %v12983 = vpop.f32.mrf.mxu0
    %v12984 = vpop.f32.mrf.mxu0
    %v12985 = vadd.f32 %v12920, %v12984
    %v12986 = vpop.f32.mrf.mxu0
    %12987 = vdwg.mxu0
    %12988 = vmatprep.subr.bf16.mxu0 0
    %12989 = vmatpush1.bf16.msra.mxu0 0
    %12990 = vmatprep.subr.bf16.mxu0 0
    %12991 = vmatpush1.bf16.msra.mxu0 0
    %12992 = vmatprep.subr.bf16.mxu0 0
    %12993 = vmatpush1.bf16.msra.mxu0 0
    %12994 = vmatprep.subr.bf16.mxu0 0
    %12995 = vmatpush1.bf16.msra.mxu0 0
    %12996 = vmatprep.subr.bf16.mxu0 0
    %12997 = vmatpush1.bf16.msra.mxu0 %v12809
    %12998 = vmatprep.subr.bf16.mxu0 0
    %12999 = vmatpush1.bf16.msra.mxu0 %v12808
    %13000 = vmatprep.subr.bf16.mxu0 0
    %13001 = vmatpush1.bf16.msra.mxu0 %v12807
    %13002 = vmatprep.subr.bf16.mxu0 0
    %13003 = vmatpush1.bf16.msra.mxu0 %v12806
    %13004 = vmatprep.subr.bf16.mxu0 0
    %13005 = vmatpush2.bf16.msra.mxu0 0
    %13006 = vmatprep.subr.bf16.mxu0 0
    %13007 = vmatpush2.bf16.msra.mxu0 0
    %13008 = vmatprep.subr.bf16.mxu0 0
    %13009 = vmatpush2.bf16.msra.mxu0 0
    %13010 = vmatprep.subr.bf16.mxu0 0
    %13011 = vmatpush2.bf16.msra.mxu0 0
    %13012 = vmatprep.subr.bf16.mxu0 0
    %13013 = vmatpush2.bf16.msra.mxu0 0
    %13014 = vmatprep.subr.bf16.mxu0 0
    %13015 = vmatpush2.bf16.msra.mxu0 0
    %13016 = vmatprep.subr.bf16.mxu0 0
    %13017 = vmatpush2.bf16.msra.mxu0 0
    %13018 = vmatprep.subr.bf16.mxu0 0
    %13019 = vmatpush2.bf16.msra.mxu0 0
    %13020 = vmatprep.mubr.bf16.mxu0 0
    %13021 = vmatmul.mubr.bf16.gmra.mxu0 %v12847
    %v13022 = vpop.f32.mrf.mxu0
    %v13023 = vadd.f32 %v12958, %v13022
    %v13024 = vpop.f32.mrf.mxu0
    %v13025 = vpop.f32.mrf.mxu0
    %v13026 = vadd.f32 %v12961, %v13025
    %v13027 = vpop.f32.mrf.mxu0
    %13028 = vmatprep.mubr.bf16.mxu0 0
    %13029 = vmatmul.mubr.bf16.gmra.mxu0 %v12850
    %v13030 = vpop.f32.mrf.mxu0
    %v13031 = vadd.f32 %v12966, %v13030
    %v13032 = vpop.f32.mrf.mxu0
    %v13033 = vpop.f32.mrf.mxu0
    %v13034 = vadd.f32 %v12969, %v13033
    %v13035 = vpop.f32.mrf.mxu0
    %13036 = vmatprep.mubr.bf16.mxu0 0
    %13037 = vmatmul.mubr.bf16.gmra.mxu0 %v12853
    %v13038 = vpop.f32.mrf.mxu0
    %v13039 = vadd.f32 %v12974, %v13038
    %v13040 = vpop.f32.mrf.mxu0
    %v13041 = vpop.f32.mrf.mxu0
    %v13042 = vadd.f32 %v12977, %v13041
    %v13043 = vpop.f32.mrf.mxu0
    %13044 = vmatprep.mubr.bf16.mxu0 0
    %13045 = vmatmul.mubr.bf16.gmra.mxu0 %v12856
    %v13046 = vpop.f32.mrf.mxu0
    %v13047 = vadd.f32 %v12982, %v13046
    %v13048 = vpop.f32.mrf.mxu0
    %v13049 = vpop.f32.mrf.mxu0
    %v13050 = vadd.f32 %v12985, %v13049
    %v13051 = vpop.f32.mrf.mxu0
    %13052 = vdwg.mxu0
    %vm13053 = vcmp.lt.s32.totalorder %v9641, 2
    %vm13054 = vcmp.lt.s32.totalorder %v9642, 2
    %v13055 = vsel %vm13053, 1, 0
    %v13056 = vsel %vm13054, 1, 0
    %v13057 = vcvt.s32.f32 %v13055
    %v13058 = vcvt.s32.f32 %v13056
    %v13059 = vmul.f32 %v13023, %v13057
    %v13060 = vmul.f32 %v13026, %v13058
    %v13061 = vmul.f32 %v13031, %v13057
    %v13062 = vmul.f32 %v13034, %v13058
    %v13063 = vmul.f32 %v13039, %v13057
    %v13064 = vmul.f32 %v13042, %v13058
    %v13065 = vmul.f32 %v13047, %v13057
    %v13066 = vmul.f32 %v13050, %v13058
    %v13067 = vsel %vm5514, %v13059, 0.0
    %v13068 = vsel %vm5514, %v13060, 0.0
    %v13069 = vadd.f32 %v13067, %v13068
    %v13070 = vsel %vm5514, %v13061, 0.0
    %v13071 = vadd.f32 %v13069, %v13070
    %v13072 = vsel %vm5514, %v13062, 0.0
    %v13073 = vadd.f32 %v13071, %v13072
    %v13074 = vsel %vm5514, %v13063, 0.0
    %v13075 = vadd.f32 %v13073, %v13074
    %v13076 = vsel %vm5514, %v13064, 0.0
    %v13077 = vadd.f32 %v13075, %v13076
    %v13078 = vsel %vm5514, %v13065, 0.0
    %v13079 = vadd.f32 %v13077, %v13078
    %v13080 = vsel %vm5514, %v13066, 0.0
    %v13081 = vadd.f32 %v13079, %v13080
    %v13082 = vrot.slane %v13081, 4
    %v13083 = vadd.f32 %v13081, %v13082
    %v13084 = vrot.slane %v13083, 2
    %v13085 = vadd.f32 %v13083, %v13084
    %v13086 = vrot.slane %v13085, 1
    %v13087 = vadd.f32 %v13085, %v13086
    %v13088 = vmul.f32 %v13059, %v13059
    %v13089 = vmul.f32 %v13060, %v13060
    %v13090 = vmul.f32 %v13061, %v13061
    %v13091 = vmul.f32 %v13062, %v13062
    %v13092 = vmul.f32 %v13063, %v13063
    %v13093 = vmul.f32 %v13064, %v13064
    %v13094 = vmul.f32 %v13065, %v13065
    %v13095 = vmul.f32 %v13066, %v13066
    %v13096 = vsel %vm5514, %v13088, 0.0
    %v13097 = vsel %vm5514, %v13089, 0.0
    %v13098 = vadd.f32 %v13096, %v13097
    %v13099 = vsel %vm5514, %v13090, 0.0
    %v13100 = vadd.f32 %v13098, %v13099
    %v13101 = vsel %vm5514, %v13091, 0.0
    %v13102 = vadd.f32 %v13100, %v13101
    %v13103 = vsel %vm5514, %v13092, 0.0
    %v13104 = vadd.f32 %v13102, %v13103
    %v13105 = vsel %vm5514, %v13093, 0.0
    %v13106 = vadd.f32 %v13104, %v13105
    %v13107 = vsel %vm5514, %v13094, 0.0
    %v13108 = vadd.f32 %v13106, %v13107
    %v13109 = vsel %vm5514, %v13095, 0.0
    %v13110 = vadd.f32 %v13108, %v13109
    %v13111 = vrot.slane %v13110, 4
    %v13112 = vadd.f32 %v13110, %v13111
    %v13113 = vrot.slane %v13112, 2
    %v13114 = vadd.f32 %v13112, %v13113
    %v13115 = vrot.slane %v13114, 1
    %v13116 = vadd.f32 %v13114, %v13115
    %v13117 = vrcp.pop 8.0
    %v13118 = vmul.f32 %v13087, %v13117
    %v13119 = vmul.f32 %v13116, %v13117
    %v13120 = vmul.f32 %v13118, %v13118
    %v13121 = vsub.f32 %v13119, %v13120
    %v13122 = vmax.f32 %v13121, 0.0
    %v13123 = vld [vmem:[%s11] sm:$0x1]
    %v13124 = vadd.f32 %v13122, 1e-05
    %v13125 = vrsqrt.pop %v13124
    %v13126 = vmul.f32 %v13123, %v13125
    %v13127 = vld [vmem:[%s12] sm:$0x1]
    %v13128 = vmul.f32 %v13118, %v13126
    %v13129 = vsub.f32 %v13127, %v13128
    %v13131 = vlaneseq
    %v13132 = vshrl.u32 %v13131, 7
    %v13133 = vsub.s32 0, %v13132
    %v13134 = vrot.slane %v13126, %v13133
    %v13136 = vmul.f32 %v13023, %v13134
    %v13137 = vmul.f32 %v13031, %v13134
    %v13138 = vmul.f32 %v13039, %v13134
    %v13139 = vmul.f32 %v13047, %v13134
    %v13141 = vlaneseq
    %v13142 = vshrl.u32 %v13141, 7
    %v13143 = vsub.s32 0, %v13142
    %v13144 = vrot.slane %v13129, %v13143
    %v13146 = vadd.f32 %v13136, %v13144
    %v13147 = vadd.f32 %v13137, %v13144
    %v13148 = vadd.f32 %v13138, %v13144
    %v13149 = vadd.f32 %v13139, %v13144
    %v13150 = vmax.f32 %v13146, %v13147
    %v13151 = vmax.f32 %v13148, %v13149
    %v13154 = vrot.slane %v13150, 1
    %v13155 = vrot.slane %v13151, 1
    %v13158 = vmax.f32 %v13150, %v13154
    %v13159 = vmax.f32 %v13151, %v13155
    %v13160 = vmax.f32 %v13158, 0.0
    %v13161 = vmax.f32 %v13159, 0.0
    %vm13162 = vsmask.f32 1280
    %vm13163 = vmand %vm12094, %vm13162
    %v13164 = vld [vmem:[#allocation6] sm:$0x3]
    %v13165 = vsel %vm13163, 0, %v13164
    %13166 = vst [vmem:[#allocation6] sm:$0x3] %v13165
    %v13167 = vld [vmem:[#allocation6 + $0x6] sm:$0x3]
    %v13168 = vsel %vm13163, 0, %v13167
    %13169 = vst [vmem:[#allocation6 + $0x6] sm:$0x3] %v13168
    %s13170 = scalar_lea.vmem [#allocation6], 4
    %v13171 = vld [vmem:[%s13170] sm:$0x3]
    %v13172 = vsel %vm13163, 0, %v13171
    %13173 = vst [vmem:[%s13170] sm:$0x3] %v13172
    %v13174 = vld [vmem:[%s13170 + $0x6] sm:$0x3]
    %v13175 = vsel %vm13163, 0, %v13174
    %13176 = vst [vmem:[%s13170 + $0x6] sm:$0x3] %v13175
    %v13177 = vld [vmem:[#allocation6] sm:$0x1]
    %v13178 = vsel %vm6564, 0, %v13177
    %13179 = vst [vmem:[#allocation6] sm:$0x1] %v13178
    %v13180 = vld [vmem:[#allocation6 + $0x2] sm:$0x1]
    %v13181 = vsel %vm6564, 0, %v13180
    %13182 = vst [vmem:[#allocation6 + $0x2] sm:$0x1] %v13181
    %v13183 = vld [vmem:[#allocation6 + $0x4] sm:$0x1]
    %v13184 = vsel %vm6564, 0, %v13183
    %13185 = vst [vmem:[#allocation6 + $0x4] sm:$0x1] %v13184
    %v13186 = vld [vmem:[#allocation6 + $0x6] sm:$0x1]
    %v13187 = vsel %vm6564, 0, %v13186
    %13188 = vst [vmem:[#allocation6 + $0x6] sm:$0x1] %v13187
    %v13189 = vld [vmem:[#allocation6 + $0x8] sm:$0x1]
    %v13190 = vsel %vm6564, 0, %v13189
    %13191 = vst [vmem:[#allocation6 + $0x8] sm:$0x1] %v13190
    %v13192 = vld [vmem:[#allocation6 + $0xa] sm:$0x1]
    %v13193 = vsel %vm6564, 0, %v13192
    %13194 = vst [vmem:[#allocation6 + $0xa] sm:$0x1] %v13193
    %vm13195 = vcmask 517121
    %vm13196 = vmand %vm13195, %vm13162
    %v13197 = vld [vmem:[#allocation6] sm:$0x2]
    %v13198 = vsel %vm13196, 0, %v13197
    %13199 = vst [vmem:[#allocation6] sm:$0x2] %v13198
    %v13200 = vld [vmem:[#allocation6 + $0x2] sm:$0x2]
    %v13201 = vsel %vm13196, 0, %v13200
    %13202 = vst [vmem:[#allocation6 + $0x2] sm:$0x2] %v13201
    %v13203 = vld [vmem:[#allocation6 + $0x4] sm:$0x2]
    %v13204 = vsel %vm13196, 0, %v13203
    %13205 = vst [vmem:[#allocation6 + $0x4] sm:$0x2] %v13204
    %v13206 = vld [vmem:[#allocation6 + $0x6] sm:$0x2]
    %v13207 = vsel %vm13196, 0, %v13206
    %13208 = vst [vmem:[#allocation6 + $0x6] sm:$0x2] %v13207
    %v13209 = vld [vmem:[#allocation6 + $0x8] sm:$0x2]
    %v13210 = vsel %vm13196, 0, %v13209
    %13211 = vst [vmem:[#allocation6 + $0x8] sm:$0x2] %v13210
    %v13212 = vld [vmem:[#allocation6 + $0xa] sm:$0x2]
    %v13213 = vsel %vm13196, 0, %v13212
    %13214 = vst [vmem:[#allocation6 + $0xa] sm:$0x2] %v13213
    %v13215 = vpack.c.bf16 %v13160, %v13160
    %v13216 = vpack.c.bf16 %v13161, %v13161
    %v13220 = vunpack.c.l.s4 1983009808
    %v13221 = vunpack.c.0.s8 %v13220
    %v13222 = vlaneseq
    %v13223 = vshrl.u32 %v13222, 7
    %v13224 = vsub.s32 %v13221, %v13223
    %v13225 = vrot.slane %v13215, %v13224
    %v13227 = vunpack.c.l.s4 1983009808
    %v13228 = vunpack.c.0.s8 %v13227
    %v13229 = vlaneseq
    %v13230 = vshrl.u32 %v13229, 7
    %v13231 = vsub.s32 %v13228, %v13230
    %v13232 = vrot.slane %v13216, %v13231
    %v13234 = vshll.u32 %v13225, 16
    %v13237 = vshll.u32 %v13232, 16
    %s13241 = scalar_lea.vmem [#allocation6], 2
    %vm13242 = vmand %vm6563, %vm178
    %v13243 = vld [vmem:[%s13241] sm:$0x1]
    %v13244 = vsel %vm13242, %v13234, %v13243
    %13245 = vst [vmem:[%s13241] sm:$0x1] %v13244
    %v13246 = vld [vmem:[%s13241 + $0x6] sm:$0x1]
    %v13247 = vsel %vm13242, %v13237, %v13246
    %13248 = vst [vmem:[%s13241 + $0x6] sm:$0x1] %v13247
    %v13249 = vld [vmem:[%s13241] sm:$0x1]
    %v13250 = vld [vmem:[%s13241 + $0x6] sm:$0x1]
    %v13251 = vld [vmem:[%s13] sm:$0xf]
    %v13252 = vld [vmem:[%s13 + $0x4] sm:$0xf]
    %v13253 = vld [vmem:[%s13 + $0x8] sm:$0xf]
    %v13254 = vld [vmem:[%s13 + $0xc] sm:$0xf]
    %v13255 = vld [vmem:[%s13 + $0x10] sm:$0xf]
    %v13256 = vld [vmem:[%s13 + $0x14] sm:$0xf]
    %v13257 = vld [vmem:[%s13 + $0x18] sm:$0xf]
    %v13258 = vld [vmem:[%s13 + $0x1c] sm:$0xf]
    %v13259 = vld [vmem:[%s14] sm:$0x1]
    %v13261 = vlaneseq
    %v13262 = vshrl.u32 %v13261, 7
    %v13263 = vsub.s32 0, %v13262
    %v13264 = vrot.slane %v13259, %v13263
    %v13269 = vunpack.c.l.s4 1983009808
    %v13270 = vunpack.c.0.s8 %v13269
    %v13271 = vlaneseq
    %v13272 = vshrl.u32 %v13271, 7
    %v13273 = vsub.s32 %v13270, %v13272
    %v13274 = vrot.slane %v13249, %v13273
    %v13276 = vunpack.c.l.s4 1983009808
    %v13277 = vunpack.c.0.s8 %v13276
    %v13278 = vlaneseq
    %v13279 = vshrl.u32 %v13278, 7
    %v13280 = vsub.s32 %v13277, %v13279
    %v13281 = vrot.slane %v13250, %v13280
    %v13282 = vunpack.c.l.b16 %v13274
    %v13283 = vunpack.c.l.b16 %v13281
    %v13284 = vrot.slane %v13282, 1
    %vm13285 = vcmask 1041409
    %v13286 = vsel %vm13285, %v13283, %v13284
    %v13287 = vpack.c.b16 %v13286, %v13286
    %v13296 = vunpack.c.l.b16 %v13251
    %v13297 = vunpack.c.l.b16 %v13252
    %v13298 = vunpack.c.l.b16 %v13253
    %v13299 = vunpack.c.l.b16 %v13254
    %v13300 = vunpack.c.l.b16 %v13255
    %v13301 = vunpack.c.l.b16 %v13256
    %v13302 = vunpack.c.l.b16 %v13257
    %v13303 = vunpack.c.l.b16 %v13258
    %v13304 = vpack.c.b16 %v13297, %v13296
    %v13305 = vpack.c.b16 %v13299, %v13298
    %v13306 = vpack.c.b16 %v13301, %v13300
    %v13307 = vpack.c.b16 %v13303, %v13302
    %v13313 = vsel %vm5514, %v13287, 0
    %13315 = vmatprep.subr.bf16.mxu0 0
    %13316 = vmatpush1.bf16.msra.mxu0 0
    %13317 = vmatprep.subr.bf16.mxu0 0
    %13318 = vmatpush1.bf16.msra.mxu0 0
    %13319 = vmatprep.subr.bf16.mxu0 0
    %13320 = vmatpush1.bf16.msra.mxu0 0
    %13321 = vmatprep.subr.bf16.mxu0 0
    %13322 = vmatpush1.bf16.msra.mxu0 0
    %13323 = vmatprep.subr.bf16.mxu0 0
    %13324 = vmatpush1.bf16.msra.mxu0 %v13307
    %13325 = vmatprep.subr.bf16.mxu0 0
    %13326 = vmatpush1.bf16.msra.mxu0 %v13306
    %13327 = vmatprep.subr.bf16.mxu0 0
    %13328 = vmatpush1.bf16.msra.mxu0 %v13305
    %13329 = vmatprep.subr.bf16.mxu0 0
    %13330 = vmatpush1.bf16.msra.mxu0 %v13304
    %13331 = vmatprep.subr.bf16.mxu0 0
    %13332 = vmatpush2.bf16.msra.mxu0 0
    %13333 = vmatprep.subr.bf16.mxu0 0
    %13334 = vmatpush2.bf16.msra.mxu0 0
    %13335 = vmatprep.subr.bf16.mxu0 0
    %13336 = vmatpush2.bf16.msra.mxu0 0
    %13337 = vmatprep.subr.bf16.mxu0 0
    %13338 = vmatpush2.bf16.msra.mxu0 0
    %13339 = vmatprep.subr.bf16.mxu0 0
    %13340 = vmatpush2.bf16.msra.mxu0 0
    %13341 = vmatprep.subr.bf16.mxu0 0
    %13342 = vmatpush2.bf16.msra.mxu0 0
    %13343 = vmatprep.subr.bf16.mxu0 0
    %13344 = vmatpush2.bf16.msra.mxu0 0
    %13345 = vmatprep.subr.bf16.mxu0 0
    %13346 = vmatpush2.bf16.msra.mxu0 0
    %13347 = vmatprep.mubr.bf16.mxu0 0
    %13348 = vmatmul.mubr.bf16.gmra.mxu0 %v13313
    %v13349 = vpop.f32.mrf.mxu0
    %v13350 = vadd.f32 %v13264, %v13349
    %v13351 = vpop.f32.mrf.mxu0
    %v13352 = vpop.f32.mrf.mxu0
    %v13353 = vpop.f32.mrf.mxu0
    %13354 = vdwg.mxu0
    %vm13355 = vcmask 33792
    %13356 = vst.msk [vmem:[#allocation7] sm:$0x3] %vm13355, %v13350
    // Predicated region
    $region62: #{cnn4_forward.1} parent=1 // pred_check
      _
    $region63: #{cnn4_forward.1} parent=1 // pred_check_branch
      %13358 = sbr.rel (0) target = $region65
    $region64: #{cnn4_forward.1} parent=1 // pred_region
      %s13360 = ssub.s32 32, 32
      %13361 = vsyncadd [#allocation8], %s13360
      %s13363 = sshll.u32 [#allocation7], 4
      %s13364 = int_to_ptr.vmem [resolvable:$true] %s13363
      %13366 = dma.vmem_to_hbm [thread:$0]  %s13364, 32, %s15, [#allocation8]
    $region65: #{cnn4_forward.1} parent=1 // pred_fallthru
      _
    // Predicated region
    $region66: #{cnn4_forward.1} parent=1 // pred_check
      _
    $region67: #{cnn4_forward.1} parent=1 // pred_check_branch
      %13368 = sbr.rel (0) target = $region69
    $region68: #{cnn4_forward.1} parent=1 // pred_region
      %13369 = dma.done [#allocation8], 32
    $region69: #{cnn4_forward.1} parent=1 // pred_fallthru
      _
    %13370 = vsyncpa [#allocation8], 1

</llo_original>
